<compile_context>
chip_gen: v7x
topology: tpu7x:2x2x1
jax: 0.10.0
libtpu: 0.0.40
codegen_flags: <defaults>
</compile_context>

<pallas_src>
import numpy as np
import jax
import jax.numpy as jnp
from jax.experimental import pallas as pl
from jax.experimental.pallas import tpu as pltpu

EPS = 1e-5


def _bn_train(x, gamma, beta, axis):
    # nn.BatchNorm* in training mode, folded to one scale/shift:
    #   a = gamma * rsqrt(var + eps), b = beta - mean * a, y = x * a + b.
    # Two-pass mean / biased variance (matches PyTorch); rsqrt runs on the EUP.
    n = x.shape[axis]
    mean = jnp.sum(x, axis=axis, keepdims=True) * (1.0 / n)
    d = x - mean
    var = jnp.sum(d * d, axis=axis, keepdims=True) * (1.0 / n)
    a = gamma * jax.lax.rsqrt(var + EPS)
    b = beta - mean * a
    return x * a + b


# ------------------------------ fused kernel -------------------------------

def _jepa_kernel(p1t_ref, w1t_ref, gsel_ref, w2m_ref, fcw_ref,
                 act_ref, w1s_ref, w1a_ref, w2_ref, w3_ref,
                 cvec_ref, rvec_ref, out_ref):
    f32 = jnp.float32
    bf16 = jnp.bfloat16
    Tp1, B, R = out_ref.shape
    T = Tp1 - 1
    KK, S1, S2 = gsel_ref.shape          # 9 conv2 taps, conv1 / conv2 spatial
    C1 = w1t_ref.shape[0]                # 32 conv1 output channels
    H1 = w1s_ref.shape[1]
    H2 = w2_ref.shape[1]

    # ---- encoder: conv1 (C->32, 3x3, s2, p1) + BN(train) + ReLU ------------
    # Channel-major matmul (32, C*9) @ (C*9, B*S1): big dim stays on lanes.
    # The conv bias is cancelled exactly by the BN mean subtraction (dropped).
    y1 = jnp.dot(w1t_ref[...], p1t_ref[...], preferred_element_type=f32)
    y1 = jnp.maximum(
        _bn_train(y1, cvec_ref[0:C1, 0:1], cvec_ref[0:C1, 1:2], axis=1), 0.0)

    # ---- conv2 (32->64, 3x3, s2, p1) + BN(train) + ReLU --------------------
    # Gather-then-weight with per-image (block-diagonal) selection matrices:
    # 9 tiny 0/1 tap matmuls per image (exact in bf16 -- each output column
    # copies at most one input value), then ONE (64, 9*32) weight matmul.
    # TODO(synk): for large B, switch the static per-image loop to one
    # (C1*B, S1) x (S1, S2) matmul per tap.
    gmats = [gsel_ref[k] for k in range(KK)]                       # (S1, S2) each
    per_image = []
    for b in range(B):
        y1_b = y1[:, b * S1:(b + 1) * S1].astype(bf16)             # (32, S1)
        taps = [jnp.dot(y1_b, gmats[k], preferred_element_type=f32)
                for k in range(KK)]                                # 9 x (32, S2)
        per_image.append(jnp.concatenate(taps, axis=0))            # (9*32, S2)
    g = jnp.concatenate(per_image, axis=1).astype(bf16)            # (9*32, B*S2)
    x2 = jnp.dot(w2m_ref[...], g, preferred_element_type=f32)      # (64, B*S2)
    x2 = jnp.maximum(
        _bn_train(x2, cvec_ref[:, 2:3], cvec_ref[:, 3:4], axis=1), 0.0)

    # ---- AdaptiveAvgPool2d((1,1)) + Flatten + Linear(64, R) + ReLU ---------
    # Pool = per-image lane reduction (XLU); the tiny FC is a broadcast
    # multiply + sublane reduction (no in-kernel transpose needed).
    fcw = fcw_ref[...].astype(f32)                                 # (64, R)
    inv_s2 = 1.0 / S2
    rows = []
    for b in range(B):
        pooled_b = jnp.sum(x2[:, b * S2:(b + 1) * S2], axis=1,
                           keepdims=True) * inv_s2                 # (64, 1)
        rows.append(jnp.sum(pooled_b * fcw, axis=0, keepdims=True))  # (1, R)
    s = jnp.maximum(jnp.concatenate(rows, axis=0) + rvec_ref[0:1, 0:R], 0.0)

    out_ref[0] = s                                                 # (B, R) slab

    # ---- predictor rollout (weights stay VMEM-resident across steps) -------
    # Action projections for every step in one matmul; Linear biases b1/b2
    # precede a train-mode BN and are cancelled exactly (dropped).
    aproj = jnp.dot(act_ref[...], w1a_ref[...], preferred_element_type=f32)
    # TODO(synk): convert to lax.fori_loop with a VMEM carry if T grows large.
    for t in range(T):
        h = (jnp.dot(s.astype(bf16), w1s_ref[...], preferred_element_type=f32)
             + aproj[t * B:(t + 1) * B, :])
        h = jnp.maximum(
            _bn_train(h, rvec_ref[1:2, 0:H1], rvec_ref[2:3, 0:H1], axis=0), 0.0)
        h = jnp.dot(h.astype(bf16), w2_ref[...], preferred_element_type=f32)
        h = jnp.maximum(
            _bn_train(h, rvec_ref[3:4, 0:H2], rvec_ref[4:5, 0:H2], axis=0), 0.0)
        s = (jnp.dot(h.astype(bf16), w3_ref[...], preferred_element_type=f32)
             + rvec_ref[5:6, 0:R])
        out_ref[t + 1] = s


# --------------------------- host-side constants ----------------------------

def _conv_out(n, k=3, stride=2, pad=1):
    return (n + 2 * pad - k) // stride + 1


def _im2col_T(x, k=3, stride=2, pad=1):
    # (N, C, H, W) -> (C*k*k, N*OH*OW): rows ordered (c, kh, kw), columns
    # (n, oh, ow) lane-dense.  A handful of XLA ops on the raw first frame.
    N, C, H, W = x.shape
    OH, OW = _conv_out(H, k, stride, pad), _conv_out(W, k, stride, pad)
    xp = jnp.pad(x, ((0, 0), (0, 0), (pad, pad), (pad, pad)))
    taps = []
    for i in range(k):
        for j in range(k):
            taps.append(xp[:, :, i:i + stride * OH:stride, j:j + stride * OW:stride])
    t = jnp.stack(taps, axis=2)              # (N, C, k*k, OH, OW)
    t = t.transpose(1, 2, 0, 3, 4)           # (C, k*k, N, OH, OW)
    return t.reshape(C * k * k, N * OH * OW), OH, OW


def _conv2_tap_select(OH1, OW1, OH2, OW2):
    # Per-image selection: G[k, ih*OW1+iw, oh*OW2+ow] = 1 iff tap k = kh*3+kw
    # of conv2 output pixel (oh, ow) reads conv1 output pixel
    # (ih, iw) = (2*oh-1+kh, 2*ow-1+kw); all-zero columns realize the padding.
    S1, S2 = OH1 * OW1, OH2 * OW2
    G = np.zeros((9, S1, S2), np.float32)
    for kh in range(3):
        for kw in range(3):
            k = kh * 3 + kw
            for oh in range(OH2):
                ih = 2 * oh - 1 + kh
                if not 0 <= ih < OH1:
                    continue
                for ow in range(OW2):
                    iw = 2 * ow - 1 + kw
                    if not 0 <= iw < OW1:
                        continue
                    G[k, ih * OW1 + iw, oh * OW2 + ow] = 1.0
    return G


# ------------------------------- forward pass -------------------------------

@jax.jit
def jepa_forward(params, states, actions):
    # states: (B, T, C, H, W), actions: (B, Ta, A) -> preds: (B, Ta+1, R)
    B = states.shape[0]
    Ta, A = actions.shape[1], actions.shape[2]
    R = params["fc_w"].shape[1]
    bf16 = jnp.bfloat16

    # conv1 im2col on the raw first frame (only states[:, 0] is encoded).
    p1t, OH1, OW1 = _im2col_T(states[:, 0])
    OH2, OW2 = _conv_out(OH1), _conv_out(OW1)

    gsel = jnp.asarray(_conv2_tap_select(OH1, OW1, OH2, OW2), dtype=bf16)

    # actions: time-major, flattened so one matmul projects every step.
    act = actions.transpose(1, 0, 2).reshape(Ta * B, A).astype(bf16)

    out_tbr = pl.pallas_call(
        _jepa_kernel,
        out_shape=jax.ShapeDtypeStruct((Ta + 1, B, R), jnp.float32),
        compiler_params=pltpu.CompilerParams(
            # Actual footprint is <2 MiB at these shapes; 48 MiB leaves
            # explicit headroom for larger B/H/W while staying under the
            # v7x 64 MiB physical VMEM (v5e/v6e have 128 MiB).
            vmem_limit_bytes=48 * 1024 * 1024),
    )(p1t.astype(bf16), params["w1t"], gsel, params["w2m"], params["fc_w"],
      act, params["w1s"], params["w1a"], params["w2"], params["w3"],
      params["cvec"], params["rvec"])

    # kernel writes time-major lane-dense slabs; transpose back host-side.
    return jnp.transpose(out_tbr, (1, 0, 2))


def init_params(key, input_channels=1, repr_dim=256, action_dim=2,
                hidden_dims=(512, 256)):
    ks = jax.random.split(key, 6)

    def rnd(k, shape, fan_in):
        return jax.random.normal(k, shape, jnp.float32) / jnp.sqrt(float(fan_in))

    h1, h2 = hidden_dims
    c = input_channels
    bf16 = jnp.bfloat16

    # Conv2d(32, 64, 3, 2, 1) weight, tap-major for the gather-then-weight
    # matmul: w2m[oc, k*32 + ic] = W2[oc, ic, kh, kw], k = kh*3 + kw.
    w2 = rnd(ks[1], (64, 32, 3, 3), 32 * 9)
    w2m = jnp.transpose(w2.reshape(64, 32, 9), (0, 2, 1)).reshape(64, 9 * 32)

    # predictor first Linear: cat([s, a], 1) @ W1 == s @ w1s + a @ w1a
    w1 = rnd(ks[3], (repr_dim + action_dim, h1), repr_dim + action_dim)

    # packed conv-BN params, columns = [bn1_gamma, bn1_beta, bn2_gamma, bn2_beta]
    cvec = np.zeros((64, 4), np.float32)
    cvec[:32, 0] = 1.0      # encoder BN1 gamma (32 channels)
    cvec[:, 2] = 1.0        # encoder BN2 gamma (64 channels)

    # packed row vectors: [fc_b, pbn1_g, pbn1_b, pbn2_g, pbn2_b, b3]
    Wmax = max(h1, h2, repr_dim)
    rvec = np.zeros((6, Wmax), np.float32)
    rvec[1, :h1] = 1.0      # predictor BN1 gamma
    rvec[3, :h2] = 1.0      # predictor BN2 gamma

    return {
        # ---- encoder (matmul weights stored bf16) ----
        "w1t": rnd(ks[0], (32, c * 9), c * 9).astype(bf16),   # Conv2d(c,32,3,2,1).weight.reshape(32,-1)
        "w2m": w2m.astype(bf16),
        "fc_w": rnd(ks[2], (64, repr_dim), 64).astype(bf16),  # Linear(64, repr).weight.T
        # ---- predictor MLP (bf16) ----
        "w1s": w1[:repr_dim].astype(bf16),
        "w1a": w1[repr_dim:].astype(bf16),
        "w2": rnd(ks[4], (h1, h2), h1).astype(bf16),
        "w3": rnd(ks[5], (h2, repr_dim), h2).astype(bf16),
        # ---- packed per-channel / bias params (f32) ----
        "cvec": jnp.asarray(cvec),
        "rvec": jnp.asarray(rvec),
        # NOTE: the torch module's conv biases and predictor b1/b2 precede a
        # train-mode BatchNorm and are cancelled exactly by the batch-mean
        # subtraction, so the kernel does not consume them.
    }


if __name__ == "__main__":
    key = jax.random.PRNGKey(0)
    kp, kst, ka = jax.random.split(key, 3)

    B, T, C, H, W = 2, 4, 1, 16, 16
    Ta, action_dim, repr_dim = 3, 2, 256

    params = init_params(kp, input_channels=C, repr_dim=repr_dim,
                         action_dim=action_dim, hidden_dims=(512, 256))
    states = jax.random.normal(kst, (B, T, C, H, W), jnp.float32)
    actions = jax.random.normal(ka, (B, Ta, action_dim), jnp.float32)

    preds = jax.block_until_ready(jepa_forward(params, states, actions))
    assert preds.shape == (B, Ta + 1, repr_dim), preds.shape
    assert bool(jnp.all(jnp.isfinite(preds)))
    print("KERNEL_OK")
</pallas_src>

<mosaic_0001>
module attributes {stable_mosaic.version = 11 : i64} {
  func.func @_jepa_kernel(%arg0: memref<9x128xbf16, #tpu.memory_space<vmem>>, %arg1: memref<32x9xbf16, #tpu.memory_space<vmem>>, %arg2: memref<9x64x16xbf16, #tpu.memory_space<vmem>>, %arg3: memref<64x288xbf16, #tpu.memory_space<vmem>>, %arg4: memref<64x256xbf16, #tpu.memory_space<vmem>>, %arg5: memref<6x2xbf16, #tpu.memory_space<vmem>>, %arg6: memref<256x512xbf16, #tpu.memory_space<vmem>>, %arg7: memref<2x512xbf16, #tpu.memory_space<vmem>>, %arg8: memref<512x256xbf16, #tpu.memory_space<vmem>>, %arg9: memref<256x256xbf16, #tpu.memory_space<vmem>>, %arg10: memref<64x4xf32, #tpu.memory_space<vmem>>, %arg11: memref<6x512xf32, #tpu.memory_space<vmem>>, %arg12: memref<4x2x256xf32, #tpu.memory_space<vmem>>) attributes {dimension_semantics = [], scalar_prefetch = 0 : i64, scratch_operands = 0 : i64, tpu.core_type = #tpu.core_type<tc>} {
    %c0 = arith.constant 0 : index
    %c0_0 = arith.constant 0 : index
    %0 = vector.load %arg1[%c0, %c0_0] : memref<32x9xbf16, #tpu.memory_space<vmem>>, vector<32x9xbf16>
    %c0_1 = arith.constant 0 : index
    %c0_2 = arith.constant 0 : index
    %1 = vector.load %arg0[%c0_1, %c0_2] : memref<9x128xbf16, #tpu.memory_space<vmem>>, vector<9x128xbf16>
    %cst = arith.constant dense<0.000000e+00> : vector<32x128xf32>
    %2 = tpu.matmul %0, %1, %cst {dimension_numbers = #tpu.dot_dimension_numbers<[1], [0], [0], [1], [0, 0, 1, 1], [], []>} : vector<32x9xbf16>, vector<9x128xbf16>, vector<32x128xf32> -> vector<32x128xf32>
    %c0_3 = arith.constant 0 : index
    %c0_4 = arith.constant 0 : index
    %3 = vector.load %arg10[%c0_3, %c0_4] : memref<64x4xf32, #tpu.memory_space<vmem>>, vector<32x1xf32>
    %c0_5 = arith.constant 0 : index
    %c1 = arith.constant 1 : index
    %4 = vector.load %arg10[%c0_5, %c1] : memref<64x4xf32, #tpu.memory_space<vmem>>, vector<32x1xf32>
    %cst_6 = arith.constant dense<0.000000e+00> : vector<32xf32>
    %5 = vector.multi_reduction <add>, %2, %cst_6 [1] : vector<32x128xf32> to vector<32xf32>
    %6 = vector.shape_cast %5 : vector<32xf32> to vector<32x1xf32>
    %cst_7 = arith.constant 7.812500e-03 : f32
    %7 = vector.broadcast %cst_7 : f32 to vector<32x1xf32>
    %8 = arith.mulf %6, %7 : vector<32x1xf32>
    %9 = vector.broadcast %8 : vector<32x1xf32> to vector<32x128xf32>
    %10 = arith.subf %2, %9 : vector<32x128xf32>
    %11 = arith.mulf %10, %10 : vector<32x128xf32>
    %cst_8 = arith.constant dense<0.000000e+00> : vector<32xf32>
    %12 = vector.multi_reduction <add>, %11, %cst_8 [1] : vector<32x128xf32> to vector<32xf32>
    %13 = vector.shape_cast %12 : vector<32xf32> to vector<32x1xf32>
    %cst_9 = arith.constant 7.812500e-03 : f32
    %14 = vector.broadcast %cst_9 : f32 to vector<32x1xf32>
    %15 = arith.mulf %13, %14 : vector<32x1xf32>
    %cst_10 = arith.constant 9.99999974E-6 : f32
    %16 = vector.broadcast %cst_10 : f32 to vector<32x1xf32>
    %17 = arith.addf %15, %16 : vector<32x1xf32>
    %18 = math.rsqrt %17 : vector<32x1xf32>
    %19 = arith.mulf %3, %18 : vector<32x1xf32>
    %20 = arith.mulf %8, %19 : vector<32x1xf32>
    %21 = arith.subf %4, %20 : vector<32x1xf32>
    %22 = vector.broadcast %19 : vector<32x1xf32> to vector<32x128xf32>
    %23 = arith.mulf %2, %22 : vector<32x128xf32>
    %24 = vector.broadcast %21 : vector<32x1xf32> to vector<32x128xf32>
    %25 = arith.addf %23, %24 : vector<32x128xf32>
    %cst_11 = arith.constant 0.000000e+00 : f32
    %26 = vector.broadcast %cst_11 : f32 to vector<32x128xf32>
    %27 = arith.maximumf %25, %26 : vector<32x128xf32>
    %c0_12 = arith.constant 0 : index
    %c0_13 = arith.constant 0 : index
    %c0_14 = arith.constant 0 : index
    %28 = vector.load %arg2[%c0_12, %c0_13, %c0_14] : memref<9x64x16xbf16, #tpu.memory_space<vmem>>, vector<1x64x16xbf16>
    %29 = vector.shape_cast %28 : vector<1x64x16xbf16> to vector<64x16xbf16>
    %c1_15 = arith.constant 1 : index
    %c0_16 = arith.constant 0 : index
    %c0_17 = arith.constant 0 : index
    %30 = vector.load %arg2[%c1_15, %c0_16, %c0_17] : memref<9x64x16xbf16, #tpu.memory_space<vmem>>, vector<1x64x16xbf16>
    %31 = vector.shape_cast %30 : vector<1x64x16xbf16> to vector<64x16xbf16>
    %c2 = arith.constant 2 : index
    %c0_18 = arith.constant 0 : index
    %c0_19 = arith.constant 0 : index
    %32 = vector.load %arg2[%c2, %c0_18, %c0_19] : memref<9x64x16xbf16, #tpu.memory_space<vmem>>, vector<1x64x16xbf16>
    %33 = vector.shape_cast %32 : vector<1x64x16xbf16> to vector<64x16xbf16>
    %c3 = arith.constant 3 : index
    %c0_20 = arith.constant 0 : index
    %c0_21 = arith.constant 0 : index
    %34 = vector.load %arg2[%c3, %c0_20, %c0_21] : memref<9x64x16xbf16, #tpu.memory_space<vmem>>, vector<1x64x16xbf16>
    %35 = vector.shape_cast %34 : vector<1x64x16xbf16> to vector<64x16xbf16>
    %c4 = arith.constant 4 : index
    %c0_22 = arith.constant 0 : index
    %c0_23 = arith.constant 0 : index
    %36 = vector.load %arg2[%c4, %c0_22, %c0_23] : memref<9x64x16xbf16, #tpu.memory_space<vmem>>, vector<1x64x16xbf16>
    %37 = vector.shape_cast %36 : vector<1x64x16xbf16> to vector<64x16xbf16>
    %c5 = arith.constant 5 : index
    %c0_24 = arith.constant 0 : index
    %c0_25 = arith.constant 0 : index
    %38 = vector.load %arg2[%c5, %c0_24, %c0_25] : memref<9x64x16xbf16, #tpu.memory_space<vmem>>, vector<1x64x16xbf16>
    %39 = vector.shape_cast %38 : vector<1x64x16xbf16> to vector<64x16xbf16>
    %c6 = arith.constant 6 : index
    %c0_26 = arith.constant 0 : index
    %c0_27 = arith.constant 0 : index
    %40 = vector.load %arg2[%c6, %c0_26, %c0_27] : memref<9x64x16xbf16, #tpu.memory_space<vmem>>, vector<1x64x16xbf16>
    %41 = vector.shape_cast %40 : vector<1x64x16xbf16> to vector<64x16xbf16>
    %c7 = arith.constant 7 : index
    %c0_28 = arith.constant 0 : index
    %c0_29 = arith.constant 0 : index
    %42 = vector.load %arg2[%c7, %c0_28, %c0_29] : memref<9x64x16xbf16, #tpu.memory_space<vmem>>, vector<1x64x16xbf16>
    %43 = vector.shape_cast %42 : vector<1x64x16xbf16> to vector<64x16xbf16>
    %c8 = arith.constant 8 : index
    %c0_30 = arith.constant 0 : index
    %c0_31 = arith.constant 0 : index
    %44 = vector.load %arg2[%c8, %c0_30, %c0_31] : memref<9x64x16xbf16, #tpu.memory_space<vmem>>, vector<1x64x16xbf16>
    %45 = vector.shape_cast %44 : vector<1x64x16xbf16> to vector<64x16xbf16>
    %46 = vector.extract_strided_slice %27 {offsets = [0, 0], sizes = [32, 64], strides = [1, 1]} : vector<32x128xf32> to vector<32x64xf32>
    %47 = arith.truncf %46 : vector<32x64xf32> to vector<32x64xbf16>
    %cst_32 = arith.constant dense<0.000000e+00> : vector<32x16xf32>
    %48 = tpu.matmul %47, %29, %cst_32 {dimension_numbers = #tpu.dot_dimension_numbers<[1], [0], [0], [1], [0, 0, 1, 1], [], []>} : vector<32x64xbf16>, vector<64x16xbf16>, vector<32x16xf32> -> vector<32x16xf32>
    %cst_33 = arith.constant dense<0.000000e+00> : vector<32x16xf32>
    %49 = tpu.matmul %47, %31, %cst_33 {dimension_numbers = #tpu.dot_dimension_numbers<[1], [0], [0], [1], [0, 0, 1, 1], [], []>} : vector<32x64xbf16>, vector<64x16xbf16>, vector<32x16xf32> -> vector<32x16xf32>
    %cst_34 = arith.constant dense<0.000000e+00> : vector<32x16xf32>
    %50 = tpu.matmul %47, %33, %cst_34 {dimension_numbers = #tpu.dot_dimension_numbers<[1], [0], [0], [1], [0, 0, 1, 1], [], []>} : vector<32x64xbf16>, vector<64x16xbf16>, vector<32x16xf32> -> vector<32x16xf32>
    %cst_35 = arith.constant dense<0.000000e+00> : vector<32x16xf32>
    %51 = tpu.matmul %47, %35, %cst_35 {dimension_numbers = #tpu.dot_dimension_numbers<[1], [0], [0], [1], [0, 0, 1, 1], [], []>} : vector<32x64xbf16>, vector<64x16xbf16>, vector<32x16xf32> -> vector<32x16xf32>
    %cst_36 = arith.constant dense<0.000000e+00> : vector<32x16xf32>
    %52 = tpu.matmul %47, %37, %cst_36 {dimension_numbers = #tpu.dot_dimension_numbers<[1], [0], [0], [1], [0, 0, 1, 1], [], []>} : vector<32x64xbf16>, vector<64x16xbf16>, vector<32x16xf32> -> vector<32x16xf32>
    %cst_37 = arith.constant dense<0.000000e+00> : vector<32x16xf32>
    %53 = tpu.matmul %47, %39, %cst_37 {dimension_numbers = #tpu.dot_dimension_numbers<[1], [0], [0], [1], [0, 0, 1, 1], [], []>} : vector<32x64xbf16>, vector<64x16xbf16>, vector<32x16xf32> -> vector<32x16xf32>
    %cst_38 = arith.constant dense<0.000000e+00> : vector<32x16xf32>
    %54 = tpu.matmul %47, %41, %cst_38 {dimension_numbers = #tpu.dot_dimension_numbers<[1], [0], [0], [1], [0, 0, 1, 1], [], []>} : vector<32x64xbf16>, vector<64x16xbf16>, vector<32x16xf32> -> vector<32x16xf32>
    %cst_39 = arith.constant dense<0.000000e+00> : vector<32x16xf32>
    %55 = tpu.matmul %47, %43, %cst_39 {dimension_numbers = #tpu.dot_dimension_numbers<[1], [0], [0], [1], [0, 0, 1, 1], [], []>} : vector<32x64xbf16>, vector<64x16xbf16>, vector<32x16xf32> -> vector<32x16xf32>
    %cst_40 = arith.constant dense<0.000000e+00> : vector<32x16xf32>
    %56 = tpu.matmul %47, %45, %cst_40 {dimension_numbers = #tpu.dot_dimension_numbers<[1], [0], [0], [1], [0, 0, 1, 1], [], []>} : vector<32x64xbf16>, vector<64x16xbf16>, vector<32x16xf32> -> vector<32x16xf32>
    %57 = tpu.concatenate %48, %49, %50, %51, %52, %53, %54, %55, %56 in 0 : vector<32x16xf32>, vector<32x16xf32>, vector<32x16xf32>, vector<32x16xf32>, vector<32x16xf32>, vector<32x16xf32>, vector<32x16xf32>, vector<32x16xf32>, vector<32x16xf32> -> vector<288x16xf32>
    %58 = vector.extract_strided_slice %27 {offsets = [0, 64], sizes = [32, 64], strides = [1, 1]} : vector<32x128xf32> to vector<32x64xf32>
    %59 = arith.truncf %58 : vector<32x64xf32> to vector<32x64xbf16>
    %cst_41 = arith.constant dense<0.000000e+00> : vector<32x16xf32>
    %60 = tpu.matmul %59, %29, %cst_41 {dimension_numbers = #tpu.dot_dimension_numbers<[1], [0], [0], [1], [0, 0, 1, 1], [], []>} : vector<32x64xbf16>, vector<64x16xbf16>, vector<32x16xf32> -> vector<32x16xf32>
    %cst_42 = arith.constant dense<0.000000e+00> : vector<32x16xf32>
    %61 = tpu.matmul %59, %31, %cst_42 {dimension_numbers = #tpu.dot_dimension_numbers<[1], [0], [0], [1], [0, 0, 1, 1], [], []>} : vector<32x64xbf16>, vector<64x16xbf16>, vector<32x16xf32> -> vector<32x16xf32>
    %cst_43 = arith.constant dense<0.000000e+00> : vector<32x16xf32>
    %62 = tpu.matmul %59, %33, %cst_43 {dimension_numbers = #tpu.dot_dimension_numbers<[1], [0], [0], [1], [0, 0, 1, 1], [], []>} : vector<32x64xbf16>, vector<64x16xbf16>, vector<32x16xf32> -> vector<32x16xf32>
    %cst_44 = arith.constant dense<0.000000e+00> : vector<32x16xf32>
    %63 = tpu.matmul %59, %35, %cst_44 {dimension_numbers = #tpu.dot_dimension_numbers<[1], [0], [0], [1], [0, 0, 1, 1], [], []>} : vector<32x64xbf16>, vector<64x16xbf16>, vector<32x16xf32> -> vector<32x16xf32>
    %cst_45 = arith.constant dense<0.000000e+00> : vector<32x16xf32>
    %64 = tpu.matmul %59, %37, %cst_45 {dimension_numbers = #tpu.dot_dimension_numbers<[1], [0], [0], [1], [0, 0, 1, 1], [], []>} : vector<32x64xbf16>, vector<64x16xbf16>, vector<32x16xf32> -> vector<32x16xf32>
    %cst_46 = arith.constant dense<0.000000e+00> : vector<32x16xf32>
    %65 = tpu.matmul %59, %39, %cst_46 {dimension_numbers = #tpu.dot_dimension_numbers<[1], [0], [0], [1], [0, 0, 1, 1], [], []>} : vector<32x64xbf16>, vector<64x16xbf16>, vector<32x16xf32> -> vector<32x16xf32>
    %cst_47 = arith.constant dense<0.000000e+00> : vector<32x16xf32>
    %66 = tpu.matmul %59, %41, %cst_47 {dimension_numbers = #tpu.dot_dimension_numbers<[1], [0], [0], [1], [0, 0, 1, 1], [], []>} : vector<32x64xbf16>, vector<64x16xbf16>, vector<32x16xf32> -> vector<32x16xf32>
    %cst_48 = arith.constant dense<0.000000e+00> : vector<32x16xf32>
    %67 = tpu.matmul %59, %43, %cst_48 {dimension_numbers = #tpu.dot_dimension_numbers<[1], [0], [0], [1], [0, 0, 1, 1], [], []>} : vector<32x64xbf16>, vector<64x16xbf16>, vector<32x16xf32> -> vector<32x16xf32>
    %cst_49 = arith.constant dense<0.000000e+00> : vector<32x16xf32>
    %68 = tpu.matmul %59, %45, %cst_49 {dimension_numbers = #tpu.dot_dimension_numbers<[1], [0], [0], [1], [0, 0, 1, 1], [], []>} : vector<32x64xbf16>, vector<64x16xbf16>, vector<32x16xf32> -> vector<32x16xf32>
    %69 = tpu.concatenate %60, %61, %62, %63, %64, %65, %66, %67, %68 in 0 : vector<32x16xf32>, vector<32x16xf32>, vector<32x16xf32>, vector<32x16xf32>, vector<32x16xf32>, vector<32x16xf32>, vector<32x16xf32>, vector<32x16xf32>, vector<32x16xf32> -> vector<288x16xf32>
    %70 = tpu.concatenate %57, %69 in 1 : vector<288x16xf32>, vector<288x16xf32> -> vector<288x32xf32>
    %71 = arith.truncf %70 : vector<288x32xf32> to vector<288x32xbf16>
    %c0_50 = arith.constant 0 : index
    %c0_51 = arith.constant 0 : index
    %72 = vector.load %arg3[%c0_50, %c0_51] : memref<64x288xbf16, #tpu.memory_space<vmem>>, vector<64x288xbf16>
    %cst_52 = arith.constant dense<0.000000e+00> : vector<64x32xf32>
    %73 = tpu.matmul %72, %71, %cst_52 {dimension_numbers = #tpu.dot_dimension_numbers<[1], [0], [0], [1], [0, 0, 1, 1], [], []>} : vector<64x288xbf16>, vector<288x32xbf16>, vector<64x32xf32> -> vector<64x32xf32>
    %c0_53 = arith.constant 0 : index
    %c2_54 = arith.constant 2 : index
    %74 = vector.load %arg10[%c0_53, %c2_54] : memref<64x4xf32, #tpu.memory_space<vmem>>, vector<64x1xf32>
    %c0_55 = arith.constant 0 : index
    %c3_56 = arith.constant 3 : index
    %75 = vector.load %arg10[%c0_55, %c3_56] : memref<64x4xf32, #tpu.memory_space<vmem>>, vector<64x1xf32>
    %cst_57 = arith.constant dense<0.000000e+00> : vector<64xf32>
    %76 = vector.multi_reduction <add>, %73, %cst_57 [1] : vector<64x32xf32> to vector<64xf32>
    %77 = vector.shape_cast %76 : vector<64xf32> to vector<64x1xf32>
    %cst_58 = arith.constant 3.125000e-02 : f32
    %78 = vector.broadcast %cst_58 : f32 to vector<64x1xf32>
    %79 = arith.mulf %77, %78 : vector<64x1xf32>
    %80 = vector.broadcast %79 : vector<64x1xf32> to vector<64x32xf32>
    %81 = arith.subf %73, %80 : vector<64x32xf32>
    %82 = arith.mulf %81, %81 : vector<64x32xf32>
    %cst_59 = arith.constant dense<0.000000e+00> : vector<64xf32>
    %83 = vector.multi_reduction <add>, %82, %cst_59 [1] : vector<64x32xf32> to vector<64xf32>
    %84 = vector.shape_cast %83 : vector<64xf32> to vector<64x1xf32>
    %cst_60 = arith.constant 3.125000e-02 : f32
    %85 = vector.broadcast %cst_60 : f32 to vector<64x1xf32>
    %86 = arith.mulf %84, %85 : vector<64x1xf32>
    %cst_61 = arith.constant 9.99999974E-6 : f32
    %87 = vector.broadcast %cst_61 : f32 to vector<64x1xf32>
    %88 = arith.addf %86, %87 : vector<64x1xf32>
    %89 = math.rsqrt %88 : vector<64x1xf32>
    %90 = arith.mulf %74, %89 : vector<64x1xf32>
    %91 = arith.mulf %79, %90 : vector<64x1xf32>
    %92 = arith.subf %75, %91 : vector<64x1xf32>
    %93 = vector.broadcast %90 : vector<64x1xf32> to vector<64x32xf32>
    %94 = arith.mulf %73, %93 : vector<64x32xf32>
    %95 = vector.broadcast %92 : vector<64x1xf32> to vector<64x32xf32>
    %96 = arith.addf %94, %95 : vector<64x32xf32>
    %cst_62 = arith.constant 0.000000e+00 : f32
    %97 = vector.broadcast %cst_62 : f32 to vector<64x32xf32>
    %98 = arith.maximumf %96, %97 : vector<64x32xf32>
    %c0_63 = arith.constant 0 : index
    %c0_64 = arith.constant 0 : index
    %99 = vector.load %arg4[%c0_63, %c0_64] : memref<64x256xbf16, #tpu.memory_space<vmem>>, vector<64x256xbf16>
    %100 = arith.extf %99 : vector<64x256xbf16> to vector<64x256xf32>
    %101 = vector.extract_strided_slice %98 {offsets = [0, 0], sizes = [64, 16], strides = [1, 1]} : vector<64x32xf32> to vector<64x16xf32>
    %cst_65 = arith.constant dense<0.000000e+00> : vector<64xf32>
    %102 = vector.multi_reduction <add>, %101, %cst_65 [1] : vector<64x16xf32> to vector<64xf32>
    %103 = vector.shape_cast %102 : vector<64xf32> to vector<64x1xf32>
    %cst_66 = arith.constant 6.250000e-02 : f32
    %104 = vector.broadcast %cst_66 : f32 to vector<64x1xf32>
    %105 = arith.mulf %103, %104 : vector<64x1xf32>
    %106 = vector.broadcast %105 : vector<64x1xf32> to vector<64x256xf32>
    %107 = arith.mulf %106, %100 : vector<64x256xf32>
    %cst_67 = arith.constant dense<0.000000e+00> : vector<256xf32>
    %108 = vector.multi_reduction <add>, %107, %cst_67 [0] : vector<64x256xf32> to vector<256xf32>
    %109 = vector.shape_cast %108 : vector<256xf32> to vector<1x256xf32>
    %110 = vector.extract_strided_slice %98 {offsets = [0, 16], sizes = [64, 16], strides = [1, 1]} : vector<64x32xf32> to vector<64x16xf32>
    %cst_68 = arith.constant dense<0.000000e+00> : vector<64xf32>
    %111 = vector.multi_reduction <add>, %110, %cst_68 [1] : vector<64x16xf32> to vector<64xf32>
    %112 = vector.shape_cast %111 : vector<64xf32> to vector<64x1xf32>
    %cst_69 = arith.constant 6.250000e-02 : f32
    %113 = vector.broadcast %cst_69 : f32 to vector<64x1xf32>
    %114 = arith.mulf %112, %113 : vector<64x1xf32>
    %115 = vector.broadcast %114 : vector<64x1xf32> to vector<64x256xf32>
    %116 = arith.mulf %115, %100 : vector<64x256xf32>
    %cst_70 = arith.constant dense<0.000000e+00> : vector<256xf32>
    %117 = vector.multi_reduction <add>, %116, %cst_70 [0] : vector<64x256xf32> to vector<256xf32>
    %118 = vector.shape_cast %117 : vector<256xf32> to vector<1x256xf32>
    %119 = tpu.concatenate %109, %118 in 0 : vector<1x256xf32>, vector<1x256xf32> -> vector<2x256xf32>
    %c0_71 = arith.constant 0 : index
    %c0_72 = arith.constant 0 : index
    %120 = vector.load %arg11[%c0_71, %c0_72] : memref<6x512xf32, #tpu.memory_space<vmem>>, vector<1x256xf32>
    %121 = vector.broadcast %120 : vector<1x256xf32> to vector<2x256xf32>
    %122 = arith.addf %119, %121 : vector<2x256xf32>
    %cst_73 = arith.constant 0.000000e+00 : f32
    %123 = vector.broadcast %cst_73 : f32 to vector<2x256xf32>
    %124 = arith.maximumf %122, %123 : vector<2x256xf32>
    %c0_74 = arith.constant 0 : index
    %c0_75 = arith.constant 0 : index
    %c0_76 = arith.constant 0 : index
    %125 = vector.load %arg12[%c0_74, %c0_75, %c0_76] : memref<4x2x256xf32, #tpu.memory_space<vmem>>, vector<1x2x256xf32>
    %126 = vector.shape_cast %125 : vector<1x2x256xf32> to vector<2x256xf32>
    %127 = vector.shape_cast %124 : vector<2x256xf32> to vector<1x2x256xf32>
    tpu.vector_store %arg12[%c0_74, %c0_75, %c0_76], %127 {strides = array<i32>} : memref<4x2x256xf32, #tpu.memory_space<vmem>>, vector<1x2x256xf32>,
    %c0_77 = arith.constant 0 : index
    %c0_78 = arith.constant 0 : index
    %128 = vector.load %arg5[%c0_77, %c0_78] : memref<6x2xbf16, #tpu.memory_space<vmem>>, vector<6x2xbf16>
    %c0_79 = arith.constant 0 : index
    %c0_80 = arith.constant 0 : index
    %129 = vector.load %arg7[%c0_79, %c0_80] : memref<2x512xbf16, #tpu.memory_space<vmem>>, vector<2x512xbf16>
    %cst_81 = arith.constant dense<0.000000e+00> : vector<6x512xf32>
    %130 = tpu.matmul %128, %129, %cst_81 {dimension_numbers = #tpu.dot_dimension_numbers<[1], [0], [0], [1], [0, 0, 1, 1], [], []>} : vector<6x2xbf16>, vector<2x512xbf16>, vector<6x512xf32> -> vector<6x512xf32>
    %131 = arith.truncf %124 : vector<2x256xf32> to vector<2x256xbf16>
    %c0_82 = arith.constant 0 : index
    %c0_83 = arith.constant 0 : index
    %132 = vector.load %arg6[%c0_82, %c0_83] : memref<256x512xbf16, #tpu.memory_space<vmem>>, vector<256x512xbf16>
    %cst_84 = arith.constant dense<0.000000e+00> : vector<2x512xf32>
    %133 = tpu.matmul %131, %132, %cst_84 {dimension_numbers = #tpu.dot_dimension_numbers<[1], [0], [0], [1], [0, 0, 1, 1], [], []>} : vector<2x256xbf16>, vector<256x512xbf16>, vector<2x512xf32> -> vector<2x512xf32>
    %134 = vector.extract_strided_slice %130 {offsets = [0, 0], sizes = [2, 512], strides = [1, 1]} : vector<6x512xf32> to vector<2x512xf32>
    %135 = arith.addf %133, %134 : vector<2x512xf32>
    %c1_85 = arith.constant 1 : index
    %c0_86 = arith.constant 0 : index
    %136 = vector.load %arg11[%c1_85, %c0_86] : memref<6x512xf32, #tpu.memory_space<vmem>>, vector<1x512xf32>
    %c2_87 = arith.constant 2 : index
    %c0_88 = arith.constant 0 : index
    %137 = vector.load %arg11[%c2_87, %c0_88] : memref<6x512xf32, #tpu.memory_space<vmem>>, vector<1x512xf32>
    %cst_89 = arith.constant dense<0.000000e+00> : vector<512xf32>
    %138 = vector.multi_reduction <add>, %135, %cst_89 [0] : vector<2x512xf32> to vector<512xf32>
    %139 = vector.shape_cast %138 : vector<512xf32> to vector<1x512xf32>
    %cst_90 = arith.constant 5.000000e-01 : f32
    %140 = vector.broadcast %cst_90 : f32 to vector<1x512xf32>
    %141 = arith.mulf %139, %140 : vector<1x512xf32>
    %142 = vector.broadcast %141 : vector<1x512xf32> to vector<2x512xf32>
    %143 = arith.subf %135, %142 : vector<2x512xf32>
    %144 = arith.mulf %143, %143 : vector<2x512xf32>
    %cst_91 = arith.constant dense<0.000000e+00> : vector<512xf32>
    %145 = vector.multi_reduction <add>, %144, %cst_91 [0] : vector<2x512xf32> to vector<512xf32>
    %146 = vector.shape_cast %145 : vector<512xf32> to vector<1x512xf32>
    %cst_92 = arith.constant 5.000000e-01 : f32
    %147 = vector.broadcast %cst_92 : f32 to vector<1x512xf32>
    %148 = arith.mulf %146, %147 : vector<1x512xf32>
    %cst_93 = arith.constant 9.99999974E-6 : f32
    %149 = vector.broadcast %cst_93 : f32 to vector<1x512xf32>
    %150 = arith.addf %148, %149 : vector<1x512xf32>
    %151 = math.rsqrt %150 : vector<1x512xf32>
    %152 = arith.mulf %136, %151 : vector<1x512xf32>
    %153 = arith.mulf %141, %152 : vector<1x512xf32>
    %154 = arith.subf %137, %153 : vector<1x512xf32>
    %155 = vector.broadcast %152 : vector<1x512xf32> to vector<2x512xf32>
    %156 = arith.mulf %135, %155 : vector<2x512xf32>
    %157 = vector.broadcast %154 : vector<1x512xf32> to vector<2x512xf32>
    %158 = arith.addf %156, %157 : vector<2x512xf32>
    %cst_94 = arith.constant 0.000000e+00 : f32
    %159 = vector.broadcast %cst_94 : f32 to vector<2x512xf32>
    %160 = arith.maximumf %158, %159 : vector<2x512xf32>
    %161 = arith.truncf %160 : vector<2x512xf32> to vector<2x512xbf16>
    %c0_95 = arith.constant 0 : index
    %c0_96 = arith.constant 0 : index
    %162 = vector.load %arg8[%c0_95, %c0_96] : memref<512x256xbf16, #tpu.memory_space<vmem>>, vector<512x256xbf16>
    %cst_97 = arith.constant dense<0.000000e+00> : vector<2x256xf32>
    %163 = tpu.matmul %161, %162, %cst_97 {dimension_numbers = #tpu.dot_dimension_numbers<[1], [0], [0], [1], [0, 0, 1, 1], [], []>} : vector<2x512xbf16>, vector<512x256xbf16>, vector<2x256xf32> -> vector<2x256xf32>
    %c3_98 = arith.constant 3 : index
    %c0_99 = arith.constant 0 : index
    %164 = vector.load %arg11[%c3_98, %c0_99] : memref<6x512xf32, #tpu.memory_space<vmem>>, vector<1x256xf32>
    %c4_100 = arith.constant 4 : index
    %c0_101 = arith.constant 0 : index
    %165 = vector.load %arg11[%c4_100, %c0_101] : memref<6x512xf32, #tpu.memory_space<vmem>>, vector<1x256xf32>
    %cst_102 = arith.constant dense<0.000000e+00> : vector<256xf32>
    %166 = vector.multi_reduction <add>, %163, %cst_102 [0] : vector<2x256xf32> to vector<256xf32>
    %167 = vector.shape_cast %166 : vector<256xf32> to vector<1x256xf32>
    %cst_103 = arith.constant 5.000000e-01 : f32
    %168 = vector.broadcast %cst_103 : f32 to vector<1x256xf32>
    %169 = arith.mulf %167, %168 : vector<1x256xf32>
    %170 = vector.broadcast %169 : vector<1x256xf32> to vector<2x256xf32>
    %171 = arith.subf %163, %170 : vector<2x256xf32>
    %172 = arith.mulf %171, %171 : vector<2x256xf32>
    %cst_104 = arith.constant dense<0.000000e+00> : vector<256xf32>
    %173 = vector.multi_reduction <add>, %172, %cst_104 [0] : vector<2x256xf32> to vector<256xf32>
    %174 = vector.shape_cast %173 : vector<256xf32> to vector<1x256xf32>
    %cst_105 = arith.constant 5.000000e-01 : f32
    %175 = vector.broadcast %cst_105 : f32 to vector<1x256xf32>
    %176 = arith.mulf %174, %175 : vector<1x256xf32>
    %cst_106 = arith.constant 9.99999974E-6 : f32
    %177 = vector.broadcast %cst_106 : f32 to vector<1x256xf32>
    %178 = arith.addf %176, %177 : vector<1x256xf32>
    %179 = math.rsqrt %178 : vector<1x256xf32>
    %180 = arith.mulf %164, %179 : vector<1x256xf32>
    %181 = arith.mulf %169, %180 : vector<1x256xf32>
    %182 = arith.subf %165, %181 : vector<1x256xf32>
    %183 = vector.broadcast %180 : vector<1x256xf32> to vector<2x256xf32>
    %184 = arith.mulf %163, %183 : vector<2x256xf32>
    %185 = vector.broadcast %182 : vector<1x256xf32> to vector<2x256xf32>
    %186 = arith.addf %184, %185 : vector<2x256xf32>
    %cst_107 = arith.constant 0.000000e+00 : f32
    %187 = vector.broadcast %cst_107 : f32 to vector<2x256xf32>
    %188 = arith.maximumf %186, %187 : vector<2x256xf32>
    %189 = arith.truncf %188 : vector<2x256xf32> to vector<2x256xbf16>
    %c0_108 = arith.constant 0 : index
    %c0_109 = arith.constant 0 : index
    %190 = vector.load %arg9[%c0_108, %c0_109] : memref<256x256xbf16, #tpu.memory_space<vmem>>, vector<256x256xbf16>
    %cst_110 = arith.constant dense<0.000000e+00> : vector<2x256xf32>
    %191 = tpu.matmul %189, %190, %cst_110 {dimension_numbers = #tpu.dot_dimension_numbers<[1], [0], [0], [1], [0, 0, 1, 1], [], []>} : vector<2x256xbf16>, vector<256x256xbf16>, vector<2x256xf32> -> vector<2x256xf32>
    %c5_111 = arith.constant 5 : index
    %c0_112 = arith.constant 0 : index
    %192 = vector.load %arg11[%c5_111, %c0_112] : memref<6x512xf32, #tpu.memory_space<vmem>>, vector<1x256xf32>
    %193 = vector.broadcast %192 : vector<1x256xf32> to vector<2x256xf32>
    %194 = arith.addf %191, %193 : vector<2x256xf32>
    %c1_113 = arith.constant 1 : index
    %c0_114 = arith.constant 0 : index
    %c0_115 = arith.constant 0 : index
    %195 = vector.load %arg12[%c1_113, %c0_114, %c0_115] : memref<4x2x256xf32, #tpu.memory_space<vmem>>, vector<1x2x256xf32>
    %196 = vector.shape_cast %195 : vector<1x2x256xf32> to vector<2x256xf32>
    %197 = vector.shape_cast %194 : vector<2x256xf32> to vector<1x2x256xf32>
    tpu.vector_store %arg12[%c1_113, %c0_114, %c0_115], %197 {strides = array<i32>} : memref<4x2x256xf32, #tpu.memory_space<vmem>>, vector<1x2x256xf32>,
    %198 = arith.truncf %194 : vector<2x256xf32> to vector<2x256xbf16>
    %c0_116 = arith.constant 0 : index
    %c0_117 = arith.constant 0 : index
    %199 = vector.load %arg6[%c0_116, %c0_117] : memref<256x512xbf16, #tpu.memory_space<vmem>>, vector<256x512xbf16>
    %cst_118 = arith.constant dense<0.000000e+00> : vector<2x512xf32>
    %200 = tpu.matmul %198, %199, %cst_118 {dimension_numbers = #tpu.dot_dimension_numbers<[1], [0], [0], [1], [0, 0, 1, 1], [], []>} : vector<2x256xbf16>, vector<256x512xbf16>, vector<2x512xf32> -> vector<2x512xf32>
    %201 = vector.extract_strided_slice %130 {offsets = [2, 0], sizes = [2, 512], strides = [1, 1]} : vector<6x512xf32> to vector<2x512xf32>
    %202 = arith.addf %200, %201 : vector<2x512xf32>
    %c1_119 = arith.constant 1 : index
    %c0_120 = arith.constant 0 : index
    %203 = vector.load %arg11[%c1_119, %c0_120] : memref<6x512xf32, #tpu.memory_space<vmem>>, vector<1x512xf32>
    %c2_121 = arith.constant 2 : index
    %c0_122 = arith.constant 0 : index
    %204 = vector.load %arg11[%c2_121, %c0_122] : memref<6x512xf32, #tpu.memory_space<vmem>>, vector<1x512xf32>
    %cst_123 = arith.constant dense<0.000000e+00> : vector<512xf32>
    %205 = vector.multi_reduction <add>, %202, %cst_123 [0] : vector<2x512xf32> to vector<512xf32>
    %206 = vector.shape_cast %205 : vector<512xf32> to vector<1x512xf32>
    %cst_124 = arith.constant 5.000000e-01 : f32
    %207 = vector.broadcast %cst_124 : f32 to vector<1x512xf32>
    %208 = arith.mulf %206, %207 : vector<1x512xf32>
    %209 = vector.broadcast %208 : vector<1x512xf32> to vector<2x512xf32>
    %210 = arith.subf %202, %209 : vector<2x512xf32>
    %211 = arith.mulf %210, %210 : vector<2x512xf32>
    %cst_125 = arith.constant dense<0.000000e+00> : vector<512xf32>
    %212 = vector.multi_reduction <add>, %211, %cst_125 [0] : vector<2x512xf32> to vector<512xf32>
    %213 = vector.shape_cast %212 : vector<512xf32> to vector<1x512xf32>
    %cst_126 = arith.constant 5.000000e-01 : f32
    %214 = vector.broadcast %cst_126 : f32 to vector<1x512xf32>
    %215 = arith.mulf %213, %214 : vector<1x512xf32>
    %cst_127 = arith.constant 9.99999974E-6 : f32
    %216 = vector.broadcast %cst_127 : f32 to vector<1x512xf32>
    %217 = arith.addf %215, %216 : vector<1x512xf32>
    %218 = math.rsqrt %217 : vector<1x512xf32>
    %219 = arith.mulf %203, %218 : vector<1x512xf32>
    %220 = arith.mulf %208, %219 : vector<1x512xf32>
    %221 = arith.subf %204, %220 : vector<1x512xf32>
    %222 = vector.broadcast %219 : vector<1x512xf32> to vector<2x512xf32>
    %223 = arith.mulf %202, %222 : vector<2x512xf32>
    %224 = vector.broadcast %221 : vector<1x512xf32> to vector<2x512xf32>
    %225 = arith.addf %223, %224 : vector<2x512xf32>
    %cst_128 = arith.constant 0.000000e+00 : f32
    %226 = vector.broadcast %cst_128 : f32 to vector<2x512xf32>
    %227 = arith.maximumf %225, %226 : vector<2x512xf32>
    %228 = arith.truncf %227 : vector<2x512xf32> to vector<2x512xbf16>
    %c0_129 = arith.constant 0 : index
    %c0_130 = arith.constant 0 : index
    %229 = vector.load %arg8[%c0_129, %c0_130] : memref<512x256xbf16, #tpu.memory_space<vmem>>, vector<512x256xbf16>
    %cst_131 = arith.constant dense<0.000000e+00> : vector<2x256xf32>
    %230 = tpu.matmul %228, %229, %cst_131 {dimension_numbers = #tpu.dot_dimension_numbers<[1], [0], [0], [1], [0, 0, 1, 1], [], []>} : vector<2x512xbf16>, vector<512x256xbf16>, vector<2x256xf32> -> vector<2x256xf32>
    %c3_132 = arith.constant 3 : index
    %c0_133 = arith.constant 0 : index
    %231 = vector.load %arg11[%c3_132, %c0_133] : memref<6x512xf32, #tpu.memory_space<vmem>>, vector<1x256xf32>
    %c4_134 = arith.constant 4 : index
    %c0_135 = arith.constant 0 : index
    %232 = vector.load %arg11[%c4_134, %c0_135] : memref<6x512xf32, #tpu.memory_space<vmem>>, vector<1x256xf32>
    %cst_136 = arith.constant dense<0.000000e+00> : vector<256xf32>
    %233 = vector.multi_reduction <add>, %230, %cst_136 [0] : vector<2x256xf32> to vector<256xf32>
    %234 = vector.shape_cast %233 : vector<256xf32> to vector<1x256xf32>
    %cst_137 = arith.constant 5.000000e-01 : f32
    %235 = vector.broadcast %cst_137 : f32 to vector<1x256xf32>
    %236 = arith.mulf %234, %235 : vector<1x256xf32>
    %237 = vector.broadcast %236 : vector<1x256xf32> to vector<2x256xf32>
    %238 = arith.subf %230, %237 : vector<2x256xf32>
    %239 = arith.mulf %238, %238 : vector<2x256xf32>
    %cst_138 = arith.constant dense<0.000000e+00> : vector<256xf32>
    %240 = vector.multi_reduction <add>, %239, %cst_138 [0] : vector<2x256xf32> to vector<256xf32>
    %241 = vector.shape_cast %240 : vector<256xf32> to vector<1x256xf32>
    %cst_139 = arith.constant 5.000000e-01 : f32
    %242 = vector.broadcast %cst_139 : f32 to vector<1x256xf32>
    %243 = arith.mulf %241, %242 : vector<1x256xf32>
    %cst_140 = arith.constant 9.99999974E-6 : f32
    %244 = vector.broadcast %cst_140 : f32 to vector<1x256xf32>
    %245 = arith.addf %243, %244 : vector<1x256xf32>
    %246 = math.rsqrt %245 : vector<1x256xf32>
    %247 = arith.mulf %231, %246 : vector<1x256xf32>
    %248 = arith.mulf %236, %247 : vector<1x256xf32>
    %249 = arith.subf %232, %248 : vector<1x256xf32>
    %250 = vector.broadcast %247 : vector<1x256xf32> to vector<2x256xf32>
    %251 = arith.mulf %230, %250 : vector<2x256xf32>
    %252 = vector.broadcast %249 : vector<1x256xf32> to vector<2x256xf32>
    %253 = arith.addf %251, %252 : vector<2x256xf32>
    %cst_141 = arith.constant 0.000000e+00 : f32
    %254 = vector.broadcast %cst_141 : f32 to vector<2x256xf32>
    %255 = arith.maximumf %253, %254 : vector<2x256xf32>
    %256 = arith.truncf %255 : vector<2x256xf32> to vector<2x256xbf16>
    %c0_142 = arith.constant 0 : index
    %c0_143 = arith.constant 0 : index
    %257 = vector.load %arg9[%c0_142, %c0_143] : memref<256x256xbf16, #tpu.memory_space<vmem>>, vector<256x256xbf16>
    %cst_144 = arith.constant dense<0.000000e+00> : vector<2x256xf32>
    %258 = tpu.matmul %256, %257, %cst_144 {dimension_numbers = #tpu.dot_dimension_numbers<[1], [0], [0], [1], [0, 0, 1, 1], [], []>} : vector<2x256xbf16>, vector<256x256xbf16>, vector<2x256xf32> -> vector<2x256xf32>
    %c5_145 = arith.constant 5 : index
    %c0_146 = arith.constant 0 : index
    %259 = vector.load %arg11[%c5_145, %c0_146] : memref<6x512xf32, #tpu.memory_space<vmem>>, vector<1x256xf32>
    %260 = vector.broadcast %259 : vector<1x256xf32> to vector<2x256xf32>
    %261 = arith.addf %258, %260 : vector<2x256xf32>
    %c2_147 = arith.constant 2 : index
    %c0_148 = arith.constant 0 : index
    %c0_149 = arith.constant 0 : index
    %262 = vector.load %arg12[%c2_147, %c0_148, %c0_149] : memref<4x2x256xf32, #tpu.memory_space<vmem>>, vector<1x2x256xf32>
    %263 = vector.shape_cast %262 : vector<1x2x256xf32> to vector<2x256xf32>
    %264 = vector.shape_cast %261 : vector<2x256xf32> to vector<1x2x256xf32>
    tpu.vector_store %arg12[%c2_147, %c0_148, %c0_149], %264 {strides = array<i32>} : memref<4x2x256xf32, #tpu.memory_space<vmem>>, vector<1x2x256xf32>,
    %265 = arith.truncf %261 : vector<2x256xf32> to vector<2x256xbf16>
    %c0_150 = arith.constant 0 : index
    %c0_151 = arith.constant 0 : index
    %266 = vector.load %arg6[%c0_150, %c0_151] : memref<256x512xbf16, #tpu.memory_space<vmem>>, vector<256x512xbf16>
    %cst_152 = arith.constant dense<0.000000e+00> : vector<2x512xf32>
    %267 = tpu.matmul %265, %266, %cst_152 {dimension_numbers = #tpu.dot_dimension_numbers<[1], [0], [0], [1], [0, 0, 1, 1], [], []>} : vector<2x256xbf16>, vector<256x512xbf16>, vector<2x512xf32> -> vector<2x512xf32>
    %268 = vector.extract_strided_slice %130 {offsets = [4, 0], sizes = [2, 512], strides = [1, 1]} : vector<6x512xf32> to vector<2x512xf32>
    %269 = arith.addf %267, %268 : vector<2x512xf32>
    %c1_153 = arith.constant 1 : index
    %c0_154 = arith.constant 0 : index
    %270 = vector.load %arg11[%c1_153, %c0_154] : memref<6x512xf32, #tpu.memory_space<vmem>>, vector<1x512xf32>
    %c2_155 = arith.constant 2 : index
    %c0_156 = arith.constant 0 : index
    %271 = vector.load %arg11[%c2_155, %c0_156] : memref<6x512xf32, #tpu.memory_space<vmem>>, vector<1x512xf32>
    %cst_157 = arith.constant dense<0.000000e+00> : vector<512xf32>
    %272 = vector.multi_reduction <add>, %269, %cst_157 [0] : vector<2x512xf32> to vector<512xf32>
    %273 = vector.shape_cast %272 : vector<512xf32> to vector<1x512xf32>
    %cst_158 = arith.constant 5.000000e-01 : f32
    %274 = vector.broadcast %cst_158 : f32 to vector<1x512xf32>
    %275 = arith.mulf %273, %274 : vector<1x512xf32>
    %276 = vector.broadcast %275 : vector<1x512xf32> to vector<2x512xf32>
    %277 = arith.subf %269, %276 : vector<2x512xf32>
    %278 = arith.mulf %277, %277 : vector<2x512xf32>
    %cst_159 = arith.constant dense<0.000000e+00> : vector<512xf32>
    %279 = vector.multi_reduction <add>, %278, %cst_159 [0] : vector<2x512xf32> to vector<512xf32>
    %280 = vector.shape_cast %279 : vector<512xf32> to vector<1x512xf32>
    %cst_160 = arith.constant 5.000000e-01 : f32
    %281 = vector.broadcast %cst_160 : f32 to vector<1x512xf32>
    %282 = arith.mulf %280, %281 : vector<1x512xf32>
    %cst_161 = arith.constant 9.99999974E-6 : f32
    %283 = vector.broadcast %cst_161 : f32 to vector<1x512xf32>
    %284 = arith.addf %282, %283 : vector<1x512xf32>
    %285 = math.rsqrt %284 : vector<1x512xf32>
    %286 = arith.mulf %270, %285 : vector<1x512xf32>
    %287 = arith.mulf %275, %286 : vector<1x512xf32>
    %288 = arith.subf %271, %287 : vector<1x512xf32>
    %289 = vector.broadcast %286 : vector<1x512xf32> to vector<2x512xf32>
    %290 = arith.mulf %269, %289 : vector<2x512xf32>
    %291 = vector.broadcast %288 : vector<1x512xf32> to vector<2x512xf32>
    %292 = arith.addf %290, %291 : vector<2x512xf32>
    %cst_162 = arith.constant 0.000000e+00 : f32
    %293 = vector.broadcast %cst_162 : f32 to vector<2x512xf32>
    %294 = arith.maximumf %292, %293 : vector<2x512xf32>
    %295 = arith.truncf %294 : vector<2x512xf32> to vector<2x512xbf16>
    %c0_163 = arith.constant 0 : index
    %c0_164 = arith.constant 0 : index
    %296 = vector.load %arg8[%c0_163, %c0_164] : memref<512x256xbf16, #tpu.memory_space<vmem>>, vector<512x256xbf16>
    %cst_165 = arith.constant dense<0.000000e+00> : vector<2x256xf32>
    %297 = tpu.matmul %295, %296, %cst_165 {dimension_numbers = #tpu.dot_dimension_numbers<[1], [0], [0], [1], [0, 0, 1, 1], [], []>} : vector<2x512xbf16>, vector<512x256xbf16>, vector<2x256xf32> -> vector<2x256xf32>
    %c3_166 = arith.constant 3 : index
    %c0_167 = arith.constant 0 : index
    %298 = vector.load %arg11[%c3_166, %c0_167] : memref<6x512xf32, #tpu.memory_space<vmem>>, vector<1x256xf32>
    %c4_168 = arith.constant 4 : index
    %c0_169 = arith.constant 0 : index
    %299 = vector.load %arg11[%c4_168, %c0_169] : memref<6x512xf32, #tpu.memory_space<vmem>>, vector<1x256xf32>
    %cst_170 = arith.constant dense<0.000000e+00> : vector<256xf32>
    %300 = vector.multi_reduction <add>, %297, %cst_170 [0] : vector<2x256xf32> to vector<256xf32>
    %301 = vector.shape_cast %300 : vector<256xf32> to vector<1x256xf32>
    %cst_171 = arith.constant 5.000000e-01 : f32
    %302 = vector.broadcast %cst_171 : f32 to vector<1x256xf32>
    %303 = arith.mulf %301, %302 : vector<1x256xf32>
    %304 = vector.broadcast %303 : vector<1x256xf32> to vector<2x256xf32>
    %305 = arith.subf %297, %304 : vector<2x256xf32>
    %306 = arith.mulf %305, %305 : vector<2x256xf32>
    %cst_172 = arith.constant dense<0.000000e+00> : vector<256xf32>
    %307 = vector.multi_reduction <add>, %306, %cst_172 [0] : vector<2x256xf32> to vector<256xf32>
    %308 = vector.shape_cast %307 : vector<256xf32> to vector<1x256xf32>
    %cst_173 = arith.constant 5.000000e-01 : f32
    %309 = vector.broadcast %cst_173 : f32 to vector<1x256xf32>
    %310 = arith.mulf %308, %309 : vector<1x256xf32>
    %cst_174 = arith.constant 9.99999974E-6 : f32
    %311 = vector.broadcast %cst_174 : f32 to vector<1x256xf32>
    %312 = arith.addf %310, %311 : vector<1x256xf32>
    %313 = math.rsqrt %312 : vector<1x256xf32>
    %314 = arith.mulf %298, %313 : vector<1x256xf32>
    %315 = arith.mulf %303, %314 : vector<1x256xf32>
    %316 = arith.subf %299, %315 : vector<1x256xf32>
    %317 = vector.broadcast %314 : vector<1x256xf32> to vector<2x256xf32>
    %318 = arith.mulf %297, %317 : vector<2x256xf32>
    %319 = vector.broadcast %316 : vector<1x256xf32> to vector<2x256xf32>
    %320 = arith.addf %318, %319 : vector<2x256xf32>
    %cst_175 = arith.constant 0.000000e+00 : f32
    %321 = vector.broadcast %cst_175 : f32 to vector<2x256xf32>
    %322 = arith.maximumf %320, %321 : vector<2x256xf32>
    %323 = arith.truncf %322 : vector<2x256xf32> to vector<2x256xbf16>
    %c0_176 = arith.constant 0 : index
    %c0_177 = arith.constant 0 : index
    %324 = vector.load %arg9[%c0_176, %c0_177] : memref<256x256xbf16, #tpu.memory_space<vmem>>, vector<256x256xbf16>
    %cst_178 = arith.constant dense<0.000000e+00> : vector<2x256xf32>
    %325 = tpu.matmul %323, %324, %cst_178 {dimension_numbers = #tpu.dot_dimension_numbers<[1], [0], [0], [1], [0, 0, 1, 1], [], []>} : vector<2x256xbf16>, vector<256x256xbf16>, vector<2x256xf32> -> vector<2x256xf32>
    %c5_179 = arith.constant 5 : index
    %c0_180 = arith.constant 0 : index
    %326 = vector.load %arg11[%c5_179, %c0_180] : memref<6x512xf32, #tpu.memory_space<vmem>>, vector<1x256xf32>
    %327 = vector.broadcast %326 : vector<1x256xf32> to vector<2x256xf32>
    %328 = arith.addf %325, %327 : vector<2x256xf32>
    %c3_181 = arith.constant 3 : index
    %c0_182 = arith.constant 0 : index
    %c0_183 = arith.constant 0 : index
    %329 = vector.load %arg12[%c3_181, %c0_182, %c0_183] : memref<4x2x256xf32, #tpu.memory_space<vmem>>, vector<1x2x256xf32>
    %330 = vector.shape_cast %329 : vector<1x2x256xf32> to vector<2x256xf32>
    %331 = vector.shape_cast %328 : vector<2x256xf32> to vector<1x2x256xf32>
    tpu.vector_store %arg12[%c3_181, %c0_182, %c0_183], %331 {strides = array<i32>} : memref<4x2x256xf32, #tpu.memory_space<vmem>>, vector<1x2x256xf32>,
    return
  }
}

</mosaic_0001>

<llo_original>
// kernel: jepa_forward.1
$region0: #{jepa_forward.1}
  #allocation0 [shape = 'u32[]', space=smem, size = 0x4, offset = 0x4, fixed_abs, tag = 'smem constant byte address 0x4 - core index']
  #allocation1 [shape = 'u32[144,128]{1,0:T(1,128)}', space=vmem, size = 0x12000, scoped, tag = 'internal scratch']
  %s0 = inlined_call_operand.vmem [shape: bf16[9,128], index: 0, kind: input, shape index: {}]
  %s1 = inlined_call_operand.vmem [shape: bf16[32,9], index: 1, kind: input, shape index: {}]
  %s2 = inlined_call_operand.hbm [shape: bf16[9,64,16], index: 2, kind: input, shape index: {}]
  %s3 = inlined_call_operand.hbm [shape: bf16[64,288], index: 3, kind: input, shape index: {}]
  %s4 = inlined_call_operand.vmem [shape: bf16[64,256], index: 4, kind: input, shape index: {}]
  %s5 = inlined_call_operand.vmem [shape: bf16[6,2], index: 5, kind: input, shape index: {}]
  %s6 = inlined_call_operand.vmem [shape: bf16[256,512], index: 6, kind: input, shape index: {}]
  %s7 = inlined_call_operand.hbm [shape: bf16[2,512], index: 7, kind: input, shape index: {}]
  %s8 = inlined_call_operand.hbm [shape: bf16[512,256], index: 8, kind: input, shape index: {}]
  %s9 = inlined_call_operand.hbm [shape: bf16[256,256], index: 9, kind: input, shape index: {}]
  %s10 = inlined_call_operand.vmem [shape: f32[64,4], index: 10, kind: input, shape index: {}]
  %s11 = inlined_call_operand.hbm [shape: f32[6,512], index: 11, kind: input, shape index: {}]
  %s12 = inlined_call_operand.vmem [shape: f32[4,2,256], index: 12, kind: output, shape index: {}]
  %s13 = sld [smem:[#allocation0]]
  $region82: #{jepa_forward.1} parent=0
    _
  %s15 = ssub.s32 1, %s13
  %s16 = scalar_select 0, %s15, %s13
  $region1: #{jepa_forward.1} parent=0
    #allocation2 [shape = 'u8[147456]{0}', space=vmem, size = 0x24000, scoped, tag = 'input window, operand 2, single buffered']
    #allocation3 [shape = 's32[1]{0}', space=sflag, size = 0x4, scoped, tag = 'scoped memory for jepa_forward.1']
    #allocation4 [shape = 'u8[49152]{0}', space=vmem, size = 0xc000, scoped, tag = 'input window, operand 3, single buffered']
    #allocation5 [shape = 's32[1]{0}', space=sflag, size = 0x4, scoped, tag = 'scoped memory for jepa_forward.1']
    #allocation6 [shape = 'u8[2048]{0}', space=vmem, size = 0x800, scoped, tag = 'input window, operand 7, single buffered']
    #allocation7 [shape = 'u8[262144]{0}', space=vmem, size = 0x40000, scoped, tag = 'input window, operand 8, single buffered']
    #allocation8 [shape = 's32[1]{0}', space=sflag, size = 0x4, scoped, tag = 'scoped memory for jepa_forward.1']
    #allocation9 [shape = 'u8[131072]{0}', space=vmem, size = 0x20000, scoped, tag = 'input window, operand 9, single buffered']
    #allocation10 [shape = 'u8[16384]{0}', space=vmem, size = 0x4000, scoped, tag = 'input window, operand 11, single buffered']
    #allocation11 [shape = 's32[1]{0}', space=sflag, size = 0x4, scoped, tag = 'scoped memory for jepa_forward.1']
    %17 = vsyncpa [#allocation3], 0
    %18 = vsyncpa [#allocation5], 0
    %19 = vsyncpa [#allocation8], 0
    %20 = vsyncpa [#allocation11], 0
    // Predicated region
    $region2: #{jepa_forward.1} parent=1 // pred_check
      _
    $region3: #{jepa_forward.1} parent=1 // pred_check_branch
      %22 = sbr.rel (0) target = $region5
    $region4: #{jepa_forward.1} parent=1 // pred_region
      _
    $region5: #{jepa_forward.1} parent=1 // pred_fallthru
      _
    // Predicated region
    $region6: #{jepa_forward.1} parent=1 // pred_check
      _
    $region7: #{jepa_forward.1} parent=1 // pred_check_branch
      %24 = sbr.rel (0) target = $region9
    $region8: #{jepa_forward.1} parent=1 // pred_region
      _
    $region9: #{jepa_forward.1} parent=1 // pred_fallthru
      _
    // Predicated region
    $region10: #{jepa_forward.1} parent=1 // pred_check
      _
    $region11: #{jepa_forward.1} parent=1 // pred_check_branch
      %26 = sbr.rel (0) target = $region13
    $region12: #{jepa_forward.1} parent=1 // pred_region
      %s28 = ssub.s32 4608, 4608
      %29 = vsyncadd [#allocation3], %s28
      %s30 = sshll.u32 [#allocation2], 4
      %s31 = int_to_ptr.vmem [resolvable:$true] %s30
      %36 = dma.hbm_to_vmem [thread:$0]  %s2, 4608, %s31, [#allocation3], 64, 64, 4
    $region13: #{jepa_forward.1} parent=1 // pred_fallthru
      _
    // Predicated region
    $region14: #{jepa_forward.1} parent=1 // pred_check
      _
    $region15: #{jepa_forward.1} parent=1 // pred_check_branch
      %38 = sbr.rel (0) target = $region17
    $region16: #{jepa_forward.1} parent=1 // pred_region
      %s40 = ssub.s32 1536, 1536
      %41 = vsyncadd [#allocation5], %s40
      %s42 = sshll.u32 [#allocation4], 4
      %s43 = int_to_ptr.vmem [resolvable:$true] %s42
      %48 = dma.hbm_to_vmem [thread:$0]  %s3, 1536, %s43, [#allocation5], 192, 192, 12
    $region17: #{jepa_forward.1} parent=1 // pred_fallthru
      _
    // Predicated region
    $region18: #{jepa_forward.1} parent=1 // pred_check
      _
    $region19: #{jepa_forward.1} parent=1 // pred_check_branch
      %50 = sbr.rel (0) target = $region21
    $region20: #{jepa_forward.1} parent=1 // pred_region
      _
    $region21: #{jepa_forward.1} parent=1 // pred_fallthru
      _
    // Predicated region
    $region22: #{jepa_forward.1} parent=1 // pred_check
      _
    $region23: #{jepa_forward.1} parent=1 // pred_check_branch
      %52 = sbr.rel (0) target = $region25
    $region24: #{jepa_forward.1} parent=1 // pred_region
      _
    $region25: #{jepa_forward.1} parent=1 // pred_fallthru
      _
    // Predicated region
    $region26: #{jepa_forward.1} parent=1 // pred_check
      _
    $region27: #{jepa_forward.1} parent=1 // pred_check_branch
      %54 = sbr.rel (0) target = $region29
    $region28: #{jepa_forward.1} parent=1 // pred_region
      _
    $region29: #{jepa_forward.1} parent=1 // pred_fallthru
      _
    // Predicated region
    $region30: #{jepa_forward.1} parent=1 // pred_check
      _
    $region31: #{jepa_forward.1} parent=1 // pred_check_branch
      %56 = sbr.rel (0) target = $region33
    $region32: #{jepa_forward.1} parent=1 // pred_region
      %s58 = ssub.s32 64, 64
      %59 = vsyncadd [#allocation5], %s58
      %s61 = sshll.u32 [#allocation6], 4
      %s62 = int_to_ptr.vmem [resolvable:$true] %s61
      %64 = dma.hbm_to_vmem [thread:$0]  %s7, 64, %s62, [#allocation5]
    $region33: #{jepa_forward.1} parent=1 // pred_fallthru
      _
    // Predicated region
    $region34: #{jepa_forward.1} parent=1 // pred_check
      _
    $region35: #{jepa_forward.1} parent=1 // pred_check_branch
      %66 = sbr.rel (0) target = $region37
    $region36: #{jepa_forward.1} parent=1 // pred_region
      %s68 = ssub.s32 8192, 8192
      %69 = vsyncadd [#allocation8], %s68
      %s70 = sshll.u32 [#allocation7], 4
      %s71 = int_to_ptr.vmem [resolvable:$true] %s70
      %76 = dma.hbm_to_vmem [thread:$0]  %s8, 8192, %s71, [#allocation8], 128, 128, 8
    $region37: #{jepa_forward.1} parent=1 // pred_fallthru
      _
    // Predicated region
    $region38: #{jepa_forward.1} parent=1 // pred_check
      _
    $region39: #{jepa_forward.1} parent=1 // pred_check_branch
      %78 = sbr.rel (0) target = $region41
    $region40: #{jepa_forward.1} parent=1 // pred_region
      %s80 = ssub.s32 4096, 4096
      %81 = vsyncadd [#allocation8], %s80
      %s82 = sshll.u32 [#allocation9], 4
      %s83 = int_to_ptr.vmem [resolvable:$true] %s82
      %88 = dma.hbm_to_vmem [thread:$0]  %s9, 4096, %s83, [#allocation8], 128, 128, 8
    $region41: #{jepa_forward.1} parent=1 // pred_fallthru
      _
    // Predicated region
    $region42: #{jepa_forward.1} parent=1 // pred_check
      _
    $region43: #{jepa_forward.1} parent=1 // pred_check_branch
      %90 = sbr.rel (0) target = $region45
    $region44: #{jepa_forward.1} parent=1 // pred_region
      _
    $region45: #{jepa_forward.1} parent=1 // pred_fallthru
      _
    // Predicated region
    $region46: #{jepa_forward.1} parent=1 // pred_check
      _
    $region47: #{jepa_forward.1} parent=1 // pred_check_branch
      %92 = sbr.rel (0) target = $region49
    $region48: #{jepa_forward.1} parent=1 // pred_region
      %s94 = ssub.s32 512, 512
      %95 = vsyncadd [#allocation11], %s94
      %s97 = sshll.u32 [#allocation10], 4
      %s98 = int_to_ptr.vmem [resolvable:$true] %s97
      %100 = dma.hbm_to_vmem [thread:$0]  %s11, 512, %s98, [#allocation11]
    $region49: #{jepa_forward.1} parent=1 // pred_fallthru
      _
    // Predicated region
    $region50: #{jepa_forward.1} parent=1 // pred_check
      _
    $region51: #{jepa_forward.1} parent=1 // pred_check_branch
      %102 = sbr.rel (0) target = $region53
    $region52: #{jepa_forward.1} parent=1 // pred_region
      %103 = dma.done [#allocation3], 4608
    $region53: #{jepa_forward.1} parent=1 // pred_fallthru
      _
    // Predicated region
    $region54: #{jepa_forward.1} parent=1 // pred_check
      _
    $region55: #{jepa_forward.1} parent=1 // pred_check_branch
      %105 = sbr.rel (0) target = $region57
    $region56: #{jepa_forward.1} parent=1 // pred_region
      %106 = dma.done [#allocation5], 1536
    $region57: #{jepa_forward.1} parent=1 // pred_fallthru
      _
    // Predicated region
    $region58: #{jepa_forward.1} parent=1 // pred_check
      _
    $region59: #{jepa_forward.1} parent=1 // pred_check_branch
      %108 = sbr.rel (0) target = $region61
    $region60: #{jepa_forward.1} parent=1 // pred_region
      %109 = dma.done [#allocation5], 64
    $region61: #{jepa_forward.1} parent=1 // pred_fallthru
      _
    // Predicated region
    $region62: #{jepa_forward.1} parent=1 // pred_check
      _
    $region63: #{jepa_forward.1} parent=1 // pred_check_branch
      %111 = sbr.rel (0) target = $region65
    $region64: #{jepa_forward.1} parent=1 // pred_region
      %112 = dma.done [#allocation8], 8192
    $region65: #{jepa_forward.1} parent=1 // pred_fallthru
      _
    // Predicated region
    $region66: #{jepa_forward.1} parent=1 // pred_check
      _
    $region67: #{jepa_forward.1} parent=1 // pred_check_branch
      %114 = sbr.rel (0) target = $region69
    $region68: #{jepa_forward.1} parent=1 // pred_region
      %115 = dma.done [#allocation8], 4096
    $region69: #{jepa_forward.1} parent=1 // pred_fallthru
      _
    // Predicated region
    $region70: #{jepa_forward.1} parent=1 // pred_check
      _
    $region71: #{jepa_forward.1} parent=1 // pred_check_branch
      %117 = sbr.rel (0) target = $region73
    $region72: #{jepa_forward.1} parent=1 // pred_region
      %118 = dma.done [#allocation11], 512
    $region73: #{jepa_forward.1} parent=1 // pred_fallthru
      _
    %v120 = vld [vmem:[%s1] sm:$0xf]
    %v121 = vld [vmem:[%s1 + $0x4] sm:$0xf]
    %v122 = vld [vmem:[%s1 + $0x8] sm:$0xf]
    %v123 = vld [vmem:[%s1 + $0xc] sm:$0xf]
    %v124 = vld [vmem:[%s0] sm:$0xf]
    %v125 = vld [vmem:[%s0 + $0x4] sm:$0x1]
    %v130 = vunpack.c.l.b16 %v120
    %v131 = vunpack.c.l.b16 %v121
    %v132 = vunpack.c.l.b16 %v122
    %v133 = vunpack.c.l.b16 %v123
    %v134 = vpack.c.b16 %v131, %v130
    %v135 = vpack.c.b16 %v133, %v132
    %v138 = vunpack.c.l.b16 %v124
    %v139 = vunpack.c.l.b16 %v125
    %v140 = vpack.c.b16 %v139, %v138
    %vm141 = vcmask 72704
    %v143 = vsel %vm141, %v134, 0
    %v146 = vsel %vm141, %v135, 0
    %vm148 = vcmask 1043456
    %vm149 = vcmask 1044480
    %v150 = vsel %vm148, 4294967295, 65535
    %v151 = vsel %vm149, %v150, 0
    %v153 = vand.u32 %v140, %v151
    %155 = vmatprep.subr.bf16.mxu0 0
    %156 = vmatpush1.bf16.msra.mxu0 %v153
    %157 = vmatprep.subr.bf16.mxu0 0
    %158 = vmatpush1.bf16.msra.mxu0 0
    %159 = vmatprep.subr.bf16.mxu0 0
    %160 = vmatpush1.bf16.msra.mxu0 0
    %161 = vmatprep.subr.bf16.mxu0 0
    %162 = vmatpush1.bf16.msra.mxu0 0
    %163 = vmatprep.subr.bf16.mxu0 0
    %164 = vmatpush1.bf16.msra.mxu0 0
    %165 = vmatprep.subr.bf16.mxu0 0
    %166 = vmatpush1.bf16.msra.mxu0 0
    %167 = vmatprep.subr.bf16.mxu0 0
    %168 = vmatpush1.bf16.msra.mxu0 0
    %169 = vmatprep.subr.bf16.mxu0 0
    %170 = vmatpush1.bf16.msra.mxu0 0
    %171 = vmatprep.subr.bf16.mxu0 0
    %172 = vmatpush1.bf16.msra.mxu0 0
    %173 = vmatprep.subr.bf16.mxu0 0
    %174 = vmatpush1.bf16.msra.mxu0 0
    %175 = vmatprep.subr.bf16.mxu0 0
    %176 = vmatpush1.bf16.msra.mxu0 0
    %177 = vmatprep.subr.bf16.mxu0 0
    %178 = vmatpush1.bf16.msra.mxu0 0
    %179 = vmatprep.subr.bf16.mxu0 0
    %180 = vmatpush1.bf16.msra.mxu0 0
    %181 = vmatprep.subr.bf16.mxu0 0
    %182 = vmatpush1.bf16.msra.mxu0 0
    %183 = vmatprep.subr.bf16.mxu0 0
    %184 = vmatpush1.bf16.msra.mxu0 0
    %185 = vmatprep.subr.bf16.mxu0 0
    %186 = vmatpush1.bf16.msra.mxu0 0
    %187 = vmatprep.mubr.bf16.mxu0 0
    %188 = vmatmul.mubr.bf16.gmra.mrb[0].mxu0 %v143
    %v189 = vpop.f32.mrb[0].mxu0
    %v190 = vadd.f32 0.0, %v189
    %v191 = vpop.f32.mrb[0].mxu0
    %v192 = vpop.f32.mrb[0].mxu0
    %v193 = vadd.f32 0.0, %v192
    %v194 = vpop.f32.mrb[0].mxu0
    %195 = vmatprep.mubr.bf16.mxu0 0
    %196 = vmatmul.mubr.bf16.gmra.mrb[0].mxu0 %v146
    %v197 = vpop.f32.mrb[0].mxu0
    %v198 = vadd.f32 0.0, %v197
    %v199 = vpop.f32.mrb[0].mxu0
    %v200 = vpop.f32.mrb[0].mxu0
    %v201 = vadd.f32 0.0, %v200
    %v202 = vpop.f32.mrb[0].mxu0
    %203 = vdwg.mxu0
    %v204 = vld [vmem:[%s10] sm:$0xff]
    %v205 = vld [vmem:[%s10 + $0x8] sm:$0xff]
    %v206 = vld [vmem:[%s10 + $0x10] sm:$0xff]
    %v207 = vld [vmem:[%s10 + $0x18] sm:$0xff]
    %208 = vadd.xlane.f32.xlu0 %v190
    %v209 = vpop.xlane.xlu0 %208
    %210 = vadd.xlane.f32.xlu0 %v193
    %v211 = vpop.xlane.xlu0 %210
    %212 = vadd.xlane.f32.xlu0 %v198
    %v213 = vpop.xlane.xlu0 %212
    %214 = vadd.xlane.f32.xlu0 %v201
    %v215 = vpop.xlane.xlu0 %214
    %v216 = vmul.f32 %v209, 0.0078125
    %v217 = vmul.f32 %v211, 0.0078125
    %v218 = vmul.f32 %v213, 0.0078125
    %v219 = vmul.f32 %v215, 0.0078125
    %v220 = vsub.f32 %v190, %v216
    %v221 = vsub.f32 %v193, %v217
    %v222 = vsub.f32 %v198, %v218
    %v223 = vsub.f32 %v201, %v219
    %v224 = vmul.f32 %v220, %v220
    %v225 = vmul.f32 %v221, %v221
    %v226 = vmul.f32 %v222, %v222
    %v227 = vmul.f32 %v223, %v223
    %228 = vadd.xlane.f32.xlu0 %v224
    %v229 = vpop.xlane.xlu0 %228
    %230 = vadd.xlane.f32.xlu0 %v225
    %v231 = vpop.xlane.xlu0 %230
    %232 = vadd.xlane.f32.xlu0 %v226
    %v233 = vpop.xlane.xlu0 %232
    %234 = vadd.xlane.f32.xlu0 %v227
    %v235 = vpop.xlane.xlu0 %234
    %v236 = vmul.f32 %v229, 0.0078125
    %v237 = vmul.f32 %v231, 0.0078125
    %v238 = vmul.f32 %v233, 0.0078125
    %v239 = vmul.f32 %v235, 0.0078125
    %v240 = vadd.f32 %v236, 1e-05
    %v241 = vadd.f32 %v237, 1e-05
    %v242 = vadd.f32 %v238, 1e-05
    %v243 = vadd.f32 %v239, 1e-05
    %v244 = vrsqrt.pop %v240
    %v245 = vrsqrt.pop %v241
    %v246 = vrsqrt.pop %v242
    %v247 = vrsqrt.pop %v243
    %v248 = vmul.f32 %v204, %v244
    %v249 = vmul.f32 %v205, %v245
    %v250 = vmul.f32 %v206, %v246
    %v251 = vmul.f32 %v207, %v247
    %v252 = vmul.f32 %v216, %v248
    %v253 = vmul.f32 %v217, %v249
    %v254 = vmul.f32 %v218, %v250
    %v255 = vmul.f32 %v219, %v251
    %260 = vrot.lane.b32.xlu0 %v252, 1
    %v261 = vpop.permute.xlu0 %260
    %262 = vrot.lane.b32.xlu0 %v253, 1
    %v263 = vpop.permute.xlu0 %262
    %264 = vrot.lane.b32.xlu0 %v254, 1
    %v265 = vpop.permute.xlu0 %264
    %266 = vrot.lane.b32.xlu0 %v255, 1
    %v267 = vpop.permute.xlu0 %266
    %v272 = vsub.f32 %v204, %v261
    %v273 = vsub.f32 %v205, %v263
    %v274 = vsub.f32 %v206, %v265
    %v275 = vsub.f32 %v207, %v267
    %277 = vset.pattern.permute.xlu0 0
    %278 = vperm.xlu0 %277, %v248
    %v279 = vpop.permute.xlu0 %278
    %282 = vset.pattern.permute.xlu0 0
    %283 = vperm.xlu0 %282, %v249
    %v284 = vpop.permute.xlu0 %283
    %287 = vset.pattern.permute.xlu0 0
    %288 = vperm.xlu0 %287, %v250
    %v289 = vpop.permute.xlu0 %288
    %292 = vset.pattern.permute.xlu0 0
    %293 = vperm.xlu0 %292, %v251
    %v294 = vpop.permute.xlu0 %293
    %v296 = vmul.f32 %v190, %v279
    %v297 = vmul.f32 %v193, %v284
    %v298 = vmul.f32 %v198, %v289
    %v299 = vmul.f32 %v201, %v294
    %301 = vset.pattern.permute.xlu0 1
    %302 = vperm.xlu0 %301, %v272
    %v303 = vpop.permute.xlu0 %302
    %306 = vset.pattern.permute.xlu0 1
    %307 = vperm.xlu0 %306, %v273
    %v308 = vpop.permute.xlu0 %307
    %311 = vset.pattern.permute.xlu0 1
    %312 = vperm.xlu0 %311, %v274
    %v313 = vpop.permute.xlu0 %312
    %316 = vset.pattern.permute.xlu0 1
    %317 = vperm.xlu0 %316, %v275
    %v318 = vpop.permute.xlu0 %317
    %v320 = vadd.f32 %v296, %v303
    %v321 = vadd.f32 %v297, %v308
    %v322 = vadd.f32 %v298, %v313
    %v323 = vadd.f32 %v299, %v318
    %v324 = vmax.f32 %v320, 0.0
    %v325 = vmax.f32 %v321, 0.0
    %v326 = vmax.f32 %v322, 0.0
    %v327 = vmax.f32 %v323, 0.0
    %v328 = vld [vmem:[#allocation2] sm:$0xf]
    %v329 = vld [vmem:[#allocation2 + $0x4] sm:$0xf]
    %v330 = vld [vmem:[#allocation2 + $0x8] sm:$0xf]
    %v331 = vld [vmem:[#allocation2 + $0xc] sm:$0xf]
    %v332 = vld [vmem:[#allocation2 + $0x10] sm:$0xf]
    %v333 = vld [vmem:[#allocation2 + $0x14] sm:$0xf]
    %v334 = vld [vmem:[#allocation2 + $0x18] sm:$0xf]
    %v335 = vld [vmem:[#allocation2 + $0x1c] sm:$0xf]
    %s336 = scalar_lea.vmem [#allocation2], 32
    %v337 = vld [vmem:[%s336] sm:$0xf]
    %v338 = vld [vmem:[%s336 + $0x4] sm:$0xf]
    %v339 = vld [vmem:[%s336 + $0x8] sm:$0xf]
    %v340 = vld [vmem:[%s336 + $0xc] sm:$0xf]
    %v341 = vld [vmem:[%s336 + $0x10] sm:$0xf]
    %v342 = vld [vmem:[%s336 + $0x14] sm:$0xf]
    %v343 = vld [vmem:[%s336 + $0x18] sm:$0xf]
    %v344 = vld [vmem:[%s336 + $0x1c] sm:$0xf]
    %s345 = scalar_lea.vmem [#allocation2], 64
    %v346 = vld [vmem:[%s345] sm:$0xf]
    %v347 = vld [vmem:[%s345 + $0x4] sm:$0xf]
    %v348 = vld [vmem:[%s345 + $0x8] sm:$0xf]
    %v349 = vld [vmem:[%s345 + $0xc] sm:$0xf]
    %v350 = vld [vmem:[%s345 + $0x10] sm:$0xf]
    %v351 = vld [vmem:[%s345 + $0x14] sm:$0xf]
    %v352 = vld [vmem:[%s345 + $0x18] sm:$0xf]
    %v353 = vld [vmem:[%s345 + $0x1c] sm:$0xf]
    %s354 = scalar_lea.vmem [#allocation2], 96
    %v355 = vld [vmem:[%s354] sm:$0xf]
    %v356 = vld [vmem:[%s354 + $0x4] sm:$0xf]
    %v357 = vld [vmem:[%s354 + $0x8] sm:$0xf]
    %v358 = vld [vmem:[%s354 + $0xc] sm:$0xf]
    %v359 = vld [vmem:[%s354 + $0x10] sm:$0xf]
    %v360 = vld [vmem:[%s354 + $0x14] sm:$0xf]
    %v361 = vld [vmem:[%s354 + $0x18] sm:$0xf]
    %v362 = vld [vmem:[%s354 + $0x1c] sm:$0xf]
    %s363 = scalar_lea.vmem [#allocation2], 128
    %v364 = vld [vmem:[%s363] sm:$0xf]
    %v365 = vld [vmem:[%s363 + $0x4] sm:$0xf]
    %v366 = vld [vmem:[%s363 + $0x8] sm:$0xf]
    %v367 = vld [vmem:[%s363 + $0xc] sm:$0xf]
    %v368 = vld [vmem:[%s363 + $0x10] sm:$0xf]
    %v369 = vld [vmem:[%s363 + $0x14] sm:$0xf]
    %v370 = vld [vmem:[%s363 + $0x18] sm:$0xf]
    %v371 = vld [vmem:[%s363 + $0x1c] sm:$0xf]
    %s372 = scalar_lea.vmem [#allocation2], 160
    %v373 = vld [vmem:[%s372] sm:$0xf]
    %v374 = vld [vmem:[%s372 + $0x4] sm:$0xf]
    %v375 = vld [vmem:[%s372 + $0x8] sm:$0xf]
    %v376 = vld [vmem:[%s372 + $0xc] sm:$0xf]
    %v377 = vld [vmem:[%s372 + $0x10] sm:$0xf]
    %v378 = vld [vmem:[%s372 + $0x14] sm:$0xf]
    %v379 = vld [vmem:[%s372 + $0x18] sm:$0xf]
    %v380 = vld [vmem:[%s372 + $0x1c] sm:$0xf]
    %s381 = scalar_lea.vmem [#allocation2], 192
    %v382 = vld [vmem:[%s381] sm:$0xf]
    %v383 = vld [vmem:[%s381 + $0x4] sm:$0xf]
    %v384 = vld [vmem:[%s381 + $0x8] sm:$0xf]
    %v385 = vld [vmem:[%s381 + $0xc] sm:$0xf]
    %v386 = vld [vmem:[%s381 + $0x10] sm:$0xf]
    %v387 = vld [vmem:[%s381 + $0x14] sm:$0xf]
    %v388 = vld [vmem:[%s381 + $0x18] sm:$0xf]
    %v389 = vld [vmem:[%s381 + $0x1c] sm:$0xf]
    %s390 = scalar_lea.vmem [#allocation2], 224
    %v391 = vld [vmem:[%s390] sm:$0xf]
    %v392 = vld [vmem:[%s390 + $0x4] sm:$0xf]
    %v393 = vld [vmem:[%s390 + $0x8] sm:$0xf]
    %v394 = vld [vmem:[%s390 + $0xc] sm:$0xf]
    %v395 = vld [vmem:[%s390 + $0x10] sm:$0xf]
    %v396 = vld [vmem:[%s390 + $0x14] sm:$0xf]
    %v397 = vld [vmem:[%s390 + $0x18] sm:$0xf]
    %v398 = vld [vmem:[%s390 + $0x1c] sm:$0xf]
    %s399 = scalar_lea.vmem [#allocation2], 256
    %v400 = vld [vmem:[%s399] sm:$0xf]
    %v401 = vld [vmem:[%s399 + $0x4] sm:$0xf]
    %v402 = vld [vmem:[%s399 + $0x8] sm:$0xf]
    %v403 = vld [vmem:[%s399 + $0xc] sm:$0xf]
    %v404 = vld [vmem:[%s399 + $0x10] sm:$0xf]
    %v405 = vld [vmem:[%s399 + $0x14] sm:$0xf]
    %v406 = vld [vmem:[%s399 + $0x18] sm:$0xf]
    %v407 = vld [vmem:[%s399 + $0x1c] sm:$0xf]
    %v408 = vpack.c.bf16 %v325, %v324
    %v409 = vpack.c.bf16 %v327, %v326
    %v418 = vunpack.c.l.b16 %v328
    %v419 = vunpack.c.l.b16 %v329
    %v420 = vunpack.c.l.b16 %v330
    %v421 = vunpack.c.l.b16 %v331
    %v422 = vunpack.c.l.b16 %v332
    %v423 = vunpack.c.l.b16 %v333
    %v424 = vunpack.c.l.b16 %v334
    %v425 = vunpack.c.l.b16 %v335
    %v426 = vpack.c.b16 %v419, %v418
    %v427 = vpack.c.b16 %v421, %v420
    %v428 = vpack.c.b16 %v423, %v422
    %v429 = vpack.c.b16 %v425, %v424
    %vm434 = vcmask 523264
    %v436 = vsel %vm434, %v408, 0
    %v439 = vsel %vm434, %v409, 0
    %441 = vmatprep.subr.bf16.mxu0 0
    %442 = vmatpush1.bf16.msra.mxu0 %v426
    %443 = vmatprep.subr.bf16.mxu0 0
    %444 = vmatpush1.bf16.msra.mxu0 %v427
    %445 = vmatprep.subr.bf16.mxu0 0
    %446 = vmatpush1.bf16.msra.mxu0 %v428
    %447 = vmatprep.subr.bf16.mxu0 0
    %448 = vmatpush1.bf16.msra.mxu0 %v429
    %449 = vmatprep.subr.bf16.mxu0 0
    %450 = vmatpush1.bf16.msra.mxu0 0
    %451 = vmatprep.subr.bf16.mxu0 0
    %452 = vmatpush1.bf16.msra.mxu0 0
    %453 = vmatprep.subr.bf16.mxu0 0
    %454 = vmatpush1.bf16.msra.mxu0 0
    %455 = vmatprep.subr.bf16.mxu0 0
    %456 = vmatpush1.bf16.msra.mxu0 0
    %457 = vmatprep.subr.bf16.mxu0 0
    %458 = vmatpush1.bf16.msra.mxu0 0
    %459 = vmatprep.subr.bf16.mxu0 0
    %460 = vmatpush1.bf16.msra.mxu0 0
    %461 = vmatprep.subr.bf16.mxu0 0
    %462 = vmatpush1.bf16.msra.mxu0 0
    %463 = vmatprep.subr.bf16.mxu0 0
    %464 = vmatpush1.bf16.msra.mxu0 0
    %465 = vmatprep.subr.bf16.mxu0 0
    %466 = vmatpush1.bf16.msra.mxu0 0
    %467 = vmatprep.subr.bf16.mxu0 0
    %468 = vmatpush1.bf16.msra.mxu0 0
    %469 = vmatprep.subr.bf16.mxu0 0
    %470 = vmatpush1.bf16.msra.mxu0 0
    %471 = vmatprep.subr.bf16.mxu0 0
    %472 = vmatpush1.bf16.msra.mxu0 0
    %473 = vmatprep.mubr.bf16.mxu0 0
    %474 = vmatmul.mubr.bf16.gmra.mrb[0].mxu0 %v436
    %v475 = vpop.f32.mrb[0].mxu0
    %v476 = vadd.f32 0.0, %v475
    %v477 = vpop.f32.mrb[0].mxu0
    %v478 = vpop.f32.mrb[0].mxu0
    %v479 = vadd.f32 0.0, %v478
    %v480 = vpop.f32.mrb[0].mxu0
    %481 = vmatprep.mubr.bf16.mxu0 0
    %482 = vmatmul.mubr.bf16.gmra.mrb[0].mxu0 %v439
    %v483 = vpop.f32.mrb[0].mxu0
    %v484 = vadd.f32 0.0, %v483
    %v485 = vpop.f32.mrb[0].mxu0
    %v486 = vpop.f32.mrb[0].mxu0
    %v487 = vadd.f32 0.0, %v486
    %v488 = vpop.f32.mrb[0].mxu0
    %489 = vdwg.mxu0
    %v498 = vunpack.c.l.b16 %v337
    %v499 = vunpack.c.l.b16 %v338
    %v500 = vunpack.c.l.b16 %v339
    %v501 = vunpack.c.l.b16 %v340
    %v502 = vunpack.c.l.b16 %v341
    %v503 = vunpack.c.l.b16 %v342
    %v504 = vunpack.c.l.b16 %v343
    %v505 = vunpack.c.l.b16 %v344
    %v506 = vpack.c.b16 %v499, %v498
    %v507 = vpack.c.b16 %v501, %v500
    %v508 = vpack.c.b16 %v503, %v502
    %v509 = vpack.c.b16 %v505, %v504
    %514 = vmatprep.subr.bf16.mxu0 0
    %515 = vmatpush1.bf16.msra.mxu0 %v506
    %516 = vmatprep.subr.bf16.mxu0 0
    %517 = vmatpush1.bf16.msra.mxu0 %v507
    %518 = vmatprep.subr.bf16.mxu0 0
    %519 = vmatpush1.bf16.msra.mxu0 %v508
    %520 = vmatprep.subr.bf16.mxu0 0
    %521 = vmatpush1.bf16.msra.mxu0 %v509
    %522 = vmatprep.subr.bf16.mxu0 0
    %523 = vmatpush1.bf16.msra.mxu0 0
    %524 = vmatprep.subr.bf16.mxu0 0
    %525 = vmatpush1.bf16.msra.mxu0 0
    %526 = vmatprep.subr.bf16.mxu0 0
    %527 = vmatpush1.bf16.msra.mxu0 0
    %528 = vmatprep.subr.bf16.mxu0 0
    %529 = vmatpush1.bf16.msra.mxu0 0
    %530 = vmatprep.subr.bf16.mxu0 0
    %531 = vmatpush1.bf16.msra.mxu0 0
    %532 = vmatprep.subr.bf16.mxu0 0
    %533 = vmatpush1.bf16.msra.mxu0 0
    %534 = vmatprep.subr.bf16.mxu0 0
    %535 = vmatpush1.bf16.msra.mxu0 0
    %536 = vmatprep.subr.bf16.mxu0 0
    %537 = vmatpush1.bf16.msra.mxu0 0
    %538 = vmatprep.subr.bf16.mxu0 0
    %539 = vmatpush1.bf16.msra.mxu0 0
    %540 = vmatprep.subr.bf16.mxu0 0
    %541 = vmatpush1.bf16.msra.mxu0 0
    %542 = vmatprep.subr.bf16.mxu0 0
    %543 = vmatpush1.bf16.msra.mxu0 0
    %544 = vmatprep.subr.bf16.mxu0 0
    %545 = vmatpush1.bf16.msra.mxu0 0
    %546 = vmatprep.mubr.bf16.mxu0 0
    %547 = vmatmul.mubr.bf16.gmra.mrb[0].mxu0 %v436
    %v548 = vpop.f32.mrb[0].mxu0
    %v549 = vadd.f32 0.0, %v548
    %v550 = vpop.f32.mrb[0].mxu0
    %v551 = vpop.f32.mrb[0].mxu0
    %v552 = vadd.f32 0.0, %v551
    %v553 = vpop.f32.mrb[0].mxu0
    %554 = vmatprep.mubr.bf16.mxu0 0
    %555 = vmatmul.mubr.bf16.gmra.mrb[0].mxu0 %v439
    %v556 = vpop.f32.mrb[0].mxu0
    %v557 = vadd.f32 0.0, %v556
    %v558 = vpop.f32.mrb[0].mxu0
    %v559 = vpop.f32.mrb[0].mxu0
    %v560 = vadd.f32 0.0, %v559
    %v561 = vpop.f32.mrb[0].mxu0
    %562 = vdwg.mxu0
    %v571 = vunpack.c.l.b16 %v346
    %v572 = vunpack.c.l.b16 %v347
    %v573 = vunpack.c.l.b16 %v348
    %v574 = vunpack.c.l.b16 %v349
    %v575 = vunpack.c.l.b16 %v350
    %v576 = vunpack.c.l.b16 %v351
    %v577 = vunpack.c.l.b16 %v352
    %v578 = vunpack.c.l.b16 %v353
    %v579 = vpack.c.b16 %v572, %v571
    %v580 = vpack.c.b16 %v574, %v573
    %v581 = vpack.c.b16 %v576, %v575
    %v582 = vpack.c.b16 %v578, %v577
    %587 = vmatprep.subr.bf16.mxu0 0
    %588 = vmatpush1.bf16.msra.mxu0 %v579
    %589 = vmatprep.subr.bf16.mxu0 0
    %590 = vmatpush1.bf16.msra.mxu0 %v580
    %591 = vmatprep.subr.bf16.mxu0 0
    %592 = vmatpush1.bf16.msra.mxu0 %v581
    %593 = vmatprep.subr.bf16.mxu0 0
    %594 = vmatpush1.bf16.msra.mxu0 %v582
    %595 = vmatprep.subr.bf16.mxu0 0
    %596 = vmatpush1.bf16.msra.mxu0 0
    %597 = vmatprep.subr.bf16.mxu0 0
    %598 = vmatpush1.bf16.msra.mxu0 0
    %599 = vmatprep.subr.bf16.mxu0 0
    %600 = vmatpush1.bf16.msra.mxu0 0
    %601 = vmatprep.subr.bf16.mxu0 0
    %602 = vmatpush1.bf16.msra.mxu0 0
    %603 = vmatprep.subr.bf16.mxu0 0
    %604 = vmatpush1.bf16.msra.mxu0 0
    %605 = vmatprep.subr.bf16.mxu0 0
    %606 = vmatpush1.bf16.msra.mxu0 0
    %607 = vmatprep.subr.bf16.mxu0 0
    %608 = vmatpush1.bf16.msra.mxu0 0
    %609 = vmatprep.subr.bf16.mxu0 0
    %610 = vmatpush1.bf16.msra.mxu0 0
    %611 = vmatprep.subr.bf16.mxu0 0
    %612 = vmatpush1.bf16.msra.mxu0 0
    %613 = vmatprep.subr.bf16.mxu0 0
    %614 = vmatpush1.bf16.msra.mxu0 0
    %615 = vmatprep.subr.bf16.mxu0 0
    %616 = vmatpush1.bf16.msra.mxu0 0
    %617 = vmatprep.subr.bf16.mxu0 0
    %618 = vmatpush1.bf16.msra.mxu0 0
    %619 = vmatprep.mubr.bf16.mxu0 0
    %620 = vmatmul.mubr.bf16.gmra.mrb[0].mxu0 %v436
    %v621 = vpop.f32.mrb[0].mxu0
    %v622 = vadd.f32 0.0, %v621
    %v623 = vpop.f32.mrb[0].mxu0
    %v624 = vpop.f32.mrb[0].mxu0
    %v625 = vadd.f32 0.0, %v624
    %v626 = vpop.f32.mrb[0].mxu0
    %627 = vmatprep.mubr.bf16.mxu0 0
    %628 = vmatmul.mubr.bf16.gmra.mrb[0].mxu0 %v439
    %v629 = vpop.f32.mrb[0].mxu0
    %v630 = vadd.f32 0.0, %v629
    %v631 = vpop.f32.mrb[0].mxu0
    %v632 = vpop.f32.mrb[0].mxu0
    %v633 = vadd.f32 0.0, %v632
    %v634 = vpop.f32.mrb[0].mxu0
    %635 = vdwg.mxu0
    %v644 = vunpack.c.l.b16 %v355
    %v645 = vunpack.c.l.b16 %v356
    %v646 = vunpack.c.l.b16 %v357
    %v647 = vunpack.c.l.b16 %v358
    %v648 = vunpack.c.l.b16 %v359
    %v649 = vunpack.c.l.b16 %v360
    %v650 = vunpack.c.l.b16 %v361
    %v651 = vunpack.c.l.b16 %v362
    %v652 = vpack.c.b16 %v645, %v644
    %v653 = vpack.c.b16 %v647, %v646
    %v654 = vpack.c.b16 %v649, %v648
    %v655 = vpack.c.b16 %v651, %v650
    %660 = vmatprep.subr.bf16.mxu0 0
    %661 = vmatpush1.bf16.msra.mxu0 %v652
    %662 = vmatprep.subr.bf16.mxu0 0
    %663 = vmatpush1.bf16.msra.mxu0 %v653
    %664 = vmatprep.subr.bf16.mxu0 0
    %665 = vmatpush1.bf16.msra.mxu0 %v654
    %666 = vmatprep.subr.bf16.mxu0 0
    %667 = vmatpush1.bf16.msra.mxu0 %v655
    %668 = vmatprep.subr.bf16.mxu0 0
    %669 = vmatpush1.bf16.msra.mxu0 0
    %670 = vmatprep.subr.bf16.mxu0 0
    %671 = vmatpush1.bf16.msra.mxu0 0
    %672 = vmatprep.subr.bf16.mxu0 0
    %673 = vmatpush1.bf16.msra.mxu0 0
    %674 = vmatprep.subr.bf16.mxu0 0
    %675 = vmatpush1.bf16.msra.mxu0 0
    %676 = vmatprep.subr.bf16.mxu0 0
    %677 = vmatpush1.bf16.msra.mxu0 0
    %678 = vmatprep.subr.bf16.mxu0 0
    %679 = vmatpush1.bf16.msra.mxu0 0
    %680 = vmatprep.subr.bf16.mxu0 0
    %681 = vmatpush1.bf16.msra.mxu0 0
    %682 = vmatprep.subr.bf16.mxu0 0
    %683 = vmatpush1.bf16.msra.mxu0 0
    %684 = vmatprep.subr.bf16.mxu0 0
    %685 = vmatpush1.bf16.msra.mxu0 0
    %686 = vmatprep.subr.bf16.mxu0 0
    %687 = vmatpush1.bf16.msra.mxu0 0
    %688 = vmatprep.subr.bf16.mxu0 0
    %689 = vmatpush1.bf16.msra.mxu0 0
    %690 = vmatprep.subr.bf16.mxu0 0
    %691 = vmatpush1.bf16.msra.mxu0 0
    %692 = vmatprep.mubr.bf16.mxu0 0
    %693 = vmatmul.mubr.bf16.gmra.mrb[0].mxu0 %v436
    %v694 = vpop.f32.mrb[0].mxu0
    %v695 = vadd.f32 0.0, %v694
    %v696 = vpop.f32.mrb[0].mxu0
    %v697 = vpop.f32.mrb[0].mxu0
    %v698 = vadd.f32 0.0, %v697
    %v699 = vpop.f32.mrb[0].mxu0
    %700 = vmatprep.mubr.bf16.mxu0 0
    %701 = vmatmul.mubr.bf16.gmra.mrb[0].mxu0 %v439
    %v702 = vpop.f32.mrb[0].mxu0
    %v703 = vadd.f32 0.0, %v702
    %v704 = vpop.f32.mrb[0].mxu0
    %v705 = vpop.f32.mrb[0].mxu0
    %v706 = vadd.f32 0.0, %v705
    %v707 = vpop.f32.mrb[0].mxu0
    %708 = vdwg.mxu0
    %v717 = vunpack.c.l.b16 %v364
    %v718 = vunpack.c.l.b16 %v365
    %v719 = vunpack.c.l.b16 %v366
    %v720 = vunpack.c.l.b16 %v367
    %v721 = vunpack.c.l.b16 %v368
    %v722 = vunpack.c.l.b16 %v369
    %v723 = vunpack.c.l.b16 %v370
    %v724 = vunpack.c.l.b16 %v371
    %v725 = vpack.c.b16 %v718, %v717
    %v726 = vpack.c.b16 %v720, %v719
    %v727 = vpack.c.b16 %v722, %v721
    %v728 = vpack.c.b16 %v724, %v723
    %733 = vmatprep.subr.bf16.mxu0 0
    %734 = vmatpush1.bf16.msra.mxu0 %v725
    %735 = vmatprep.subr.bf16.mxu0 0
    %736 = vmatpush1.bf16.msra.mxu0 %v726
    %737 = vmatprep.subr.bf16.mxu0 0
    %738 = vmatpush1.bf16.msra.mxu0 %v727
    %739 = vmatprep.subr.bf16.mxu0 0
    %740 = vmatpush1.bf16.msra.mxu0 %v728
    %741 = vmatprep.subr.bf16.mxu0 0
    %742 = vmatpush1.bf16.msra.mxu0 0
    %743 = vmatprep.subr.bf16.mxu0 0
    %744 = vmatpush1.bf16.msra.mxu0 0
    %745 = vmatprep.subr.bf16.mxu0 0
    %746 = vmatpush1.bf16.msra.mxu0 0
    %747 = vmatprep.subr.bf16.mxu0 0
    %748 = vmatpush1.bf16.msra.mxu0 0
    %749 = vmatprep.subr.bf16.mxu0 0
    %750 = vmatpush1.bf16.msra.mxu0 0
    %751 = vmatprep.subr.bf16.mxu0 0
    %752 = vmatpush1.bf16.msra.mxu0 0
    %753 = vmatprep.subr.bf16.mxu0 0
    %754 = vmatpush1.bf16.msra.mxu0 0
    %755 = vmatprep.subr.bf16.mxu0 0
    %756 = vmatpush1.bf16.msra.mxu0 0
    %757 = vmatprep.subr.bf16.mxu0 0
    %758 = vmatpush1.bf16.msra.mxu0 0
    %759 = vmatprep.subr.bf16.mxu0 0
    %760 = vmatpush1.bf16.msra.mxu0 0
    %761 = vmatprep.subr.bf16.mxu0 0
    %762 = vmatpush1.bf16.msra.mxu0 0
    %763 = vmatprep.subr.bf16.mxu0 0
    %764 = vmatpush1.bf16.msra.mxu0 0
    %765 = vmatprep.mubr.bf16.mxu0 0
    %766 = vmatmul.mubr.bf16.gmra.mrb[0].mxu0 %v436
    %v767 = vpop.f32.mrb[0].mxu0
    %v768 = vadd.f32 0.0, %v767
    %v769 = vpop.f32.mrb[0].mxu0
    %v770 = vpop.f32.mrb[0].mxu0
    %v771 = vadd.f32 0.0, %v770
    %v772 = vpop.f32.mrb[0].mxu0
    %773 = vmatprep.mubr.bf16.mxu0 0
    %774 = vmatmul.mubr.bf16.gmra.mrb[0].mxu0 %v439
    %v775 = vpop.f32.mrb[0].mxu0
    %v776 = vadd.f32 0.0, %v775
    %v777 = vpop.f32.mrb[0].mxu0
    %v778 = vpop.f32.mrb[0].mxu0
    %v779 = vadd.f32 0.0, %v778
    %v780 = vpop.f32.mrb[0].mxu0
    %781 = vdwg.mxu0
    %v790 = vunpack.c.l.b16 %v373
    %v791 = vunpack.c.l.b16 %v374
    %v792 = vunpack.c.l.b16 %v375
    %v793 = vunpack.c.l.b16 %v376
    %v794 = vunpack.c.l.b16 %v377
    %v795 = vunpack.c.l.b16 %v378
    %v796 = vunpack.c.l.b16 %v379
    %v797 = vunpack.c.l.b16 %v380
    %v798 = vpack.c.b16 %v791, %v790
    %v799 = vpack.c.b16 %v793, %v792
    %v800 = vpack.c.b16 %v795, %v794
    %v801 = vpack.c.b16 %v797, %v796
    %806 = vmatprep.subr.bf16.mxu0 0
    %807 = vmatpush1.bf16.msra.mxu0 %v798
    %808 = vmatprep.subr.bf16.mxu0 0
    %809 = vmatpush1.bf16.msra.mxu0 %v799
    %810 = vmatprep.subr.bf16.mxu0 0
    %811 = vmatpush1.bf16.msra.mxu0 %v800
    %812 = vmatprep.subr.bf16.mxu0 0
    %813 = vmatpush1.bf16.msra.mxu0 %v801
    %814 = vmatprep.subr.bf16.mxu0 0
    %815 = vmatpush1.bf16.msra.mxu0 0
    %816 = vmatprep.subr.bf16.mxu0 0
    %817 = vmatpush1.bf16.msra.mxu0 0
    %818 = vmatprep.subr.bf16.mxu0 0
    %819 = vmatpush1.bf16.msra.mxu0 0
    %820 = vmatprep.subr.bf16.mxu0 0
    %821 = vmatpush1.bf16.msra.mxu0 0
    %822 = vmatprep.subr.bf16.mxu0 0
    %823 = vmatpush1.bf16.msra.mxu0 0
    %824 = vmatprep.subr.bf16.mxu0 0
    %825 = vmatpush1.bf16.msra.mxu0 0
    %826 = vmatprep.subr.bf16.mxu0 0
    %827 = vmatpush1.bf16.msra.mxu0 0
    %828 = vmatprep.subr.bf16.mxu0 0
    %829 = vmatpush1.bf16.msra.mxu0 0
    %830 = vmatprep.subr.bf16.mxu0 0
    %831 = vmatpush1.bf16.msra.mxu0 0
    %832 = vmatprep.subr.bf16.mxu0 0
    %833 = vmatpush1.bf16.msra.mxu0 0
    %834 = vmatprep.subr.bf16.mxu0 0
    %835 = vmatpush1.bf16.msra.mxu0 0
    %836 = vmatprep.subr.bf16.mxu0 0
    %837 = vmatpush1.bf16.msra.mxu0 0
    %838 = vmatprep.mubr.bf16.mxu0 0
    %839 = vmatmul.mubr.bf16.gmra.mrb[0].mxu0 %v436
    %v840 = vpop.f32.mrb[0].mxu0
    %v841 = vadd.f32 0.0, %v840
    %v842 = vpop.f32.mrb[0].mxu0
    %v843 = vpop.f32.mrb[0].mxu0
    %v844 = vadd.f32 0.0, %v843
    %v845 = vpop.f32.mrb[0].mxu0
    %846 = vmatprep.mubr.bf16.mxu0 0
    %847 = vmatmul.mubr.bf16.gmra.mrb[0].mxu0 %v439
    %v848 = vpop.f32.mrb[0].mxu0
    %v849 = vadd.f32 0.0, %v848
    %v850 = vpop.f32.mrb[0].mxu0
    %v851 = vpop.f32.mrb[0].mxu0
    %v852 = vadd.f32 0.0, %v851
    %v853 = vpop.f32.mrb[0].mxu0
    %854 = vdwg.mxu0
    %v863 = vunpack.c.l.b16 %v382
    %v864 = vunpack.c.l.b16 %v383
    %v865 = vunpack.c.l.b16 %v384
    %v866 = vunpack.c.l.b16 %v385
    %v867 = vunpack.c.l.b16 %v386
    %v868 = vunpack.c.l.b16 %v387
    %v869 = vunpack.c.l.b16 %v388
    %v870 = vunpack.c.l.b16 %v389
    %v871 = vpack.c.b16 %v864, %v863
    %v872 = vpack.c.b16 %v866, %v865
    %v873 = vpack.c.b16 %v868, %v867
    %v874 = vpack.c.b16 %v870, %v869
    %879 = vmatprep.subr.bf16.mxu0 0
    %880 = vmatpush1.bf16.msra.mxu0 %v871
    %881 = vmatprep.subr.bf16.mxu0 0
    %882 = vmatpush1.bf16.msra.mxu0 %v872
    %883 = vmatprep.subr.bf16.mxu0 0
    %884 = vmatpush1.bf16.msra.mxu0 %v873
    %885 = vmatprep.subr.bf16.mxu0 0
    %886 = vmatpush1.bf16.msra.mxu0 %v874
    %887 = vmatprep.subr.bf16.mxu0 0
    %888 = vmatpush1.bf16.msra.mxu0 0
    %889 = vmatprep.subr.bf16.mxu0 0
    %890 = vmatpush1.bf16.msra.mxu0 0
    %891 = vmatprep.subr.bf16.mxu0 0
    %892 = vmatpush1.bf16.msra.mxu0 0
    %893 = vmatprep.subr.bf16.mxu0 0
    %894 = vmatpush1.bf16.msra.mxu0 0
    %895 = vmatprep.subr.bf16.mxu0 0
    %896 = vmatpush1.bf16.msra.mxu0 0
    %897 = vmatprep.subr.bf16.mxu0 0
    %898 = vmatpush1.bf16.msra.mxu0 0
    %899 = vmatprep.subr.bf16.mxu0 0
    %900 = vmatpush1.bf16.msra.mxu0 0
    %901 = vmatprep.subr.bf16.mxu0 0
    %902 = vmatpush1.bf16.msra.mxu0 0
    %903 = vmatprep.subr.bf16.mxu0 0
    %904 = vmatpush1.bf16.msra.mxu0 0
    %905 = vmatprep.subr.bf16.mxu0 0
    %906 = vmatpush1.bf16.msra.mxu0 0
    %907 = vmatprep.subr.bf16.mxu0 0
    %908 = vmatpush1.bf16.msra.mxu0 0
    %909 = vmatprep.subr.bf16.mxu0 0
    %910 = vmatpush1.bf16.msra.mxu0 0
    %911 = vmatprep.mubr.bf16.mxu0 0
    %912 = vmatmul.mubr.bf16.gmra.mrb[0].mxu0 %v436
    %v913 = vpop.f32.mrb[0].mxu0
    %v914 = vadd.f32 0.0, %v913
    %v915 = vpop.f32.mrb[0].mxu0
    %v916 = vpop.f32.mrb[0].mxu0
    %v917 = vadd.f32 0.0, %v916
    %v918 = vpop.f32.mrb[0].mxu0
    %919 = vmatprep.mubr.bf16.mxu0 0
    %920 = vmatmul.mubr.bf16.gmra.mrb[0].mxu0 %v439
    %v921 = vpop.f32.mrb[0].mxu0
    %v922 = vadd.f32 0.0, %v921
    %v923 = vpop.f32.mrb[0].mxu0
    %v924 = vpop.f32.mrb[0].mxu0
    %v925 = vadd.f32 0.0, %v924
    %v926 = vpop.f32.mrb[0].mxu0
    %927 = vdwg.mxu0
    %v936 = vunpack.c.l.b16 %v391
    %v937 = vunpack.c.l.b16 %v392
    %v938 = vunpack.c.l.b16 %v393
    %v939 = vunpack.c.l.b16 %v394
    %v940 = vunpack.c.l.b16 %v395
    %v941 = vunpack.c.l.b16 %v396
    %v942 = vunpack.c.l.b16 %v397
    %v943 = vunpack.c.l.b16 %v398
    %v944 = vpack.c.b16 %v937, %v936
    %v945 = vpack.c.b16 %v939, %v938
    %v946 = vpack.c.b16 %v941, %v940
    %v947 = vpack.c.b16 %v943, %v942
    %952 = vmatprep.subr.bf16.mxu0 0
    %953 = vmatpush1.bf16.msra.mxu0 %v944
    %954 = vmatprep.subr.bf16.mxu0 0
    %955 = vmatpush1.bf16.msra.mxu0 %v945
    %956 = vmatprep.subr.bf16.mxu0 0
    %957 = vmatpush1.bf16.msra.mxu0 %v946
    %958 = vmatprep.subr.bf16.mxu0 0
    %959 = vmatpush1.bf16.msra.mxu0 %v947
    %960 = vmatprep.subr.bf16.mxu0 0
    %961 = vmatpush1.bf16.msra.mxu0 0
    %962 = vmatprep.subr.bf16.mxu0 0
    %963 = vmatpush1.bf16.msra.mxu0 0
    %964 = vmatprep.subr.bf16.mxu0 0
    %965 = vmatpush1.bf16.msra.mxu0 0
    %966 = vmatprep.subr.bf16.mxu0 0
    %967 = vmatpush1.bf16.msra.mxu0 0
    %968 = vmatprep.subr.bf16.mxu0 0
    %969 = vmatpush1.bf16.msra.mxu0 0
    %970 = vmatprep.subr.bf16.mxu0 0
    %971 = vmatpush1.bf16.msra.mxu0 0
    %972 = vmatprep.subr.bf16.mxu0 0
    %973 = vmatpush1.bf16.msra.mxu0 0
    %974 = vmatprep.subr.bf16.mxu0 0
    %975 = vmatpush1.bf16.msra.mxu0 0
    %976 = vmatprep.subr.bf16.mxu0 0
    %977 = vmatpush1.bf16.msra.mxu0 0
    %978 = vmatprep.subr.bf16.mxu0 0
    %979 = vmatpush1.bf16.msra.mxu0 0
    %980 = vmatprep.subr.bf16.mxu0 0
    %981 = vmatpush1.bf16.msra.mxu0 0
    %982 = vmatprep.subr.bf16.mxu0 0
    %983 = vmatpush1.bf16.msra.mxu0 0
    %984 = vmatprep.mubr.bf16.mxu0 0
    %985 = vmatmul.mubr.bf16.gmra.mrb[0].mxu0 %v436
    %v986 = vpop.f32.mrb[0].mxu0
    %v987 = vadd.f32 0.0, %v986
    %v988 = vpop.f32.mrb[0].mxu0
    %v989 = vpop.f32.mrb[0].mxu0
    %v990 = vadd.f32 0.0, %v989
    %v991 = vpop.f32.mrb[0].mxu0
    %992 = vmatprep.mubr.bf16.mxu0 0
    %993 = vmatmul.mubr.bf16.gmra.mrb[0].mxu0 %v439
    %v994 = vpop.f32.mrb[0].mxu0
    %v995 = vadd.f32 0.0, %v994
    %v996 = vpop.f32.mrb[0].mxu0
    %v997 = vpop.f32.mrb[0].mxu0
    %v998 = vadd.f32 0.0, %v997
    %v999 = vpop.f32.mrb[0].mxu0
    %1000 = vdwg.mxu0
    %v1009 = vunpack.c.l.b16 %v400
    %v1010 = vunpack.c.l.b16 %v401
    %v1011 = vunpack.c.l.b16 %v402
    %v1012 = vunpack.c.l.b16 %v403
    %v1013 = vunpack.c.l.b16 %v404
    %v1014 = vunpack.c.l.b16 %v405
    %v1015 = vunpack.c.l.b16 %v406
    %v1016 = vunpack.c.l.b16 %v407
    %v1017 = vpack.c.b16 %v1010, %v1009
    %v1018 = vpack.c.b16 %v1012, %v1011
    %v1019 = vpack.c.b16 %v1014, %v1013
    %v1020 = vpack.c.b16 %v1016, %v1015
    %1025 = vmatprep.subr.bf16.mxu0 0
    %1026 = vmatpush1.bf16.msra.mxu0 %v1017
    %1027 = vmatprep.subr.bf16.mxu0 0
    %1028 = vmatpush1.bf16.msra.mxu0 %v1018
    %1029 = vmatprep.subr.bf16.mxu0 0
    %1030 = vmatpush1.bf16.msra.mxu0 %v1019
    %1031 = vmatprep.subr.bf16.mxu0 0
    %1032 = vmatpush1.bf16.msra.mxu0 %v1020
    %1033 = vmatprep.subr.bf16.mxu0 0
    %1034 = vmatpush1.bf16.msra.mxu0 0
    %1035 = vmatprep.subr.bf16.mxu0 0
    %1036 = vmatpush1.bf16.msra.mxu0 0
    %1037 = vmatprep.subr.bf16.mxu0 0
    %1038 = vmatpush1.bf16.msra.mxu0 0
    %1039 = vmatprep.subr.bf16.mxu0 0
    %1040 = vmatpush1.bf16.msra.mxu0 0
    %1041 = vmatprep.subr.bf16.mxu0 0
    %1042 = vmatpush1.bf16.msra.mxu0 0
    %1043 = vmatprep.subr.bf16.mxu0 0
    %1044 = vmatpush1.bf16.msra.mxu0 0
    %1045 = vmatprep.subr.bf16.mxu0 0
    %1046 = vmatpush1.bf16.msra.mxu0 0
    %1047 = vmatprep.subr.bf16.mxu0 0
    %1048 = vmatpush1.bf16.msra.mxu0 0
    %1049 = vmatprep.subr.bf16.mxu0 0
    %1050 = vmatpush1.bf16.msra.mxu0 0
    %1051 = vmatprep.subr.bf16.mxu0 0
    %1052 = vmatpush1.bf16.msra.mxu0 0
    %1053 = vmatprep.subr.bf16.mxu0 0
    %1054 = vmatpush1.bf16.msra.mxu0 0
    %1055 = vmatprep.subr.bf16.mxu0 0
    %1056 = vmatpush1.bf16.msra.mxu0 0
    %1057 = vmatprep.mubr.bf16.mxu0 0
    %1058 = vmatmul.mubr.bf16.gmra.mrb[0].mxu0 %v436
    %v1059 = vpop.f32.mrb[0].mxu0
    %v1060 = vadd.f32 0.0, %v1059
    %v1061 = vpop.f32.mrb[0].mxu0
    %v1062 = vpop.f32.mrb[0].mxu0
    %v1063 = vadd.f32 0.0, %v1062
    %v1064 = vpop.f32.mrb[0].mxu0
    %1065 = vmatprep.mubr.bf16.mxu0 0
    %1066 = vmatmul.mubr.bf16.gmra.mrb[0].mxu0 %v439
    %v1067 = vpop.f32.mrb[0].mxu0
    %v1068 = vadd.f32 0.0, %v1067
    %v1069 = vpop.f32.mrb[0].mxu0
    %v1070 = vpop.f32.mrb[0].mxu0
    %v1071 = vadd.f32 0.0, %v1070
    %v1072 = vpop.f32.mrb[0].mxu0
    %1073 = vdwg.mxu0
    %1076 = vrot.lane.b32.xlu0 %v408, 64
    %v1077 = vpop.permute.xlu0 %1076
    %1078 = vrot.lane.b32.xlu0 %v409, 64
    %v1079 = vpop.permute.xlu0 %1078
    %v1081 = vsel %vm434, %v1077, 0
    %v1084 = vsel %vm434, %v1079, 0
    %1086 = vmatprep.subr.bf16.mxu0 0
    %1087 = vmatpush1.bf16.msra.mxu0 %v426
    %1088 = vmatprep.subr.bf16.mxu0 0
    %1089 = vmatpush1.bf16.msra.mxu0 %v427
    %1090 = vmatprep.subr.bf16.mxu0 0
    %1091 = vmatpush1.bf16.msra.mxu0 %v428
    %1092 = vmatprep.subr.bf16.mxu0 0
    %1093 = vmatpush1.bf16.msra.mxu0 %v429
    %1094 = vmatprep.subr.bf16.mxu0 0
    %1095 = vmatpush1.bf16.msra.mxu0 0
    %1096 = vmatprep.subr.bf16.mxu0 0
    %1097 = vmatpush1.bf16.msra.mxu0 0
    %1098 = vmatprep.subr.bf16.mxu0 0
    %1099 = vmatpush1.bf16.msra.mxu0 0
    %1100 = vmatprep.subr.bf16.mxu0 0
    %1101 = vmatpush1.bf16.msra.mxu0 0
    %1102 = vmatprep.subr.bf16.mxu0 0
    %1103 = vmatpush1.bf16.msra.mxu0 0
    %1104 = vmatprep.subr.bf16.mxu0 0
    %1105 = vmatpush1.bf16.msra.mxu0 0
    %1106 = vmatprep.subr.bf16.mxu0 0
    %1107 = vmatpush1.bf16.msra.mxu0 0
    %1108 = vmatprep.subr.bf16.mxu0 0
    %1109 = vmatpush1.bf16.msra.mxu0 0
    %1110 = vmatprep.subr.bf16.mxu0 0
    %1111 = vmatpush1.bf16.msra.mxu0 0
    %1112 = vmatprep.subr.bf16.mxu0 0
    %1113 = vmatpush1.bf16.msra.mxu0 0
    %1114 = vmatprep.subr.bf16.mxu0 0
    %1115 = vmatpush1.bf16.msra.mxu0 0
    %1116 = vmatprep.subr.bf16.mxu0 0
    %1117 = vmatpush1.bf16.msra.mxu0 0
    %1118 = vmatprep.mubr.bf16.mxu0 0
    %1119 = vmatmul.mubr.bf16.gmra.mrb[0].mxu0 %v1081
    %v1120 = vpop.f32.mrb[0].mxu0
    %v1121 = vadd.f32 0.0, %v1120
    %v1122 = vpop.f32.mrb[0].mxu0
    %v1123 = vpop.f32.mrb[0].mxu0
    %v1124 = vadd.f32 0.0, %v1123
    %v1125 = vpop.f32.mrb[0].mxu0
    %1126 = vmatprep.mubr.bf16.mxu0 0
    %1127 = vmatmul.mubr.bf16.gmra.mrb[0].mxu0 %v1084
    %v1128 = vpop.f32.mrb[0].mxu0
    %v1129 = vadd.f32 0.0, %v1128
    %v1130 = vpop.f32.mrb[0].mxu0
    %v1131 = vpop.f32.mrb[0].mxu0
    %v1132 = vadd.f32 0.0, %v1131
    %v1133 = vpop.f32.mrb[0].mxu0
    %1134 = vdwg.mxu0
    %1135 = vmatprep.subr.bf16.mxu0 0
    %1136 = vmatpush1.bf16.msra.mxu0 %v506
    %1137 = vmatprep.subr.bf16.mxu0 0
    %1138 = vmatpush1.bf16.msra.mxu0 %v507
    %1139 = vmatprep.subr.bf16.mxu0 0
    %1140 = vmatpush1.bf16.msra.mxu0 %v508
    %1141 = vmatprep.subr.bf16.mxu0 0
    %1142 = vmatpush1.bf16.msra.mxu0 %v509
    %1143 = vmatprep.subr.bf16.mxu0 0
    %1144 = vmatpush1.bf16.msra.mxu0 0
    %1145 = vmatprep.subr.bf16.mxu0 0
    %1146 = vmatpush1.bf16.msra.mxu0 0
    %1147 = vmatprep.subr.bf16.mxu0 0
    %1148 = vmatpush1.bf16.msra.mxu0 0
    %1149 = vmatprep.subr.bf16.mxu0 0
    %1150 = vmatpush1.bf16.msra.mxu0 0
    %1151 = vmatprep.subr.bf16.mxu0 0
    %1152 = vmatpush1.bf16.msra.mxu0 0
    %1153 = vmatprep.subr.bf16.mxu0 0
    %1154 = vmatpush1.bf16.msra.mxu0 0
    %1155 = vmatprep.subr.bf16.mxu0 0
    %1156 = vmatpush1.bf16.msra.mxu0 0
    %1157 = vmatprep.subr.bf16.mxu0 0
    %1158 = vmatpush1.bf16.msra.mxu0 0
    %1159 = vmatprep.subr.bf16.mxu0 0
    %1160 = vmatpush1.bf16.msra.mxu0 0
    %1161 = vmatprep.subr.bf16.mxu0 0
    %1162 = vmatpush1.bf16.msra.mxu0 0
    %1163 = vmatprep.subr.bf16.mxu0 0
    %1164 = vmatpush1.bf16.msra.mxu0 0
    %1165 = vmatprep.subr.bf16.mxu0 0
    %1166 = vmatpush1.bf16.msra.mxu0 0
    %1167 = vmatprep.mubr.bf16.mxu0 0
    %1168 = vmatmul.mubr.bf16.gmra.mrb[0].mxu0 %v1081
    %v1169 = vpop.f32.mrb[0].mxu0
    %v1170 = vadd.f32 0.0, %v1169
    %v1171 = vpop.f32.mrb[0].mxu0
    %v1172 = vpop.f32.mrb[0].mxu0
    %v1173 = vadd.f32 0.0, %v1172
    %v1174 = vpop.f32.mrb[0].mxu0
    %1175 = vmatprep.mubr.bf16.mxu0 0
    %1176 = vmatmul.mubr.bf16.gmra.mrb[0].mxu0 %v1084
    %v1177 = vpop.f32.mrb[0].mxu0
    %v1178 = vadd.f32 0.0, %v1177
    %v1179 = vpop.f32.mrb[0].mxu0
    %v1180 = vpop.f32.mrb[0].mxu0
    %v1181 = vadd.f32 0.0, %v1180
    %v1182 = vpop.f32.mrb[0].mxu0
    %1183 = vdwg.mxu0
    %1184 = vmatprep.subr.bf16.mxu0 0
    %1185 = vmatpush1.bf16.msra.mxu0 %v579
    %1186 = vmatprep.subr.bf16.mxu0 0
    %1187 = vmatpush1.bf16.msra.mxu0 %v580
    %1188 = vmatprep.subr.bf16.mxu0 0
    %1189 = vmatpush1.bf16.msra.mxu0 %v581
    %1190 = vmatprep.subr.bf16.mxu0 0
    %1191 = vmatpush1.bf16.msra.mxu0 %v582
    %1192 = vmatprep.subr.bf16.mxu0 0
    %1193 = vmatpush1.bf16.msra.mxu0 0
    %1194 = vmatprep.subr.bf16.mxu0 0
    %1195 = vmatpush1.bf16.msra.mxu0 0
    %1196 = vmatprep.subr.bf16.mxu0 0
    %1197 = vmatpush1.bf16.msra.mxu0 0
    %1198 = vmatprep.subr.bf16.mxu0 0
    %1199 = vmatpush1.bf16.msra.mxu0 0
    %1200 = vmatprep.subr.bf16.mxu0 0
    %1201 = vmatpush1.bf16.msra.mxu0 0
    %1202 = vmatprep.subr.bf16.mxu0 0
    %1203 = vmatpush1.bf16.msra.mxu0 0
    %1204 = vmatprep.subr.bf16.mxu0 0
    %1205 = vmatpush1.bf16.msra.mxu0 0
    %1206 = vmatprep.subr.bf16.mxu0 0
    %1207 = vmatpush1.bf16.msra.mxu0 0
    %1208 = vmatprep.subr.bf16.mxu0 0
    %1209 = vmatpush1.bf16.msra.mxu0 0
    %1210 = vmatprep.subr.bf16.mxu0 0
    %1211 = vmatpush1.bf16.msra.mxu0 0
    %1212 = vmatprep.subr.bf16.mxu0 0
    %1213 = vmatpush1.bf16.msra.mxu0 0
    %1214 = vmatprep.subr.bf16.mxu0 0
    %1215 = vmatpush1.bf16.msra.mxu0 0
    %1216 = vmatprep.mubr.bf16.mxu0 0
    %1217 = vmatmul.mubr.bf16.gmra.mrb[0].mxu0 %v1081
    %v1218 = vpop.f32.mrb[0].mxu0
    %v1219 = vadd.f32 0.0, %v1218
    %v1220 = vpop.f32.mrb[0].mxu0
    %v1221 = vpop.f32.mrb[0].mxu0
    %v1222 = vadd.f32 0.0, %v1221
    %v1223 = vpop.f32.mrb[0].mxu0
    %1224 = vmatprep.mubr.bf16.mxu0 0
    %1225 = vmatmul.mubr.bf16.gmra.mrb[0].mxu0 %v1084
    %v1226 = vpop.f32.mrb[0].mxu0
    %v1227 = vadd.f32 0.0, %v1226
    %v1228 = vpop.f32.mrb[0].mxu0
    %v1229 = vpop.f32.mrb[0].mxu0
    %v1230 = vadd.f32 0.0, %v1229
    %v1231 = vpop.f32.mrb[0].mxu0
    %1232 = vdwg.mxu0
    %1233 = vmatprep.subr.bf16.mxu0 0
    %1234 = vmatpush1.bf16.msra.mxu0 %v652
    %1235 = vmatprep.subr.bf16.mxu0 0
    %1236 = vmatpush1.bf16.msra.mxu0 %v653
    %1237 = vmatprep.subr.bf16.mxu0 0
    %1238 = vmatpush1.bf16.msra.mxu0 %v654
    %1239 = vmatprep.subr.bf16.mxu0 0
    %1240 = vmatpush1.bf16.msra.mxu0 %v655
    %1241 = vmatprep.subr.bf16.mxu0 0
    %1242 = vmatpush1.bf16.msra.mxu0 0
    %1243 = vmatprep.subr.bf16.mxu0 0
    %1244 = vmatpush1.bf16.msra.mxu0 0
    %1245 = vmatprep.subr.bf16.mxu0 0
    %1246 = vmatpush1.bf16.msra.mxu0 0
    %1247 = vmatprep.subr.bf16.mxu0 0
    %1248 = vmatpush1.bf16.msra.mxu0 0
    %1249 = vmatprep.subr.bf16.mxu0 0
    %1250 = vmatpush1.bf16.msra.mxu0 0
    %1251 = vmatprep.subr.bf16.mxu0 0
    %1252 = vmatpush1.bf16.msra.mxu0 0
    %1253 = vmatprep.subr.bf16.mxu0 0
    %1254 = vmatpush1.bf16.msra.mxu0 0
    %1255 = vmatprep.subr.bf16.mxu0 0
    %1256 = vmatpush1.bf16.msra.mxu0 0
    %1257 = vmatprep.subr.bf16.mxu0 0
    %1258 = vmatpush1.bf16.msra.mxu0 0
    %1259 = vmatprep.subr.bf16.mxu0 0
    %1260 = vmatpush1.bf16.msra.mxu0 0
    %1261 = vmatprep.subr.bf16.mxu0 0
    %1262 = vmatpush1.bf16.msra.mxu0 0
    %1263 = vmatprep.subr.bf16.mxu0 0
    %1264 = vmatpush1.bf16.msra.mxu0 0
    %1265 = vmatprep.mubr.bf16.mxu0 0
    %1266 = vmatmul.mubr.bf16.gmra.mrb[0].mxu0 %v1081
    %v1267 = vpop.f32.mrb[0].mxu0
    %v1268 = vadd.f32 0.0, %v1267
    %v1269 = vpop.f32.mrb[0].mxu0
    %v1270 = vpop.f32.mrb[0].mxu0
    %v1271 = vadd.f32 0.0, %v1270
    %v1272 = vpop.f32.mrb[0].mxu0
    %1273 = vmatprep.mubr.bf16.mxu0 0
    %1274 = vmatmul.mubr.bf16.gmra.mrb[0].mxu0 %v1084
    %v1275 = vpop.f32.mrb[0].mxu0
    %v1276 = vadd.f32 0.0, %v1275
    %v1277 = vpop.f32.mrb[0].mxu0
    %v1278 = vpop.f32.mrb[0].mxu0
    %v1279 = vadd.f32 0.0, %v1278
    %v1280 = vpop.f32.mrb[0].mxu0
    %1281 = vdwg.mxu0
    %1282 = vmatprep.subr.bf16.mxu0 0
    %1283 = vmatpush1.bf16.msra.mxu0 %v725
    %1284 = vmatprep.subr.bf16.mxu0 0
    %1285 = vmatpush1.bf16.msra.mxu0 %v726
    %1286 = vmatprep.subr.bf16.mxu0 0
    %1287 = vmatpush1.bf16.msra.mxu0 %v727
    %1288 = vmatprep.subr.bf16.mxu0 0
    %1289 = vmatpush1.bf16.msra.mxu0 %v728
    %1290 = vmatprep.subr.bf16.mxu0 0
    %1291 = vmatpush1.bf16.msra.mxu0 0
    %1292 = vmatprep.subr.bf16.mxu0 0
    %1293 = vmatpush1.bf16.msra.mxu0 0
    %1294 = vmatprep.subr.bf16.mxu0 0
    %1295 = vmatpush1.bf16.msra.mxu0 0
    %1296 = vmatprep.subr.bf16.mxu0 0
    %1297 = vmatpush1.bf16.msra.mxu0 0
    %1298 = vmatprep.subr.bf16.mxu0 0
    %1299 = vmatpush1.bf16.msra.mxu0 0
    %1300 = vmatprep.subr.bf16.mxu0 0
    %1301 = vmatpush1.bf16.msra.mxu0 0
    %1302 = vmatprep.subr.bf16.mxu0 0
    %1303 = vmatpush1.bf16.msra.mxu0 0
    %1304 = vmatprep.subr.bf16.mxu0 0
    %1305 = vmatpush1.bf16.msra.mxu0 0
    %1306 = vmatprep.subr.bf16.mxu0 0
    %1307 = vmatpush1.bf16.msra.mxu0 0
    %1308 = vmatprep.subr.bf16.mxu0 0
    %1309 = vmatpush1.bf16.msra.mxu0 0
    %1310 = vmatprep.subr.bf16.mxu0 0
    %1311 = vmatpush1.bf16.msra.mxu0 0
    %1312 = vmatprep.subr.bf16.mxu0 0
    %1313 = vmatpush1.bf16.msra.mxu0 0
    %1314 = vmatprep.mubr.bf16.mxu0 0
    %1315 = vmatmul.mubr.bf16.gmra.mrb[0].mxu0 %v1081
    %v1316 = vpop.f32.mrb[0].mxu0
    %v1317 = vadd.f32 0.0, %v1316
    %v1318 = vpop.f32.mrb[0].mxu0
    %v1319 = vpop.f32.mrb[0].mxu0
    %v1320 = vadd.f32 0.0, %v1319
    %v1321 = vpop.f32.mrb[0].mxu0
    %1322 = vmatprep.mubr.bf16.mxu0 0
    %1323 = vmatmul.mubr.bf16.gmra.mrb[0].mxu0 %v1084
    %v1324 = vpop.f32.mrb[0].mxu0
    %v1325 = vadd.f32 0.0, %v1324
    %v1326 = vpop.f32.mrb[0].mxu0
    %v1327 = vpop.f32.mrb[0].mxu0
    %v1328 = vadd.f32 0.0, %v1327
    %v1329 = vpop.f32.mrb[0].mxu0
    %1330 = vdwg.mxu0
    %1331 = vmatprep.subr.bf16.mxu0 0
    %1332 = vmatpush1.bf16.msra.mxu0 %v798
    %1333 = vmatprep.subr.bf16.mxu0 0
    %1334 = vmatpush1.bf16.msra.mxu0 %v799
    %1335 = vmatprep.subr.bf16.mxu0 0
    %1336 = vmatpush1.bf16.msra.mxu0 %v800
    %1337 = vmatprep.subr.bf16.mxu0 0
    %1338 = vmatpush1.bf16.msra.mxu0 %v801
    %1339 = vmatprep.subr.bf16.mxu0 0
    %1340 = vmatpush1.bf16.msra.mxu0 0
    %1341 = vmatprep.subr.bf16.mxu0 0
    %1342 = vmatpush1.bf16.msra.mxu0 0
    %1343 = vmatprep.subr.bf16.mxu0 0
    %1344 = vmatpush1.bf16.msra.mxu0 0
    %1345 = vmatprep.subr.bf16.mxu0 0
    %1346 = vmatpush1.bf16.msra.mxu0 0
    %1347 = vmatprep.subr.bf16.mxu0 0
    %1348 = vmatpush1.bf16.msra.mxu0 0
    %1349 = vmatprep.subr.bf16.mxu0 0
    %1350 = vmatpush1.bf16.msra.mxu0 0
    %1351 = vmatprep.subr.bf16.mxu0 0
    %1352 = vmatpush1.bf16.msra.mxu0 0
    %1353 = vmatprep.subr.bf16.mxu0 0
    %1354 = vmatpush1.bf16.msra.mxu0 0
    %1355 = vmatprep.subr.bf16.mxu0 0
    %1356 = vmatpush1.bf16.msra.mxu0 0
    %1357 = vmatprep.subr.bf16.mxu0 0
    %1358 = vmatpush1.bf16.msra.mxu0 0
    %1359 = vmatprep.subr.bf16.mxu0 0
    %1360 = vmatpush1.bf16.msra.mxu0 0
    %1361 = vmatprep.subr.bf16.mxu0 0
    %1362 = vmatpush1.bf16.msra.mxu0 0
    %1363 = vmatprep.mubr.bf16.mxu0 0
    %1364 = vmatmul.mubr.bf16.gmra.mrb[0].mxu0 %v1081
    %v1365 = vpop.f32.mrb[0].mxu0
    %v1366 = vadd.f32 0.0, %v1365
    %v1367 = vpop.f32.mrb[0].mxu0
    %v1368 = vpop.f32.mrb[0].mxu0
    %v1369 = vadd.f32 0.0, %v1368
    %v1370 = vpop.f32.mrb[0].mxu0
    %1371 = vmatprep.mubr.bf16.mxu0 0
    %1372 = vmatmul.mubr.bf16.gmra.mrb[0].mxu0 %v1084
    %v1373 = vpop.f32.mrb[0].mxu0
    %v1374 = vadd.f32 0.0, %v1373
    %v1375 = vpop.f32.mrb[0].mxu0
    %v1376 = vpop.f32.mrb[0].mxu0
    %v1377 = vadd.f32 0.0, %v1376
    %v1378 = vpop.f32.mrb[0].mxu0
    %1379 = vdwg.mxu0
    %1380 = vmatprep.subr.bf16.mxu0 0
    %1381 = vmatpush1.bf16.msra.mxu0 %v871
    %1382 = vmatprep.subr.bf16.mxu0 0
    %1383 = vmatpush1.bf16.msra.mxu0 %v872
    %1384 = vmatprep.subr.bf16.mxu0 0
    %1385 = vmatpush1.bf16.msra.mxu0 %v873
    %1386 = vmatprep.subr.bf16.mxu0 0
    %1387 = vmatpush1.bf16.msra.mxu0 %v874
    %1388 = vmatprep.subr.bf16.mxu0 0
    %1389 = vmatpush1.bf16.msra.mxu0 0
    %1390 = vmatprep.subr.bf16.mxu0 0
    %1391 = vmatpush1.bf16.msra.mxu0 0
    %1392 = vmatprep.subr.bf16.mxu0 0
    %1393 = vmatpush1.bf16.msra.mxu0 0
    %1394 = vmatprep.subr.bf16.mxu0 0
    %1395 = vmatpush1.bf16.msra.mxu0 0
    %1396 = vmatprep.subr.bf16.mxu0 0
    %1397 = vmatpush1.bf16.msra.mxu0 0
    %1398 = vmatprep.subr.bf16.mxu0 0
    %1399 = vmatpush1.bf16.msra.mxu0 0
    %1400 = vmatprep.subr.bf16.mxu0 0
    %1401 = vmatpush1.bf16.msra.mxu0 0
    %1402 = vmatprep.subr.bf16.mxu0 0
    %1403 = vmatpush1.bf16.msra.mxu0 0
    %1404 = vmatprep.subr.bf16.mxu0 0
    %1405 = vmatpush1.bf16.msra.mxu0 0
    %1406 = vmatprep.subr.bf16.mxu0 0
    %1407 = vmatpush1.bf16.msra.mxu0 0
    %1408 = vmatprep.subr.bf16.mxu0 0
    %1409 = vmatpush1.bf16.msra.mxu0 0
    %1410 = vmatprep.subr.bf16.mxu0 0
    %1411 = vmatpush1.bf16.msra.mxu0 0
    %1412 = vmatprep.mubr.bf16.mxu0 0
    %1413 = vmatmul.mubr.bf16.gmra.mrb[0].mxu0 %v1081
    %v1414 = vpop.f32.mrb[0].mxu0
    %v1415 = vadd.f32 0.0, %v1414
    %v1416 = vpop.f32.mrb[0].mxu0
    %v1417 = vpop.f32.mrb[0].mxu0
    %v1418 = vadd.f32 0.0, %v1417
    %v1419 = vpop.f32.mrb[0].mxu0
    %1420 = vmatprep.mubr.bf16.mxu0 0
    %1421 = vmatmul.mubr.bf16.gmra.mrb[0].mxu0 %v1084
    %v1422 = vpop.f32.mrb[0].mxu0
    %v1423 = vadd.f32 0.0, %v1422
    %v1424 = vpop.f32.mrb[0].mxu0
    %v1425 = vpop.f32.mrb[0].mxu0
    %v1426 = vadd.f32 0.0, %v1425
    %v1427 = vpop.f32.mrb[0].mxu0
    %1428 = vdwg.mxu0
    %1429 = vmatprep.subr.bf16.mxu0 0
    %1430 = vmatpush1.bf16.msra.mxu0 %v944
    %1431 = vmatprep.subr.bf16.mxu0 0
    %1432 = vmatpush1.bf16.msra.mxu0 %v945
    %1433 = vmatprep.subr.bf16.mxu0 0
    %1434 = vmatpush1.bf16.msra.mxu0 %v946
    %1435 = vmatprep.subr.bf16.mxu0 0
    %1436 = vmatpush1.bf16.msra.mxu0 %v947
    %1437 = vmatprep.subr.bf16.mxu0 0
    %1438 = vmatpush1.bf16.msra.mxu0 0
    %1439 = vmatprep.subr.bf16.mxu0 0
    %1440 = vmatpush1.bf16.msra.mxu0 0
    %1441 = vmatprep.subr.bf16.mxu0 0
    %1442 = vmatpush1.bf16.msra.mxu0 0
    %1443 = vmatprep.subr.bf16.mxu0 0
    %1444 = vmatpush1.bf16.msra.mxu0 0
    %1445 = vmatprep.subr.bf16.mxu0 0
    %1446 = vmatpush1.bf16.msra.mxu0 0
    %1447 = vmatprep.subr.bf16.mxu0 0
    %1448 = vmatpush1.bf16.msra.mxu0 0
    %1449 = vmatprep.subr.bf16.mxu0 0
    %1450 = vmatpush1.bf16.msra.mxu0 0
    %1451 = vmatprep.subr.bf16.mxu0 0
    %1452 = vmatpush1.bf16.msra.mxu0 0
    %1453 = vmatprep.subr.bf16.mxu0 0
    %1454 = vmatpush1.bf16.msra.mxu0 0
    %1455 = vmatprep.subr.bf16.mxu0 0
    %1456 = vmatpush1.bf16.msra.mxu0 0
    %1457 = vmatprep.subr.bf16.mxu0 0
    %1458 = vmatpush1.bf16.msra.mxu0 0
    %1459 = vmatprep.subr.bf16.mxu0 0
    %1460 = vmatpush1.bf16.msra.mxu0 0
    %1461 = vmatprep.mubr.bf16.mxu0 0
    %1462 = vmatmul.mubr.bf16.gmra.mrb[0].mxu0 %v1081
    %v1463 = vpop.f32.mrb[0].mxu0
    %v1464 = vadd.f32 0.0, %v1463
    %v1465 = vpop.f32.mrb[0].mxu0
    %v1466 = vpop.f32.mrb[0].mxu0
    %v1467 = vadd.f32 0.0, %v1466
    %v1468 = vpop.f32.mrb[0].mxu0
    %1469 = vmatprep.mubr.bf16.mxu0 0
    %1470 = vmatmul.mubr.bf16.gmra.mrb[0].mxu0 %v1084
    %v1471 = vpop.f32.mrb[0].mxu0
    %v1472 = vadd.f32 0.0, %v1471
    %v1473 = vpop.f32.mrb[0].mxu0
    %v1474 = vpop.f32.mrb[0].mxu0
    %v1475 = vadd.f32 0.0, %v1474
    %v1476 = vpop.f32.mrb[0].mxu0
    %1477 = vdwg.mxu0
    %1478 = vmatprep.subr.bf16.mxu0 0
    %1479 = vmatpush1.bf16.msra.mxu0 %v1017
    %1480 = vmatprep.subr.bf16.mxu0 0
    %1481 = vmatpush1.bf16.msra.mxu0 %v1018
    %1482 = vmatprep.subr.bf16.mxu0 0
    %1483 = vmatpush1.bf16.msra.mxu0 %v1019
    %1484 = vmatprep.subr.bf16.mxu0 0
    %1485 = vmatpush1.bf16.msra.mxu0 %v1020
    %1486 = vmatprep.subr.bf16.mxu0 0
    %1487 = vmatpush1.bf16.msra.mxu0 0
    %1488 = vmatprep.subr.bf16.mxu0 0
    %1489 = vmatpush1.bf16.msra.mxu0 0
    %1490 = vmatprep.subr.bf16.mxu0 0
    %1491 = vmatpush1.bf16.msra.mxu0 0
    %1492 = vmatprep.subr.bf16.mxu0 0
    %1493 = vmatpush1.bf16.msra.mxu0 0
    %1494 = vmatprep.subr.bf16.mxu0 0
    %1495 = vmatpush1.bf16.msra.mxu0 0
    %1496 = vmatprep.subr.bf16.mxu0 0
    %1497 = vmatpush1.bf16.msra.mxu0 0
    %1498 = vmatprep.subr.bf16.mxu0 0
    %1499 = vmatpush1.bf16.msra.mxu0 0
    %1500 = vmatprep.subr.bf16.mxu0 0
    %1501 = vmatpush1.bf16.msra.mxu0 0
    %1502 = vmatprep.subr.bf16.mxu0 0
    %1503 = vmatpush1.bf16.msra.mxu0 0
    %1504 = vmatprep.subr.bf16.mxu0 0
    %1505 = vmatpush1.bf16.msra.mxu0 0
    %1506 = vmatprep.subr.bf16.mxu0 0
    %1507 = vmatpush1.bf16.msra.mxu0 0
    %1508 = vmatprep.subr.bf16.mxu0 0
    %1509 = vmatpush1.bf16.msra.mxu0 0
    %1510 = vmatprep.mubr.bf16.mxu0 0
    %1511 = vmatmul.mubr.bf16.gmra.mrb[0].mxu0 %v1081
    %v1512 = vpop.f32.mrb[0].mxu0
    %v1513 = vadd.f32 0.0, %v1512
    %v1514 = vpop.f32.mrb[0].mxu0
    %v1515 = vpop.f32.mrb[0].mxu0
    %v1516 = vadd.f32 0.0, %v1515
    %v1517 = vpop.f32.mrb[0].mxu0
    %1518 = vmatprep.mubr.bf16.mxu0 0
    %1519 = vmatmul.mubr.bf16.gmra.mrb[0].mxu0 %v1084
    %v1520 = vpop.f32.mrb[0].mxu0
    %v1521 = vadd.f32 0.0, %v1520
    %v1522 = vpop.f32.mrb[0].mxu0
    %v1523 = vpop.f32.mrb[0].mxu0
    %v1524 = vadd.f32 0.0, %v1523
    %v1525 = vpop.f32.mrb[0].mxu0
    %1526 = vdwg.mxu0
    %1563 = vrot.lane.b32.xlu0 %v1121, 16
    %v1564 = vpop.permute.xlu0 %1563
    %1565 = vrot.lane.b32.xlu0 %v1124, 16
    %v1566 = vpop.permute.xlu0 %1565
    %1567 = vrot.lane.b32.xlu0 %v1129, 16
    %v1568 = vpop.permute.xlu0 %1567
    %1569 = vrot.lane.b32.xlu0 %v1132, 16
    %v1570 = vpop.permute.xlu0 %1569
    %1571 = vrot.lane.b32.xlu0 %v1170, 16
    %v1572 = vpop.permute.xlu0 %1571
    %1573 = vrot.lane.b32.xlu0 %v1173, 16
    %v1574 = vpop.permute.xlu0 %1573
    %1575 = vrot.lane.b32.xlu0 %v1178, 16
    %v1576 = vpop.permute.xlu0 %1575
    %1577 = vrot.lane.b32.xlu0 %v1181, 16
    %v1578 = vpop.permute.xlu0 %1577
    %1579 = vrot.lane.b32.xlu0 %v1219, 16
    %v1580 = vpop.permute.xlu0 %1579
    %1581 = vrot.lane.b32.xlu0 %v1222, 16
    %v1582 = vpop.permute.xlu0 %1581
    %1583 = vrot.lane.b32.xlu0 %v1227, 16
    %v1584 = vpop.permute.xlu0 %1583
    %1585 = vrot.lane.b32.xlu0 %v1230, 16
    %v1586 = vpop.permute.xlu0 %1585
    %1587 = vrot.lane.b32.xlu0 %v1268, 16
    %v1588 = vpop.permute.xlu0 %1587
    %1589 = vrot.lane.b32.xlu0 %v1271, 16
    %v1590 = vpop.permute.xlu0 %1589
    %1591 = vrot.lane.b32.xlu0 %v1276, 16
    %v1592 = vpop.permute.xlu0 %1591
    %1593 = vrot.lane.b32.xlu0 %v1279, 16
    %v1594 = vpop.permute.xlu0 %1593
    %1595 = vrot.lane.b32.xlu0 %v1317, 16
    %v1596 = vpop.permute.xlu0 %1595
    %1597 = vrot.lane.b32.xlu0 %v1320, 16
    %v1598 = vpop.permute.xlu0 %1597
    %1599 = vrot.lane.b32.xlu0 %v1325, 16
    %v1600 = vpop.permute.xlu0 %1599
    %1601 = vrot.lane.b32.xlu0 %v1328, 16
    %v1602 = vpop.permute.xlu0 %1601
    %1603 = vrot.lane.b32.xlu0 %v1366, 16
    %v1604 = vpop.permute.xlu0 %1603
    %1605 = vrot.lane.b32.xlu0 %v1369, 16
    %v1606 = vpop.permute.xlu0 %1605
    %1607 = vrot.lane.b32.xlu0 %v1374, 16
    %v1608 = vpop.permute.xlu0 %1607
    %1609 = vrot.lane.b32.xlu0 %v1377, 16
    %v1610 = vpop.permute.xlu0 %1609
    %1611 = vrot.lane.b32.xlu0 %v1415, 16
    %v1612 = vpop.permute.xlu0 %1611
    %1613 = vrot.lane.b32.xlu0 %v1418, 16
    %v1614 = vpop.permute.xlu0 %1613
    %1615 = vrot.lane.b32.xlu0 %v1423, 16
    %v1616 = vpop.permute.xlu0 %1615
    %1617 = vrot.lane.b32.xlu0 %v1426, 16
    %v1618 = vpop.permute.xlu0 %1617
    %1619 = vrot.lane.b32.xlu0 %v1464, 16
    %v1620 = vpop.permute.xlu0 %1619
    %1621 = vrot.lane.b32.xlu0 %v1467, 16
    %v1622 = vpop.permute.xlu0 %1621
    %1623 = vrot.lane.b32.xlu0 %v1472, 16
    %v1624 = vpop.permute.xlu0 %1623
    %1625 = vrot.lane.b32.xlu0 %v1475, 16
    %v1626 = vpop.permute.xlu0 %1625
    %1627 = vrot.lane.b32.xlu0 %v1513, 16
    %v1628 = vpop.permute.xlu0 %1627
    %1629 = vrot.lane.b32.xlu0 %v1516, 16
    %v1630 = vpop.permute.xlu0 %1629
    %1631 = vrot.lane.b32.xlu0 %v1521, 16
    %v1632 = vpop.permute.xlu0 %1631
    %1633 = vrot.lane.b32.xlu0 %v1524, 16
    %v1634 = vpop.permute.xlu0 %1633
    %vm1671 = vcmask 130048
    %v1672 = vsel %vm1671, %v476, %v1564
    %v1673 = vsel %vm1671, %v479, %v1566
    %v1674 = vsel %vm1671, %v484, %v1568
    %v1675 = vsel %vm1671, %v487, %v1570
    %v1676 = vsel %vm1671, %v549, %v1572
    %v1677 = vsel %vm1671, %v552, %v1574
    %v1678 = vsel %vm1671, %v557, %v1576
    %v1679 = vsel %vm1671, %v560, %v1578
    %v1680 = vsel %vm1671, %v622, %v1580
    %v1681 = vsel %vm1671, %v625, %v1582
    %v1682 = vsel %vm1671, %v630, %v1584
    %v1683 = vsel %vm1671, %v633, %v1586
    %v1684 = vsel %vm1671, %v695, %v1588
    %v1685 = vsel %vm1671, %v698, %v1590
    %v1686 = vsel %vm1671, %v703, %v1592
    %v1687 = vsel %vm1671, %v706, %v1594
    %v1688 = vsel %vm1671, %v768, %v1596
    %v1689 = vsel %vm1671, %v771, %v1598
    %v1690 = vsel %vm1671, %v776, %v1600
    %v1691 = vsel %vm1671, %v779, %v1602
    %v1692 = vsel %vm1671, %v841, %v1604
    %v1693 = vsel %vm1671, %v844, %v1606
    %v1694 = vsel %vm1671, %v849, %v1608
    %v1695 = vsel %vm1671, %v852, %v1610
    %v1696 = vsel %vm1671, %v914, %v1612
    %v1697 = vsel %vm1671, %v917, %v1614
    %v1698 = vsel %vm1671, %v922, %v1616
    %v1699 = vsel %vm1671, %v925, %v1618
    %v1700 = vsel %vm1671, %v987, %v1620
    %v1701 = vsel %vm1671, %v990, %v1622
    %v1702 = vsel %vm1671, %v995, %v1624
    %v1703 = vsel %vm1671, %v998, %v1626
    %v1704 = vsel %vm1671, %v1060, %v1628
    %v1705 = vsel %vm1671, %v1063, %v1630
    %v1706 = vsel %vm1671, %v1068, %v1632
    %v1707 = vsel %vm1671, %v1071, %v1634
    %v1708 = vpack.c.bf16 %v1673, %v1672
    %v1709 = vpack.c.bf16 %v1675, %v1674
    %v1710 = vpack.c.bf16 %v1677, %v1676
    %v1711 = vpack.c.bf16 %v1679, %v1678
    %v1712 = vpack.c.bf16 %v1681, %v1680
    %v1713 = vpack.c.bf16 %v1683, %v1682
    %v1714 = vpack.c.bf16 %v1685, %v1684
    %v1715 = vpack.c.bf16 %v1687, %v1686
    %v1716 = vpack.c.bf16 %v1689, %v1688
    %v1717 = vpack.c.bf16 %v1691, %v1690
    %v1718 = vpack.c.bf16 %v1693, %v1692
    %v1719 = vpack.c.bf16 %v1695, %v1694
    %v1720 = vpack.c.bf16 %v1697, %v1696
    %v1721 = vpack.c.bf16 %v1699, %v1698
    %v1722 = vpack.c.bf16 %v1701, %v1700
    %v1723 = vpack.c.bf16 %v1703, %v1702
    %v1724 = vpack.c.bf16 %v1705, %v1704
    %v1725 = vpack.c.bf16 %v1707, %v1706
    %v1726 = vld [vmem:[#allocation4] sm:$0xff]
    %v1727 = vld [vmem:[#allocation4 + $0x8] sm:$0xf]
    %v1728 = vld [vmem:[#allocation4 + $0xc] sm:$0xff]
    %v1729 = vld [vmem:[#allocation4 + $0x14] sm:$0xf]
    %v1730 = vld [vmem:[#allocation4 + $0x18] sm:$0xff]
    %v1731 = vld [vmem:[#allocation4 + $0x20] sm:$0xf]
    %v1732 = vld [vmem:[#allocation4 + $0x24] sm:$0xff]
    %v1733 = vld [vmem:[#allocation4 + $0x2c] sm:$0xf]
    %v1734 = vld [vmem:[#allocation4 + $0x30] sm:$0xff]
    %v1735 = vld [vmem:[#allocation4 + $0x38] sm:$0xf]
    %v1736 = vld [vmem:[#allocation4 + $0x3c] sm:$0xff]
    %v1737 = vld [vmem:[#allocation4 + $0x44] sm:$0xf]
    %v1738 = vld [vmem:[#allocation4 + $0x48] sm:$0xff]
    %v1739 = vld [vmem:[#allocation4 + $0x50] sm:$0xf]
    %v1740 = vld [vmem:[#allocation4 + $0x54] sm:$0xff]
    %v1741 = vld [vmem:[#allocation4 + $0x5c] sm:$0xf]
    %v1758 = vunpack.c.l.b16 %v1726
    %v1759 = vunpack.c.h.b16 %v1726
    %v1760 = vunpack.c.l.b16 %v1727
    %v1761 = vunpack.c.l.b16 %v1728
    %v1762 = vunpack.c.h.b16 %v1728
    %v1763 = vunpack.c.l.b16 %v1729
    %v1764 = vunpack.c.l.b16 %v1730
    %v1765 = vunpack.c.h.b16 %v1730
    %v1766 = vunpack.c.l.b16 %v1731
    %v1767 = vunpack.c.l.b16 %v1732
    %v1768 = vunpack.c.h.b16 %v1732
    %v1769 = vunpack.c.l.b16 %v1733
    %v1770 = vunpack.c.l.b16 %v1734
    %v1771 = vunpack.c.h.b16 %v1734
    %v1772 = vunpack.c.l.b16 %v1735
    %v1773 = vunpack.c.l.b16 %v1736
    %v1774 = vunpack.c.h.b16 %v1736
    %v1775 = vunpack.c.l.b16 %v1737
    %v1776 = vunpack.c.l.b16 %v1738
    %v1777 = vunpack.c.h.b16 %v1738
    %v1778 = vunpack.c.l.b16 %v1739
    %v1779 = vunpack.c.l.b16 %v1740
    %v1780 = vunpack.c.h.b16 %v1740
    %v1781 = vunpack.c.l.b16 %v1741
    %v1782 = vpack.c.b16 %v1761, %v1758
    %v1783 = vpack.c.b16 %v1762, %v1759
    %v1784 = vpack.c.b16 %v1763, %v1760
    %v1785 = vpack.c.b16 %v1767, %v1764
    %v1786 = vpack.c.b16 %v1768, %v1765
    %v1787 = vpack.c.b16 %v1769, %v1766
    %v1788 = vpack.c.b16 %v1773, %v1770
    %v1789 = vpack.c.b16 %v1774, %v1771
    %v1790 = vpack.c.b16 %v1775, %v1772
    %v1791 = vpack.c.b16 %v1779, %v1776
    %v1792 = vpack.c.b16 %v1780, %v1777
    %v1793 = vpack.c.b16 %v1781, %v1778
    %vm1802 = vcmask 261120
    %v1804 = vsel %vm1802, %v1784, 0
    %v1807 = vsel %vm1802, %v1787, 0
    %v1810 = vsel %vm1802, %v1790, 0
    %v1813 = vsel %vm1802, %v1793, 0
    %1815 = vmatprep.subr.bf16.mxu0 0
    %1816 = vmatpush1.bf16.msra.mxu0 %v1708
    %1817 = vmatprep.subr.bf16.mxu0 0
    %1818 = vmatpush1.bf16.msra.mxu0 %v1709
    %1819 = vmatprep.subr.bf16.mxu0 0
    %1820 = vmatpush1.bf16.msra.mxu0 %v1710
    %1821 = vmatprep.subr.bf16.mxu0 0
    %1822 = vmatpush1.bf16.msra.mxu0 %v1711
    %1823 = vmatprep.subr.bf16.mxu0 0
    %1824 = vmatpush1.bf16.msra.mxu0 %v1712
    %1825 = vmatprep.subr.bf16.mxu0 0
    %1826 = vmatpush1.bf16.msra.mxu0 %v1713
    %1827 = vmatprep.subr.bf16.mxu0 0
    %1828 = vmatpush1.bf16.msra.mxu0 %v1714
    %1829 = vmatprep.subr.bf16.mxu0 0
    %1830 = vmatpush1.bf16.msra.mxu0 %v1715
    %1831 = vmatprep.subr.bf16.mxu0 0
    %1832 = vmatpush1.bf16.msra.mxu0 %v1716
    %1833 = vmatprep.subr.bf16.mxu0 0
    %1834 = vmatpush1.bf16.msra.mxu0 %v1717
    %1835 = vmatprep.subr.bf16.mxu0 0
    %1836 = vmatpush1.bf16.msra.mxu0 %v1718
    %1837 = vmatprep.subr.bf16.mxu0 0
    %1838 = vmatpush1.bf16.msra.mxu0 %v1719
    %1839 = vmatprep.subr.bf16.mxu0 0
    %1840 = vmatpush1.bf16.msra.mxu0 %v1720
    %1841 = vmatprep.subr.bf16.mxu0 0
    %1842 = vmatpush1.bf16.msra.mxu0 %v1721
    %1843 = vmatprep.subr.bf16.mxu0 0
    %1844 = vmatpush1.bf16.msra.mxu0 %v1722
    %1845 = vmatprep.subr.bf16.mxu0 0
    %1846 = vmatpush1.bf16.msra.mxu0 %v1723
    %1847 = vmatprep.mubr.bf16.mxu0 %v1783
    %1848 = vmatmul.mubr.bf16.gmra.mrb[0].mxu0 %v1782
    %v1849 = vpop.f32.mrb[0].mxu0
    %v1850 = vadd.f32 0.0, %v1849
    %v1851 = vpop.f32.mrb[0].mxu0
    %v1852 = vpop.f32.mrb[0].mxu0
    %v1853 = vadd.f32 0.0, %v1852
    %v1854 = vpop.f32.mrb[0].mxu0
    %1855 = vmatprep.mubr.bf16.mxu0 %v1786
    %1856 = vmatmul.mubr.bf16.gmra.mrb[0].mxu0 %v1785
    %v1857 = vpop.f32.mrb[0].mxu0
    %v1858 = vadd.f32 0.0, %v1857
    %v1859 = vpop.f32.mrb[0].mxu0
    %v1860 = vpop.f32.mrb[0].mxu0
    %v1861 = vadd.f32 0.0, %v1860
    %v1862 = vpop.f32.mrb[0].mxu0
    %1863 = vmatprep.mubr.bf16.mxu0 %v1789
    %1864 = vmatmul.mubr.bf16.gmra.mrb[0].mxu0 %v1788
    %v1865 = vpop.f32.mrb[0].mxu0
    %v1866 = vadd.f32 0.0, %v1865
    %v1867 = vpop.f32.mrb[0].mxu0
    %v1868 = vpop.f32.mrb[0].mxu0
    %v1869 = vadd.f32 0.0, %v1868
    %v1870 = vpop.f32.mrb[0].mxu0
    %1871 = vmatprep.mubr.bf16.mxu0 %v1792
    %1872 = vmatmul.mubr.bf16.gmra.mrb[0].mxu0 %v1791
    %v1873 = vpop.f32.mrb[0].mxu0
    %v1874 = vadd.f32 0.0, %v1873
    %v1875 = vpop.f32.mrb[0].mxu0
    %v1876 = vpop.f32.mrb[0].mxu0
    %v1877 = vadd.f32 0.0, %v1876
    %v1878 = vpop.f32.mrb[0].mxu0
    %1879 = vdwg.mxu0
    %1880 = vmatprep.subr.bf16.mxu0 0
    %1881 = vmatpush1.bf16.msra.mxu0 %v1724
    %1882 = vmatprep.subr.bf16.mxu0 0
    %1883 = vmatpush1.bf16.msra.mxu0 %v1725
    %1884 = vmatprep.subr.bf16.mxu0 0
    %1885 = vmatpush1.bf16.msra.mxu0 0
    %1886 = vmatprep.subr.bf16.mxu0 0
    %1887 = vmatpush1.bf16.msra.mxu0 0
    %1888 = vmatprep.subr.bf16.mxu0 0
    %1889 = vmatpush1.bf16.msra.mxu0 0
    %1890 = vmatprep.subr.bf16.mxu0 0
    %1891 = vmatpush1.bf16.msra.mxu0 0
    %1892 = vmatprep.subr.bf16.mxu0 0
    %1893 = vmatpush1.bf16.msra.mxu0 0
    %1894 = vmatprep.subr.bf16.mxu0 0
    %1895 = vmatpush1.bf16.msra.mxu0 0
    %1896 = vmatprep.subr.bf16.mxu0 0
    %1897 = vmatpush1.bf16.msra.mxu0 0
    %1898 = vmatprep.subr.bf16.mxu0 0
    %1899 = vmatpush1.bf16.msra.mxu0 0
    %1900 = vmatprep.subr.bf16.mxu0 0
    %1901 = vmatpush1.bf16.msra.mxu0 0
    %1902 = vmatprep.subr.bf16.mxu0 0
    %1903 = vmatpush1.bf16.msra.mxu0 0
    %1904 = vmatprep.subr.bf16.mxu0 0
    %1905 = vmatpush1.bf16.msra.mxu0 0
    %1906 = vmatprep.subr.bf16.mxu0 0
    %1907 = vmatpush1.bf16.msra.mxu0 0
    %1908 = vmatprep.subr.bf16.mxu0 0
    %1909 = vmatpush1.bf16.msra.mxu0 0
    %1910 = vmatprep.subr.bf16.mxu0 0
    %1911 = vmatpush1.bf16.msra.mxu0 0
    %1912 = vmatprep.mubr.bf16.mxu0 0
    %1913 = vmatmul.mubr.bf16.gmra.mrb[0].mxu0 %v1804
    %v1914 = vpop.f32.mrb[0].mxu0
    %v1915 = vadd.f32 %v1850, %v1914
    %v1916 = vpop.f32.mrb[0].mxu0
    %v1917 = vpop.f32.mrb[0].mxu0
    %v1918 = vadd.f32 %v1853, %v1917
    %v1919 = vpop.f32.mrb[0].mxu0
    %1920 = vmatprep.mubr.bf16.mxu0 0
    %1921 = vmatmul.mubr.bf16.gmra.mrb[0].mxu0 %v1807
    %v1922 = vpop.f32.mrb[0].mxu0
    %v1923 = vadd.f32 %v1858, %v1922
    %v1924 = vpop.f32.mrb[0].mxu0
    %v1925 = vpop.f32.mrb[0].mxu0
    %v1926 = vadd.f32 %v1861, %v1925
    %v1927 = vpop.f32.mrb[0].mxu0
    %1928 = vmatprep.mubr.bf16.mxu0 0
    %1929 = vmatmul.mubr.bf16.gmra.mrb[0].mxu0 %v1810
    %v1930 = vpop.f32.mrb[0].mxu0
    %v1931 = vadd.f32 %v1866, %v1930
    %v1932 = vpop.f32.mrb[0].mxu0
    %v1933 = vpop.f32.mrb[0].mxu0
    %v1934 = vadd.f32 %v1869, %v1933
    %v1935 = vpop.f32.mrb[0].mxu0
    %1936 = vmatprep.mubr.bf16.mxu0 0
    %1937 = vmatmul.mubr.bf16.gmra.mrb[0].mxu0 %v1813
    %v1938 = vpop.f32.mrb[0].mxu0
    %v1939 = vadd.f32 %v1874, %v1938
    %v1940 = vpop.f32.mrb[0].mxu0
    %v1941 = vpop.f32.mrb[0].mxu0
    %v1942 = vadd.f32 %v1877, %v1941
    %v1943 = vpop.f32.mrb[0].mxu0
    %1944 = vdwg.mxu0
    %v1945 = vld [vmem:[%s10] sm:$0xff]
    %v1946 = vld [vmem:[%s10 + $0x8] sm:$0xff]
    %v1947 = vld [vmem:[%s10 + $0x10] sm:$0xff]
    %v1948 = vld [vmem:[%s10 + $0x18] sm:$0xff]
    %v1949 = vld [vmem:[%s10 + $0x20] sm:$0xff]
    %v1950 = vld [vmem:[%s10 + $0x28] sm:$0xff]
    %v1951 = vld [vmem:[%s10 + $0x30] sm:$0xff]
    %v1952 = vld [vmem:[%s10 + $0x38] sm:$0xff]
    %v1953 = vsel %vm1802, %v1915, 0.0
    %1954 = vadd.xlane.f32.xlu0 %v1953
    %v1955 = vpop.xlane.xlu0 %1954
    %v1956 = vsel %vm1802, %v1918, 0.0
    %1957 = vadd.xlane.f32.xlu0 %v1956
    %v1958 = vpop.xlane.xlu0 %1957
    %v1959 = vsel %vm1802, %v1923, 0.0
    %1960 = vadd.xlane.f32.xlu0 %v1959
    %v1961 = vpop.xlane.xlu0 %1960
    %v1962 = vsel %vm1802, %v1926, 0.0
    %1963 = vadd.xlane.f32.xlu0 %v1962
    %v1964 = vpop.xlane.xlu0 %1963
    %v1965 = vsel %vm1802, %v1931, 0.0
    %1966 = vadd.xlane.f32.xlu0 %v1965
    %v1967 = vpop.xlane.xlu0 %1966
    %v1968 = vsel %vm1802, %v1934, 0.0
    %1969 = vadd.xlane.f32.xlu0 %v1968
    %v1970 = vpop.xlane.xlu0 %1969
    %v1971 = vsel %vm1802, %v1939, 0.0
    %1972 = vadd.xlane.f32.xlu0 %v1971
    %v1973 = vpop.xlane.xlu0 %1972
    %v1974 = vsel %vm1802, %v1942, 0.0
    %1975 = vadd.xlane.f32.xlu0 %v1974
    %v1976 = vpop.xlane.xlu0 %1975
    %v1977 = vmul.f32 %v1955, 0.03125
    %v1978 = vmul.f32 %v1958, 0.03125
    %v1979 = vmul.f32 %v1961, 0.03125
    %v1980 = vmul.f32 %v1964, 0.03125
    %v1981 = vmul.f32 %v1967, 0.03125
    %v1982 = vmul.f32 %v1970, 0.03125
    %v1983 = vmul.f32 %v1973, 0.03125
    %v1984 = vmul.f32 %v1976, 0.03125
    %v1985 = vsub.f32 %v1915, %v1977
    %v1986 = vsub.f32 %v1918, %v1978
    %v1987 = vsub.f32 %v1923, %v1979
    %v1988 = vsub.f32 %v1926, %v1980
    %v1989 = vsub.f32 %v1931, %v1981
    %v1990 = vsub.f32 %v1934, %v1982
    %v1991 = vsub.f32 %v1939, %v1983
    %v1992 = vsub.f32 %v1942, %v1984
    %v1993 = vmul.f32 %v1985, %v1985
    %v1994 = vmul.f32 %v1986, %v1986
    %v1995 = vmul.f32 %v1987, %v1987
    %v1996 = vmul.f32 %v1988, %v1988
    %v1997 = vmul.f32 %v1989, %v1989
    %v1998 = vmul.f32 %v1990, %v1990
    %v1999 = vmul.f32 %v1991, %v1991
    %v2000 = vmul.f32 %v1992, %v1992
    %v2001 = vsel %vm1802, %v1993, 0.0
    %2002 = vadd.xlane.f32.xlu0 %v2001
    %v2003 = vpop.xlane.xlu0 %2002
    %v2004 = vsel %vm1802, %v1994, 0.0
    %2005 = vadd.xlane.f32.xlu0 %v2004
    %v2006 = vpop.xlane.xlu0 %2005
    %v2007 = vsel %vm1802, %v1995, 0.0
    %2008 = vadd.xlane.f32.xlu0 %v2007
    %v2009 = vpop.xlane.xlu0 %2008
    %v2010 = vsel %vm1802, %v1996, 0.0
    %2011 = vadd.xlane.f32.xlu0 %v2010
    %v2012 = vpop.xlane.xlu0 %2011
    %v2013 = vsel %vm1802, %v1997, 0.0
    %2014 = vadd.xlane.f32.xlu0 %v2013
    %v2015 = vpop.xlane.xlu0 %2014
    %v2016 = vsel %vm1802, %v1998, 0.0
    %2017 = vadd.xlane.f32.xlu0 %v2016
    %v2018 = vpop.xlane.xlu0 %2017
    %v2019 = vsel %vm1802, %v1999, 0.0
    %2020 = vadd.xlane.f32.xlu0 %v2019
    %v2021 = vpop.xlane.xlu0 %2020
    %v2022 = vsel %vm1802, %v2000, 0.0
    %2023 = vadd.xlane.f32.xlu0 %v2022
    %v2024 = vpop.xlane.xlu0 %2023
    %v2025 = vmul.f32 %v2003, 0.03125
    %v2026 = vmul.f32 %v2006, 0.03125
    %v2027 = vmul.f32 %v2009, 0.03125
    %v2028 = vmul.f32 %v2012, 0.03125
    %v2029 = vmul.f32 %v2015, 0.03125
    %v2030 = vmul.f32 %v2018, 0.03125
    %v2031 = vmul.f32 %v2021, 0.03125
    %v2032 = vmul.f32 %v2024, 0.03125
    %v2033 = vadd.f32 %v2025, 1e-05
    %v2034 = vadd.f32 %v2026, 1e-05
    %v2035 = vadd.f32 %v2027, 1e-05
    %v2036 = vadd.f32 %v2028, 1e-05
    %v2037 = vadd.f32 %v2029, 1e-05
    %v2038 = vadd.f32 %v2030, 1e-05
    %v2039 = vadd.f32 %v2031, 1e-05
    %v2040 = vadd.f32 %v2032, 1e-05
    %v2041 = vrsqrt.pop %v2033
    %v2042 = vrsqrt.pop %v2034
    %v2043 = vrsqrt.pop %v2035
    %v2044 = vrsqrt.pop %v2036
    %v2045 = vrsqrt.pop %v2037
    %v2046 = vrsqrt.pop %v2038
    %v2047 = vrsqrt.pop %v2039
    %v2048 = vrsqrt.pop %v2040
    %v2049 = vmul.f32 %v1945, %v2041
    %v2050 = vmul.f32 %v1946, %v2042
    %v2051 = vmul.f32 %v1947, %v2043
    %v2052 = vmul.f32 %v1948, %v2044
    %v2053 = vmul.f32 %v1949, %v2045
    %v2054 = vmul.f32 %v1950, %v2046
    %v2055 = vmul.f32 %v1951, %v2047
    %v2056 = vmul.f32 %v1952, %v2048
    %v2057 = vmul.f32 %v1977, %v2049
    %v2058 = vmul.f32 %v1978, %v2050
    %v2059 = vmul.f32 %v1979, %v2051
    %v2060 = vmul.f32 %v1980, %v2052
    %v2061 = vmul.f32 %v1981, %v2053
    %v2062 = vmul.f32 %v1982, %v2054
    %v2063 = vmul.f32 %v1983, %v2055
    %v2064 = vmul.f32 %v1984, %v2056
    %2073 = vrot.lane.b32.xlu0 %v2057, 1
    %v2074 = vpop.permute.xlu0 %2073
    %2075 = vrot.lane.b32.xlu0 %v2058, 1
    %v2076 = vpop.permute.xlu0 %2075
    %2077 = vrot.lane.b32.xlu0 %v2059, 1
    %v2078 = vpop.permute.xlu0 %2077
    %2079 = vrot.lane.b32.xlu0 %v2060, 1
    %v2080 = vpop.permute.xlu0 %2079
    %2081 = vrot.lane.b32.xlu0 %v2061, 1
    %v2082 = vpop.permute.xlu0 %2081
    %2083 = vrot.lane.b32.xlu0 %v2062, 1
    %v2084 = vpop.permute.xlu0 %2083
    %2085 = vrot.lane.b32.xlu0 %v2063, 1
    %v2086 = vpop.permute.xlu0 %2085
    %2087 = vrot.lane.b32.xlu0 %v2064, 1
    %v2088 = vpop.permute.xlu0 %2087
    %v2097 = vsub.f32 %v1945, %v2074
    %v2098 = vsub.f32 %v1946, %v2076
    %v2099 = vsub.f32 %v1947, %v2078
    %v2100 = vsub.f32 %v1948, %v2080
    %v2101 = vsub.f32 %v1949, %v2082
    %v2102 = vsub.f32 %v1950, %v2084
    %v2103 = vsub.f32 %v1951, %v2086
    %v2104 = vsub.f32 %v1952, %v2088
    %2106 = vset.pattern.permute.xlu0 2
    %2107 = vperm.xlu0 %2106, %v2049
    %v2108 = vpop.permute.xlu0 %2107
    %2111 = vset.pattern.permute.xlu0 2
    %2112 = vperm.xlu0 %2111, %v2050
    %v2113 = vpop.permute.xlu0 %2112
    %2116 = vset.pattern.permute.xlu0 2
    %2117 = vperm.xlu0 %2116, %v2051
    %v2118 = vpop.permute.xlu0 %2117
    %2121 = vset.pattern.permute.xlu0 2
    %2122 = vperm.xlu0 %2121, %v2052
    %v2123 = vpop.permute.xlu0 %2122
    %2126 = vset.pattern.permute.xlu0 2
    %2127 = vperm.xlu0 %2126, %v2053
    %v2128 = vpop.permute.xlu0 %2127
    %2131 = vset.pattern.permute.xlu0 2
    %2132 = vperm.xlu0 %2131, %v2054
    %v2133 = vpop.permute.xlu0 %2132
    %2136 = vset.pattern.permute.xlu0 2
    %2137 = vperm.xlu0 %2136, %v2055
    %v2138 = vpop.permute.xlu0 %2137
    %2141 = vset.pattern.permute.xlu0 2
    %2142 = vperm.xlu0 %2141, %v2056
    %v2143 = vpop.permute.xlu0 %2142
    %v2145 = vmul.f32 %v1915, %v2108
    %v2146 = vmul.f32 %v1918, %v2113
    %v2147 = vmul.f32 %v1923, %v2118
    %v2148 = vmul.f32 %v1926, %v2123
    %v2149 = vmul.f32 %v1931, %v2128
    %v2150 = vmul.f32 %v1934, %v2133
    %v2151 = vmul.f32 %v1939, %v2138
    %v2152 = vmul.f32 %v1942, %v2143
    %2154 = vset.pattern.permute.xlu0 3
    %2155 = vperm.xlu0 %2154, %v2097
    %v2156 = vpop.permute.xlu0 %2155
    %2159 = vset.pattern.permute.xlu0 3
    %2160 = vperm.xlu0 %2159, %v2098
    %v2161 = vpop.permute.xlu0 %2160
    %2164 = vset.pattern.permute.xlu0 3
    %2165 = vperm.xlu0 %2164, %v2099
    %v2166 = vpop.permute.xlu0 %2165
    %2169 = vset.pattern.permute.xlu0 3
    %2170 = vperm.xlu0 %2169, %v2100
    %v2171 = vpop.permute.xlu0 %2170
    %2174 = vset.pattern.permute.xlu0 3
    %2175 = vperm.xlu0 %2174, %v2101
    %v2176 = vpop.permute.xlu0 %2175
    %2179 = vset.pattern.permute.xlu0 3
    %2180 = vperm.xlu0 %2179, %v2102
    %v2181 = vpop.permute.xlu0 %2180
    %2184 = vset.pattern.permute.xlu0 3
    %2185 = vperm.xlu0 %2184, %v2103
    %v2186 = vpop.permute.xlu0 %2185
    %2189 = vset.pattern.permute.xlu0 3
    %2190 = vperm.xlu0 %2189, %v2104
    %v2191 = vpop.permute.xlu0 %2190
    %v2193 = vadd.f32 %v2145, %v2156
    %v2194 = vadd.f32 %v2146, %v2161
    %v2195 = vadd.f32 %v2147, %v2166
    %v2196 = vadd.f32 %v2148, %v2171
    %v2197 = vadd.f32 %v2149, %v2176
    %v2198 = vadd.f32 %v2150, %v2181
    %v2199 = vadd.f32 %v2151, %v2186
    %v2200 = vadd.f32 %v2152, %v2191
    %v2201 = vmax.f32 %v2193, 0.0
    %v2202 = vmax.f32 %v2194, 0.0
    %v2203 = vmax.f32 %v2195, 0.0
    %v2204 = vmax.f32 %v2196, 0.0
    %v2205 = vmax.f32 %v2197, 0.0
    %v2206 = vmax.f32 %v2198, 0.0
    %v2207 = vmax.f32 %v2199, 0.0
    %v2208 = vmax.f32 %v2200, 0.0
    %v2209 = vld [vmem:[%s4] sm:$0xff]
    %v2210 = vld [vmem:[%s4 + $0x8] sm:$0xff]
    %v2211 = vld [vmem:[%s4 + $0x10] sm:$0xff]
    %v2212 = vld [vmem:[%s4 + $0x18] sm:$0xff]
    %v2213 = vld [vmem:[%s4 + $0x20] sm:$0xff]
    %v2214 = vld [vmem:[%s4 + $0x28] sm:$0xff]
    %v2215 = vld [vmem:[%s4 + $0x30] sm:$0xff]
    %v2216 = vld [vmem:[%s4 + $0x38] sm:$0xff]
    %v2217 = vunpack.c.l.bf16 %v2209
    %v2218 = vunpack.c.h.bf16 %v2209
    %v2219 = vunpack.c.l.bf16 %v2210
    %v2220 = vunpack.c.h.bf16 %v2210
    %v2221 = vunpack.c.l.bf16 %v2211
    %v2222 = vunpack.c.h.bf16 %v2211
    %v2223 = vunpack.c.l.bf16 %v2212
    %v2224 = vunpack.c.h.bf16 %v2212
    %v2225 = vunpack.c.l.bf16 %v2213
    %v2226 = vunpack.c.h.bf16 %v2213
    %v2227 = vunpack.c.l.bf16 %v2214
    %v2228 = vunpack.c.h.bf16 %v2214
    %v2229 = vunpack.c.l.bf16 %v2215
    %v2230 = vunpack.c.h.bf16 %v2215
    %v2231 = vunpack.c.l.bf16 %v2216
    %v2232 = vunpack.c.h.bf16 %v2216
    %v2233 = vsel %vm1671, %v2201, 0.0
    %2234 = vadd.xlane.f32.xlu0 %v2233
    %v2235 = vpop.xlane.xlu0 %2234
    %v2236 = vsel %vm1671, %v2202, 0.0
    %2237 = vadd.xlane.f32.xlu0 %v2236
    %v2238 = vpop.xlane.xlu0 %2237
    %v2239 = vsel %vm1671, %v2203, 0.0
    %2240 = vadd.xlane.f32.xlu0 %v2239
    %v2241 = vpop.xlane.xlu0 %2240
    %v2242 = vsel %vm1671, %v2204, 0.0
    %2243 = vadd.xlane.f32.xlu0 %v2242
    %v2244 = vpop.xlane.xlu0 %2243
    %v2245 = vsel %vm1671, %v2205, 0.0
    %2246 = vadd.xlane.f32.xlu0 %v2245
    %v2247 = vpop.xlane.xlu0 %2246
    %v2248 = vsel %vm1671, %v2206, 0.0
    %2249 = vadd.xlane.f32.xlu0 %v2248
    %v2250 = vpop.xlane.xlu0 %2249
    %v2251 = vsel %vm1671, %v2207, 0.0
    %2252 = vadd.xlane.f32.xlu0 %v2251
    %v2253 = vpop.xlane.xlu0 %2252
    %v2254 = vsel %vm1671, %v2208, 0.0
    %2255 = vadd.xlane.f32.xlu0 %v2254
    %v2256 = vpop.xlane.xlu0 %2255
    %v2257 = vmul.f32 %v2235, 0.0625
    %v2258 = vmul.f32 %v2238, 0.0625
    %v2259 = vmul.f32 %v2241, 0.0625
    %v2260 = vmul.f32 %v2244, 0.0625
    %v2261 = vmul.f32 %v2247, 0.0625
    %v2262 = vmul.f32 %v2250, 0.0625
    %v2263 = vmul.f32 %v2253, 0.0625
    %v2264 = vmul.f32 %v2256, 0.0625
    %v2265 = vmul.f32 %v2257, %v2217
    %v2266 = vmul.f32 %v2257, %v2218
    %v2267 = vmul.f32 %v2258, %v2219
    %v2268 = vmul.f32 %v2258, %v2220
    %v2269 = vmul.f32 %v2259, %v2221
    %v2270 = vmul.f32 %v2259, %v2222
    %v2271 = vmul.f32 %v2260, %v2223
    %v2272 = vmul.f32 %v2260, %v2224
    %v2273 = vmul.f32 %v2261, %v2225
    %v2274 = vmul.f32 %v2261, %v2226
    %v2275 = vmul.f32 %v2262, %v2227
    %v2276 = vmul.f32 %v2262, %v2228
    %v2277 = vmul.f32 %v2263, %v2229
    %v2278 = vmul.f32 %v2263, %v2230
    %v2279 = vmul.f32 %v2264, %v2231
    %v2280 = vmul.f32 %v2264, %v2232
    %v2281 = vadd.f32 %v2265, %v2267
    %v2282 = vadd.f32 %v2281, %v2269
    %v2283 = vadd.f32 %v2282, %v2271
    %v2284 = vadd.f32 %v2283, %v2273
    %v2285 = vadd.f32 %v2284, %v2275
    %v2286 = vadd.f32 %v2285, %v2277
    %v2287 = vadd.f32 %v2286, %v2279
    %v2288 = vrot.slane %v2287, 4
    %v2289 = vadd.f32 %v2287, %v2288
    %v2290 = vrot.slane %v2289, 2
    %v2291 = vadd.f32 %v2289, %v2290
    %v2292 = vrot.slane %v2291, 1
    %v2293 = vadd.f32 %v2291, %v2292
    %v2294 = vadd.f32 %v2266, %v2268
    %v2295 = vadd.f32 %v2294, %v2270
    %v2296 = vadd.f32 %v2295, %v2272
    %v2297 = vadd.f32 %v2296, %v2274
    %v2298 = vadd.f32 %v2297, %v2276
    %v2299 = vadd.f32 %v2298, %v2278
    %v2300 = vadd.f32 %v2299, %v2280
    %v2301 = vrot.slane %v2300, 4
    %v2302 = vadd.f32 %v2300, %v2301
    %v2303 = vrot.slane %v2302, 2
    %v2304 = vadd.f32 %v2302, %v2303
    %v2305 = vrot.slane %v2304, 1
    %v2306 = vadd.f32 %v2304, %v2305
    %2315 = vrot.lane.b32.xlu0 %v2201, 112
    %v2316 = vpop.permute.xlu0 %2315
    %2317 = vrot.lane.b32.xlu0 %v2202, 112
    %v2318 = vpop.permute.xlu0 %2317
    %2319 = vrot.lane.b32.xlu0 %v2203, 112
    %v2320 = vpop.permute.xlu0 %2319
    %2321 = vrot.lane.b32.xlu0 %v2204, 112
    %v2322 = vpop.permute.xlu0 %2321
    %2323 = vrot.lane.b32.xlu0 %v2205, 112
    %v2324 = vpop.permute.xlu0 %2323
    %2325 = vrot.lane.b32.xlu0 %v2206, 112
    %v2326 = vpop.permute.xlu0 %2325
    %2327 = vrot.lane.b32.xlu0 %v2207, 112
    %v2328 = vpop.permute.xlu0 %2327
    %2329 = vrot.lane.b32.xlu0 %v2208, 112
    %v2330 = vpop.permute.xlu0 %2329
    %v2339 = vsel %vm1671, %v2316, 0.0
    %2340 = vadd.xlane.f32.xlu0 %v2339
    %v2341 = vpop.xlane.xlu0 %2340
    %v2342 = vsel %vm1671, %v2318, 0.0
    %2343 = vadd.xlane.f32.xlu0 %v2342
    %v2344 = vpop.xlane.xlu0 %2343
    %v2345 = vsel %vm1671, %v2320, 0.0
    %2346 = vadd.xlane.f32.xlu0 %v2345
    %v2347 = vpop.xlane.xlu0 %2346
    %v2348 = vsel %vm1671, %v2322, 0.0
    %2349 = vadd.xlane.f32.xlu0 %v2348
    %v2350 = vpop.xlane.xlu0 %2349
    %v2351 = vsel %vm1671, %v2324, 0.0
    %2352 = vadd.xlane.f32.xlu0 %v2351
    %v2353 = vpop.xlane.xlu0 %2352
    %v2354 = vsel %vm1671, %v2326, 0.0
    %2355 = vadd.xlane.f32.xlu0 %v2354
    %v2356 = vpop.xlane.xlu0 %2355
    %v2357 = vsel %vm1671, %v2328, 0.0
    %2358 = vadd.xlane.f32.xlu0 %v2357
    %v2359 = vpop.xlane.xlu0 %2358
    %v2360 = vsel %vm1671, %v2330, 0.0
    %2361 = vadd.xlane.f32.xlu0 %v2360
    %v2362 = vpop.xlane.xlu0 %2361
    %v2363 = vmul.f32 %v2341, 0.0625
    %v2364 = vmul.f32 %v2344, 0.0625
    %v2365 = vmul.f32 %v2347, 0.0625
    %v2366 = vmul.f32 %v2350, 0.0625
    %v2367 = vmul.f32 %v2353, 0.0625
    %v2368 = vmul.f32 %v2356, 0.0625
    %v2369 = vmul.f32 %v2359, 0.0625
    %v2370 = vmul.f32 %v2362, 0.0625
    %v2371 = vmul.f32 %v2363, %v2217
    %v2372 = vmul.f32 %v2363, %v2218
    %v2373 = vmul.f32 %v2364, %v2219
    %v2374 = vmul.f32 %v2364, %v2220
    %v2375 = vmul.f32 %v2365, %v2221
    %v2376 = vmul.f32 %v2365, %v2222
    %v2377 = vmul.f32 %v2366, %v2223
    %v2378 = vmul.f32 %v2366, %v2224
    %v2379 = vmul.f32 %v2367, %v2225
    %v2380 = vmul.f32 %v2367, %v2226
    %v2381 = vmul.f32 %v2368, %v2227
    %v2382 = vmul.f32 %v2368, %v2228
    %v2383 = vmul.f32 %v2369, %v2229
    %v2384 = vmul.f32 %v2369, %v2230
    %v2385 = vmul.f32 %v2370, %v2231
    %v2386 = vmul.f32 %v2370, %v2232
    %v2387 = vadd.f32 %v2371, %v2373
    %v2388 = vadd.f32 %v2387, %v2375
    %v2389 = vadd.f32 %v2388, %v2377
    %v2390 = vadd.f32 %v2389, %v2379
    %v2391 = vadd.f32 %v2390, %v2381
    %v2392 = vadd.f32 %v2391, %v2383
    %v2393 = vadd.f32 %v2392, %v2385
    %v2394 = vrot.slane %v2393, 4
    %v2395 = vadd.f32 %v2393, %v2394
    %v2396 = vrot.slane %v2395, 2
    %v2397 = vadd.f32 %v2395, %v2396
    %v2398 = vrot.slane %v2397, 1
    %v2399 = vadd.f32 %v2397, %v2398
    %v2400 = vadd.f32 %v2372, %v2374
    %v2401 = vadd.f32 %v2400, %v2376
    %v2402 = vadd.f32 %v2401, %v2378
    %v2403 = vadd.f32 %v2402, %v2380
    %v2404 = vadd.f32 %v2403, %v2382
    %v2405 = vadd.f32 %v2404, %v2384
    %v2406 = vadd.f32 %v2405, %v2386
    %v2407 = vrot.slane %v2406, 4
    %v2408 = vadd.f32 %v2406, %v2407
    %v2409 = vrot.slane %v2408, 2
    %v2410 = vadd.f32 %v2408, %v2409
    %v2411 = vrot.slane %v2410, 1
    %v2412 = vadd.f32 %v2410, %v2411
    %vm2413 = vcmask 1040384
    %v2414 = vsel %vm2413, %v2293, %v2399
    %v2415 = vsel %vm2413, %v2306, %v2412
    %v2416 = vld [vmem:[#allocation10] ss:$8 sm:$0x3]
    %v2418 = vlaneseq
    %v2419 = vshrl.u32 %v2418, 7
    %v2420 = vsub.s32 0, %v2419
    %v2421 = vrot.slane %v2416, %v2420
    %v2422 = vlaneseq
    %v2423 = vshrl.u32 %v2422, 7
    %v2424 = vsub.s32 1, %v2423
    %v2425 = vrot.slane %v2416, %v2424
    %v2428 = vadd.f32 %v2414, %v2421
    %v2429 = vadd.f32 %v2415, %v2425
    %v2430 = vmax.f32 %v2428, 0.0
    %v2431 = vmax.f32 %v2429, 0.0
    %v2434 = vcombine.low %v2430, %v2431
    %v2436 = vunpack.c.l.s4 1983009808
    %v2437 = vunpack.c.0.s8 %v2436
    %v2438 = vlaneseq
    %v2439 = vshrl.u32 %v2438, 7
    %v2440 = vsub.s32 %v2437, %v2439
    %v2441 = vrot.slane %v2434, %v2440
    %2443 = vst [vmem:[%s12] sm:$0xf] %v2441
    %v2444 = vld [vmem:[%s5] sm:$0x7]
    %v2445 = vld [vmem:[#allocation6] sm:$0xf]
    %v2448 = vunpack.c.l.s4 1966171168
    %v2449 = vunpack.c.0.s8 %v2448
    %v2450 = vlaneseq
    %v2451 = vshrl.u32 %v2450, 7
    %v2452 = vsub.s32 %v2449, %v2451
    %v2453 = vrot.slane %v2445, %v2452
    %v2454 = vcombine.high %v2453, %v2453
    %v2456 = vunpack.c.l.s4 1966171168
    %v2457 = vunpack.c.0.s8 %v2456
    %v2458 = vlaneseq
    %v2459 = vshrl.u32 %v2458, 7
    %v2460 = vsub.s32 %v2457, %v2459
    %v2461 = vrot.slane %v2453, %v2460
    %v2463 = vunpack.c.l.s4 1966171168
    %v2464 = vunpack.c.0.s8 %v2463
    %v2465 = vlaneseq
    %v2466 = vshrl.u32 %v2465, 7
    %v2467 = vsub.s32 %v2464, %v2466
    %v2468 = vrot.slane %v2454, %v2467
    %v2469 = vcombine.high %v2461, %v2461
    %v2470 = vcombine.high %v2468, %v2468
    %vm2471 = vcmask 15360
    %v2473 = vsel %vm2471, %v2444, 0
    %v2476 = vsel %vm2413, %v2461, 0
    %v2479 = vsel %vm2413, %v2468, 0
    %v2482 = vsel %vm2413, %v2469, 0
    %v2485 = vsel %vm2413, %v2470, 0
    %2487 = vmatprep.subr.bf16.mxu0 %v2479
    %2488 = vmatpush1.bf16.msra.mxu0 %v2476
    %2489 = vmatprep.subr.bf16.mxu0 0
    %2490 = vmatpush1.bf16.msra.mxu0 0
    %2491 = vmatprep.subr.bf16.mxu0 0
    %2492 = vmatpush1.bf16.msra.mxu0 0
    %2493 = vmatprep.subr.bf16.mxu0 0
    %2494 = vmatpush1.bf16.msra.mxu0 0
    %2495 = vmatprep.subr.bf16.mxu0 0
    %2496 = vmatpush1.bf16.msra.mxu0 0
    %2497 = vmatprep.subr.bf16.mxu0 0
    %2498 = vmatpush1.bf16.msra.mxu0 0
    %2499 = vmatprep.subr.bf16.mxu0 0
    %2500 = vmatpush1.bf16.msra.mxu0 0
    %2501 = vmatprep.subr.bf16.mxu0 0
    %2502 = vmatpush1.bf16.msra.mxu0 0
    %2503 = vmatprep.subr.bf16.mxu0 0
    %2504 = vmatpush1.bf16.msra.mxu0 0
    %2505 = vmatprep.subr.bf16.mxu0 0
    %2506 = vmatpush1.bf16.msra.mxu0 0
    %2507 = vmatprep.subr.bf16.mxu0 0
    %2508 = vmatpush1.bf16.msra.mxu0 0
    %2509 = vmatprep.subr.bf16.mxu0 0
    %2510 = vmatpush1.bf16.msra.mxu0 0
    %2511 = vmatprep.subr.bf16.mxu0 0
    %2512 = vmatpush1.bf16.msra.mxu0 0
    %2513 = vmatprep.subr.bf16.mxu0 0
    %2514 = vmatpush1.bf16.msra.mxu0 0
    %2515 = vmatprep.subr.bf16.mxu0 0
    %2516 = vmatpush1.bf16.msra.mxu0 0
    %2517 = vmatprep.subr.bf16.mxu0 0
    %2518 = vmatpush1.bf16.msra.mxu0 0
    %2519 = vmatprep.mubr.bf16.mxu0 0
    %2520 = vmatmul.mubr.bf16.gmra.mrb[0].mxu0 %v2473
    %v2521 = vpop.f32.mrb[0].mxu0
    %v2522 = vadd.f32 0.0, %v2521
    %v2523 = vpop.f32.mrb[0].mxu0
    %v2524 = vadd.f32 0.0, %v2523
    %v2525 = vpop.f32.mrb[0].mxu0
    %v2526 = vpop.f32.mrb[0].mxu0
    %2527 = vdwg.mxu0
    %2528 = vmatprep.subr.bf16.mxu0 %v2485
    %2529 = vmatpush1.bf16.msra.mxu0 %v2482
    %2530 = vmatprep.subr.bf16.mxu0 0
    %2531 = vmatpush1.bf16.msra.mxu0 0
    %2532 = vmatprep.subr.bf16.mxu0 0
    %2533 = vmatpush1.bf16.msra.mxu0 0
    %2534 = vmatprep.subr.bf16.mxu0 0
    %2535 = vmatpush1.bf16.msra.mxu0 0
    %2536 = vmatprep.subr.bf16.mxu0 0
    %2537 = vmatpush1.bf16.msra.mxu0 0
    %2538 = vmatprep.subr.bf16.mxu0 0
    %2539 = vmatpush1.bf16.msra.mxu0 0
    %2540 = vmatprep.subr.bf16.mxu0 0
    %2541 = vmatpush1.bf16.msra.mxu0 0
    %2542 = vmatprep.subr.bf16.mxu0 0
    %2543 = vmatpush1.bf16.msra.mxu0 0
    %2544 = vmatprep.subr.bf16.mxu0 0
    %2545 = vmatpush1.bf16.msra.mxu0 0
    %2546 = vmatprep.subr.bf16.mxu0 0
    %2547 = vmatpush1.bf16.msra.mxu0 0
    %2548 = vmatprep.subr.bf16.mxu0 0
    %2549 = vmatpush1.bf16.msra.mxu0 0
    %2550 = vmatprep.subr.bf16.mxu0 0
    %2551 = vmatpush1.bf16.msra.mxu0 0
    %2552 = vmatprep.subr.bf16.mxu0 0
    %2553 = vmatpush1.bf16.msra.mxu0 0
    %2554 = vmatprep.subr.bf16.mxu0 0
    %2555 = vmatpush1.bf16.msra.mxu0 0
    %2556 = vmatprep.subr.bf16.mxu0 0
    %2557 = vmatpush1.bf16.msra.mxu0 0
    %2558 = vmatprep.subr.bf16.mxu0 0
    %2559 = vmatpush1.bf16.msra.mxu0 0
    %2560 = vmatprep.mubr.bf16.mxu0 0
    %2561 = vmatmul.mubr.bf16.gmra.mrb[0].mxu0 %v2473
    %v2562 = vpop.f32.mrb[0].mxu0
    %v2563 = vadd.f32 0.0, %v2562
    %v2564 = vpop.f32.mrb[0].mxu0
    %v2565 = vadd.f32 0.0, %v2564
    %v2566 = vpop.f32.mrb[0].mxu0
    %v2567 = vpop.f32.mrb[0].mxu0
    %2568 = vdwg.mxu0
    %v2569 = vpack.c.bf16 %v2430, %v2430
    %v2570 = vpack.c.bf16 %v2431, %v2431
    %v2571 = vld [vmem:[%s6] sm:$0xff]
    %v2572 = vld [vmem:[%s6 + $0x8] sm:$0xff]
    %v2573 = vld [vmem:[%s6 + $0x10] sm:$0xff]
    %v2574 = vld [vmem:[%s6 + $0x18] sm:$0xff]
    %v2575 = vld [vmem:[%s6 + $0x20] sm:$0xff]
    %v2576 = vld [vmem:[%s6 + $0x28] sm:$0xff]
    %v2577 = vld [vmem:[%s6 + $0x30] sm:$0xff]
    %v2578 = vld [vmem:[%s6 + $0x38] sm:$0xff]
    %v2579 = vld [vmem:[%s6 + $0x40] sm:$0xff]
    %v2580 = vld [vmem:[%s6 + $0x48] sm:$0xff]
    %v2581 = vld [vmem:[%s6 + $0x50] sm:$0xff]
    %v2582 = vld [vmem:[%s6 + $0x58] sm:$0xff]
    %v2583 = vld [vmem:[%s6 + $0x60] sm:$0xff]
    %v2584 = vld [vmem:[%s6 + $0x68] sm:$0xff]
    %v2585 = vld [vmem:[%s6 + $0x70] sm:$0xff]
    %v2586 = vld [vmem:[%s6 + $0x78] sm:$0xff]
    %v2587 = vld [vmem:[%s6 + $0x80] sm:$0xff]
    %v2588 = vld [vmem:[%s6 + $0x88] sm:$0xff]
    %v2589 = vld [vmem:[%s6 + $0x90] sm:$0xff]
    %v2590 = vld [vmem:[%s6 + $0x98] sm:$0xff]
    %v2591 = vld [vmem:[%s6 + $0xa0] sm:$0xff]
    %v2592 = vld [vmem:[%s6 + $0xa8] sm:$0xff]
    %v2593 = vld [vmem:[%s6 + $0xb0] sm:$0xff]
    %v2594 = vld [vmem:[%s6 + $0xb8] sm:$0xff]
    %v2595 = vld [vmem:[%s6 + $0xc0] sm:$0xff]
    %v2596 = vld [vmem:[%s6 + $0xc8] sm:$0xff]
    %v2597 = vld [vmem:[%s6 + $0xd0] sm:$0xff]
    %v2598 = vld [vmem:[%s6 + $0xd8] sm:$0xff]
    %v2599 = vld [vmem:[%s6 + $0xe0] sm:$0xff]
    %v2600 = vld [vmem:[%s6 + $0xe8] sm:$0xff]
    %v2601 = vld [vmem:[%s6 + $0xf0] sm:$0xff]
    %v2602 = vld [vmem:[%s6 + $0xf8] sm:$0xff]
    %v2603 = vld [vmem:[%s6 + $0x100] sm:$0xff]
    %v2604 = vld [vmem:[%s6 + $0x108] sm:$0xff]
    %v2605 = vld [vmem:[%s6 + $0x110] sm:$0xff]
    %v2606 = vld [vmem:[%s6 + $0x118] sm:$0xff]
    %v2607 = vld [vmem:[%s6 + $0x120] sm:$0xff]
    %v2608 = vld [vmem:[%s6 + $0x128] sm:$0xff]
    %v2609 = vld [vmem:[%s6 + $0x130] sm:$0xff]
    %v2610 = vld [vmem:[%s6 + $0x138] sm:$0xff]
    %v2611 = vld [vmem:[%s6 + $0x140] sm:$0xff]
    %v2612 = vld [vmem:[%s6 + $0x148] sm:$0xff]
    %v2613 = vld [vmem:[%s6 + $0x150] sm:$0xff]
    %v2614 = vld [vmem:[%s6 + $0x158] sm:$0xff]
    %v2615 = vld [vmem:[%s6 + $0x160] sm:$0xff]
    %v2616 = vld [vmem:[%s6 + $0x168] sm:$0xff]
    %v2617 = vld [vmem:[%s6 + $0x170] sm:$0xff]
    %v2618 = vld [vmem:[%s6 + $0x178] sm:$0xff]
    %v2619 = vld [vmem:[%s6 + $0x180] sm:$0xff]
    %v2620 = vld [vmem:[%s6 + $0x188] sm:$0xff]
    %v2621 = vld [vmem:[%s6 + $0x190] sm:$0xff]
    %v2622 = vld [vmem:[%s6 + $0x198] sm:$0xff]
    %v2623 = vld [vmem:[%s6 + $0x1a0] sm:$0xff]
    %v2624 = vld [vmem:[%s6 + $0x1a8] sm:$0xff]
    %v2625 = vld [vmem:[%s6 + $0x1b0] sm:$0xff]
    %v2626 = vld [vmem:[%s6 + $0x1b8] sm:$0xff]
    %v2627 = vld [vmem:[%s6 + $0x1c0] sm:$0xff]
    %v2628 = vld [vmem:[%s6 + $0x1c8] sm:$0xff]
    %v2629 = vld [vmem:[%s6 + $0x1d0] sm:$0xff]
    %v2630 = vld [vmem:[%s6 + $0x1d8] sm:$0xff]
    %v2631 = vld [vmem:[%s6 + $0x1e0] sm:$0xff]
    %v2632 = vld [vmem:[%s6 + $0x1e8] sm:$0xff]
    %v2633 = vld [vmem:[%s6 + $0x1f0] sm:$0xff]
    %v2634 = vld [vmem:[%s6 + $0x1f8] sm:$0xff]
    %v2699 = vunpack.c.l.b16 %v2571
    %v2700 = vunpack.c.h.b16 %v2571
    %v2701 = vunpack.c.l.b16 %v2572
    %v2702 = vunpack.c.h.b16 %v2572
    %v2703 = vunpack.c.l.b16 %v2573
    %v2704 = vunpack.c.h.b16 %v2573
    %v2705 = vunpack.c.l.b16 %v2574
    %v2706 = vunpack.c.h.b16 %v2574
    %v2707 = vunpack.c.l.b16 %v2575
    %v2708 = vunpack.c.h.b16 %v2575
    %v2709 = vunpack.c.l.b16 %v2576
    %v2710 = vunpack.c.h.b16 %v2576
    %v2711 = vunpack.c.l.b16 %v2577
    %v2712 = vunpack.c.h.b16 %v2577
    %v2713 = vunpack.c.l.b16 %v2578
    %v2714 = vunpack.c.h.b16 %v2578
    %v2715 = vunpack.c.l.b16 %v2579
    %v2716 = vunpack.c.h.b16 %v2579
    %v2717 = vunpack.c.l.b16 %v2580
    %v2718 = vunpack.c.h.b16 %v2580
    %v2719 = vunpack.c.l.b16 %v2581
    %v2720 = vunpack.c.h.b16 %v2581
    %v2721 = vunpack.c.l.b16 %v2582
    %v2722 = vunpack.c.h.b16 %v2582
    %v2723 = vunpack.c.l.b16 %v2583
    %v2724 = vunpack.c.h.b16 %v2583
    %v2725 = vunpack.c.l.b16 %v2584
    %v2726 = vunpack.c.h.b16 %v2584
    %v2727 = vunpack.c.l.b16 %v2585
    %v2728 = vunpack.c.h.b16 %v2585
    %v2729 = vunpack.c.l.b16 %v2586
    %v2730 = vunpack.c.h.b16 %v2586
    %v2731 = vunpack.c.l.b16 %v2587
    %v2732 = vunpack.c.h.b16 %v2587
    %v2733 = vunpack.c.l.b16 %v2588
    %v2734 = vunpack.c.h.b16 %v2588
    %v2735 = vunpack.c.l.b16 %v2589
    %v2736 = vunpack.c.h.b16 %v2589
    %v2737 = vunpack.c.l.b16 %v2590
    %v2738 = vunpack.c.h.b16 %v2590
    %v2739 = vunpack.c.l.b16 %v2591
    %v2740 = vunpack.c.h.b16 %v2591
    %v2741 = vunpack.c.l.b16 %v2592
    %v2742 = vunpack.c.h.b16 %v2592
    %v2743 = vunpack.c.l.b16 %v2593
    %v2744 = vunpack.c.h.b16 %v2593
    %v2745 = vunpack.c.l.b16 %v2594
    %v2746 = vunpack.c.h.b16 %v2594
    %v2747 = vunpack.c.l.b16 %v2595
    %v2748 = vunpack.c.h.b16 %v2595
    %v2749 = vunpack.c.l.b16 %v2596
    %v2750 = vunpack.c.h.b16 %v2596
    %v2751 = vunpack.c.l.b16 %v2597
    %v2752 = vunpack.c.h.b16 %v2597
    %v2753 = vunpack.c.l.b16 %v2598
    %v2754 = vunpack.c.h.b16 %v2598
    %v2755 = vunpack.c.l.b16 %v2599
    %v2756 = vunpack.c.h.b16 %v2599
    %v2757 = vunpack.c.l.b16 %v2600
    %v2758 = vunpack.c.h.b16 %v2600
    %v2759 = vunpack.c.l.b16 %v2601
    %v2760 = vunpack.c.h.b16 %v2601
    %v2761 = vunpack.c.l.b16 %v2602
    %v2762 = vunpack.c.h.b16 %v2602
    %v2763 = vunpack.c.l.b16 %v2603
    %v2764 = vunpack.c.h.b16 %v2603
    %v2765 = vunpack.c.l.b16 %v2604
    %v2766 = vunpack.c.h.b16 %v2604
    %v2767 = vunpack.c.l.b16 %v2605
    %v2768 = vunpack.c.h.b16 %v2605
    %v2769 = vunpack.c.l.b16 %v2606
    %v2770 = vunpack.c.h.b16 %v2606
    %v2771 = vunpack.c.l.b16 %v2607
    %v2772 = vunpack.c.h.b16 %v2607
    %v2773 = vunpack.c.l.b16 %v2608
    %v2774 = vunpack.c.h.b16 %v2608
    %v2775 = vunpack.c.l.b16 %v2609
    %v2776 = vunpack.c.h.b16 %v2609
    %v2777 = vunpack.c.l.b16 %v2610
    %v2778 = vunpack.c.h.b16 %v2610
    %v2779 = vunpack.c.l.b16 %v2611
    %v2780 = vunpack.c.h.b16 %v2611
    %v2781 = vunpack.c.l.b16 %v2612
    %v2782 = vunpack.c.h.b16 %v2612
    %v2783 = vunpack.c.l.b16 %v2613
    %v2784 = vunpack.c.h.b16 %v2613
    %v2785 = vunpack.c.l.b16 %v2614
    %v2786 = vunpack.c.h.b16 %v2614
    %v2787 = vunpack.c.l.b16 %v2615
    %v2788 = vunpack.c.h.b16 %v2615
    %v2789 = vunpack.c.l.b16 %v2616
    %v2790 = vunpack.c.h.b16 %v2616
    %v2791 = vunpack.c.l.b16 %v2617
    %v2792 = vunpack.c.h.b16 %v2617
    %v2793 = vunpack.c.l.b16 %v2618
    %v2794 = vunpack.c.h.b16 %v2618
    %v2795 = vunpack.c.l.b16 %v2619
    %v2796 = vunpack.c.h.b16 %v2619
    %v2797 = vunpack.c.l.b16 %v2620
    %v2798 = vunpack.c.h.b16 %v2620
    %v2799 = vunpack.c.l.b16 %v2621
    %v2800 = vunpack.c.h.b16 %v2621
    %v2801 = vunpack.c.l.b16 %v2622
    %v2802 = vunpack.c.h.b16 %v2622
    %v2803 = vunpack.c.l.b16 %v2623
    %v2804 = vunpack.c.h.b16 %v2623
    %v2805 = vunpack.c.l.b16 %v2624
    %v2806 = vunpack.c.h.b16 %v2624
    %v2807 = vunpack.c.l.b16 %v2625
    %v2808 = vunpack.c.h.b16 %v2625
    %v2809 = vunpack.c.l.b16 %v2626
    %v2810 = vunpack.c.h.b16 %v2626
    %v2811 = vunpack.c.l.b16 %v2627
    %v2812 = vunpack.c.h.b16 %v2627
    %v2813 = vunpack.c.l.b16 %v2628
    %v2814 = vunpack.c.h.b16 %v2628
    %v2815 = vunpack.c.l.b16 %v2629
    %v2816 = vunpack.c.h.b16 %v2629
    %v2817 = vunpack.c.l.b16 %v2630
    %v2818 = vunpack.c.h.b16 %v2630
    %v2819 = vunpack.c.l.b16 %v2631
    %v2820 = vunpack.c.h.b16 %v2631
    %v2821 = vunpack.c.l.b16 %v2632
    %v2822 = vunpack.c.h.b16 %v2632
    %v2823 = vunpack.c.l.b16 %v2633
    %v2824 = vunpack.c.h.b16 %v2633
    %v2825 = vunpack.c.l.b16 %v2634
    %v2826 = vunpack.c.h.b16 %v2634
    %v2827 = vpack.c.b16 %v2703, %v2699
    %v2828 = vpack.c.b16 %v2704, %v2700
    %v2829 = vpack.c.b16 %v2705, %v2701
    %v2830 = vpack.c.b16 %v2706, %v2702
    %v2831 = vpack.c.b16 %v2711, %v2707
    %v2832 = vpack.c.b16 %v2712, %v2708
    %v2833 = vpack.c.b16 %v2713, %v2709
    %v2834 = vpack.c.b16 %v2714, %v2710
    %v2835 = vpack.c.b16 %v2719, %v2715
    %v2836 = vpack.c.b16 %v2720, %v2716
    %v2837 = vpack.c.b16 %v2721, %v2717
    %v2838 = vpack.c.b16 %v2722, %v2718
    %v2839 = vpack.c.b16 %v2727, %v2723
    %v2840 = vpack.c.b16 %v2728, %v2724
    %v2841 = vpack.c.b16 %v2729, %v2725
    %v2842 = vpack.c.b16 %v2730, %v2726
    %v2843 = vpack.c.b16 %v2735, %v2731
    %v2844 = vpack.c.b16 %v2736, %v2732
    %v2845 = vpack.c.b16 %v2737, %v2733
    %v2846 = vpack.c.b16 %v2738, %v2734
    %v2847 = vpack.c.b16 %v2743, %v2739
    %v2848 = vpack.c.b16 %v2744, %v2740
    %v2849 = vpack.c.b16 %v2745, %v2741
    %v2850 = vpack.c.b16 %v2746, %v2742
    %v2851 = vpack.c.b16 %v2751, %v2747
    %v2852 = vpack.c.b16 %v2752, %v2748
    %v2853 = vpack.c.b16 %v2753, %v2749
    %v2854 = vpack.c.b16 %v2754, %v2750
    %v2855 = vpack.c.b16 %v2759, %v2755
    %v2856 = vpack.c.b16 %v2760, %v2756
    %v2857 = vpack.c.b16 %v2761, %v2757
    %v2858 = vpack.c.b16 %v2762, %v2758
    %v2859 = vpack.c.b16 %v2767, %v2763
    %v2860 = vpack.c.b16 %v2768, %v2764
    %v2861 = vpack.c.b16 %v2769, %v2765
    %v2862 = vpack.c.b16 %v2770, %v2766
    %v2863 = vpack.c.b16 %v2775, %v2771
    %v2864 = vpack.c.b16 %v2776, %v2772
    %v2865 = vpack.c.b16 %v2777, %v2773
    %v2866 = vpack.c.b16 %v2778, %v2774
    %v2867 = vpack.c.b16 %v2783, %v2779
    %v2868 = vpack.c.b16 %v2784, %v2780
    %v2869 = vpack.c.b16 %v2785, %v2781
    %v2870 = vpack.c.b16 %v2786, %v2782
    %v2871 = vpack.c.b16 %v2791, %v2787
    %v2872 = vpack.c.b16 %v2792, %v2788
    %v2873 = vpack.c.b16 %v2793, %v2789
    %v2874 = vpack.c.b16 %v2794, %v2790
    %v2875 = vpack.c.b16 %v2799, %v2795
    %v2876 = vpack.c.b16 %v2800, %v2796
    %v2877 = vpack.c.b16 %v2801, %v2797
    %v2878 = vpack.c.b16 %v2802, %v2798
    %v2879 = vpack.c.b16 %v2807, %v2803
    %v2880 = vpack.c.b16 %v2808, %v2804
    %v2881 = vpack.c.b16 %v2809, %v2805
    %v2882 = vpack.c.b16 %v2810, %v2806
    %v2883 = vpack.c.b16 %v2815, %v2811
    %v2884 = vpack.c.b16 %v2816, %v2812
    %v2885 = vpack.c.b16 %v2817, %v2813
    %v2886 = vpack.c.b16 %v2818, %v2814
    %v2887 = vpack.c.b16 %v2823, %v2819
    %v2888 = vpack.c.b16 %v2824, %v2820
    %v2889 = vpack.c.b16 %v2825, %v2821
    %v2890 = vpack.c.b16 %v2826, %v2822
    %2955 = vmatprep.subr.bf16.mxu0 %v2828
    %2956 = vmatpush1.bf16.msra.mxu0 %v2827
    %2957 = vmatprep.subr.bf16.mxu0 %v2832
    %2958 = vmatpush1.bf16.msra.mxu0 %v2831
    %2959 = vmatprep.subr.bf16.mxu0 %v2836
    %2960 = vmatpush1.bf16.msra.mxu0 %v2835
    %2961 = vmatprep.subr.bf16.mxu0 %v2840
    %2962 = vmatpush1.bf16.msra.mxu0 %v2839
    %2963 = vmatprep.subr.bf16.mxu0 %v2844
    %2964 = vmatpush1.bf16.msra.mxu0 %v2843
    %2965 = vmatprep.subr.bf16.mxu0 %v2848
    %2966 = vmatpush1.bf16.msra.mxu0 %v2847
    %2967 = vmatprep.subr.bf16.mxu0 %v2852
    %2968 = vmatpush1.bf16.msra.mxu0 %v2851
    %2969 = vmatprep.subr.bf16.mxu0 %v2856
    %2970 = vmatpush1.bf16.msra.mxu0 %v2855
    %2971 = vmatprep.subr.bf16.mxu0 %v2860
    %2972 = vmatpush1.bf16.msra.mxu0 %v2859
    %2973 = vmatprep.subr.bf16.mxu0 %v2864
    %2974 = vmatpush1.bf16.msra.mxu0 %v2863
    %2975 = vmatprep.subr.bf16.mxu0 %v2868
    %2976 = vmatpush1.bf16.msra.mxu0 %v2867
    %2977 = vmatprep.subr.bf16.mxu0 %v2872
    %2978 = vmatpush1.bf16.msra.mxu0 %v2871
    %2979 = vmatprep.subr.bf16.mxu0 %v2876
    %2980 = vmatpush1.bf16.msra.mxu0 %v2875
    %2981 = vmatprep.subr.bf16.mxu0 %v2880
    %2982 = vmatpush1.bf16.msra.mxu0 %v2879
    %2983 = vmatprep.subr.bf16.mxu0 %v2884
    %2984 = vmatpush1.bf16.msra.mxu0 %v2883
    %2985 = vmatprep.subr.bf16.mxu0 %v2888
    %2986 = vmatpush1.bf16.msra.mxu0 %v2887
    %2987 = vmatprep.mubr.bf16.mxu0 %v2570
    %2988 = vmatmul.mubr.bf16.gmra.mrb[0].mxu0 %v2569
    %v2989 = vpop.f32.mrb[0].mxu0
    %v2990 = vadd.f32 %v2522, %v2989
    %v2991 = vpop.f32.mrb[0].mxu0
    %v2992 = vadd.f32 %v2524, %v2991
    %v2993 = vpop.f32.mrb[0].mxu0
    %v2994 = vpop.f32.mrb[0].mxu0
    %2995 = vdwg.mxu0
    %2996 = vmatprep.subr.bf16.mxu0 %v2830
    %2997 = vmatpush1.bf16.msra.mxu0 %v2829
    %2998 = vmatprep.subr.bf16.mxu0 %v2834
    %2999 = vmatpush1.bf16.msra.mxu0 %v2833
    %3000 = vmatprep.subr.bf16.mxu0 %v2838
    %3001 = vmatpush1.bf16.msra.mxu0 %v2837
    %3002 = vmatprep.subr.bf16.mxu0 %v2842
    %3003 = vmatpush1.bf16.msra.mxu0 %v2841
    %3004 = vmatprep.subr.bf16.mxu0 %v2846
    %3005 = vmatpush1.bf16.msra.mxu0 %v2845
    %3006 = vmatprep.subr.bf16.mxu0 %v2850
    %3007 = vmatpush1.bf16.msra.mxu0 %v2849
    %3008 = vmatprep.subr.bf16.mxu0 %v2854
    %3009 = vmatpush1.bf16.msra.mxu0 %v2853
    %3010 = vmatprep.subr.bf16.mxu0 %v2858
    %3011 = vmatpush1.bf16.msra.mxu0 %v2857
    %3012 = vmatprep.subr.bf16.mxu0 %v2862
    %3013 = vmatpush1.bf16.msra.mxu0 %v2861
    %3014 = vmatprep.subr.bf16.mxu0 %v2866
    %3015 = vmatpush1.bf16.msra.mxu0 %v2865
    %3016 = vmatprep.subr.bf16.mxu0 %v2870
    %3017 = vmatpush1.bf16.msra.mxu0 %v2869
    %3018 = vmatprep.subr.bf16.mxu0 %v2874
    %3019 = vmatpush1.bf16.msra.mxu0 %v2873
    %3020 = vmatprep.subr.bf16.mxu0 %v2878
    %3021 = vmatpush1.bf16.msra.mxu0 %v2877
    %3022 = vmatprep.subr.bf16.mxu0 %v2882
    %3023 = vmatpush1.bf16.msra.mxu0 %v2881
    %3024 = vmatprep.subr.bf16.mxu0 %v2886
    %3025 = vmatpush1.bf16.msra.mxu0 %v2885
    %3026 = vmatprep.subr.bf16.mxu0 %v2890
    %3027 = vmatpush1.bf16.msra.mxu0 %v2889
    %3028 = vmatprep.mubr.bf16.mxu0 %v2570
    %3029 = vmatmul.mubr.bf16.gmra.mrb[0].mxu0 %v2569
    %v3030 = vpop.f32.mrb[0].mxu0
    %v3031 = vadd.f32 %v2563, %v3030
    %v3032 = vpop.f32.mrb[0].mxu0
    %v3033 = vadd.f32 %v2565, %v3032
    %v3034 = vpop.f32.mrb[0].mxu0
    %v3035 = vpop.f32.mrb[0].mxu0
    %3036 = vdwg.mxu0
    %s3037 = scalar_lea.vmem [#allocation10], 1
    %v3038 = vld [vmem:[%s3037] ss:$8 sm:$0xf]
    %s3039 = scalar_lea.vmem [#allocation10], 2
    %v3040 = vld [vmem:[%s3039] ss:$8 sm:$0xf]
    %vm3041 = vcmask 1041408
    %v3042 = vsel %vm3041, %v2990, 0.0
    %v3043 = vrot.slane %v3042, 4
    %v3044 = vadd.f32 %v3042, %v3043
    %v3045 = vrot.slane %v3044, 2
    %v3046 = vadd.f32 %v3044, %v3045
    %v3047 = vrot.slane %v3046, 1
    %v3048 = vadd.f32 %v3046, %v3047
    %v3049 = vsel %vm3041, %v2992, 0.0
    %v3050 = vrot.slane %v3049, 4
    %v3051 = vadd.f32 %v3049, %v3050
    %v3052 = vrot.slane %v3051, 2
    %v3053 = vadd.f32 %v3051, %v3052
    %v3054 = vrot.slane %v3053, 1
    %v3055 = vadd.f32 %v3053, %v3054
    %v3056 = vsel %vm3041, %v3031, 0.0
    %v3057 = vrot.slane %v3056, 4
    %v3058 = vadd.f32 %v3056, %v3057
    %v3059 = vrot.slane %v3058, 2
    %v3060 = vadd.f32 %v3058, %v3059
    %v3061 = vrot.slane %v3060, 1
    %v3062 = vadd.f32 %v3060, %v3061
    %v3063 = vsel %vm3041, %v3033, 0.0
    %v3064 = vrot.slane %v3063, 4
    %v3065 = vadd.f32 %v3063, %v3064
    %v3066 = vrot.slane %v3065, 2
    %v3067 = vadd.f32 %v3065, %v3066
    %v3068 = vrot.slane %v3067, 1
    %v3069 = vadd.f32 %v3067, %v3068
    %v3070 = vmul.f32 %v3048, 0.5
    %v3071 = vmul.f32 %v3055, 0.5
    %v3072 = vmul.f32 %v3062, 0.5
    %v3073 = vmul.f32 %v3069, 0.5
    %v3074 = vsub.f32 %v2990, %v3070
    %v3075 = vsub.f32 %v2992, %v3071
    %v3076 = vsub.f32 %v3031, %v3072
    %v3077 = vsub.f32 %v3033, %v3073
    %v3078 = vmul.f32 %v3074, %v3074
    %v3079 = vmul.f32 %v3075, %v3075
    %v3080 = vmul.f32 %v3076, %v3076
    %v3081 = vmul.f32 %v3077, %v3077
    %v3082 = vsel %vm3041, %v3078, 0.0
    %v3083 = vrot.slane %v3082, 4
    %v3084 = vadd.f32 %v3082, %v3083
    %v3085 = vrot.slane %v3084, 2
    %v3086 = vadd.f32 %v3084, %v3085
    %v3087 = vrot.slane %v3086, 1
    %v3088 = vadd.f32 %v3086, %v3087
    %v3089 = vsel %vm3041, %v3079, 0.0
    %v3090 = vrot.slane %v3089, 4
    %v3091 = vadd.f32 %v3089, %v3090
    %v3092 = vrot.slane %v3091, 2
    %v3093 = vadd.f32 %v3091, %v3092
    %v3094 = vrot.slane %v3093, 1
    %v3095 = vadd.f32 %v3093, %v3094
    %v3096 = vsel %vm3041, %v3080, 0.0
    %v3097 = vrot.slane %v3096, 4
    %v3098 = vadd.f32 %v3096, %v3097
    %v3099 = vrot.slane %v3098, 2
    %v3100 = vadd.f32 %v3098, %v3099
    %v3101 = vrot.slane %v3100, 1
    %v3102 = vadd.f32 %v3100, %v3101
    %v3103 = vsel %vm3041, %v3081, 0.0
    %v3104 = vrot.slane %v3103, 4
    %v3105 = vadd.f32 %v3103, %v3104
    %v3106 = vrot.slane %v3105, 2
    %v3107 = vadd.f32 %v3105, %v3106
    %v3108 = vrot.slane %v3107, 1
    %v3109 = vadd.f32 %v3107, %v3108
    %v3110 = vmul.f32 %v3088, 0.5
    %v3111 = vmul.f32 %v3095, 0.5
    %v3112 = vmul.f32 %v3102, 0.5
    %v3113 = vmul.f32 %v3109, 0.5
    %v3114 = vadd.f32 %v3110, 1e-05
    %v3115 = vadd.f32 %v3111, 1e-05
    %v3116 = vadd.f32 %v3112, 1e-05
    %v3117 = vadd.f32 %v3113, 1e-05
    %v3118 = vrsqrt.pop %v3114
    %v3119 = vrsqrt.pop %v3115
    %v3120 = vrsqrt.pop %v3116
    %v3121 = vrsqrt.pop %v3117
    %v3126 = vcombine.low %v3118, %v3119
    %v3127 = vcombine.low %v3120, %v3121
    %v3129 = vunpack.c.l.s4 1966171168
    %v3130 = vunpack.c.0.s8 %v3129
    %v3131 = vlaneseq
    %v3132 = vshrl.u32 %v3131, 7
    %v3133 = vsub.s32 %v3130, %v3132
    %v3134 = vrot.slane %v3126, %v3133
    %v3136 = vunpack.c.l.s4 1966171168
    %v3137 = vunpack.c.0.s8 %v3136
    %v3138 = vlaneseq
    %v3139 = vshrl.u32 %v3138, 7
    %v3140 = vsub.s32 %v3137, %v3139
    %v3141 = vrot.slane %v3127, %v3140
    %v3142 = vcombine.low %v3134, %v3141
    %v3144 = vunpack.c.l.s4 1966171168
    %v3145 = vunpack.c.0.s8 %v3144
    %v3146 = vlaneseq
    %v3147 = vshrl.u32 %v3146, 7
    %v3148 = vsub.s32 %v3145, %v3147
    %v3149 = vrot.slane %v3142, %v3148
    %v3151 = vmul.f32 %v3038, %v3149
    %v3153 = vlaneseq
    %v3154 = vshrl.u32 %v3153, 7
    %v3155 = vsub.s32 0, %v3154
    %v3156 = vrot.slane %v3151, %v3155
    %v3157 = vlaneseq
    %v3158 = vshrl.u32 %v3157, 7
    %v3159 = vsub.s32 1, %v3158
    %v3160 = vrot.slane %v3151, %v3159
    %v3161 = vlaneseq
    %v3162 = vshrl.u32 %v3161, 7
    %v3163 = vsub.s32 2, %v3162
    %v3164 = vrot.slane %v3151, %v3163
    %v3165 = vlaneseq
    %v3166 = vshrl.u32 %v3165, 7
    %v3167 = vsub.s32 3, %v3166
    %v3168 = vrot.slane %v3151, %v3167
    %v3173 = vmul.f32 %v3070, %v3156
    %v3174 = vmul.f32 %v3071, %v3160
    %v3175 = vmul.f32 %v3072, %v3164
    %v3176 = vmul.f32 %v3073, %v3168
    %v3181 = vcombine.low %v3173, %v3174
    %v3182 = vcombine.low %v3175, %v3176
    %v3184 = vunpack.c.l.s4 1966171168
    %v3185 = vunpack.c.0.s8 %v3184
    %v3186 = vlaneseq
    %v3187 = vshrl.u32 %v3186, 7
    %v3188 = vsub.s32 %v3185, %v3187
    %v3189 = vrot.slane %v3181, %v3188
    %v3191 = vunpack.c.l.s4 1966171168
    %v3192 = vunpack.c.0.s8 %v3191
    %v3193 = vlaneseq
    %v3194 = vshrl.u32 %v3193, 7
    %v3195 = vsub.s32 %v3192, %v3194
    %v3196 = vrot.slane %v3182, %v3195
    %v3197 = vcombine.low %v3189, %v3196
    %v3199 = vunpack.c.l.s4 1966171168
    %v3200 = vunpack.c.0.s8 %v3199
    %v3201 = vlaneseq
    %v3202 = vshrl.u32 %v3201, 7
    %v3203 = vsub.s32 %v3200, %v3202
    %v3204 = vrot.slane %v3197, %v3203
    %v3206 = vsub.f32 %v3040, %v3204
    %v3207 = vmul.f32 %v2990, %v3156
    %v3208 = vmul.f32 %v2992, %v3160
    %v3209 = vmul.f32 %v3031, %v3164
    %v3210 = vmul.f32 %v3033, %v3168
    %v3212 = vlaneseq
    %v3213 = vshrl.u32 %v3212, 7
    %v3214 = vsub.s32 0, %v3213
    %v3215 = vrot.slane %v3206, %v3214
    %v3216 = vlaneseq
    %v3217 = vshrl.u32 %v3216, 7
    %v3218 = vsub.s32 1, %v3217
    %v3219 = vrot.slane %v3206, %v3218
    %v3220 = vlaneseq
    %v3221 = vshrl.u32 %v3220, 7
    %v3222 = vsub.s32 2, %v3221
    %v3223 = vrot.slane %v3206, %v3222
    %v3224 = vlaneseq
    %v3225 = vshrl.u32 %v3224, 7
    %v3226 = vsub.s32 3, %v3225
    %v3227 = vrot.slane %v3206, %v3226
    %v3232 = vadd.f32 %v3207, %v3215
    %v3233 = vadd.f32 %v3208, %v3219
    %v3234 = vadd.f32 %v3209, %v3223
    %v3235 = vadd.f32 %v3210, %v3227
    %v3236 = vmax.f32 %v3232, 0.0
    %v3237 = vmax.f32 %v3233, 0.0
    %v3238 = vmax.f32 %v3234, 0.0
    %v3239 = vmax.f32 %v3235, 0.0
    %v3240 = vpack.c.bf16 %v3236, %v3236
    %v3241 = vpack.c.bf16 %v3237, %v3237
    %v3242 = vpack.c.bf16 %v3238, %v3238
    %v3243 = vpack.c.bf16 %v3239, %v3239
    %v3244 = vld [vmem:[#allocation7] sm:$0xff]
    %v3245 = vld [vmem:[#allocation7 + $0x8] sm:$0xff]
    %v3246 = vld [vmem:[#allocation7 + $0x10] sm:$0xff]
    %v3247 = vld [vmem:[#allocation7 + $0x18] sm:$0xff]
    %v3248 = vld [vmem:[#allocation7 + $0x20] sm:$0xff]
    %v3249 = vld [vmem:[#allocation7 + $0x28] sm:$0xff]
    %v3250 = vld [vmem:[#allocation7 + $0x30] sm:$0xff]
    %v3251 = vld [vmem:[#allocation7 + $0x38] sm:$0xff]
    %v3252 = vld [vmem:[#allocation7 + $0x40] sm:$0xff]
    %v3253 = vld [vmem:[#allocation7 + $0x48] sm:$0xff]
    %v3254 = vld [vmem:[#allocation7 + $0x50] sm:$0xff]
    %v3255 = vld [vmem:[#allocation7 + $0x58] sm:$0xff]
    %v3256 = vld [vmem:[#allocation7 + $0x60] sm:$0xff]
    %v3257 = vld [vmem:[#allocation7 + $0x68] sm:$0xff]
    %v3258 = vld [vmem:[#allocation7 + $0x70] sm:$0xff]
    %v3259 = vld [vmem:[#allocation7 + $0x78] sm:$0xff]
    %v3260 = vld [vmem:[#allocation7 + $0x80] sm:$0xff]
    %v3261 = vld [vmem:[#allocation7 + $0x88] sm:$0xff]
    %v3262 = vld [vmem:[#allocation7 + $0x90] sm:$0xff]
    %v3263 = vld [vmem:[#allocation7 + $0x98] sm:$0xff]
    %v3264 = vld [vmem:[#allocation7 + $0xa0] sm:$0xff]
    %v3265 = vld [vmem:[#allocation7 + $0xa8] sm:$0xff]
    %v3266 = vld [vmem:[#allocation7 + $0xb0] sm:$0xff]
    %v3267 = vld [vmem:[#allocation7 + $0xb8] sm:$0xff]
    %v3268 = vld [vmem:[#allocation7 + $0xc0] sm:$0xff]
    %v3269 = vld [vmem:[#allocation7 + $0xc8] sm:$0xff]
    %v3270 = vld [vmem:[#allocation7 + $0xd0] sm:$0xff]
    %v3271 = vld [vmem:[#allocation7 + $0xd8] sm:$0xff]
    %v3272 = vld [vmem:[#allocation7 + $0xe0] sm:$0xff]
    %v3273 = vld [vmem:[#allocation7 + $0xe8] sm:$0xff]
    %v3274 = vld [vmem:[#allocation7 + $0xf0] sm:$0xff]
    %v3275 = vld [vmem:[#allocation7 + $0xf8] sm:$0xff]
    %v3276 = vld [vmem:[#allocation7 + $0x100] sm:$0xff]
    %v3277 = vld [vmem:[#allocation7 + $0x108] sm:$0xff]
    %v3278 = vld [vmem:[#allocation7 + $0x110] sm:$0xff]
    %v3279 = vld [vmem:[#allocation7 + $0x118] sm:$0xff]
    %v3280 = vld [vmem:[#allocation7 + $0x120] sm:$0xff]
    %v3281 = vld [vmem:[#allocation7 + $0x128] sm:$0xff]
    %v3282 = vld [vmem:[#allocation7 + $0x130] sm:$0xff]
    %v3283 = vld [vmem:[#allocation7 + $0x138] sm:$0xff]
    %v3284 = vld [vmem:[#allocation7 + $0x140] sm:$0xff]
    %v3285 = vld [vmem:[#allocation7 + $0x148] sm:$0xff]
    %v3286 = vld [vmem:[#allocation7 + $0x150] sm:$0xff]
    %v3287 = vld [vmem:[#allocation7 + $0x158] sm:$0xff]
    %v3288 = vld [vmem:[#allocation7 + $0x160] sm:$0xff]
    %v3289 = vld [vmem:[#allocation7 + $0x168] sm:$0xff]
    %v3290 = vld [vmem:[#allocation7 + $0x170] sm:$0xff]
    %v3291 = vld [vmem:[#allocation7 + $0x178] sm:$0xff]
    %v3292 = vld [vmem:[#allocation7 + $0x180] sm:$0xff]
    %v3293 = vld [vmem:[#allocation7 + $0x188] sm:$0xff]
    %v3294 = vld [vmem:[#allocation7 + $0x190] sm:$0xff]
    %v3295 = vld [vmem:[#allocation7 + $0x198] sm:$0xff]
    %v3296 = vld [vmem:[#allocation7 + $0x1a0] sm:$0xff]
    %v3297 = vld [vmem:[#allocation7 + $0x1a8] sm:$0xff]
    %v3298 = vld [vmem:[#allocation7 + $0x1b0] sm:$0xff]
    %v3299 = vld [vmem:[#allocation7 + $0x1b8] sm:$0xff]
    %v3300 = vld [vmem:[#allocation7 + $0x1c0] sm:$0xff]
    %v3301 = vld [vmem:[#allocation7 + $0x1c8] sm:$0xff]
    %v3302 = vld [vmem:[#allocation7 + $0x1d0] sm:$0xff]
    %v3303 = vld [vmem:[#allocation7 + $0x1d8] sm:$0xff]
    %v3304 = vld [vmem:[#allocation7 + $0x1e0] sm:$0xff]
    %v3305 = vld [vmem:[#allocation7 + $0x1e8] sm:$0xff]
    %v3306 = vld [vmem:[#allocation7 + $0x1f0] sm:$0xff]
    %v3307 = vld [vmem:[#allocation7 + $0x1f8] sm:$0xff]
    %v3372 = vunpack.c.l.b16 %v3244
    %v3373 = vunpack.c.h.b16 %v3244
    %v3374 = vunpack.c.l.b16 %v3245
    %v3375 = vunpack.c.h.b16 %v3245
    %v3376 = vunpack.c.l.b16 %v3246
    %v3377 = vunpack.c.h.b16 %v3246
    %v3378 = vunpack.c.l.b16 %v3247
    %v3379 = vunpack.c.h.b16 %v3247
    %v3380 = vunpack.c.l.b16 %v3248
    %v3381 = vunpack.c.h.b16 %v3248
    %v3382 = vunpack.c.l.b16 %v3249
    %v3383 = vunpack.c.h.b16 %v3249
    %v3384 = vunpack.c.l.b16 %v3250
    %v3385 = vunpack.c.h.b16 %v3250
    %v3386 = vunpack.c.l.b16 %v3251
    %v3387 = vunpack.c.h.b16 %v3251
    %v3388 = vunpack.c.l.b16 %v3252
    %v3389 = vunpack.c.h.b16 %v3252
    %v3390 = vunpack.c.l.b16 %v3253
    %v3391 = vunpack.c.h.b16 %v3253
    %v3392 = vunpack.c.l.b16 %v3254
    %v3393 = vunpack.c.h.b16 %v3254
    %v3394 = vunpack.c.l.b16 %v3255
    %v3395 = vunpack.c.h.b16 %v3255
    %v3396 = vunpack.c.l.b16 %v3256
    %v3397 = vunpack.c.h.b16 %v3256
    %v3398 = vunpack.c.l.b16 %v3257
    %v3399 = vunpack.c.h.b16 %v3257
    %v3400 = vunpack.c.l.b16 %v3258
    %v3401 = vunpack.c.h.b16 %v3258
    %v3402 = vunpack.c.l.b16 %v3259
    %v3403 = vunpack.c.h.b16 %v3259
    %v3404 = vunpack.c.l.b16 %v3260
    %v3405 = vunpack.c.h.b16 %v3260
    %v3406 = vunpack.c.l.b16 %v3261
    %v3407 = vunpack.c.h.b16 %v3261
    %v3408 = vunpack.c.l.b16 %v3262
    %v3409 = vunpack.c.h.b16 %v3262
    %v3410 = vunpack.c.l.b16 %v3263
    %v3411 = vunpack.c.h.b16 %v3263
    %v3412 = vunpack.c.l.b16 %v3264
    %v3413 = vunpack.c.h.b16 %v3264
    %v3414 = vunpack.c.l.b16 %v3265
    %v3415 = vunpack.c.h.b16 %v3265
    %v3416 = vunpack.c.l.b16 %v3266
    %v3417 = vunpack.c.h.b16 %v3266
    %v3418 = vunpack.c.l.b16 %v3267
    %v3419 = vunpack.c.h.b16 %v3267
    %v3420 = vunpack.c.l.b16 %v3268
    %v3421 = vunpack.c.h.b16 %v3268
    %v3422 = vunpack.c.l.b16 %v3269
    %v3423 = vunpack.c.h.b16 %v3269
    %v3424 = vunpack.c.l.b16 %v3270
    %v3425 = vunpack.c.h.b16 %v3270
    %v3426 = vunpack.c.l.b16 %v3271
    %v3427 = vunpack.c.h.b16 %v3271
    %v3428 = vunpack.c.l.b16 %v3272
    %v3429 = vunpack.c.h.b16 %v3272
    %v3430 = vunpack.c.l.b16 %v3273
    %v3431 = vunpack.c.h.b16 %v3273
    %v3432 = vunpack.c.l.b16 %v3274
    %v3433 = vunpack.c.h.b16 %v3274
    %v3434 = vunpack.c.l.b16 %v3275
    %v3435 = vunpack.c.h.b16 %v3275
    %v3436 = vunpack.c.l.b16 %v3276
    %v3437 = vunpack.c.h.b16 %v3276
    %v3438 = vunpack.c.l.b16 %v3277
    %v3439 = vunpack.c.h.b16 %v3277
    %v3440 = vunpack.c.l.b16 %v3278
    %v3441 = vunpack.c.h.b16 %v3278
    %v3442 = vunpack.c.l.b16 %v3279
    %v3443 = vunpack.c.h.b16 %v3279
    %v3444 = vunpack.c.l.b16 %v3280
    %v3445 = vunpack.c.h.b16 %v3280
    %v3446 = vunpack.c.l.b16 %v3281
    %v3447 = vunpack.c.h.b16 %v3281
    %v3448 = vunpack.c.l.b16 %v3282
    %v3449 = vunpack.c.h.b16 %v3282
    %v3450 = vunpack.c.l.b16 %v3283
    %v3451 = vunpack.c.h.b16 %v3283
    %v3452 = vunpack.c.l.b16 %v3284
    %v3453 = vunpack.c.h.b16 %v3284
    %v3454 = vunpack.c.l.b16 %v3285
    %v3455 = vunpack.c.h.b16 %v3285
    %v3456 = vunpack.c.l.b16 %v3286
    %v3457 = vunpack.c.h.b16 %v3286
    %v3458 = vunpack.c.l.b16 %v3287
    %v3459 = vunpack.c.h.b16 %v3287
    %v3460 = vunpack.c.l.b16 %v3288
    %v3461 = vunpack.c.h.b16 %v3288
    %v3462 = vunpack.c.l.b16 %v3289
    %v3463 = vunpack.c.h.b16 %v3289
    %v3464 = vunpack.c.l.b16 %v3290
    %v3465 = vunpack.c.h.b16 %v3290
    %v3466 = vunpack.c.l.b16 %v3291
    %v3467 = vunpack.c.h.b16 %v3291
    %v3468 = vunpack.c.l.b16 %v3292
    %v3469 = vunpack.c.h.b16 %v3292
    %v3470 = vunpack.c.l.b16 %v3293
    %v3471 = vunpack.c.h.b16 %v3293
    %v3472 = vunpack.c.l.b16 %v3294
    %v3473 = vunpack.c.h.b16 %v3294
    %v3474 = vunpack.c.l.b16 %v3295
    %v3475 = vunpack.c.h.b16 %v3295
    %v3476 = vunpack.c.l.b16 %v3296
    %v3477 = vunpack.c.h.b16 %v3296
    %v3478 = vunpack.c.l.b16 %v3297
    %v3479 = vunpack.c.h.b16 %v3297
    %v3480 = vunpack.c.l.b16 %v3298
    %v3481 = vunpack.c.h.b16 %v3298
    %v3482 = vunpack.c.l.b16 %v3299
    %v3483 = vunpack.c.h.b16 %v3299
    %v3484 = vunpack.c.l.b16 %v3300
    %v3485 = vunpack.c.h.b16 %v3300
    %v3486 = vunpack.c.l.b16 %v3301
    %v3487 = vunpack.c.h.b16 %v3301
    %v3488 = vunpack.c.l.b16 %v3302
    %v3489 = vunpack.c.h.b16 %v3302
    %v3490 = vunpack.c.l.b16 %v3303
    %v3491 = vunpack.c.h.b16 %v3303
    %v3492 = vunpack.c.l.b16 %v3304
    %v3493 = vunpack.c.h.b16 %v3304
    %v3494 = vunpack.c.l.b16 %v3305
    %v3495 = vunpack.c.h.b16 %v3305
    %v3496 = vunpack.c.l.b16 %v3306
    %v3497 = vunpack.c.h.b16 %v3306
    %v3498 = vunpack.c.l.b16 %v3307
    %v3499 = vunpack.c.h.b16 %v3307
    %v3500 = vpack.c.b16 %v3374, %v3372
    %v3501 = vpack.c.b16 %v3375, %v3373
    %v3502 = vpack.c.b16 %v3378, %v3376
    %v3503 = vpack.c.b16 %v3379, %v3377
    %v3504 = vpack.c.b16 %v3382, %v3380
    %v3505 = vpack.c.b16 %v3383, %v3381
    %v3506 = vpack.c.b16 %v3386, %v3384
    %v3507 = vpack.c.b16 %v3387, %v3385
    %v3508 = vpack.c.b16 %v3390, %v3388
    %v3509 = vpack.c.b16 %v3391, %v3389
    %v3510 = vpack.c.b16 %v3394, %v3392
    %v3511 = vpack.c.b16 %v3395, %v3393
    %v3512 = vpack.c.b16 %v3398, %v3396
    %v3513 = vpack.c.b16 %v3399, %v3397
    %v3514 = vpack.c.b16 %v3402, %v3400
    %v3515 = vpack.c.b16 %v3403, %v3401
    %v3516 = vpack.c.b16 %v3406, %v3404
    %v3517 = vpack.c.b16 %v3407, %v3405
    %v3518 = vpack.c.b16 %v3410, %v3408
    %v3519 = vpack.c.b16 %v3411, %v3409
    %v3520 = vpack.c.b16 %v3414, %v3412
    %v3521 = vpack.c.b16 %v3415, %v3413
    %v3522 = vpack.c.b16 %v3418, %v3416
    %v3523 = vpack.c.b16 %v3419, %v3417
    %v3524 = vpack.c.b16 %v3422, %v3420
    %v3525 = vpack.c.b16 %v3423, %v3421
    %v3526 = vpack.c.b16 %v3426, %v3424
    %v3527 = vpack.c.b16 %v3427, %v3425
    %v3528 = vpack.c.b16 %v3430, %v3428
    %v3529 = vpack.c.b16 %v3431, %v3429
    %v3530 = vpack.c.b16 %v3434, %v3432
    %v3531 = vpack.c.b16 %v3435, %v3433
    %v3532 = vpack.c.b16 %v3438, %v3436
    %v3533 = vpack.c.b16 %v3439, %v3437
    %v3534 = vpack.c.b16 %v3442, %v3440
    %v3535 = vpack.c.b16 %v3443, %v3441
    %v3536 = vpack.c.b16 %v3446, %v3444
    %v3537 = vpack.c.b16 %v3447, %v3445
    %v3538 = vpack.c.b16 %v3450, %v3448
    %v3539 = vpack.c.b16 %v3451, %v3449
    %v3540 = vpack.c.b16 %v3454, %v3452
    %v3541 = vpack.c.b16 %v3455, %v3453
    %v3542 = vpack.c.b16 %v3458, %v3456
    %v3543 = vpack.c.b16 %v3459, %v3457
    %v3544 = vpack.c.b16 %v3462, %v3460
    %v3545 = vpack.c.b16 %v3463, %v3461
    %v3546 = vpack.c.b16 %v3466, %v3464
    %v3547 = vpack.c.b16 %v3467, %v3465
    %v3548 = vpack.c.b16 %v3470, %v3468
    %v3549 = vpack.c.b16 %v3471, %v3469
    %v3550 = vpack.c.b16 %v3474, %v3472
    %v3551 = vpack.c.b16 %v3475, %v3473
    %v3552 = vpack.c.b16 %v3478, %v3476
    %v3553 = vpack.c.b16 %v3479, %v3477
    %v3554 = vpack.c.b16 %v3482, %v3480
    %v3555 = vpack.c.b16 %v3483, %v3481
    %v3556 = vpack.c.b16 %v3486, %v3484
    %v3557 = vpack.c.b16 %v3487, %v3485
    %v3558 = vpack.c.b16 %v3490, %v3488
    %v3559 = vpack.c.b16 %v3491, %v3489
    %v3560 = vpack.c.b16 %v3494, %v3492
    %v3561 = vpack.c.b16 %v3495, %v3493
    %v3562 = vpack.c.b16 %v3498, %v3496
    %v3563 = vpack.c.b16 %v3499, %v3497
    %3628 = vmatprep.subr.bf16.mxu0 %v3501
    %3629 = vmatpush1.bf16.msra.mxu0 %v3500
    %3630 = vmatprep.subr.bf16.mxu0 %v3503
    %3631 = vmatpush1.bf16.msra.mxu0 %v3502
    %3632 = vmatprep.subr.bf16.mxu0 %v3505
    %3633 = vmatpush1.bf16.msra.mxu0 %v3504
    %3634 = vmatprep.subr.bf16.mxu0 %v3507
    %3635 = vmatpush1.bf16.msra.mxu0 %v3506
    %3636 = vmatprep.subr.bf16.mxu0 %v3509
    %3637 = vmatpush1.bf16.msra.mxu0 %v3508
    %3638 = vmatprep.subr.bf16.mxu0 %v3511
    %3639 = vmatpush1.bf16.msra.mxu0 %v3510
    %3640 = vmatprep.subr.bf16.mxu0 %v3513
    %3641 = vmatpush1.bf16.msra.mxu0 %v3512
    %3642 = vmatprep.subr.bf16.mxu0 %v3515
    %3643 = vmatpush1.bf16.msra.mxu0 %v3514
    %3644 = vmatprep.subr.bf16.mxu0 %v3517
    %3645 = vmatpush1.bf16.msra.mxu0 %v3516
    %3646 = vmatprep.subr.bf16.mxu0 %v3519
    %3647 = vmatpush1.bf16.msra.mxu0 %v3518
    %3648 = vmatprep.subr.bf16.mxu0 %v3521
    %3649 = vmatpush1.bf16.msra.mxu0 %v3520
    %3650 = vmatprep.subr.bf16.mxu0 %v3523
    %3651 = vmatpush1.bf16.msra.mxu0 %v3522
    %3652 = vmatprep.subr.bf16.mxu0 %v3525
    %3653 = vmatpush1.bf16.msra.mxu0 %v3524
    %3654 = vmatprep.subr.bf16.mxu0 %v3527
    %3655 = vmatpush1.bf16.msra.mxu0 %v3526
    %3656 = vmatprep.subr.bf16.mxu0 %v3529
    %3657 = vmatpush1.bf16.msra.mxu0 %v3528
    %3658 = vmatprep.subr.bf16.mxu0 %v3531
    %3659 = vmatpush1.bf16.msra.mxu0 %v3530
    %3660 = vmatprep.mubr.bf16.mxu0 %v3241
    %3661 = vmatmul.mubr.bf16.gmra.mrb[0].mxu0 %v3240
    %v3662 = vpop.f32.mrb[0].mxu0
    %v3663 = vadd.f32 0.0, %v3662
    %v3664 = vpop.f32.mrb[0].mxu0
    %v3665 = vadd.f32 0.0, %v3664
    %v3666 = vpop.f32.mrb[0].mxu0
    %v3667 = vpop.f32.mrb[0].mxu0
    %3668 = vdwg.mxu0
    %3669 = vmatprep.subr.bf16.mxu0 %v3533
    %3670 = vmatpush1.bf16.msra.mxu0 %v3532
    %3671 = vmatprep.subr.bf16.mxu0 %v3535
    %3672 = vmatpush1.bf16.msra.mxu0 %v3534
    %3673 = vmatprep.subr.bf16.mxu0 %v3537
    %3674 = vmatpush1.bf16.msra.mxu0 %v3536
    %3675 = vmatprep.subr.bf16.mxu0 %v3539
    %3676 = vmatpush1.bf16.msra.mxu0 %v3538
    %3677 = vmatprep.subr.bf16.mxu0 %v3541
    %3678 = vmatpush1.bf16.msra.mxu0 %v3540
    %3679 = vmatprep.subr.bf16.mxu0 %v3543
    %3680 = vmatpush1.bf16.msra.mxu0 %v3542
    %3681 = vmatprep.subr.bf16.mxu0 %v3545
    %3682 = vmatpush1.bf16.msra.mxu0 %v3544
    %3683 = vmatprep.subr.bf16.mxu0 %v3547
    %3684 = vmatpush1.bf16.msra.mxu0 %v3546
    %3685 = vmatprep.subr.bf16.mxu0 %v3549
    %3686 = vmatpush1.bf16.msra.mxu0 %v3548
    %3687 = vmatprep.subr.bf16.mxu0 %v3551
    %3688 = vmatpush1.bf16.msra.mxu0 %v3550
    %3689 = vmatprep.subr.bf16.mxu0 %v3553
    %3690 = vmatpush1.bf16.msra.mxu0 %v3552
    %3691 = vmatprep.subr.bf16.mxu0 %v3555
    %3692 = vmatpush1.bf16.msra.mxu0 %v3554
    %3693 = vmatprep.subr.bf16.mxu0 %v3557
    %3694 = vmatpush1.bf16.msra.mxu0 %v3556
    %3695 = vmatprep.subr.bf16.mxu0 %v3559
    %3696 = vmatpush1.bf16.msra.mxu0 %v3558
    %3697 = vmatprep.subr.bf16.mxu0 %v3561
    %3698 = vmatpush1.bf16.msra.mxu0 %v3560
    %3699 = vmatprep.subr.bf16.mxu0 %v3563
    %3700 = vmatpush1.bf16.msra.mxu0 %v3562
    %3701 = vmatprep.mubr.bf16.mxu0 %v3243
    %3702 = vmatmul.mubr.bf16.gmra.mrb[0].mxu0 %v3242
    %v3703 = vpop.f32.mrb[0].mxu0
    %v3704 = vadd.f32 %v3663, %v3703
    %v3705 = vpop.f32.mrb[0].mxu0
    %v3706 = vadd.f32 %v3665, %v3705
    %v3707 = vpop.f32.mrb[0].mxu0
    %v3708 = vpop.f32.mrb[0].mxu0
    %3709 = vdwg.mxu0
    %s3710 = scalar_lea.vmem [#allocation10], 3
    %v3711 = vld [vmem:[%s3710] ss:$8 sm:$0x3]
    %s3712 = scalar_lea.vmem [#allocation10], 4
    %v3713 = vld [vmem:[%s3712] ss:$8 sm:$0x3]
    %v3714 = vsel %vm3041, %v3704, 0.0
    %v3715 = vrot.slane %v3714, 4
    %v3716 = vadd.f32 %v3714, %v3715
    %v3717 = vrot.slane %v3716, 2
    %v3718 = vadd.f32 %v3716, %v3717
    %v3719 = vrot.slane %v3718, 1
    %v3720 = vadd.f32 %v3718, %v3719
    %v3721 = vsel %vm3041, %v3706, 0.0
    %v3722 = vrot.slane %v3721, 4
    %v3723 = vadd.f32 %v3721, %v3722
    %v3724 = vrot.slane %v3723, 2
    %v3725 = vadd.f32 %v3723, %v3724
    %v3726 = vrot.slane %v3725, 1
    %v3727 = vadd.f32 %v3725, %v3726
    %v3728 = vmul.f32 %v3720, 0.5
    %v3729 = vmul.f32 %v3727, 0.5
    %v3730 = vsub.f32 %v3704, %v3728
    %v3731 = vsub.f32 %v3706, %v3729
    %v3732 = vmul.f32 %v3730, %v3730
    %v3733 = vmul.f32 %v3731, %v3731
    %v3734 = vsel %vm3041, %v3732, 0.0
    %v3735 = vrot.slane %v3734, 4
    %v3736 = vadd.f32 %v3734, %v3735
    %v3737 = vrot.slane %v3736, 2
    %v3738 = vadd.f32 %v3736, %v3737
    %v3739 = vrot.slane %v3738, 1
    %v3740 = vadd.f32 %v3738, %v3739
    %v3741 = vsel %vm3041, %v3733, 0.0
    %v3742 = vrot.slane %v3741, 4
    %v3743 = vadd.f32 %v3741, %v3742
    %v3744 = vrot.slane %v3743, 2
    %v3745 = vadd.f32 %v3743, %v3744
    %v3746 = vrot.slane %v3745, 1
    %v3747 = vadd.f32 %v3745, %v3746
    %v3748 = vmul.f32 %v3740, 0.5
    %v3749 = vmul.f32 %v3747, 0.5
    %v3750 = vadd.f32 %v3748, 1e-05
    %v3751 = vadd.f32 %v3749, 1e-05
    %v3752 = vrsqrt.pop %v3750
    %v3753 = vrsqrt.pop %v3751
    %v3756 = vcombine.low %v3752, %v3753
    %v3758 = vunpack.c.l.s4 1966171168
    %v3759 = vunpack.c.0.s8 %v3758
    %v3760 = vlaneseq
    %v3761 = vshrl.u32 %v3760, 7
    %v3762 = vsub.s32 %v3759, %v3761
    %v3763 = vrot.slane %v3756, %v3762
    %v3765 = vunpack.c.l.s4 1966171168
    %v3766 = vunpack.c.0.s8 %v3765
    %v3767 = vlaneseq
    %v3768 = vshrl.u32 %v3767, 7
    %v3769 = vsub.s32 %v3766, %v3768
    %v3770 = vrot.slane %v3763, %v3769
    %v3772 = vmul.f32 %v3711, %v3770
    %v3774 = vlaneseq
    %v3775 = vshrl.u32 %v3774, 7
    %v3776 = vsub.s32 0, %v3775
    %v3777 = vrot.slane %v3772, %v3776
    %v3778 = vlaneseq
    %v3779 = vshrl.u32 %v3778, 7
    %v3780 = vsub.s32 1, %v3779
    %v3781 = vrot.slane %v3772, %v3780
    %v3784 = vmul.f32 %v3728, %v3777
    %v3785 = vmul.f32 %v3729, %v3781
    %v3788 = vcombine.low %v3784, %v3785
    %v3790 = vunpack.c.l.s4 1966171168
    %v3791 = vunpack.c.0.s8 %v3790
    %v3792 = vlaneseq
    %v3793 = vshrl.u32 %v3792, 7
    %v3794 = vsub.s32 %v3791, %v3793
    %v3795 = vrot.slane %v3788, %v3794
    %v3797 = vunpack.c.l.s4 1966171168
    %v3798 = vunpack.c.0.s8 %v3797
    %v3799 = vlaneseq
    %v3800 = vshrl.u32 %v3799, 7
    %v3801 = vsub.s32 %v3798, %v3800
    %v3802 = vrot.slane %v3795, %v3801
    %v3804 = vsub.f32 %v3713, %v3802
    %v3805 = vmul.f32 %v3704, %v3777
    %v3806 = vmul.f32 %v3706, %v3781
    %v3808 = vlaneseq
    %v3809 = vshrl.u32 %v3808, 7
    %v3810 = vsub.s32 0, %v3809
    %v3811 = vrot.slane %v3804, %v3810
    %v3812 = vlaneseq
    %v3813 = vshrl.u32 %v3812, 7
    %v3814 = vsub.s32 1, %v3813
    %v3815 = vrot.slane %v3804, %v3814
    %v3818 = vadd.f32 %v3805, %v3811
    %v3819 = vadd.f32 %v3806, %v3815
    %v3820 = vmax.f32 %v3818, 0.0
    %v3821 = vmax.f32 %v3819, 0.0
    %v3822 = vpack.c.bf16 %v3820, %v3820
    %v3823 = vpack.c.bf16 %v3821, %v3821
    %v3824 = vld [vmem:[#allocation9] sm:$0xff]
    %v3825 = vld [vmem:[#allocation9 + $0x8] sm:$0xff]
    %v3826 = vld [vmem:[#allocation9 + $0x10] sm:$0xff]
    %v3827 = vld [vmem:[#allocation9 + $0x18] sm:$0xff]
    %v3828 = vld [vmem:[#allocation9 + $0x20] sm:$0xff]
    %v3829 = vld [vmem:[#allocation9 + $0x28] sm:$0xff]
    %v3830 = vld [vmem:[#allocation9 + $0x30] sm:$0xff]
    %v3831 = vld [vmem:[#allocation9 + $0x38] sm:$0xff]
    %v3832 = vld [vmem:[#allocation9 + $0x40] sm:$0xff]
    %v3833 = vld [vmem:[#allocation9 + $0x48] sm:$0xff]
    %v3834 = vld [vmem:[#allocation9 + $0x50] sm:$0xff]
    %v3835 = vld [vmem:[#allocation9 + $0x58] sm:$0xff]
    %v3836 = vld [vmem:[#allocation9 + $0x60] sm:$0xff]
    %v3837 = vld [vmem:[#allocation9 + $0x68] sm:$0xff]
    %v3838 = vld [vmem:[#allocation9 + $0x70] sm:$0xff]
    %v3839 = vld [vmem:[#allocation9 + $0x78] sm:$0xff]
    %v3840 = vld [vmem:[#allocation9 + $0x80] sm:$0xff]
    %v3841 = vld [vmem:[#allocation9 + $0x88] sm:$0xff]
    %v3842 = vld [vmem:[#allocation9 + $0x90] sm:$0xff]
    %v3843 = vld [vmem:[#allocation9 + $0x98] sm:$0xff]
    %v3844 = vld [vmem:[#allocation9 + $0xa0] sm:$0xff]
    %v3845 = vld [vmem:[#allocation9 + $0xa8] sm:$0xff]
    %v3846 = vld [vmem:[#allocation9 + $0xb0] sm:$0xff]
    %v3847 = vld [vmem:[#allocation9 + $0xb8] sm:$0xff]
    %v3848 = vld [vmem:[#allocation9 + $0xc0] sm:$0xff]
    %v3849 = vld [vmem:[#allocation9 + $0xc8] sm:$0xff]
    %v3850 = vld [vmem:[#allocation9 + $0xd0] sm:$0xff]
    %v3851 = vld [vmem:[#allocation9 + $0xd8] sm:$0xff]
    %v3852 = vld [vmem:[#allocation9 + $0xe0] sm:$0xff]
    %v3853 = vld [vmem:[#allocation9 + $0xe8] sm:$0xff]
    %v3854 = vld [vmem:[#allocation9 + $0xf0] sm:$0xff]
    %v3855 = vld [vmem:[#allocation9 + $0xf8] sm:$0xff]
    %s3856 = scalar_lea.vmem [#allocation10], 5
    %v3857 = vld [vmem:[%s3856] ss:$8 sm:$0x3]
    %v3859 = vlaneseq
    %v3860 = vshrl.u32 %v3859, 7
    %v3861 = vsub.s32 0, %v3860
    %v3862 = vrot.slane %v3857, %v3861
    %v3863 = vlaneseq
    %v3864 = vshrl.u32 %v3863, 7
    %v3865 = vsub.s32 1, %v3864
    %v3866 = vrot.slane %v3857, %v3865
    %v3901 = vunpack.c.l.b16 %v3824
    %v3902 = vunpack.c.h.b16 %v3824
    %v3903 = vunpack.c.l.b16 %v3825
    %v3904 = vunpack.c.h.b16 %v3825
    %v3905 = vunpack.c.l.b16 %v3826
    %v3906 = vunpack.c.h.b16 %v3826
    %v3907 = vunpack.c.l.b16 %v3827
    %v3908 = vunpack.c.h.b16 %v3827
    %v3909 = vunpack.c.l.b16 %v3828
    %v3910 = vunpack.c.h.b16 %v3828
    %v3911 = vunpack.c.l.b16 %v3829
    %v3912 = vunpack.c.h.b16 %v3829
    %v3913 = vunpack.c.l.b16 %v3830
    %v3914 = vunpack.c.h.b16 %v3830
    %v3915 = vunpack.c.l.b16 %v3831
    %v3916 = vunpack.c.h.b16 %v3831
    %v3917 = vunpack.c.l.b16 %v3832
    %v3918 = vunpack.c.h.b16 %v3832
    %v3919 = vunpack.c.l.b16 %v3833
    %v3920 = vunpack.c.h.b16 %v3833
    %v3921 = vunpack.c.l.b16 %v3834
    %v3922 = vunpack.c.h.b16 %v3834
    %v3923 = vunpack.c.l.b16 %v3835
    %v3924 = vunpack.c.h.b16 %v3835
    %v3925 = vunpack.c.l.b16 %v3836
    %v3926 = vunpack.c.h.b16 %v3836
    %v3927 = vunpack.c.l.b16 %v3837
    %v3928 = vunpack.c.h.b16 %v3837
    %v3929 = vunpack.c.l.b16 %v3838
    %v3930 = vunpack.c.h.b16 %v3838
    %v3931 = vunpack.c.l.b16 %v3839
    %v3932 = vunpack.c.h.b16 %v3839
    %v3933 = vunpack.c.l.b16 %v3840
    %v3934 = vunpack.c.h.b16 %v3840
    %v3935 = vunpack.c.l.b16 %v3841
    %v3936 = vunpack.c.h.b16 %v3841
    %v3937 = vunpack.c.l.b16 %v3842
    %v3938 = vunpack.c.h.b16 %v3842
    %v3939 = vunpack.c.l.b16 %v3843
    %v3940 = vunpack.c.h.b16 %v3843
    %v3941 = vunpack.c.l.b16 %v3844
    %v3942 = vunpack.c.h.b16 %v3844
    %v3943 = vunpack.c.l.b16 %v3845
    %v3944 = vunpack.c.h.b16 %v3845
    %v3945 = vunpack.c.l.b16 %v3846
    %v3946 = vunpack.c.h.b16 %v3846
    %v3947 = vunpack.c.l.b16 %v3847
    %v3948 = vunpack.c.h.b16 %v3847
    %v3949 = vunpack.c.l.b16 %v3848
    %v3950 = vunpack.c.h.b16 %v3848
    %v3951 = vunpack.c.l.b16 %v3849
    %v3952 = vunpack.c.h.b16 %v3849
    %v3953 = vunpack.c.l.b16 %v3850
    %v3954 = vunpack.c.h.b16 %v3850
    %v3955 = vunpack.c.l.b16 %v3851
    %v3956 = vunpack.c.h.b16 %v3851
    %v3957 = vunpack.c.l.b16 %v3852
    %v3958 = vunpack.c.h.b16 %v3852
    %v3959 = vunpack.c.l.b16 %v3853
    %v3960 = vunpack.c.h.b16 %v3853
    %v3961 = vunpack.c.l.b16 %v3854
    %v3962 = vunpack.c.h.b16 %v3854
    %v3963 = vunpack.c.l.b16 %v3855
    %v3964 = vunpack.c.h.b16 %v3855
    %v3965 = vpack.c.b16 %v3903, %v3901
    %v3966 = vpack.c.b16 %v3904, %v3902
    %v3967 = vpack.c.b16 %v3907, %v3905
    %v3968 = vpack.c.b16 %v3908, %v3906
    %v3969 = vpack.c.b16 %v3911, %v3909
    %v3970 = vpack.c.b16 %v3912, %v3910
    %v3971 = vpack.c.b16 %v3915, %v3913
    %v3972 = vpack.c.b16 %v3916, %v3914
    %v3973 = vpack.c.b16 %v3919, %v3917
    %v3974 = vpack.c.b16 %v3920, %v3918
    %v3975 = vpack.c.b16 %v3923, %v3921
    %v3976 = vpack.c.b16 %v3924, %v3922
    %v3977 = vpack.c.b16 %v3927, %v3925
    %v3978 = vpack.c.b16 %v3928, %v3926
    %v3979 = vpack.c.b16 %v3931, %v3929
    %v3980 = vpack.c.b16 %v3932, %v3930
    %v3981 = vpack.c.b16 %v3935, %v3933
    %v3982 = vpack.c.b16 %v3936, %v3934
    %v3983 = vpack.c.b16 %v3939, %v3937
    %v3984 = vpack.c.b16 %v3940, %v3938
    %v3985 = vpack.c.b16 %v3943, %v3941
    %v3986 = vpack.c.b16 %v3944, %v3942
    %v3987 = vpack.c.b16 %v3947, %v3945
    %v3988 = vpack.c.b16 %v3948, %v3946
    %v3989 = vpack.c.b16 %v3951, %v3949
    %v3990 = vpack.c.b16 %v3952, %v3950
    %v3991 = vpack.c.b16 %v3955, %v3953
    %v3992 = vpack.c.b16 %v3956, %v3954
    %v3993 = vpack.c.b16 %v3959, %v3957
    %v3994 = vpack.c.b16 %v3960, %v3958
    %v3995 = vpack.c.b16 %v3963, %v3961
    %v3996 = vpack.c.b16 %v3964, %v3962
    %4029 = vmatprep.subr.bf16.mxu0 %v3966
    %4030 = vmatpush1.bf16.msra.mxu0 %v3965
    %4031 = vmatprep.subr.bf16.mxu0 %v3968
    %4032 = vmatpush1.bf16.msra.mxu0 %v3967
    %4033 = vmatprep.subr.bf16.mxu0 %v3970
    %4034 = vmatpush1.bf16.msra.mxu0 %v3969
    %4035 = vmatprep.subr.bf16.mxu0 %v3972
    %4036 = vmatpush1.bf16.msra.mxu0 %v3971
    %4037 = vmatprep.subr.bf16.mxu0 %v3974
    %4038 = vmatpush1.bf16.msra.mxu0 %v3973
    %4039 = vmatprep.subr.bf16.mxu0 %v3976
    %4040 = vmatpush1.bf16.msra.mxu0 %v3975
    %4041 = vmatprep.subr.bf16.mxu0 %v3978
    %4042 = vmatpush1.bf16.msra.mxu0 %v3977
    %4043 = vmatprep.subr.bf16.mxu0 %v3980
    %4044 = vmatpush1.bf16.msra.mxu0 %v3979
    %4045 = vmatprep.subr.bf16.mxu0 %v3982
    %4046 = vmatpush1.bf16.msra.mxu0 %v3981
    %4047 = vmatprep.subr.bf16.mxu0 %v3984
    %4048 = vmatpush1.bf16.msra.mxu0 %v3983
    %4049 = vmatprep.subr.bf16.mxu0 %v3986
    %4050 = vmatpush1.bf16.msra.mxu0 %v3985
    %4051 = vmatprep.subr.bf16.mxu0 %v3988
    %4052 = vmatpush1.bf16.msra.mxu0 %v3987
    %4053 = vmatprep.subr.bf16.mxu0 %v3990
    %4054 = vmatpush1.bf16.msra.mxu0 %v3989
    %4055 = vmatprep.subr.bf16.mxu0 %v3992
    %4056 = vmatpush1.bf16.msra.mxu0 %v3991
    %4057 = vmatprep.subr.bf16.mxu0 %v3994
    %4058 = vmatpush1.bf16.msra.mxu0 %v3993
    %4059 = vmatprep.subr.bf16.mxu0 %v3996
    %4060 = vmatpush1.bf16.msra.mxu0 %v3995
    %4061 = vmatprep.mubr.bf16.mxu0 %v3823
    %4062 = vmatmul.mubr.bf16.gmra.mrb[0].mxu0 %v3822
    %v4063 = vpop.f32.mrb[0].mxu0
    %v4064 = vadd.f32 %v3862, %v4063
    %v4065 = vpop.f32.mrb[0].mxu0
    %v4066 = vadd.f32 %v3866, %v4065
    %v4067 = vpop.f32.mrb[0].mxu0
    %v4068 = vpop.f32.mrb[0].mxu0
    %4069 = vdwg.mxu0
    %v4072 = vcombine.low %v4064, %v4066
    %v4074 = vunpack.c.l.s4 1983009808
    %v4075 = vunpack.c.0.s8 %v4074
    %v4076 = vlaneseq
    %v4077 = vshrl.u32 %v4076, 7
    %v4078 = vsub.s32 %v4075, %v4077
    %v4079 = vrot.slane %v4072, %v4078
    %s4081 = scalar_lea.vmem %s12, 4
    %4082 = vst [vmem:[%s4081] sm:$0xf] %v4079
    %v4083 = vpack.c.bf16 %v4064, %v4064
    %v4084 = vpack.c.bf16 %v4066, %v4066
    %v4085 = vld [vmem:[%s6] sm:$0xff]
    %v4086 = vld [vmem:[%s6 + $0x8] sm:$0xff]
    %v4087 = vld [vmem:[%s6 + $0x10] sm:$0xff]
    %v4088 = vld [vmem:[%s6 + $0x18] sm:$0xff]
    %v4089 = vld [vmem:[%s6 + $0x20] sm:$0xff]
    %v4090 = vld [vmem:[%s6 + $0x28] sm:$0xff]
    %v4091 = vld [vmem:[%s6 + $0x30] sm:$0xff]
    %v4092 = vld [vmem:[%s6 + $0x38] sm:$0xff]
    %v4093 = vld [vmem:[%s6 + $0x40] sm:$0xff]
    %v4094 = vld [vmem:[%s6 + $0x48] sm:$0xff]
    %v4095 = vld [vmem:[%s6 + $0x50] sm:$0xff]
    %v4096 = vld [vmem:[%s6 + $0x58] sm:$0xff]
    %v4097 = vld [vmem:[%s6 + $0x60] sm:$0xff]
    %v4098 = vld [vmem:[%s6 + $0x68] sm:$0xff]
    %v4099 = vld [vmem:[%s6 + $0x70] sm:$0xff]
    %v4100 = vld [vmem:[%s6 + $0x78] sm:$0xff]
    %v4101 = vld [vmem:[%s6 + $0x80] sm:$0xff]
    %v4102 = vld [vmem:[%s6 + $0x88] sm:$0xff]
    %v4103 = vld [vmem:[%s6 + $0x90] sm:$0xff]
    %v4104 = vld [vmem:[%s6 + $0x98] sm:$0xff]
    %v4105 = vld [vmem:[%s6 + $0xa0] sm:$0xff]
    %v4106 = vld [vmem:[%s6 + $0xa8] sm:$0xff]
    %v4107 = vld [vmem:[%s6 + $0xb0] sm:$0xff]
    %v4108 = vld [vmem:[%s6 + $0xb8] sm:$0xff]
    %v4109 = vld [vmem:[%s6 + $0xc0] sm:$0xff]
    %v4110 = vld [vmem:[%s6 + $0xc8] sm:$0xff]
    %v4111 = vld [vmem:[%s6 + $0xd0] sm:$0xff]
    %v4112 = vld [vmem:[%s6 + $0xd8] sm:$0xff]
    %v4113 = vld [vmem:[%s6 + $0xe0] sm:$0xff]
    %v4114 = vld [vmem:[%s6 + $0xe8] sm:$0xff]
    %v4115 = vld [vmem:[%s6 + $0xf0] sm:$0xff]
    %v4116 = vld [vmem:[%s6 + $0xf8] sm:$0xff]
    %v4117 = vld [vmem:[%s6 + $0x100] sm:$0xff]
    %v4118 = vld [vmem:[%s6 + $0x108] sm:$0xff]
    %v4119 = vld [vmem:[%s6 + $0x110] sm:$0xff]
    %v4120 = vld [vmem:[%s6 + $0x118] sm:$0xff]
    %v4121 = vld [vmem:[%s6 + $0x120] sm:$0xff]
    %v4122 = vld [vmem:[%s6 + $0x128] sm:$0xff]
    %v4123 = vld [vmem:[%s6 + $0x130] sm:$0xff]
    %v4124 = vld [vmem:[%s6 + $0x138] sm:$0xff]
    %v4125 = vld [vmem:[%s6 + $0x140] sm:$0xff]
    %v4126 = vld [vmem:[%s6 + $0x148] sm:$0xff]
    %v4127 = vld [vmem:[%s6 + $0x150] sm:$0xff]
    %v4128 = vld [vmem:[%s6 + $0x158] sm:$0xff]
    %v4129 = vld [vmem:[%s6 + $0x160] sm:$0xff]
    %v4130 = vld [vmem:[%s6 + $0x168] sm:$0xff]
    %v4131 = vld [vmem:[%s6 + $0x170] sm:$0xff]
    %v4132 = vld [vmem:[%s6 + $0x178] sm:$0xff]
    %v4133 = vld [vmem:[%s6 + $0x180] sm:$0xff]
    %v4134 = vld [vmem:[%s6 + $0x188] sm:$0xff]
    %v4135 = vld [vmem:[%s6 + $0x190] sm:$0xff]
    %v4136 = vld [vmem:[%s6 + $0x198] sm:$0xff]
    %v4137 = vld [vmem:[%s6 + $0x1a0] sm:$0xff]
    %v4138 = vld [vmem:[%s6 + $0x1a8] sm:$0xff]
    %v4139 = vld [vmem:[%s6 + $0x1b0] sm:$0xff]
    %v4140 = vld [vmem:[%s6 + $0x1b8] sm:$0xff]
    %v4141 = vld [vmem:[%s6 + $0x1c0] sm:$0xff]
    %v4142 = vld [vmem:[%s6 + $0x1c8] sm:$0xff]
    %v4143 = vld [vmem:[%s6 + $0x1d0] sm:$0xff]
    %v4144 = vld [vmem:[%s6 + $0x1d8] sm:$0xff]
    %v4145 = vld [vmem:[%s6 + $0x1e0] sm:$0xff]
    %v4146 = vld [vmem:[%s6 + $0x1e8] sm:$0xff]
    %v4147 = vld [vmem:[%s6 + $0x1f0] sm:$0xff]
    %v4148 = vld [vmem:[%s6 + $0x1f8] sm:$0xff]
    %v4213 = vunpack.c.l.b16 %v4085
    %v4214 = vunpack.c.h.b16 %v4085
    %v4215 = vunpack.c.l.b16 %v4086
    %v4216 = vunpack.c.h.b16 %v4086
    %v4217 = vunpack.c.l.b16 %v4087
    %v4218 = vunpack.c.h.b16 %v4087
    %v4219 = vunpack.c.l.b16 %v4088
    %v4220 = vunpack.c.h.b16 %v4088
    %v4221 = vunpack.c.l.b16 %v4089
    %v4222 = vunpack.c.h.b16 %v4089
    %v4223 = vunpack.c.l.b16 %v4090
    %v4224 = vunpack.c.h.b16 %v4090
    %v4225 = vunpack.c.l.b16 %v4091
    %v4226 = vunpack.c.h.b16 %v4091
    %v4227 = vunpack.c.l.b16 %v4092
    %v4228 = vunpack.c.h.b16 %v4092
    %v4229 = vunpack.c.l.b16 %v4093
    %v4230 = vunpack.c.h.b16 %v4093
    %v4231 = vunpack.c.l.b16 %v4094
    %v4232 = vunpack.c.h.b16 %v4094
    %v4233 = vunpack.c.l.b16 %v4095
    %v4234 = vunpack.c.h.b16 %v4095
    %v4235 = vunpack.c.l.b16 %v4096
    %v4236 = vunpack.c.h.b16 %v4096
    %v4237 = vunpack.c.l.b16 %v4097
    %v4238 = vunpack.c.h.b16 %v4097
    %v4239 = vunpack.c.l.b16 %v4098
    %v4240 = vunpack.c.h.b16 %v4098
    %v4241 = vunpack.c.l.b16 %v4099
    %v4242 = vunpack.c.h.b16 %v4099
    %v4243 = vunpack.c.l.b16 %v4100
    %v4244 = vunpack.c.h.b16 %v4100
    %v4245 = vunpack.c.l.b16 %v4101
    %v4246 = vunpack.c.h.b16 %v4101
    %v4247 = vunpack.c.l.b16 %v4102
    %v4248 = vunpack.c.h.b16 %v4102
    %v4249 = vunpack.c.l.b16 %v4103
    %v4250 = vunpack.c.h.b16 %v4103
    %v4251 = vunpack.c.l.b16 %v4104
    %v4252 = vunpack.c.h.b16 %v4104
    %v4253 = vunpack.c.l.b16 %v4105
    %v4254 = vunpack.c.h.b16 %v4105
    %v4255 = vunpack.c.l.b16 %v4106
    %v4256 = vunpack.c.h.b16 %v4106
    %v4257 = vunpack.c.l.b16 %v4107
    %v4258 = vunpack.c.h.b16 %v4107
    %v4259 = vunpack.c.l.b16 %v4108
    %v4260 = vunpack.c.h.b16 %v4108
    %v4261 = vunpack.c.l.b16 %v4109
    %v4262 = vunpack.c.h.b16 %v4109
    %v4263 = vunpack.c.l.b16 %v4110
    %v4264 = vunpack.c.h.b16 %v4110
    %v4265 = vunpack.c.l.b16 %v4111
    %v4266 = vunpack.c.h.b16 %v4111
    %v4267 = vunpack.c.l.b16 %v4112
    %v4268 = vunpack.c.h.b16 %v4112
    %v4269 = vunpack.c.l.b16 %v4113
    %v4270 = vunpack.c.h.b16 %v4113
    %v4271 = vunpack.c.l.b16 %v4114
    %v4272 = vunpack.c.h.b16 %v4114
    %v4273 = vunpack.c.l.b16 %v4115
    %v4274 = vunpack.c.h.b16 %v4115
    %v4275 = vunpack.c.l.b16 %v4116
    %v4276 = vunpack.c.h.b16 %v4116
    %v4277 = vunpack.c.l.b16 %v4117
    %v4278 = vunpack.c.h.b16 %v4117
    %v4279 = vunpack.c.l.b16 %v4118
    %v4280 = vunpack.c.h.b16 %v4118
    %v4281 = vunpack.c.l.b16 %v4119
    %v4282 = vunpack.c.h.b16 %v4119
    %v4283 = vunpack.c.l.b16 %v4120
    %v4284 = vunpack.c.h.b16 %v4120
    %v4285 = vunpack.c.l.b16 %v4121
    %v4286 = vunpack.c.h.b16 %v4121
    %v4287 = vunpack.c.l.b16 %v4122
    %v4288 = vunpack.c.h.b16 %v4122
    %v4289 = vunpack.c.l.b16 %v4123
    %v4290 = vunpack.c.h.b16 %v4123
    %v4291 = vunpack.c.l.b16 %v4124
    %v4292 = vunpack.c.h.b16 %v4124
    %v4293 = vunpack.c.l.b16 %v4125
    %v4294 = vunpack.c.h.b16 %v4125
    %v4295 = vunpack.c.l.b16 %v4126
    %v4296 = vunpack.c.h.b16 %v4126
    %v4297 = vunpack.c.l.b16 %v4127
    %v4298 = vunpack.c.h.b16 %v4127
    %v4299 = vunpack.c.l.b16 %v4128
    %v4300 = vunpack.c.h.b16 %v4128
    %v4301 = vunpack.c.l.b16 %v4129
    %v4302 = vunpack.c.h.b16 %v4129
    %v4303 = vunpack.c.l.b16 %v4130
    %v4304 = vunpack.c.h.b16 %v4130
    %v4305 = vunpack.c.l.b16 %v4131
    %v4306 = vunpack.c.h.b16 %v4131
    %v4307 = vunpack.c.l.b16 %v4132
    %v4308 = vunpack.c.h.b16 %v4132
    %v4309 = vunpack.c.l.b16 %v4133
    %v4310 = vunpack.c.h.b16 %v4133
    %v4311 = vunpack.c.l.b16 %v4134
    %v4312 = vunpack.c.h.b16 %v4134
    %v4313 = vunpack.c.l.b16 %v4135
    %v4314 = vunpack.c.h.b16 %v4135
    %v4315 = vunpack.c.l.b16 %v4136
    %v4316 = vunpack.c.h.b16 %v4136
    %v4317 = vunpack.c.l.b16 %v4137
    %v4318 = vunpack.c.h.b16 %v4137
    %v4319 = vunpack.c.l.b16 %v4138
    %v4320 = vunpack.c.h.b16 %v4138
    %v4321 = vunpack.c.l.b16 %v4139
    %v4322 = vunpack.c.h.b16 %v4139
    %v4323 = vunpack.c.l.b16 %v4140
    %v4324 = vunpack.c.h.b16 %v4140
    %v4325 = vunpack.c.l.b16 %v4141
    %v4326 = vunpack.c.h.b16 %v4141
    %v4327 = vunpack.c.l.b16 %v4142
    %v4328 = vunpack.c.h.b16 %v4142
    %v4329 = vunpack.c.l.b16 %v4143
    %v4330 = vunpack.c.h.b16 %v4143
    %v4331 = vunpack.c.l.b16 %v4144
    %v4332 = vunpack.c.h.b16 %v4144
    %v4333 = vunpack.c.l.b16 %v4145
    %v4334 = vunpack.c.h.b16 %v4145
    %v4335 = vunpack.c.l.b16 %v4146
    %v4336 = vunpack.c.h.b16 %v4146
    %v4337 = vunpack.c.l.b16 %v4147
    %v4338 = vunpack.c.h.b16 %v4147
    %v4339 = vunpack.c.l.b16 %v4148
    %v4340 = vunpack.c.h.b16 %v4148
    %v4341 = vpack.c.b16 %v4217, %v4213
    %v4342 = vpack.c.b16 %v4218, %v4214
    %v4343 = vpack.c.b16 %v4219, %v4215
    %v4344 = vpack.c.b16 %v4220, %v4216
    %v4345 = vpack.c.b16 %v4225, %v4221
    %v4346 = vpack.c.b16 %v4226, %v4222
    %v4347 = vpack.c.b16 %v4227, %v4223
    %v4348 = vpack.c.b16 %v4228, %v4224
    %v4349 = vpack.c.b16 %v4233, %v4229
    %v4350 = vpack.c.b16 %v4234, %v4230
    %v4351 = vpack.c.b16 %v4235, %v4231
    %v4352 = vpack.c.b16 %v4236, %v4232
    %v4353 = vpack.c.b16 %v4241, %v4237
    %v4354 = vpack.c.b16 %v4242, %v4238
    %v4355 = vpack.c.b16 %v4243, %v4239
    %v4356 = vpack.c.b16 %v4244, %v4240
    %v4357 = vpack.c.b16 %v4249, %v4245
    %v4358 = vpack.c.b16 %v4250, %v4246
    %v4359 = vpack.c.b16 %v4251, %v4247
    %v4360 = vpack.c.b16 %v4252, %v4248
    %v4361 = vpack.c.b16 %v4257, %v4253
    %v4362 = vpack.c.b16 %v4258, %v4254
    %v4363 = vpack.c.b16 %v4259, %v4255
    %v4364 = vpack.c.b16 %v4260, %v4256
    %v4365 = vpack.c.b16 %v4265, %v4261
    %v4366 = vpack.c.b16 %v4266, %v4262
    %v4367 = vpack.c.b16 %v4267, %v4263
    %v4368 = vpack.c.b16 %v4268, %v4264
    %v4369 = vpack.c.b16 %v4273, %v4269
    %v4370 = vpack.c.b16 %v4274, %v4270
    %v4371 = vpack.c.b16 %v4275, %v4271
    %v4372 = vpack.c.b16 %v4276, %v4272
    %v4373 = vpack.c.b16 %v4281, %v4277
    %v4374 = vpack.c.b16 %v4282, %v4278
    %v4375 = vpack.c.b16 %v4283, %v4279
    %v4376 = vpack.c.b16 %v4284, %v4280
    %v4377 = vpack.c.b16 %v4289, %v4285
    %v4378 = vpack.c.b16 %v4290, %v4286
    %v4379 = vpack.c.b16 %v4291, %v4287
    %v4380 = vpack.c.b16 %v4292, %v4288
    %v4381 = vpack.c.b16 %v4297, %v4293
    %v4382 = vpack.c.b16 %v4298, %v4294
    %v4383 = vpack.c.b16 %v4299, %v4295
    %v4384 = vpack.c.b16 %v4300, %v4296
    %v4385 = vpack.c.b16 %v4305, %v4301
    %v4386 = vpack.c.b16 %v4306, %v4302
    %v4387 = vpack.c.b16 %v4307, %v4303
    %v4388 = vpack.c.b16 %v4308, %v4304
    %v4389 = vpack.c.b16 %v4313, %v4309
    %v4390 = vpack.c.b16 %v4314, %v4310
    %v4391 = vpack.c.b16 %v4315, %v4311
    %v4392 = vpack.c.b16 %v4316, %v4312
    %v4393 = vpack.c.b16 %v4321, %v4317
    %v4394 = vpack.c.b16 %v4322, %v4318
    %v4395 = vpack.c.b16 %v4323, %v4319
    %v4396 = vpack.c.b16 %v4324, %v4320
    %v4397 = vpack.c.b16 %v4329, %v4325
    %v4398 = vpack.c.b16 %v4330, %v4326
    %v4399 = vpack.c.b16 %v4331, %v4327
    %v4400 = vpack.c.b16 %v4332, %v4328
    %v4401 = vpack.c.b16 %v4337, %v4333
    %v4402 = vpack.c.b16 %v4338, %v4334
    %v4403 = vpack.c.b16 %v4339, %v4335
    %v4404 = vpack.c.b16 %v4340, %v4336
    %v4473 = vrot.slane %v2522, 2
    %v4474 = vrot.slane %v2524, 2
    %v4475 = vrot.slane %v2563, 2
    %v4476 = vrot.slane %v2565, 2
    %4481 = vmatprep.subr.bf16.mxu0 %v4342
    %4482 = vmatpush1.bf16.msra.mxu0 %v4341
    %4483 = vmatprep.subr.bf16.mxu0 %v4346
    %4484 = vmatpush1.bf16.msra.mxu0 %v4345
    %4485 = vmatprep.subr.bf16.mxu0 %v4350
    %4486 = vmatpush1.bf16.msra.mxu0 %v4349
    %4487 = vmatprep.subr.bf16.mxu0 %v4354
    %4488 = vmatpush1.bf16.msra.mxu0 %v4353
    %4489 = vmatprep.subr.bf16.mxu0 %v4358
    %4490 = vmatpush1.bf16.msra.mxu0 %v4357
    %4491 = vmatprep.subr.bf16.mxu0 %v4362
    %4492 = vmatpush1.bf16.msra.mxu0 %v4361
    %4493 = vmatprep.subr.bf16.mxu0 %v4366
    %4494 = vmatpush1.bf16.msra.mxu0 %v4365
    %4495 = vmatprep.subr.bf16.mxu0 %v4370
    %4496 = vmatpush1.bf16.msra.mxu0 %v4369
    %4497 = vmatprep.subr.bf16.mxu0 %v4374
    %4498 = vmatpush1.bf16.msra.mxu0 %v4373
    %4499 = vmatprep.subr.bf16.mxu0 %v4378
    %4500 = vmatpush1.bf16.msra.mxu0 %v4377
    %4501 = vmatprep.subr.bf16.mxu0 %v4382
    %4502 = vmatpush1.bf16.msra.mxu0 %v4381
    %4503 = vmatprep.subr.bf16.mxu0 %v4386
    %4504 = vmatpush1.bf16.msra.mxu0 %v4385
    %4505 = vmatprep.subr.bf16.mxu0 %v4390
    %4506 = vmatpush1.bf16.msra.mxu0 %v4389
    %4507 = vmatprep.subr.bf16.mxu0 %v4394
    %4508 = vmatpush1.bf16.msra.mxu0 %v4393
    %4509 = vmatprep.subr.bf16.mxu0 %v4398
    %4510 = vmatpush1.bf16.msra.mxu0 %v4397
    %4511 = vmatprep.subr.bf16.mxu0 %v4402
    %4512 = vmatpush1.bf16.msra.mxu0 %v4401
    %4513 = vmatprep.mubr.bf16.mxu0 %v4084
    %4514 = vmatmul.mubr.bf16.gmra.mrb[0].mxu0 %v4083
    %v4515 = vpop.f32.mrb[0].mxu0
    %v4516 = vadd.f32 %v4473, %v4515
    %v4517 = vpop.f32.mrb[0].mxu0
    %v4518 = vadd.f32 %v4474, %v4517
    %v4519 = vpop.f32.mrb[0].mxu0
    %v4520 = vpop.f32.mrb[0].mxu0
    %4521 = vdwg.mxu0
    %4522 = vmatprep.subr.bf16.mxu0 %v4344
    %4523 = vmatpush1.bf16.msra.mxu0 %v4343
    %4524 = vmatprep.subr.bf16.mxu0 %v4348
    %4525 = vmatpush1.bf16.msra.mxu0 %v4347
    %4526 = vmatprep.subr.bf16.mxu0 %v4352
    %4527 = vmatpush1.bf16.msra.mxu0 %v4351
    %4528 = vmatprep.subr.bf16.mxu0 %v4356
    %4529 = vmatpush1.bf16.msra.mxu0 %v4355
    %4530 = vmatprep.subr.bf16.mxu0 %v4360
    %4531 = vmatpush1.bf16.msra.mxu0 %v4359
    %4532 = vmatprep.subr.bf16.mxu0 %v4364
    %4533 = vmatpush1.bf16.msra.mxu0 %v4363
    %4534 = vmatprep.subr.bf16.mxu0 %v4368
    %4535 = vmatpush1.bf16.msra.mxu0 %v4367
    %4536 = vmatprep.subr.bf16.mxu0 %v4372
    %4537 = vmatpush1.bf16.msra.mxu0 %v4371
    %4538 = vmatprep.subr.bf16.mxu0 %v4376
    %4539 = vmatpush1.bf16.msra.mxu0 %v4375
    %4540 = vmatprep.subr.bf16.mxu0 %v4380
    %4541 = vmatpush1.bf16.msra.mxu0 %v4379
    %4542 = vmatprep.subr.bf16.mxu0 %v4384
    %4543 = vmatpush1.bf16.msra.mxu0 %v4383
    %4544 = vmatprep.subr.bf16.mxu0 %v4388
    %4545 = vmatpush1.bf16.msra.mxu0 %v4387
    %4546 = vmatprep.subr.bf16.mxu0 %v4392
    %4547 = vmatpush1.bf16.msra.mxu0 %v4391
    %4548 = vmatprep.subr.bf16.mxu0 %v4396
    %4549 = vmatpush1.bf16.msra.mxu0 %v4395
    %4550 = vmatprep.subr.bf16.mxu0 %v4400
    %4551 = vmatpush1.bf16.msra.mxu0 %v4399
    %4552 = vmatprep.subr.bf16.mxu0 %v4404
    %4553 = vmatpush1.bf16.msra.mxu0 %v4403
    %4554 = vmatprep.mubr.bf16.mxu0 %v4084
    %4555 = vmatmul.mubr.bf16.gmra.mrb[0].mxu0 %v4083
    %v4556 = vpop.f32.mrb[0].mxu0
    %v4557 = vadd.f32 %v4475, %v4556
    %v4558 = vpop.f32.mrb[0].mxu0
    %v4559 = vadd.f32 %v4476, %v4558
    %v4560 = vpop.f32.mrb[0].mxu0
    %v4561 = vpop.f32.mrb[0].mxu0
    %4562 = vdwg.mxu0
    %v4563 = vld [vmem:[%s3037] ss:$8 sm:$0xf]
    %v4564 = vld [vmem:[%s3039] ss:$8 sm:$0xf]
    %v4565 = vsel %vm3041, %v4516, 0.0
    %v4566 = vrot.slane %v4565, 4
    %v4567 = vadd.f32 %v4565, %v4566
    %v4568 = vrot.slane %v4567, 2
    %v4569 = vadd.f32 %v4567, %v4568
    %v4570 = vrot.slane %v4569, 1
    %v4571 = vadd.f32 %v4569, %v4570
    %v4572 = vsel %vm3041, %v4518, 0.0
    %v4573 = vrot.slane %v4572, 4
    %v4574 = vadd.f32 %v4572, %v4573
    %v4575 = vrot.slane %v4574, 2
    %v4576 = vadd.f32 %v4574, %v4575
    %v4577 = vrot.slane %v4576, 1
    %v4578 = vadd.f32 %v4576, %v4577
    %v4579 = vsel %vm3041, %v4557, 0.0
    %v4580 = vrot.slane %v4579, 4
    %v4581 = vadd.f32 %v4579, %v4580
    %v4582 = vrot.slane %v4581, 2
    %v4583 = vadd.f32 %v4581, %v4582
    %v4584 = vrot.slane %v4583, 1
    %v4585 = vadd.f32 %v4583, %v4584
    %v4586 = vsel %vm3041, %v4559, 0.0
    %v4587 = vrot.slane %v4586, 4
    %v4588 = vadd.f32 %v4586, %v4587
    %v4589 = vrot.slane %v4588, 2
    %v4590 = vadd.f32 %v4588, %v4589
    %v4591 = vrot.slane %v4590, 1
    %v4592 = vadd.f32 %v4590, %v4591
    %v4593 = vmul.f32 %v4571, 0.5
    %v4594 = vmul.f32 %v4578, 0.5
    %v4595 = vmul.f32 %v4585, 0.5
    %v4596 = vmul.f32 %v4592, 0.5
    %v4597 = vsub.f32 %v4516, %v4593
    %v4598 = vsub.f32 %v4518, %v4594
    %v4599 = vsub.f32 %v4557, %v4595
    %v4600 = vsub.f32 %v4559, %v4596
    %v4601 = vmul.f32 %v4597, %v4597
    %v4602 = vmul.f32 %v4598, %v4598
    %v4603 = vmul.f32 %v4599, %v4599
    %v4604 = vmul.f32 %v4600, %v4600
    %v4605 = vsel %vm3041, %v4601, 0.0
    %v4606 = vrot.slane %v4605, 4
    %v4607 = vadd.f32 %v4605, %v4606
    %v4608 = vrot.slane %v4607, 2
    %v4609 = vadd.f32 %v4607, %v4608
    %v4610 = vrot.slane %v4609, 1
    %v4611 = vadd.f32 %v4609, %v4610
    %v4612 = vsel %vm3041, %v4602, 0.0
    %v4613 = vrot.slane %v4612, 4
    %v4614 = vadd.f32 %v4612, %v4613
    %v4615 = vrot.slane %v4614, 2
    %v4616 = vadd.f32 %v4614, %v4615
    %v4617 = vrot.slane %v4616, 1
    %v4618 = vadd.f32 %v4616, %v4617
    %v4619 = vsel %vm3041, %v4603, 0.0
    %v4620 = vrot.slane %v4619, 4
    %v4621 = vadd.f32 %v4619, %v4620
    %v4622 = vrot.slane %v4621, 2
    %v4623 = vadd.f32 %v4621, %v4622
    %v4624 = vrot.slane %v4623, 1
    %v4625 = vadd.f32 %v4623, %v4624
    %v4626 = vsel %vm3041, %v4604, 0.0
    %v4627 = vrot.slane %v4626, 4
    %v4628 = vadd.f32 %v4626, %v4627
    %v4629 = vrot.slane %v4628, 2
    %v4630 = vadd.f32 %v4628, %v4629
    %v4631 = vrot.slane %v4630, 1
    %v4632 = vadd.f32 %v4630, %v4631
    %v4633 = vmul.f32 %v4611, 0.5
    %v4634 = vmul.f32 %v4618, 0.5
    %v4635 = vmul.f32 %v4625, 0.5
    %v4636 = vmul.f32 %v4632, 0.5
    %v4637 = vadd.f32 %v4633, 1e-05
    %v4638 = vadd.f32 %v4634, 1e-05
    %v4639 = vadd.f32 %v4635, 1e-05
    %v4640 = vadd.f32 %v4636, 1e-05
    %v4641 = vrsqrt.pop %v4637
    %v4642 = vrsqrt.pop %v4638
    %v4643 = vrsqrt.pop %v4639
    %v4644 = vrsqrt.pop %v4640
    %v4649 = vcombine.low %v4641, %v4642
    %v4650 = vcombine.low %v4643, %v4644
    %v4652 = vunpack.c.l.s4 1966171168
    %v4653 = vunpack.c.0.s8 %v4652
    %v4654 = vlaneseq
    %v4655 = vshrl.u32 %v4654, 7
    %v4656 = vsub.s32 %v4653, %v4655
    %v4657 = vrot.slane %v4649, %v4656
    %v4659 = vunpack.c.l.s4 1966171168
    %v4660 = vunpack.c.0.s8 %v4659
    %v4661 = vlaneseq
    %v4662 = vshrl.u32 %v4661, 7
    %v4663 = vsub.s32 %v4660, %v4662
    %v4664 = vrot.slane %v4650, %v4663
    %v4665 = vcombine.low %v4657, %v4664
    %v4667 = vunpack.c.l.s4 1966171168
    %v4668 = vunpack.c.0.s8 %v4667
    %v4669 = vlaneseq
    %v4670 = vshrl.u32 %v4669, 7
    %v4671 = vsub.s32 %v4668, %v4670
    %v4672 = vrot.slane %v4665, %v4671
    %v4674 = vmul.f32 %v4563, %v4672
    %v4676 = vlaneseq
    %v4677 = vshrl.u32 %v4676, 7
    %v4678 = vsub.s32 0, %v4677
    %v4679 = vrot.slane %v4674, %v4678
    %v4680 = vlaneseq
    %v4681 = vshrl.u32 %v4680, 7
    %v4682 = vsub.s32 1, %v4681
    %v4683 = vrot.slane %v4674, %v4682
    %v4684 = vlaneseq
    %v4685 = vshrl.u32 %v4684, 7
    %v4686 = vsub.s32 2, %v4685
    %v4687 = vrot.slane %v4674, %v4686
    %v4688 = vlaneseq
    %v4689 = vshrl.u32 %v4688, 7
    %v4690 = vsub.s32 3, %v4689
    %v4691 = vrot.slane %v4674, %v4690
    %v4696 = vmul.f32 %v4593, %v4679
    %v4697 = vmul.f32 %v4594, %v4683
    %v4698 = vmul.f32 %v4595, %v4687
    %v4699 = vmul.f32 %v4596, %v4691
    %v4704 = vcombine.low %v4696, %v4697
    %v4705 = vcombine.low %v4698, %v4699
    %v4707 = vunpack.c.l.s4 1966171168
    %v4708 = vunpack.c.0.s8 %v4707
    %v4709 = vlaneseq
    %v4710 = vshrl.u32 %v4709, 7
    %v4711 = vsub.s32 %v4708, %v4710
    %v4712 = vrot.slane %v4704, %v4711
    %v4714 = vunpack.c.l.s4 1966171168
    %v4715 = vunpack.c.0.s8 %v4714
    %v4716 = vlaneseq
    %v4717 = vshrl.u32 %v4716, 7
    %v4718 = vsub.s32 %v4715, %v4717
    %v4719 = vrot.slane %v4705, %v4718
    %v4720 = vcombine.low %v4712, %v4719
    %v4722 = vunpack.c.l.s4 1966171168
    %v4723 = vunpack.c.0.s8 %v4722
    %v4724 = vlaneseq
    %v4725 = vshrl.u32 %v4724, 7
    %v4726 = vsub.s32 %v4723, %v4725
    %v4727 = vrot.slane %v4720, %v4726
    %v4729 = vsub.f32 %v4564, %v4727
    %v4730 = vmul.f32 %v4516, %v4679
    %v4731 = vmul.f32 %v4518, %v4683
    %v4732 = vmul.f32 %v4557, %v4687
    %v4733 = vmul.f32 %v4559, %v4691
    %v4735 = vlaneseq
    %v4736 = vshrl.u32 %v4735, 7
    %v4737 = vsub.s32 0, %v4736
    %v4738 = vrot.slane %v4729, %v4737
    %v4739 = vlaneseq
    %v4740 = vshrl.u32 %v4739, 7
    %v4741 = vsub.s32 1, %v4740
    %v4742 = vrot.slane %v4729, %v4741
    %v4743 = vlaneseq
    %v4744 = vshrl.u32 %v4743, 7
    %v4745 = vsub.s32 2, %v4744
    %v4746 = vrot.slane %v4729, %v4745
    %v4747 = vlaneseq
    %v4748 = vshrl.u32 %v4747, 7
    %v4749 = vsub.s32 3, %v4748
    %v4750 = vrot.slane %v4729, %v4749
    %v4755 = vadd.f32 %v4730, %v4738
    %v4756 = vadd.f32 %v4731, %v4742
    %v4757 = vadd.f32 %v4732, %v4746
    %v4758 = vadd.f32 %v4733, %v4750
    %v4759 = vmax.f32 %v4755, 0.0
    %v4760 = vmax.f32 %v4756, 0.0
    %v4761 = vmax.f32 %v4757, 0.0
    %v4762 = vmax.f32 %v4758, 0.0
    %v4763 = vpack.c.bf16 %v4759, %v4759
    %v4764 = vpack.c.bf16 %v4760, %v4760
    %v4765 = vpack.c.bf16 %v4761, %v4761
    %v4766 = vpack.c.bf16 %v4762, %v4762
    %v4767 = vld [vmem:[#allocation7] sm:$0xff]
    %v4768 = vld [vmem:[#allocation7 + $0x8] sm:$0xff]
    %v4769 = vld [vmem:[#allocation7 + $0x10] sm:$0xff]
    %v4770 = vld [vmem:[#allocation7 + $0x18] sm:$0xff]
    %v4771 = vld [vmem:[#allocation7 + $0x20] sm:$0xff]
    %v4772 = vld [vmem:[#allocation7 + $0x28] sm:$0xff]
    %v4773 = vld [vmem:[#allocation7 + $0x30] sm:$0xff]
    %v4774 = vld [vmem:[#allocation7 + $0x38] sm:$0xff]
    %v4775 = vld [vmem:[#allocation7 + $0x40] sm:$0xff]
    %v4776 = vld [vmem:[#allocation7 + $0x48] sm:$0xff]
    %v4777 = vld [vmem:[#allocation7 + $0x50] sm:$0xff]
    %v4778 = vld [vmem:[#allocation7 + $0x58] sm:$0xff]
    %v4779 = vld [vmem:[#allocation7 + $0x60] sm:$0xff]
    %v4780 = vld [vmem:[#allocation7 + $0x68] sm:$0xff]
    %v4781 = vld [vmem:[#allocation7 + $0x70] sm:$0xff]
    %v4782 = vld [vmem:[#allocation7 + $0x78] sm:$0xff]
    %v4783 = vld [vmem:[#allocation7 + $0x80] sm:$0xff]
    %v4784 = vld [vmem:[#allocation7 + $0x88] sm:$0xff]
    %v4785 = vld [vmem:[#allocation7 + $0x90] sm:$0xff]
    %v4786 = vld [vmem:[#allocation7 + $0x98] sm:$0xff]
    %v4787 = vld [vmem:[#allocation7 + $0xa0] sm:$0xff]
    %v4788 = vld [vmem:[#allocation7 + $0xa8] sm:$0xff]
    %v4789 = vld [vmem:[#allocation7 + $0xb0] sm:$0xff]
    %v4790 = vld [vmem:[#allocation7 + $0xb8] sm:$0xff]
    %v4791 = vld [vmem:[#allocation7 + $0xc0] sm:$0xff]
    %v4792 = vld [vmem:[#allocation7 + $0xc8] sm:$0xff]
    %v4793 = vld [vmem:[#allocation7 + $0xd0] sm:$0xff]
    %v4794 = vld [vmem:[#allocation7 + $0xd8] sm:$0xff]
    %v4795 = vld [vmem:[#allocation7 + $0xe0] sm:$0xff]
    %v4796 = vld [vmem:[#allocation7 + $0xe8] sm:$0xff]
    %v4797 = vld [vmem:[#allocation7 + $0xf0] sm:$0xff]
    %v4798 = vld [vmem:[#allocation7 + $0xf8] sm:$0xff]
    %v4799 = vld [vmem:[#allocation7 + $0x100] sm:$0xff]
    %v4800 = vld [vmem:[#allocation7 + $0x108] sm:$0xff]
    %v4801 = vld [vmem:[#allocation7 + $0x110] sm:$0xff]
    %v4802 = vld [vmem:[#allocation7 + $0x118] sm:$0xff]
    %v4803 = vld [vmem:[#allocation7 + $0x120] sm:$0xff]
    %v4804 = vld [vmem:[#allocation7 + $0x128] sm:$0xff]
    %v4805 = vld [vmem:[#allocation7 + $0x130] sm:$0xff]
    %v4806 = vld [vmem:[#allocation7 + $0x138] sm:$0xff]
    %v4807 = vld [vmem:[#allocation7 + $0x140] sm:$0xff]
    %v4808 = vld [vmem:[#allocation7 + $0x148] sm:$0xff]
    %v4809 = vld [vmem:[#allocation7 + $0x150] sm:$0xff]
    %v4810 = vld [vmem:[#allocation7 + $0x158] sm:$0xff]
    %v4811 = vld [vmem:[#allocation7 + $0x160] sm:$0xff]
    %v4812 = vld [vmem:[#allocation7 + $0x168] sm:$0xff]
    %v4813 = vld [vmem:[#allocation7 + $0x170] sm:$0xff]
    %v4814 = vld [vmem:[#allocation7 + $0x178] sm:$0xff]
    %v4815 = vld [vmem:[#allocation7 + $0x180] sm:$0xff]
    %v4816 = vld [vmem:[#allocation7 + $0x188] sm:$0xff]
    %v4817 = vld [vmem:[#allocation7 + $0x190] sm:$0xff]
    %v4818 = vld [vmem:[#allocation7 + $0x198] sm:$0xff]
    %v4819 = vld [vmem:[#allocation7 + $0x1a0] sm:$0xff]
    %v4820 = vld [vmem:[#allocation7 + $0x1a8] sm:$0xff]
    %v4821 = vld [vmem:[#allocation7 + $0x1b0] sm:$0xff]
    %v4822 = vld [vmem:[#allocation7 + $0x1b8] sm:$0xff]
    %v4823 = vld [vmem:[#allocation7 + $0x1c0] sm:$0xff]
    %v4824 = vld [vmem:[#allocation7 + $0x1c8] sm:$0xff]
    %v4825 = vld [vmem:[#allocation7 + $0x1d0] sm:$0xff]
    %v4826 = vld [vmem:[#allocation7 + $0x1d8] sm:$0xff]
    %v4827 = vld [vmem:[#allocation7 + $0x1e0] sm:$0xff]
    %v4828 = vld [vmem:[#allocation7 + $0x1e8] sm:$0xff]
    %v4829 = vld [vmem:[#allocation7 + $0x1f0] sm:$0xff]
    %v4830 = vld [vmem:[#allocation7 + $0x1f8] sm:$0xff]
    %v4895 = vunpack.c.l.b16 %v4767
    %v4896 = vunpack.c.h.b16 %v4767
    %v4897 = vunpack.c.l.b16 %v4768
    %v4898 = vunpack.c.h.b16 %v4768
    %v4899 = vunpack.c.l.b16 %v4769
    %v4900 = vunpack.c.h.b16 %v4769
    %v4901 = vunpack.c.l.b16 %v4770
    %v4902 = vunpack.c.h.b16 %v4770
    %v4903 = vunpack.c.l.b16 %v4771
    %v4904 = vunpack.c.h.b16 %v4771
    %v4905 = vunpack.c.l.b16 %v4772
    %v4906 = vunpack.c.h.b16 %v4772
    %v4907 = vunpack.c.l.b16 %v4773
    %v4908 = vunpack.c.h.b16 %v4773
    %v4909 = vunpack.c.l.b16 %v4774
    %v4910 = vunpack.c.h.b16 %v4774
    %v4911 = vunpack.c.l.b16 %v4775
    %v4912 = vunpack.c.h.b16 %v4775
    %v4913 = vunpack.c.l.b16 %v4776
    %v4914 = vunpack.c.h.b16 %v4776
    %v4915 = vunpack.c.l.b16 %v4777
    %v4916 = vunpack.c.h.b16 %v4777
    %v4917 = vunpack.c.l.b16 %v4778
    %v4918 = vunpack.c.h.b16 %v4778
    %v4919 = vunpack.c.l.b16 %v4779
    %v4920 = vunpack.c.h.b16 %v4779
    %v4921 = vunpack.c.l.b16 %v4780
    %v4922 = vunpack.c.h.b16 %v4780
    %v4923 = vunpack.c.l.b16 %v4781
    %v4924 = vunpack.c.h.b16 %v4781
    %v4925 = vunpack.c.l.b16 %v4782
    %v4926 = vunpack.c.h.b16 %v4782
    %v4927 = vunpack.c.l.b16 %v4783
    %v4928 = vunpack.c.h.b16 %v4783
    %v4929 = vunpack.c.l.b16 %v4784
    %v4930 = vunpack.c.h.b16 %v4784
    %v4931 = vunpack.c.l.b16 %v4785
    %v4932 = vunpack.c.h.b16 %v4785
    %v4933 = vunpack.c.l.b16 %v4786
    %v4934 = vunpack.c.h.b16 %v4786
    %v4935 = vunpack.c.l.b16 %v4787
    %v4936 = vunpack.c.h.b16 %v4787
    %v4937 = vunpack.c.l.b16 %v4788
    %v4938 = vunpack.c.h.b16 %v4788
    %v4939 = vunpack.c.l.b16 %v4789
    %v4940 = vunpack.c.h.b16 %v4789
    %v4941 = vunpack.c.l.b16 %v4790
    %v4942 = vunpack.c.h.b16 %v4790
    %v4943 = vunpack.c.l.b16 %v4791
    %v4944 = vunpack.c.h.b16 %v4791
    %v4945 = vunpack.c.l.b16 %v4792
    %v4946 = vunpack.c.h.b16 %v4792
    %v4947 = vunpack.c.l.b16 %v4793
    %v4948 = vunpack.c.h.b16 %v4793
    %v4949 = vunpack.c.l.b16 %v4794
    %v4950 = vunpack.c.h.b16 %v4794
    %v4951 = vunpack.c.l.b16 %v4795
    %v4952 = vunpack.c.h.b16 %v4795
    %v4953 = vunpack.c.l.b16 %v4796
    %v4954 = vunpack.c.h.b16 %v4796
    %v4955 = vunpack.c.l.b16 %v4797
    %v4956 = vunpack.c.h.b16 %v4797
    %v4957 = vunpack.c.l.b16 %v4798
    %v4958 = vunpack.c.h.b16 %v4798
    %v4959 = vunpack.c.l.b16 %v4799
    %v4960 = vunpack.c.h.b16 %v4799
    %v4961 = vunpack.c.l.b16 %v4800
    %v4962 = vunpack.c.h.b16 %v4800
    %v4963 = vunpack.c.l.b16 %v4801
    %v4964 = vunpack.c.h.b16 %v4801
    %v4965 = vunpack.c.l.b16 %v4802
    %v4966 = vunpack.c.h.b16 %v4802
    %v4967 = vunpack.c.l.b16 %v4803
    %v4968 = vunpack.c.h.b16 %v4803
    %v4969 = vunpack.c.l.b16 %v4804
    %v4970 = vunpack.c.h.b16 %v4804
    %v4971 = vunpack.c.l.b16 %v4805
    %v4972 = vunpack.c.h.b16 %v4805
    %v4973 = vunpack.c.l.b16 %v4806
    %v4974 = vunpack.c.h.b16 %v4806
    %v4975 = vunpack.c.l.b16 %v4807
    %v4976 = vunpack.c.h.b16 %v4807
    %v4977 = vunpack.c.l.b16 %v4808
    %v4978 = vunpack.c.h.b16 %v4808
    %v4979 = vunpack.c.l.b16 %v4809
    %v4980 = vunpack.c.h.b16 %v4809
    %v4981 = vunpack.c.l.b16 %v4810
    %v4982 = vunpack.c.h.b16 %v4810
    %v4983 = vunpack.c.l.b16 %v4811
    %v4984 = vunpack.c.h.b16 %v4811
    %v4985 = vunpack.c.l.b16 %v4812
    %v4986 = vunpack.c.h.b16 %v4812
    %v4987 = vunpack.c.l.b16 %v4813
    %v4988 = vunpack.c.h.b16 %v4813
    %v4989 = vunpack.c.l.b16 %v4814
    %v4990 = vunpack.c.h.b16 %v4814
    %v4991 = vunpack.c.l.b16 %v4815
    %v4992 = vunpack.c.h.b16 %v4815
    %v4993 = vunpack.c.l.b16 %v4816
    %v4994 = vunpack.c.h.b16 %v4816
    %v4995 = vunpack.c.l.b16 %v4817
    %v4996 = vunpack.c.h.b16 %v4817
    %v4997 = vunpack.c.l.b16 %v4818
    %v4998 = vunpack.c.h.b16 %v4818
    %v4999 = vunpack.c.l.b16 %v4819
    %v5000 = vunpack.c.h.b16 %v4819
    %v5001 = vunpack.c.l.b16 %v4820
    %v5002 = vunpack.c.h.b16 %v4820
    %v5003 = vunpack.c.l.b16 %v4821
    %v5004 = vunpack.c.h.b16 %v4821
    %v5005 = vunpack.c.l.b16 %v4822
    %v5006 = vunpack.c.h.b16 %v4822
    %v5007 = vunpack.c.l.b16 %v4823
    %v5008 = vunpack.c.h.b16 %v4823
    %v5009 = vunpack.c.l.b16 %v4824
    %v5010 = vunpack.c.h.b16 %v4824
    %v5011 = vunpack.c.l.b16 %v4825
    %v5012 = vunpack.c.h.b16 %v4825
    %v5013 = vunpack.c.l.b16 %v4826
    %v5014 = vunpack.c.h.b16 %v4826
    %v5015 = vunpack.c.l.b16 %v4827
    %v5016 = vunpack.c.h.b16 %v4827
    %v5017 = vunpack.c.l.b16 %v4828
    %v5018 = vunpack.c.h.b16 %v4828
    %v5019 = vunpack.c.l.b16 %v4829
    %v5020 = vunpack.c.h.b16 %v4829
    %v5021 = vunpack.c.l.b16 %v4830
    %v5022 = vunpack.c.h.b16 %v4830
    %v5023 = vpack.c.b16 %v4897, %v4895
    %v5024 = vpack.c.b16 %v4898, %v4896
    %v5025 = vpack.c.b16 %v4901, %v4899
    %v5026 = vpack.c.b16 %v4902, %v4900
    %v5027 = vpack.c.b16 %v4905, %v4903
    %v5028 = vpack.c.b16 %v4906, %v4904
    %v5029 = vpack.c.b16 %v4909, %v4907
    %v5030 = vpack.c.b16 %v4910, %v4908
    %v5031 = vpack.c.b16 %v4913, %v4911
    %v5032 = vpack.c.b16 %v4914, %v4912
    %v5033 = vpack.c.b16 %v4917, %v4915
    %v5034 = vpack.c.b16 %v4918, %v4916
    %v5035 = vpack.c.b16 %v4921, %v4919
    %v5036 = vpack.c.b16 %v4922, %v4920
    %v5037 = vpack.c.b16 %v4925, %v4923
    %v5038 = vpack.c.b16 %v4926, %v4924
    %v5039 = vpack.c.b16 %v4929, %v4927
    %v5040 = vpack.c.b16 %v4930, %v4928
    %v5041 = vpack.c.b16 %v4933, %v4931
    %v5042 = vpack.c.b16 %v4934, %v4932
    %v5043 = vpack.c.b16 %v4937, %v4935
    %v5044 = vpack.c.b16 %v4938, %v4936
    %v5045 = vpack.c.b16 %v4941, %v4939
    %v5046 = vpack.c.b16 %v4942, %v4940
    %v5047 = vpack.c.b16 %v4945, %v4943
    %v5048 = vpack.c.b16 %v4946, %v4944
    %v5049 = vpack.c.b16 %v4949, %v4947
    %v5050 = vpack.c.b16 %v4950, %v4948
    %v5051 = vpack.c.b16 %v4953, %v4951
    %v5052 = vpack.c.b16 %v4954, %v4952
    %v5053 = vpack.c.b16 %v4957, %v4955
    %v5054 = vpack.c.b16 %v4958, %v4956
    %v5055 = vpack.c.b16 %v4961, %v4959
    %v5056 = vpack.c.b16 %v4962, %v4960
    %v5057 = vpack.c.b16 %v4965, %v4963
    %v5058 = vpack.c.b16 %v4966, %v4964
    %v5059 = vpack.c.b16 %v4969, %v4967
    %v5060 = vpack.c.b16 %v4970, %v4968
    %v5061 = vpack.c.b16 %v4973, %v4971
    %v5062 = vpack.c.b16 %v4974, %v4972
    %v5063 = vpack.c.b16 %v4977, %v4975
    %v5064 = vpack.c.b16 %v4978, %v4976
    %v5065 = vpack.c.b16 %v4981, %v4979
    %v5066 = vpack.c.b16 %v4982, %v4980
    %v5067 = vpack.c.b16 %v4985, %v4983
    %v5068 = vpack.c.b16 %v4986, %v4984
    %v5069 = vpack.c.b16 %v4989, %v4987
    %v5070 = vpack.c.b16 %v4990, %v4988
    %v5071 = vpack.c.b16 %v4993, %v4991
    %v5072 = vpack.c.b16 %v4994, %v4992
    %v5073 = vpack.c.b16 %v4997, %v4995
    %v5074 = vpack.c.b16 %v4998, %v4996
    %v5075 = vpack.c.b16 %v5001, %v4999
    %v5076 = vpack.c.b16 %v5002, %v5000
    %v5077 = vpack.c.b16 %v5005, %v5003
    %v5078 = vpack.c.b16 %v5006, %v5004
    %v5079 = vpack.c.b16 %v5009, %v5007
    %v5080 = vpack.c.b16 %v5010, %v5008
    %v5081 = vpack.c.b16 %v5013, %v5011
    %v5082 = vpack.c.b16 %v5014, %v5012
    %v5083 = vpack.c.b16 %v5017, %v5015
    %v5084 = vpack.c.b16 %v5018, %v5016
    %v5085 = vpack.c.b16 %v5021, %v5019
    %v5086 = vpack.c.b16 %v5022, %v5020
    %5151 = vmatprep.subr.bf16.mxu0 %v5024
    %5152 = vmatpush1.bf16.msra.mxu0 %v5023
    %5153 = vmatprep.subr.bf16.mxu0 %v5026
    %5154 = vmatpush1.bf16.msra.mxu0 %v5025
    %5155 = vmatprep.subr.bf16.mxu0 %v5028
    %5156 = vmatpush1.bf16.msra.mxu0 %v5027
    %5157 = vmatprep.subr.bf16.mxu0 %v5030
    %5158 = vmatpush1.bf16.msra.mxu0 %v5029
    %5159 = vmatprep.subr.bf16.mxu0 %v5032
    %5160 = vmatpush1.bf16.msra.mxu0 %v5031
    %5161 = vmatprep.subr.bf16.mxu0 %v5034
    %5162 = vmatpush1.bf16.msra.mxu0 %v5033
    %5163 = vmatprep.subr.bf16.mxu0 %v5036
    %5164 = vmatpush1.bf16.msra.mxu0 %v5035
    %5165 = vmatprep.subr.bf16.mxu0 %v5038
    %5166 = vmatpush1.bf16.msra.mxu0 %v5037
    %5167 = vmatprep.subr.bf16.mxu0 %v5040
    %5168 = vmatpush1.bf16.msra.mxu0 %v5039
    %5169 = vmatprep.subr.bf16.mxu0 %v5042
    %5170 = vmatpush1.bf16.msra.mxu0 %v5041
    %5171 = vmatprep.subr.bf16.mxu0 %v5044
    %5172 = vmatpush1.bf16.msra.mxu0 %v5043
    %5173 = vmatprep.subr.bf16.mxu0 %v5046
    %5174 = vmatpush1.bf16.msra.mxu0 %v5045
    %5175 = vmatprep.subr.bf16.mxu0 %v5048
    %5176 = vmatpush1.bf16.msra.mxu0 %v5047
    %5177 = vmatprep.subr.bf16.mxu0 %v5050
    %5178 = vmatpush1.bf16.msra.mxu0 %v5049
    %5179 = vmatprep.subr.bf16.mxu0 %v5052
    %5180 = vmatpush1.bf16.msra.mxu0 %v5051
    %5181 = vmatprep.subr.bf16.mxu0 %v5054
    %5182 = vmatpush1.bf16.msra.mxu0 %v5053
    %5183 = vmatprep.mubr.bf16.mxu0 %v4764
    %5184 = vmatmul.mubr.bf16.gmra.mrb[0].mxu0 %v4763
    %v5185 = vpop.f32.mrb[0].mxu0
    %v5186 = vadd.f32 0.0, %v5185
    %v5187 = vpop.f32.mrb[0].mxu0
    %v5188 = vadd.f32 0.0, %v5187
    %v5189 = vpop.f32.mrb[0].mxu0
    %v5190 = vpop.f32.mrb[0].mxu0
    %5191 = vdwg.mxu0
    %5192 = vmatprep.subr.bf16.mxu0 %v5056
    %5193 = vmatpush1.bf16.msra.mxu0 %v5055
    %5194 = vmatprep.subr.bf16.mxu0 %v5058
    %5195 = vmatpush1.bf16.msra.mxu0 %v5057
    %5196 = vmatprep.subr.bf16.mxu0 %v5060
    %5197 = vmatpush1.bf16.msra.mxu0 %v5059
    %5198 = vmatprep.subr.bf16.mxu0 %v5062
    %5199 = vmatpush1.bf16.msra.mxu0 %v5061
    %5200 = vmatprep.subr.bf16.mxu0 %v5064
    %5201 = vmatpush1.bf16.msra.mxu0 %v5063
    %5202 = vmatprep.subr.bf16.mxu0 %v5066
    %5203 = vmatpush1.bf16.msra.mxu0 %v5065
    %5204 = vmatprep.subr.bf16.mxu0 %v5068
    %5205 = vmatpush1.bf16.msra.mxu0 %v5067
    %5206 = vmatprep.subr.bf16.mxu0 %v5070
    %5207 = vmatpush1.bf16.msra.mxu0 %v5069
    %5208 = vmatprep.subr.bf16.mxu0 %v5072
    %5209 = vmatpush1.bf16.msra.mxu0 %v5071
    %5210 = vmatprep.subr.bf16.mxu0 %v5074
    %5211 = vmatpush1.bf16.msra.mxu0 %v5073
    %5212 = vmatprep.subr.bf16.mxu0 %v5076
    %5213 = vmatpush1.bf16.msra.mxu0 %v5075
    %5214 = vmatprep.subr.bf16.mxu0 %v5078
    %5215 = vmatpush1.bf16.msra.mxu0 %v5077
    %5216 = vmatprep.subr.bf16.mxu0 %v5080
    %5217 = vmatpush1.bf16.msra.mxu0 %v5079
    %5218 = vmatprep.subr.bf16.mxu0 %v5082
    %5219 = vmatpush1.bf16.msra.mxu0 %v5081
    %5220 = vmatprep.subr.bf16.mxu0 %v5084
    %5221 = vmatpush1.bf16.msra.mxu0 %v5083
    %5222 = vmatprep.subr.bf16.mxu0 %v5086
    %5223 = vmatpush1.bf16.msra.mxu0 %v5085
    %5224 = vmatprep.mubr.bf16.mxu0 %v4766
    %5225 = vmatmul.mubr.bf16.gmra.mrb[0].mxu0 %v4765
    %v5226 = vpop.f32.mrb[0].mxu0
    %v5227 = vadd.f32 %v5186, %v5226
    %v5228 = vpop.f32.mrb[0].mxu0
    %v5229 = vadd.f32 %v5188, %v5228
    %v5230 = vpop.f32.mrb[0].mxu0
    %v5231 = vpop.f32.mrb[0].mxu0
    %5232 = vdwg.mxu0
    %v5233 = vld [vmem:[%s3710] ss:$8 sm:$0x3]
    %v5234 = vld [vmem:[%s3712] ss:$8 sm:$0x3]
    %v5235 = vsel %vm3041, %v5227, 0.0
    %v5236 = vrot.slane %v5235, 4
    %v5237 = vadd.f32 %v5235, %v5236
    %v5238 = vrot.slane %v5237, 2
    %v5239 = vadd.f32 %v5237, %v5238
    %v5240 = vrot.slane %v5239, 1
    %v5241 = vadd.f32 %v5239, %v5240
    %v5242 = vsel %vm3041, %v5229, 0.0
    %v5243 = vrot.slane %v5242, 4
    %v5244 = vadd.f32 %v5242, %v5243
    %v5245 = vrot.slane %v5244, 2
    %v5246 = vadd.f32 %v5244, %v5245
    %v5247 = vrot.slane %v5246, 1
    %v5248 = vadd.f32 %v5246, %v5247
    %v5249 = vmul.f32 %v5241, 0.5
    %v5250 = vmul.f32 %v5248, 0.5
    %v5251 = vsub.f32 %v5227, %v5249
    %v5252 = vsub.f32 %v5229, %v5250
    %v5253 = vmul.f32 %v5251, %v5251
    %v5254 = vmul.f32 %v5252, %v5252
    %v5255 = vsel %vm3041, %v5253, 0.0
    %v5256 = vrot.slane %v5255, 4
    %v5257 = vadd.f32 %v5255, %v5256
    %v5258 = vrot.slane %v5257, 2
    %v5259 = vadd.f32 %v5257, %v5258
    %v5260 = vrot.slane %v5259, 1
    %v5261 = vadd.f32 %v5259, %v5260
    %v5262 = vsel %vm3041, %v5254, 0.0
    %v5263 = vrot.slane %v5262, 4
    %v5264 = vadd.f32 %v5262, %v5263
    %v5265 = vrot.slane %v5264, 2
    %v5266 = vadd.f32 %v5264, %v5265
    %v5267 = vrot.slane %v5266, 1
    %v5268 = vadd.f32 %v5266, %v5267
    %v5269 = vmul.f32 %v5261, 0.5
    %v5270 = vmul.f32 %v5268, 0.5
    %v5271 = vadd.f32 %v5269, 1e-05
    %v5272 = vadd.f32 %v5270, 1e-05
    %v5273 = vrsqrt.pop %v5271
    %v5274 = vrsqrt.pop %v5272
    %v5277 = vcombine.low %v5273, %v5274
    %v5279 = vunpack.c.l.s4 1966171168
    %v5280 = vunpack.c.0.s8 %v5279
    %v5281 = vlaneseq
    %v5282 = vshrl.u32 %v5281, 7
    %v5283 = vsub.s32 %v5280, %v5282
    %v5284 = vrot.slane %v5277, %v5283
    %v5286 = vunpack.c.l.s4 1966171168
    %v5287 = vunpack.c.0.s8 %v5286
    %v5288 = vlaneseq
    %v5289 = vshrl.u32 %v5288, 7
    %v5290 = vsub.s32 %v5287, %v5289
    %v5291 = vrot.slane %v5284, %v5290
    %v5293 = vmul.f32 %v5233, %v5291
    %v5295 = vlaneseq
    %v5296 = vshrl.u32 %v5295, 7
    %v5297 = vsub.s32 0, %v5296
    %v5298 = vrot.slane %v5293, %v5297
    %v5299 = vlaneseq
    %v5300 = vshrl.u32 %v5299, 7
    %v5301 = vsub.s32 1, %v5300
    %v5302 = vrot.slane %v5293, %v5301
    %v5305 = vmul.f32 %v5249, %v5298
    %v5306 = vmul.f32 %v5250, %v5302
    %v5309 = vcombine.low %v5305, %v5306
    %v5311 = vunpack.c.l.s4 1966171168
    %v5312 = vunpack.c.0.s8 %v5311
    %v5313 = vlaneseq
    %v5314 = vshrl.u32 %v5313, 7
    %v5315 = vsub.s32 %v5312, %v5314
    %v5316 = vrot.slane %v5309, %v5315
    %v5318 = vunpack.c.l.s4 1966171168
    %v5319 = vunpack.c.0.s8 %v5318
    %v5320 = vlaneseq
    %v5321 = vshrl.u32 %v5320, 7
    %v5322 = vsub.s32 %v5319, %v5321
    %v5323 = vrot.slane %v5316, %v5322
    %v5325 = vsub.f32 %v5234, %v5323
    %v5326 = vmul.f32 %v5227, %v5298
    %v5327 = vmul.f32 %v5229, %v5302
    %v5329 = vlaneseq
    %v5330 = vshrl.u32 %v5329, 7
    %v5331 = vsub.s32 0, %v5330
    %v5332 = vrot.slane %v5325, %v5331
    %v5333 = vlaneseq
    %v5334 = vshrl.u32 %v5333, 7
    %v5335 = vsub.s32 1, %v5334
    %v5336 = vrot.slane %v5325, %v5335
    %v5339 = vadd.f32 %v5326, %v5332
    %v5340 = vadd.f32 %v5327, %v5336
    %v5341 = vmax.f32 %v5339, 0.0
    %v5342 = vmax.f32 %v5340, 0.0
    %v5343 = vpack.c.bf16 %v5341, %v5341
    %v5344 = vpack.c.bf16 %v5342, %v5342
    %v5345 = vld [vmem:[#allocation9] sm:$0xff]
    %v5346 = vld [vmem:[#allocation9 + $0x8] sm:$0xff]
    %v5347 = vld [vmem:[#allocation9 + $0x10] sm:$0xff]
    %v5348 = vld [vmem:[#allocation9 + $0x18] sm:$0xff]
    %v5349 = vld [vmem:[#allocation9 + $0x20] sm:$0xff]
    %v5350 = vld [vmem:[#allocation9 + $0x28] sm:$0xff]
    %v5351 = vld [vmem:[#allocation9 + $0x30] sm:$0xff]
    %v5352 = vld [vmem:[#allocation9 + $0x38] sm:$0xff]
    %v5353 = vld [vmem:[#allocation9 + $0x40] sm:$0xff]
    %v5354 = vld [vmem:[#allocation9 + $0x48] sm:$0xff]
    %v5355 = vld [vmem:[#allocation9 + $0x50] sm:$0xff]
    %v5356 = vld [vmem:[#allocation9 + $0x58] sm:$0xff]
    %v5357 = vld [vmem:[#allocation9 + $0x60] sm:$0xff]
    %v5358 = vld [vmem:[#allocation9 + $0x68] sm:$0xff]
    %v5359 = vld [vmem:[#allocation9 + $0x70] sm:$0xff]
    %v5360 = vld [vmem:[#allocation9 + $0x78] sm:$0xff]
    %v5361 = vld [vmem:[#allocation9 + $0x80] sm:$0xff]
    %v5362 = vld [vmem:[#allocation9 + $0x88] sm:$0xff]
    %v5363 = vld [vmem:[#allocation9 + $0x90] sm:$0xff]
    %v5364 = vld [vmem:[#allocation9 + $0x98] sm:$0xff]
    %v5365 = vld [vmem:[#allocation9 + $0xa0] sm:$0xff]
    %v5366 = vld [vmem:[#allocation9 + $0xa8] sm:$0xff]
    %v5367 = vld [vmem:[#allocation9 + $0xb0] sm:$0xff]
    %v5368 = vld [vmem:[#allocation9 + $0xb8] sm:$0xff]
    %v5369 = vld [vmem:[#allocation9 + $0xc0] sm:$0xff]
    %v5370 = vld [vmem:[#allocation9 + $0xc8] sm:$0xff]
    %v5371 = vld [vmem:[#allocation9 + $0xd0] sm:$0xff]
    %v5372 = vld [vmem:[#allocation9 + $0xd8] sm:$0xff]
    %v5373 = vld [vmem:[#allocation9 + $0xe0] sm:$0xff]
    %v5374 = vld [vmem:[#allocation9 + $0xe8] sm:$0xff]
    %v5375 = vld [vmem:[#allocation9 + $0xf0] sm:$0xff]
    %v5376 = vld [vmem:[#allocation9 + $0xf8] sm:$0xff]
    %v5377 = vld [vmem:[%s3856] ss:$8 sm:$0x3]
    %v5379 = vlaneseq
    %v5380 = vshrl.u32 %v5379, 7
    %v5381 = vsub.s32 0, %v5380
    %v5382 = vrot.slane %v5377, %v5381
    %v5383 = vlaneseq
    %v5384 = vshrl.u32 %v5383, 7
    %v5385 = vsub.s32 1, %v5384
    %v5386 = vrot.slane %v5377, %v5385
    %v5421 = vunpack.c.l.b16 %v5345
    %v5422 = vunpack.c.h.b16 %v5345
    %v5423 = vunpack.c.l.b16 %v5346
    %v5424 = vunpack.c.h.b16 %v5346
    %v5425 = vunpack.c.l.b16 %v5347
    %v5426 = vunpack.c.h.b16 %v5347
    %v5427 = vunpack.c.l.b16 %v5348
    %v5428 = vunpack.c.h.b16 %v5348
    %v5429 = vunpack.c.l.b16 %v5349
    %v5430 = vunpack.c.h.b16 %v5349
    %v5431 = vunpack.c.l.b16 %v5350
    %v5432 = vunpack.c.h.b16 %v5350
    %v5433 = vunpack.c.l.b16 %v5351
    %v5434 = vunpack.c.h.b16 %v5351
    %v5435 = vunpack.c.l.b16 %v5352
    %v5436 = vunpack.c.h.b16 %v5352
    %v5437 = vunpack.c.l.b16 %v5353
    %v5438 = vunpack.c.h.b16 %v5353
    %v5439 = vunpack.c.l.b16 %v5354
    %v5440 = vunpack.c.h.b16 %v5354
    %v5441 = vunpack.c.l.b16 %v5355
    %v5442 = vunpack.c.h.b16 %v5355
    %v5443 = vunpack.c.l.b16 %v5356
    %v5444 = vunpack.c.h.b16 %v5356
    %v5445 = vunpack.c.l.b16 %v5357
    %v5446 = vunpack.c.h.b16 %v5357
    %v5447 = vunpack.c.l.b16 %v5358
    %v5448 = vunpack.c.h.b16 %v5358
    %v5449 = vunpack.c.l.b16 %v5359
    %v5450 = vunpack.c.h.b16 %v5359
    %v5451 = vunpack.c.l.b16 %v5360
    %v5452 = vunpack.c.h.b16 %v5360
    %v5453 = vunpack.c.l.b16 %v5361
    %v5454 = vunpack.c.h.b16 %v5361
    %v5455 = vunpack.c.l.b16 %v5362
    %v5456 = vunpack.c.h.b16 %v5362
    %v5457 = vunpack.c.l.b16 %v5363
    %v5458 = vunpack.c.h.b16 %v5363
    %v5459 = vunpack.c.l.b16 %v5364
    %v5460 = vunpack.c.h.b16 %v5364
    %v5461 = vunpack.c.l.b16 %v5365
    %v5462 = vunpack.c.h.b16 %v5365
    %v5463 = vunpack.c.l.b16 %v5366
    %v5464 = vunpack.c.h.b16 %v5366
    %v5465 = vunpack.c.l.b16 %v5367
    %v5466 = vunpack.c.h.b16 %v5367
    %v5467 = vunpack.c.l.b16 %v5368
    %v5468 = vunpack.c.h.b16 %v5368
    %v5469 = vunpack.c.l.b16 %v5369
    %v5470 = vunpack.c.h.b16 %v5369
    %v5471 = vunpack.c.l.b16 %v5370
    %v5472 = vunpack.c.h.b16 %v5370
    %v5473 = vunpack.c.l.b16 %v5371
    %v5474 = vunpack.c.h.b16 %v5371
    %v5475 = vunpack.c.l.b16 %v5372
    %v5476 = vunpack.c.h.b16 %v5372
    %v5477 = vunpack.c.l.b16 %v5373
    %v5478 = vunpack.c.h.b16 %v5373
    %v5479 = vunpack.c.l.b16 %v5374
    %v5480 = vunpack.c.h.b16 %v5374
    %v5481 = vunpack.c.l.b16 %v5375
    %v5482 = vunpack.c.h.b16 %v5375
    %v5483 = vunpack.c.l.b16 %v5376
    %v5484 = vunpack.c.h.b16 %v5376
    %v5485 = vpack.c.b16 %v5423, %v5421
    %v5486 = vpack.c.b16 %v5424, %v5422
    %v5487 = vpack.c.b16 %v5427, %v5425
    %v5488 = vpack.c.b16 %v5428, %v5426
    %v5489 = vpack.c.b16 %v5431, %v5429
    %v5490 = vpack.c.b16 %v5432, %v5430
    %v5491 = vpack.c.b16 %v5435, %v5433
    %v5492 = vpack.c.b16 %v5436, %v5434
    %v5493 = vpack.c.b16 %v5439, %v5437
    %v5494 = vpack.c.b16 %v5440, %v5438
    %v5495 = vpack.c.b16 %v5443, %v5441
    %v5496 = vpack.c.b16 %v5444, %v5442
    %v5497 = vpack.c.b16 %v5447, %v5445
    %v5498 = vpack.c.b16 %v5448, %v5446
    %v5499 = vpack.c.b16 %v5451, %v5449
    %v5500 = vpack.c.b16 %v5452, %v5450
    %v5501 = vpack.c.b16 %v5455, %v5453
    %v5502 = vpack.c.b16 %v5456, %v5454
    %v5503 = vpack.c.b16 %v5459, %v5457
    %v5504 = vpack.c.b16 %v5460, %v5458
    %v5505 = vpack.c.b16 %v5463, %v5461
    %v5506 = vpack.c.b16 %v5464, %v5462
    %v5507 = vpack.c.b16 %v5467, %v5465
    %v5508 = vpack.c.b16 %v5468, %v5466
    %v5509 = vpack.c.b16 %v5471, %v5469
    %v5510 = vpack.c.b16 %v5472, %v5470
    %v5511 = vpack.c.b16 %v5475, %v5473
    %v5512 = vpack.c.b16 %v5476, %v5474
    %v5513 = vpack.c.b16 %v5479, %v5477
    %v5514 = vpack.c.b16 %v5480, %v5478
    %v5515 = vpack.c.b16 %v5483, %v5481
    %v5516 = vpack.c.b16 %v5484, %v5482
    %5549 = vmatprep.subr.bf16.mxu0 %v5486
    %5550 = vmatpush1.bf16.msra.mxu0 %v5485
    %5551 = vmatprep.subr.bf16.mxu0 %v5488
    %5552 = vmatpush1.bf16.msra.mxu0 %v5487
    %5553 = vmatprep.subr.bf16.mxu0 %v5490
    %5554 = vmatpush1.bf16.msra.mxu0 %v5489
    %5555 = vmatprep.subr.bf16.mxu0 %v5492
    %5556 = vmatpush1.bf16.msra.mxu0 %v5491
    %5557 = vmatprep.subr.bf16.mxu0 %v5494
    %5558 = vmatpush1.bf16.msra.mxu0 %v5493
    %5559 = vmatprep.subr.bf16.mxu0 %v5496
    %5560 = vmatpush1.bf16.msra.mxu0 %v5495
    %5561 = vmatprep.subr.bf16.mxu0 %v5498
    %5562 = vmatpush1.bf16.msra.mxu0 %v5497
    %5563 = vmatprep.subr.bf16.mxu0 %v5500
    %5564 = vmatpush1.bf16.msra.mxu0 %v5499
    %5565 = vmatprep.subr.bf16.mxu0 %v5502
    %5566 = vmatpush1.bf16.msra.mxu0 %v5501
    %5567 = vmatprep.subr.bf16.mxu0 %v5504
    %5568 = vmatpush1.bf16.msra.mxu0 %v5503
    %5569 = vmatprep.subr.bf16.mxu0 %v5506
    %5570 = vmatpush1.bf16.msra.mxu0 %v5505
    %5571 = vmatprep.subr.bf16.mxu0 %v5508
    %5572 = vmatpush1.bf16.msra.mxu0 %v5507
    %5573 = vmatprep.subr.bf16.mxu0 %v5510
    %5574 = vmatpush1.bf16.msra.mxu0 %v5509
    %5575 = vmatprep.subr.bf16.mxu0 %v5512
    %5576 = vmatpush1.bf16.msra.mxu0 %v5511
    %5577 = vmatprep.subr.bf16.mxu0 %v5514
    %5578 = vmatpush1.bf16.msra.mxu0 %v5513
    %5579 = vmatprep.subr.bf16.mxu0 %v5516
    %5580 = vmatpush1.bf16.msra.mxu0 %v5515
    %5581 = vmatprep.mubr.bf16.mxu0 %v5344
    %5582 = vmatmul.mubr.bf16.gmra.mrb[0].mxu0 %v5343
    %v5583 = vpop.f32.mrb[0].mxu0
    %v5584 = vadd.f32 %v5382, %v5583
    %v5585 = vpop.f32.mrb[0].mxu0
    %v5586 = vadd.f32 %v5386, %v5585
    %v5587 = vpop.f32.mrb[0].mxu0
    %v5588 = vpop.f32.mrb[0].mxu0
    %5589 = vdwg.mxu0
    %v5592 = vcombine.low %v5584, %v5586
    %v5594 = vunpack.c.l.s4 1983009808
    %v5595 = vunpack.c.0.s8 %v5594
    %v5596 = vlaneseq
    %v5597 = vshrl.u32 %v5596, 7
    %v5598 = vsub.s32 %v5595, %v5597
    %v5599 = vrot.slane %v5592, %v5598
    %s5601 = scalar_lea.vmem %s12, 8
    %5602 = vst [vmem:[%s5601] sm:$0xf] %v5599
    %v5603 = vpack.c.bf16 %v5584, %v5584
    %v5604 = vpack.c.bf16 %v5586, %v5586
    %v5605 = vld [vmem:[%s6] sm:$0xff]
    %v5606 = vld [vmem:[%s6 + $0x8] sm:$0xff]
    %v5607 = vld [vmem:[%s6 + $0x10] sm:$0xff]
    %v5608 = vld [vmem:[%s6 + $0x18] sm:$0xff]
    %v5609 = vld [vmem:[%s6 + $0x20] sm:$0xff]
    %v5610 = vld [vmem:[%s6 + $0x28] sm:$0xff]
    %v5611 = vld [vmem:[%s6 + $0x30] sm:$0xff]
    %v5612 = vld [vmem:[%s6 + $0x38] sm:$0xff]
    %v5613 = vld [vmem:[%s6 + $0x40] sm:$0xff]
    %v5614 = vld [vmem:[%s6 + $0x48] sm:$0xff]
    %v5615 = vld [vmem:[%s6 + $0x50] sm:$0xff]
    %v5616 = vld [vmem:[%s6 + $0x58] sm:$0xff]
    %v5617 = vld [vmem:[%s6 + $0x60] sm:$0xff]
    %v5618 = vld [vmem:[%s6 + $0x68] sm:$0xff]
    %v5619 = vld [vmem:[%s6 + $0x70] sm:$0xff]
    %v5620 = vld [vmem:[%s6 + $0x78] sm:$0xff]
    %v5621 = vld [vmem:[%s6 + $0x80] sm:$0xff]
    %v5622 = vld [vmem:[%s6 + $0x88] sm:$0xff]
    %v5623 = vld [vmem:[%s6 + $0x90] sm:$0xff]
    %v5624 = vld [vmem:[%s6 + $0x98] sm:$0xff]
    %v5625 = vld [vmem:[%s6 + $0xa0] sm:$0xff]
    %v5626 = vld [vmem:[%s6 + $0xa8] sm:$0xff]
    %v5627 = vld [vmem:[%s6 + $0xb0] sm:$0xff]
    %v5628 = vld [vmem:[%s6 + $0xb8] sm:$0xff]
    %v5629 = vld [vmem:[%s6 + $0xc0] sm:$0xff]
    %v5630 = vld [vmem:[%s6 + $0xc8] sm:$0xff]
    %v5631 = vld [vmem:[%s6 + $0xd0] sm:$0xff]
    %v5632 = vld [vmem:[%s6 + $0xd8] sm:$0xff]
    %v5633 = vld [vmem:[%s6 + $0xe0] sm:$0xff]
    %v5634 = vld [vmem:[%s6 + $0xe8] sm:$0xff]
    %v5635 = vld [vmem:[%s6 + $0xf0] sm:$0xff]
    %v5636 = vld [vmem:[%s6 + $0xf8] sm:$0xff]
    %v5637 = vld [vmem:[%s6 + $0x100] sm:$0xff]
    %v5638 = vld [vmem:[%s6 + $0x108] sm:$0xff]
    %v5639 = vld [vmem:[%s6 + $0x110] sm:$0xff]
    %v5640 = vld [vmem:[%s6 + $0x118] sm:$0xff]
    %v5641 = vld [vmem:[%s6 + $0x120] sm:$0xff]
    %v5642 = vld [vmem:[%s6 + $0x128] sm:$0xff]
    %v5643 = vld [vmem:[%s6 + $0x130] sm:$0xff]
    %v5644 = vld [vmem:[%s6 + $0x138] sm:$0xff]
    %v5645 = vld [vmem:[%s6 + $0x140] sm:$0xff]
    %v5646 = vld [vmem:[%s6 + $0x148] sm:$0xff]
    %v5647 = vld [vmem:[%s6 + $0x150] sm:$0xff]
    %v5648 = vld [vmem:[%s6 + $0x158] sm:$0xff]
    %v5649 = vld [vmem:[%s6 + $0x160] sm:$0xff]
    %v5650 = vld [vmem:[%s6 + $0x168] sm:$0xff]
    %v5651 = vld [vmem:[%s6 + $0x170] sm:$0xff]
    %v5652 = vld [vmem:[%s6 + $0x178] sm:$0xff]
    %v5653 = vld [vmem:[%s6 + $0x180] sm:$0xff]
    %v5654 = vld [vmem:[%s6 + $0x188] sm:$0xff]
    %v5655 = vld [vmem:[%s6 + $0x190] sm:$0xff]
    %v5656 = vld [vmem:[%s6 + $0x198] sm:$0xff]
    %v5657 = vld [vmem:[%s6 + $0x1a0] sm:$0xff]
    %v5658 = vld [vmem:[%s6 + $0x1a8] sm:$0xff]
    %v5659 = vld [vmem:[%s6 + $0x1b0] sm:$0xff]
    %v5660 = vld [vmem:[%s6 + $0x1b8] sm:$0xff]
    %v5661 = vld [vmem:[%s6 + $0x1c0] sm:$0xff]
    %v5662 = vld [vmem:[%s6 + $0x1c8] sm:$0xff]
    %v5663 = vld [vmem:[%s6 + $0x1d0] sm:$0xff]
    %v5664 = vld [vmem:[%s6 + $0x1d8] sm:$0xff]
    %v5665 = vld [vmem:[%s6 + $0x1e0] sm:$0xff]
    %v5666 = vld [vmem:[%s6 + $0x1e8] sm:$0xff]
    %v5667 = vld [vmem:[%s6 + $0x1f0] sm:$0xff]
    %v5668 = vld [vmem:[%s6 + $0x1f8] sm:$0xff]
    %v5733 = vunpack.c.l.b16 %v5605
    %v5734 = vunpack.c.h.b16 %v5605
    %v5735 = vunpack.c.l.b16 %v5606
    %v5736 = vunpack.c.h.b16 %v5606
    %v5737 = vunpack.c.l.b16 %v5607
    %v5738 = vunpack.c.h.b16 %v5607
    %v5739 = vunpack.c.l.b16 %v5608
    %v5740 = vunpack.c.h.b16 %v5608
    %v5741 = vunpack.c.l.b16 %v5609
    %v5742 = vunpack.c.h.b16 %v5609
    %v5743 = vunpack.c.l.b16 %v5610
    %v5744 = vunpack.c.h.b16 %v5610
    %v5745 = vunpack.c.l.b16 %v5611
    %v5746 = vunpack.c.h.b16 %v5611
    %v5747 = vunpack.c.l.b16 %v5612
    %v5748 = vunpack.c.h.b16 %v5612
    %v5749 = vunpack.c.l.b16 %v5613
    %v5750 = vunpack.c.h.b16 %v5613
    %v5751 = vunpack.c.l.b16 %v5614
    %v5752 = vunpack.c.h.b16 %v5614
    %v5753 = vunpack.c.l.b16 %v5615
    %v5754 = vunpack.c.h.b16 %v5615
    %v5755 = vunpack.c.l.b16 %v5616
    %v5756 = vunpack.c.h.b16 %v5616
    %v5757 = vunpack.c.l.b16 %v5617
    %v5758 = vunpack.c.h.b16 %v5617
    %v5759 = vunpack.c.l.b16 %v5618
    %v5760 = vunpack.c.h.b16 %v5618
    %v5761 = vunpack.c.l.b16 %v5619
    %v5762 = vunpack.c.h.b16 %v5619
    %v5763 = vunpack.c.l.b16 %v5620
    %v5764 = vunpack.c.h.b16 %v5620
    %v5765 = vunpack.c.l.b16 %v5621
    %v5766 = vunpack.c.h.b16 %v5621
    %v5767 = vunpack.c.l.b16 %v5622
    %v5768 = vunpack.c.h.b16 %v5622
    %v5769 = vunpack.c.l.b16 %v5623
    %v5770 = vunpack.c.h.b16 %v5623
    %v5771 = vunpack.c.l.b16 %v5624
    %v5772 = vunpack.c.h.b16 %v5624
    %v5773 = vunpack.c.l.b16 %v5625
    %v5774 = vunpack.c.h.b16 %v5625
    %v5775 = vunpack.c.l.b16 %v5626
    %v5776 = vunpack.c.h.b16 %v5626
    %v5777 = vunpack.c.l.b16 %v5627
    %v5778 = vunpack.c.h.b16 %v5627
    %v5779 = vunpack.c.l.b16 %v5628
    %v5780 = vunpack.c.h.b16 %v5628
    %v5781 = vunpack.c.l.b16 %v5629
    %v5782 = vunpack.c.h.b16 %v5629
    %v5783 = vunpack.c.l.b16 %v5630
    %v5784 = vunpack.c.h.b16 %v5630
    %v5785 = vunpack.c.l.b16 %v5631
    %v5786 = vunpack.c.h.b16 %v5631
    %v5787 = vunpack.c.l.b16 %v5632
    %v5788 = vunpack.c.h.b16 %v5632
    %v5789 = vunpack.c.l.b16 %v5633
    %v5790 = vunpack.c.h.b16 %v5633
    %v5791 = vunpack.c.l.b16 %v5634
    %v5792 = vunpack.c.h.b16 %v5634
    %v5793 = vunpack.c.l.b16 %v5635
    %v5794 = vunpack.c.h.b16 %v5635
    %v5795 = vunpack.c.l.b16 %v5636
    %v5796 = vunpack.c.h.b16 %v5636
    %v5797 = vunpack.c.l.b16 %v5637
    %v5798 = vunpack.c.h.b16 %v5637
    %v5799 = vunpack.c.l.b16 %v5638
    %v5800 = vunpack.c.h.b16 %v5638
    %v5801 = vunpack.c.l.b16 %v5639
    %v5802 = vunpack.c.h.b16 %v5639
    %v5803 = vunpack.c.l.b16 %v5640
    %v5804 = vunpack.c.h.b16 %v5640
    %v5805 = vunpack.c.l.b16 %v5641
    %v5806 = vunpack.c.h.b16 %v5641
    %v5807 = vunpack.c.l.b16 %v5642
    %v5808 = vunpack.c.h.b16 %v5642
    %v5809 = vunpack.c.l.b16 %v5643
    %v5810 = vunpack.c.h.b16 %v5643
    %v5811 = vunpack.c.l.b16 %v5644
    %v5812 = vunpack.c.h.b16 %v5644
    %v5813 = vunpack.c.l.b16 %v5645
    %v5814 = vunpack.c.h.b16 %v5645
    %v5815 = vunpack.c.l.b16 %v5646
    %v5816 = vunpack.c.h.b16 %v5646
    %v5817 = vunpack.c.l.b16 %v5647
    %v5818 = vunpack.c.h.b16 %v5647
    %v5819 = vunpack.c.l.b16 %v5648
    %v5820 = vunpack.c.h.b16 %v5648
    %v5821 = vunpack.c.l.b16 %v5649
    %v5822 = vunpack.c.h.b16 %v5649
    %v5823 = vunpack.c.l.b16 %v5650
    %v5824 = vunpack.c.h.b16 %v5650
    %v5825 = vunpack.c.l.b16 %v5651
    %v5826 = vunpack.c.h.b16 %v5651
    %v5827 = vunpack.c.l.b16 %v5652
    %v5828 = vunpack.c.h.b16 %v5652
    %v5829 = vunpack.c.l.b16 %v5653
    %v5830 = vunpack.c.h.b16 %v5653
    %v5831 = vunpack.c.l.b16 %v5654
    %v5832 = vunpack.c.h.b16 %v5654
    %v5833 = vunpack.c.l.b16 %v5655
    %v5834 = vunpack.c.h.b16 %v5655
    %v5835 = vunpack.c.l.b16 %v5656
    %v5836 = vunpack.c.h.b16 %v5656
    %v5837 = vunpack.c.l.b16 %v5657
    %v5838 = vunpack.c.h.b16 %v5657
    %v5839 = vunpack.c.l.b16 %v5658
    %v5840 = vunpack.c.h.b16 %v5658
    %v5841 = vunpack.c.l.b16 %v5659
    %v5842 = vunpack.c.h.b16 %v5659
    %v5843 = vunpack.c.l.b16 %v5660
    %v5844 = vunpack.c.h.b16 %v5660
    %v5845 = vunpack.c.l.b16 %v5661
    %v5846 = vunpack.c.h.b16 %v5661
    %v5847 = vunpack.c.l.b16 %v5662
    %v5848 = vunpack.c.h.b16 %v5662
    %v5849 = vunpack.c.l.b16 %v5663
    %v5850 = vunpack.c.h.b16 %v5663
    %v5851 = vunpack.c.l.b16 %v5664
    %v5852 = vunpack.c.h.b16 %v5664
    %v5853 = vunpack.c.l.b16 %v5665
    %v5854 = vunpack.c.h.b16 %v5665
    %v5855 = vunpack.c.l.b16 %v5666
    %v5856 = vunpack.c.h.b16 %v5666
    %v5857 = vunpack.c.l.b16 %v5667
    %v5858 = vunpack.c.h.b16 %v5667
    %v5859 = vunpack.c.l.b16 %v5668
    %v5860 = vunpack.c.h.b16 %v5668
    %v5861 = vpack.c.b16 %v5737, %v5733
    %v5862 = vpack.c.b16 %v5738, %v5734
    %v5863 = vpack.c.b16 %v5739, %v5735
    %v5864 = vpack.c.b16 %v5740, %v5736
    %v5865 = vpack.c.b16 %v5745, %v5741
    %v5866 = vpack.c.b16 %v5746, %v5742
    %v5867 = vpack.c.b16 %v5747, %v5743
    %v5868 = vpack.c.b16 %v5748, %v5744
    %v5869 = vpack.c.b16 %v5753, %v5749
    %v5870 = vpack.c.b16 %v5754, %v5750
    %v5871 = vpack.c.b16 %v5755, %v5751
    %v5872 = vpack.c.b16 %v5756, %v5752
    %v5873 = vpack.c.b16 %v5761, %v5757
    %v5874 = vpack.c.b16 %v5762, %v5758
    %v5875 = vpack.c.b16 %v5763, %v5759
    %v5876 = vpack.c.b16 %v5764, %v5760
    %v5877 = vpack.c.b16 %v5769, %v5765
    %v5878 = vpack.c.b16 %v5770, %v5766
    %v5879 = vpack.c.b16 %v5771, %v5767
    %v5880 = vpack.c.b16 %v5772, %v5768
    %v5881 = vpack.c.b16 %v5777, %v5773
    %v5882 = vpack.c.b16 %v5778, %v5774
    %v5883 = vpack.c.b16 %v5779, %v5775
    %v5884 = vpack.c.b16 %v5780, %v5776
    %v5885 = vpack.c.b16 %v5785, %v5781
    %v5886 = vpack.c.b16 %v5786, %v5782
    %v5887 = vpack.c.b16 %v5787, %v5783
    %v5888 = vpack.c.b16 %v5788, %v5784
    %v5889 = vpack.c.b16 %v5793, %v5789
    %v5890 = vpack.c.b16 %v5794, %v5790
    %v5891 = vpack.c.b16 %v5795, %v5791
    %v5892 = vpack.c.b16 %v5796, %v5792
    %v5893 = vpack.c.b16 %v5801, %v5797
    %v5894 = vpack.c.b16 %v5802, %v5798
    %v5895 = vpack.c.b16 %v5803, %v5799
    %v5896 = vpack.c.b16 %v5804, %v5800
    %v5897 = vpack.c.b16 %v5809, %v5805
    %v5898 = vpack.c.b16 %v5810, %v5806
    %v5899 = vpack.c.b16 %v5811, %v5807
    %v5900 = vpack.c.b16 %v5812, %v5808
    %v5901 = vpack.c.b16 %v5817, %v5813
    %v5902 = vpack.c.b16 %v5818, %v5814
    %v5903 = vpack.c.b16 %v5819, %v5815
    %v5904 = vpack.c.b16 %v5820, %v5816
    %v5905 = vpack.c.b16 %v5825, %v5821
    %v5906 = vpack.c.b16 %v5826, %v5822
    %v5907 = vpack.c.b16 %v5827, %v5823
    %v5908 = vpack.c.b16 %v5828, %v5824
    %v5909 = vpack.c.b16 %v5833, %v5829
    %v5910 = vpack.c.b16 %v5834, %v5830
    %v5911 = vpack.c.b16 %v5835, %v5831
    %v5912 = vpack.c.b16 %v5836, %v5832
    %v5913 = vpack.c.b16 %v5841, %v5837
    %v5914 = vpack.c.b16 %v5842, %v5838
    %v5915 = vpack.c.b16 %v5843, %v5839
    %v5916 = vpack.c.b16 %v5844, %v5840
    %v5917 = vpack.c.b16 %v5849, %v5845
    %v5918 = vpack.c.b16 %v5850, %v5846
    %v5919 = vpack.c.b16 %v5851, %v5847
    %v5920 = vpack.c.b16 %v5852, %v5848
    %v5921 = vpack.c.b16 %v5857, %v5853
    %v5922 = vpack.c.b16 %v5858, %v5854
    %v5923 = vpack.c.b16 %v5859, %v5855
    %v5924 = vpack.c.b16 %v5860, %v5856
    %v5989 = vrot.slane %v2522, 4
    %v5990 = vrot.slane %v2524, 4
    %v5991 = vrot.slane %v2563, 4
    %v5992 = vrot.slane %v2565, 4
    %5997 = vmatprep.subr.bf16.mxu0 %v5862
    %5998 = vmatpush1.bf16.msra.mxu0 %v5861
    %5999 = vmatprep.subr.bf16.mxu0 %v5866
    %6000 = vmatpush1.bf16.msra.mxu0 %v5865
    %6001 = vmatprep.subr.bf16.mxu0 %v5870
    %6002 = vmatpush1.bf16.msra.mxu0 %v5869
    %6003 = vmatprep.subr.bf16.mxu0 %v5874
    %6004 = vmatpush1.bf16.msra.mxu0 %v5873
    %6005 = vmatprep.subr.bf16.mxu0 %v5878
    %6006 = vmatpush1.bf16.msra.mxu0 %v5877
    %6007 = vmatprep.subr.bf16.mxu0 %v5882
    %6008 = vmatpush1.bf16.msra.mxu0 %v5881
    %6009 = vmatprep.subr.bf16.mxu0 %v5886
    %6010 = vmatpush1.bf16.msra.mxu0 %v5885
    %6011 = vmatprep.subr.bf16.mxu0 %v5890
    %6012 = vmatpush1.bf16.msra.mxu0 %v5889
    %6013 = vmatprep.subr.bf16.mxu0 %v5894
    %6014 = vmatpush1.bf16.msra.mxu0 %v5893
    %6015 = vmatprep.subr.bf16.mxu0 %v5898
    %6016 = vmatpush1.bf16.msra.mxu0 %v5897
    %6017 = vmatprep.subr.bf16.mxu0 %v5902
    %6018 = vmatpush1.bf16.msra.mxu0 %v5901
    %6019 = vmatprep.subr.bf16.mxu0 %v5906
    %6020 = vmatpush1.bf16.msra.mxu0 %v5905
    %6021 = vmatprep.subr.bf16.mxu0 %v5910
    %6022 = vmatpush1.bf16.msra.mxu0 %v5909
    %6023 = vmatprep.subr.bf16.mxu0 %v5914
    %6024 = vmatpush1.bf16.msra.mxu0 %v5913
    %6025 = vmatprep.subr.bf16.mxu0 %v5918
    %6026 = vmatpush1.bf16.msra.mxu0 %v5917
    %6027 = vmatprep.subr.bf16.mxu0 %v5922
    %6028 = vmatpush1.bf16.msra.mxu0 %v5921
    %6029 = vmatprep.mubr.bf16.mxu0 %v5604
    %6030 = vmatmul.mubr.bf16.gmra.mrb[0].mxu0 %v5603
    %v6031 = vpop.f32.mrb[0].mxu0
    %v6032 = vadd.f32 %v5989, %v6031
    %v6033 = vpop.f32.mrb[0].mxu0
    %v6034 = vadd.f32 %v5990, %v6033
    %v6035 = vpop.f32.mrb[0].mxu0
    %v6036 = vpop.f32.mrb[0].mxu0
    %6037 = vdwg.mxu0
    %6038 = vmatprep.subr.bf16.mxu0 %v5864
    %6039 = vmatpush1.bf16.msra.mxu0 %v5863
    %6040 = vmatprep.subr.bf16.mxu0 %v5868
    %6041 = vmatpush1.bf16.msra.mxu0 %v5867
    %6042 = vmatprep.subr.bf16.mxu0 %v5872
    %6043 = vmatpush1.bf16.msra.mxu0 %v5871
    %6044 = vmatprep.subr.bf16.mxu0 %v5876
    %6045 = vmatpush1.bf16.msra.mxu0 %v5875
    %6046 = vmatprep.subr.bf16.mxu0 %v5880
    %6047 = vmatpush1.bf16.msra.mxu0 %v5879
    %6048 = vmatprep.subr.bf16.mxu0 %v5884
    %6049 = vmatpush1.bf16.msra.mxu0 %v5883
    %6050 = vmatprep.subr.bf16.mxu0 %v5888
    %6051 = vmatpush1.bf16.msra.mxu0 %v5887
    %6052 = vmatprep.subr.bf16.mxu0 %v5892
    %6053 = vmatpush1.bf16.msra.mxu0 %v5891
    %6054 = vmatprep.subr.bf16.mxu0 %v5896
    %6055 = vmatpush1.bf16.msra.mxu0 %v5895
    %6056 = vmatprep.subr.bf16.mxu0 %v5900
    %6057 = vmatpush1.bf16.msra.mxu0 %v5899
    %6058 = vmatprep.subr.bf16.mxu0 %v5904
    %6059 = vmatpush1.bf16.msra.mxu0 %v5903
    %6060 = vmatprep.subr.bf16.mxu0 %v5908
    %6061 = vmatpush1.bf16.msra.mxu0 %v5907
    %6062 = vmatprep.subr.bf16.mxu0 %v5912
    %6063 = vmatpush1.bf16.msra.mxu0 %v5911
    %6064 = vmatprep.subr.bf16.mxu0 %v5916
    %6065 = vmatpush1.bf16.msra.mxu0 %v5915
    %6066 = vmatprep.subr.bf16.mxu0 %v5920
    %6067 = vmatpush1.bf16.msra.mxu0 %v5919
    %6068 = vmatprep.subr.bf16.mxu0 %v5924
    %6069 = vmatpush1.bf16.msra.mxu0 %v5923
    %6070 = vmatprep.mubr.bf16.mxu0 %v5604
    %6071 = vmatmul.mubr.bf16.gmra.mrb[0].mxu0 %v5603
    %v6072 = vpop.f32.mrb[0].mxu0
    %v6073 = vadd.f32 %v5991, %v6072
    %v6074 = vpop.f32.mrb[0].mxu0
    %v6075 = vadd.f32 %v5992, %v6074
    %v6076 = vpop.f32.mrb[0].mxu0
    %v6077 = vpop.f32.mrb[0].mxu0
    %6078 = vdwg.mxu0
    %v6079 = vld [vmem:[%s3037] ss:$8 sm:$0xf]
    %v6080 = vld [vmem:[%s3039] ss:$8 sm:$0xf]
    %v6081 = vsel %vm3041, %v6032, 0.0
    %v6082 = vrot.slane %v6081, 4
    %v6083 = vadd.f32 %v6081, %v6082
    %v6084 = vrot.slane %v6083, 2
    %v6085 = vadd.f32 %v6083, %v6084
    %v6086 = vrot.slane %v6085, 1
    %v6087 = vadd.f32 %v6085, %v6086
    %v6088 = vsel %vm3041, %v6034, 0.0
    %v6089 = vrot.slane %v6088, 4
    %v6090 = vadd.f32 %v6088, %v6089
    %v6091 = vrot.slane %v6090, 2
    %v6092 = vadd.f32 %v6090, %v6091
    %v6093 = vrot.slane %v6092, 1
    %v6094 = vadd.f32 %v6092, %v6093
    %v6095 = vsel %vm3041, %v6073, 0.0
    %v6096 = vrot.slane %v6095, 4
    %v6097 = vadd.f32 %v6095, %v6096
    %v6098 = vrot.slane %v6097, 2
    %v6099 = vadd.f32 %v6097, %v6098
    %v6100 = vrot.slane %v6099, 1
    %v6101 = vadd.f32 %v6099, %v6100
    %v6102 = vsel %vm3041, %v6075, 0.0
    %v6103 = vrot.slane %v6102, 4
    %v6104 = vadd.f32 %v6102, %v6103
    %v6105 = vrot.slane %v6104, 2
    %v6106 = vadd.f32 %v6104, %v6105
    %v6107 = vrot.slane %v6106, 1
    %v6108 = vadd.f32 %v6106, %v6107
    %v6109 = vmul.f32 %v6087, 0.5
    %v6110 = vmul.f32 %v6094, 0.5
    %v6111 = vmul.f32 %v6101, 0.5
    %v6112 = vmul.f32 %v6108, 0.5
    %v6113 = vsub.f32 %v6032, %v6109
    %v6114 = vsub.f32 %v6034, %v6110
    %v6115 = vsub.f32 %v6073, %v6111
    %v6116 = vsub.f32 %v6075, %v6112
    %v6117 = vmul.f32 %v6113, %v6113
    %v6118 = vmul.f32 %v6114, %v6114
    %v6119 = vmul.f32 %v6115, %v6115
    %v6120 = vmul.f32 %v6116, %v6116
    %v6121 = vsel %vm3041, %v6117, 0.0
    %v6122 = vrot.slane %v6121, 4
    %v6123 = vadd.f32 %v6121, %v6122
    %v6124 = vrot.slane %v6123, 2
    %v6125 = vadd.f32 %v6123, %v6124
    %v6126 = vrot.slane %v6125, 1
    %v6127 = vadd.f32 %v6125, %v6126
    %v6128 = vsel %vm3041, %v6118, 0.0
    %v6129 = vrot.slane %v6128, 4
    %v6130 = vadd.f32 %v6128, %v6129
    %v6131 = vrot.slane %v6130, 2
    %v6132 = vadd.f32 %v6130, %v6131
    %v6133 = vrot.slane %v6132, 1
    %v6134 = vadd.f32 %v6132, %v6133
    %v6135 = vsel %vm3041, %v6119, 0.0
    %v6136 = vrot.slane %v6135, 4
    %v6137 = vadd.f32 %v6135, %v6136
    %v6138 = vrot.slane %v6137, 2
    %v6139 = vadd.f32 %v6137, %v6138
    %v6140 = vrot.slane %v6139, 1
    %v6141 = vadd.f32 %v6139, %v6140
    %v6142 = vsel %vm3041, %v6120, 0.0
    %v6143 = vrot.slane %v6142, 4
    %v6144 = vadd.f32 %v6142, %v6143
    %v6145 = vrot.slane %v6144, 2
    %v6146 = vadd.f32 %v6144, %v6145
    %v6147 = vrot.slane %v6146, 1
    %v6148 = vadd.f32 %v6146, %v6147
    %v6149 = vmul.f32 %v6127, 0.5
    %v6150 = vmul.f32 %v6134, 0.5
    %v6151 = vmul.f32 %v6141, 0.5
    %v6152 = vmul.f32 %v6148, 0.5
    %v6153 = vadd.f32 %v6149, 1e-05
    %v6154 = vadd.f32 %v6150, 1e-05
    %v6155 = vadd.f32 %v6151, 1e-05
    %v6156 = vadd.f32 %v6152, 1e-05
    %v6157 = vrsqrt.pop %v6153
    %v6158 = vrsqrt.pop %v6154
    %v6159 = vrsqrt.pop %v6155
    %v6160 = vrsqrt.pop %v6156
    %v6165 = vcombine.low %v6157, %v6158
    %v6166 = vcombine.low %v6159, %v6160
    %v6168 = vunpack.c.l.s4 1966171168
    %v6169 = vunpack.c.0.s8 %v6168
    %v6170 = vlaneseq
    %v6171 = vshrl.u32 %v6170, 7
    %v6172 = vsub.s32 %v6169, %v6171
    %v6173 = vrot.slane %v6165, %v6172
    %v6175 = vunpack.c.l.s4 1966171168
    %v6176 = vunpack.c.0.s8 %v6175
    %v6177 = vlaneseq
    %v6178 = vshrl.u32 %v6177, 7
    %v6179 = vsub.s32 %v6176, %v6178
    %v6180 = vrot.slane %v6166, %v6179
    %v6181 = vcombine.low %v6173, %v6180
    %v6183 = vunpack.c.l.s4 1966171168
    %v6184 = vunpack.c.0.s8 %v6183
    %v6185 = vlaneseq
    %v6186 = vshrl.u32 %v6185, 7
    %v6187 = vsub.s32 %v6184, %v6186
    %v6188 = vrot.slane %v6181, %v6187
    %v6190 = vmul.f32 %v6079, %v6188
    %v6192 = vlaneseq
    %v6193 = vshrl.u32 %v6192, 7
    %v6194 = vsub.s32 0, %v6193
    %v6195 = vrot.slane %v6190, %v6194
    %v6196 = vlaneseq
    %v6197 = vshrl.u32 %v6196, 7
    %v6198 = vsub.s32 1, %v6197
    %v6199 = vrot.slane %v6190, %v6198
    %v6200 = vlaneseq
    %v6201 = vshrl.u32 %v6200, 7
    %v6202 = vsub.s32 2, %v6201
    %v6203 = vrot.slane %v6190, %v6202
    %v6204 = vlaneseq
    %v6205 = vshrl.u32 %v6204, 7
    %v6206 = vsub.s32 3, %v6205
    %v6207 = vrot.slane %v6190, %v6206
    %v6212 = vmul.f32 %v6109, %v6195
    %v6213 = vmul.f32 %v6110, %v6199
    %v6214 = vmul.f32 %v6111, %v6203
    %v6215 = vmul.f32 %v6112, %v6207
    %v6220 = vcombine.low %v6212, %v6213
    %v6221 = vcombine.low %v6214, %v6215
    %v6223 = vunpack.c.l.s4 1966171168
    %v6224 = vunpack.c.0.s8 %v6223
    %v6225 = vlaneseq
    %v6226 = vshrl.u32 %v6225, 7
    %v6227 = vsub.s32 %v6224, %v6226
    %v6228 = vrot.slane %v6220, %v6227
    %v6230 = vunpack.c.l.s4 1966171168
    %v6231 = vunpack.c.0.s8 %v6230
    %v6232 = vlaneseq
    %v6233 = vshrl.u32 %v6232, 7
    %v6234 = vsub.s32 %v6231, %v6233
    %v6235 = vrot.slane %v6221, %v6234
    %v6236 = vcombine.low %v6228, %v6235
    %v6238 = vunpack.c.l.s4 1966171168
    %v6239 = vunpack.c.0.s8 %v6238
    %v6240 = vlaneseq
    %v6241 = vshrl.u32 %v6240, 7
    %v6242 = vsub.s32 %v6239, %v6241
    %v6243 = vrot.slane %v6236, %v6242
    %v6245 = vsub.f32 %v6080, %v6243
    %v6246 = vmul.f32 %v6032, %v6195
    %v6247 = vmul.f32 %v6034, %v6199
    %v6248 = vmul.f32 %v6073, %v6203
    %v6249 = vmul.f32 %v6075, %v6207
    %v6251 = vlaneseq
    %v6252 = vshrl.u32 %v6251, 7
    %v6253 = vsub.s32 0, %v6252
    %v6254 = vrot.slane %v6245, %v6253
    %v6255 = vlaneseq
    %v6256 = vshrl.u32 %v6255, 7
    %v6257 = vsub.s32 1, %v6256
    %v6258 = vrot.slane %v6245, %v6257
    %v6259 = vlaneseq
    %v6260 = vshrl.u32 %v6259, 7
    %v6261 = vsub.s32 2, %v6260
    %v6262 = vrot.slane %v6245, %v6261
    %v6263 = vlaneseq
    %v6264 = vshrl.u32 %v6263, 7
    %v6265 = vsub.s32 3, %v6264
    %v6266 = vrot.slane %v6245, %v6265
    %v6271 = vadd.f32 %v6246, %v6254
    %v6272 = vadd.f32 %v6247, %v6258
    %v6273 = vadd.f32 %v6248, %v6262
    %v6274 = vadd.f32 %v6249, %v6266
    %v6275 = vmax.f32 %v6271, 0.0
    %v6276 = vmax.f32 %v6272, 0.0
    %v6277 = vmax.f32 %v6273, 0.0
    %v6278 = vmax.f32 %v6274, 0.0
    %v6279 = vpack.c.bf16 %v6275, %v6275
    %v6280 = vpack.c.bf16 %v6276, %v6276
    %v6281 = vpack.c.bf16 %v6277, %v6277
    %v6282 = vpack.c.bf16 %v6278, %v6278
    %v6283 = vld [vmem:[#allocation7] sm:$0xff]
    %v6284 = vld [vmem:[#allocation7 + $0x8] sm:$0xff]
    %v6285 = vld [vmem:[#allocation7 + $0x10] sm:$0xff]
    %v6286 = vld [vmem:[#allocation7 + $0x18] sm:$0xff]
    %v6287 = vld [vmem:[#allocation7 + $0x20] sm:$0xff]
    %v6288 = vld [vmem:[#allocation7 + $0x28] sm:$0xff]
    %v6289 = vld [vmem:[#allocation7 + $0x30] sm:$0xff]
    %v6290 = vld [vmem:[#allocation7 + $0x38] sm:$0xff]
    %v6291 = vld [vmem:[#allocation7 + $0x40] sm:$0xff]
    %v6292 = vld [vmem:[#allocation7 + $0x48] sm:$0xff]
    %v6293 = vld [vmem:[#allocation7 + $0x50] sm:$0xff]
    %v6294 = vld [vmem:[#allocation7 + $0x58] sm:$0xff]
    %v6295 = vld [vmem:[#allocation7 + $0x60] sm:$0xff]
    %v6296 = vld [vmem:[#allocation7 + $0x68] sm:$0xff]
    %v6297 = vld [vmem:[#allocation7 + $0x70] sm:$0xff]
    %v6298 = vld [vmem:[#allocation7 + $0x78] sm:$0xff]
    %v6299 = vld [vmem:[#allocation7 + $0x80] sm:$0xff]
    %v6300 = vld [vmem:[#allocation7 + $0x88] sm:$0xff]
    %v6301 = vld [vmem:[#allocation7 + $0x90] sm:$0xff]
    %v6302 = vld [vmem:[#allocation7 + $0x98] sm:$0xff]
    %v6303 = vld [vmem:[#allocation7 + $0xa0] sm:$0xff]
    %v6304 = vld [vmem:[#allocation7 + $0xa8] sm:$0xff]
    %v6305 = vld [vmem:[#allocation7 + $0xb0] sm:$0xff]
    %v6306 = vld [vmem:[#allocation7 + $0xb8] sm:$0xff]
    %v6307 = vld [vmem:[#allocation7 + $0xc0] sm:$0xff]
    %v6308 = vld [vmem:[#allocation7 + $0xc8] sm:$0xff]
    %v6309 = vld [vmem:[#allocation7 + $0xd0] sm:$0xff]
    %v6310 = vld [vmem:[#allocation7 + $0xd8] sm:$0xff]
    %v6311 = vld [vmem:[#allocation7 + $0xe0] sm:$0xff]
    %v6312 = vld [vmem:[#allocation7 + $0xe8] sm:$0xff]
    %v6313 = vld [vmem:[#allocation7 + $0xf0] sm:$0xff]
    %v6314 = vld [vmem:[#allocation7 + $0xf8] sm:$0xff]
    %v6315 = vld [vmem:[#allocation7 + $0x100] sm:$0xff]
    %v6316 = vld [vmem:[#allocation7 + $0x108] sm:$0xff]
    %v6317 = vld [vmem:[#allocation7 + $0x110] sm:$0xff]
    %v6318 = vld [vmem:[#allocation7 + $0x118] sm:$0xff]
    %v6319 = vld [vmem:[#allocation7 + $0x120] sm:$0xff]
    %v6320 = vld [vmem:[#allocation7 + $0x128] sm:$0xff]
    %v6321 = vld [vmem:[#allocation7 + $0x130] sm:$0xff]
    %v6322 = vld [vmem:[#allocation7 + $0x138] sm:$0xff]
    %v6323 = vld [vmem:[#allocation7 + $0x140] sm:$0xff]
    %v6324 = vld [vmem:[#allocation7 + $0x148] sm:$0xff]
    %v6325 = vld [vmem:[#allocation7 + $0x150] sm:$0xff]
    %v6326 = vld [vmem:[#allocation7 + $0x158] sm:$0xff]
    %v6327 = vld [vmem:[#allocation7 + $0x160] sm:$0xff]
    %v6328 = vld [vmem:[#allocation7 + $0x168] sm:$0xff]
    %v6329 = vld [vmem:[#allocation7 + $0x170] sm:$0xff]
    %v6330 = vld [vmem:[#allocation7 + $0x178] sm:$0xff]
    %v6331 = vld [vmem:[#allocation7 + $0x180] sm:$0xff]
    %v6332 = vld [vmem:[#allocation7 + $0x188] sm:$0xff]
    %v6333 = vld [vmem:[#allocation7 + $0x190] sm:$0xff]
    %v6334 = vld [vmem:[#allocation7 + $0x198] sm:$0xff]
    %v6335 = vld [vmem:[#allocation7 + $0x1a0] sm:$0xff]
    %v6336 = vld [vmem:[#allocation7 + $0x1a8] sm:$0xff]
    %v6337 = vld [vmem:[#allocation7 + $0x1b0] sm:$0xff]
    %v6338 = vld [vmem:[#allocation7 + $0x1b8] sm:$0xff]
    %v6339 = vld [vmem:[#allocation7 + $0x1c0] sm:$0xff]
    %v6340 = vld [vmem:[#allocation7 + $0x1c8] sm:$0xff]
    %v6341 = vld [vmem:[#allocation7 + $0x1d0] sm:$0xff]
    %v6342 = vld [vmem:[#allocation7 + $0x1d8] sm:$0xff]
    %v6343 = vld [vmem:[#allocation7 + $0x1e0] sm:$0xff]
    %v6344 = vld [vmem:[#allocation7 + $0x1e8] sm:$0xff]
    %v6345 = vld [vmem:[#allocation7 + $0x1f0] sm:$0xff]
    %v6346 = vld [vmem:[#allocation7 + $0x1f8] sm:$0xff]
    %v6411 = vunpack.c.l.b16 %v6283
    %v6412 = vunpack.c.h.b16 %v6283
    %v6413 = vunpack.c.l.b16 %v6284
    %v6414 = vunpack.c.h.b16 %v6284
    %v6415 = vunpack.c.l.b16 %v6285
    %v6416 = vunpack.c.h.b16 %v6285
    %v6417 = vunpack.c.l.b16 %v6286
    %v6418 = vunpack.c.h.b16 %v6286
    %v6419 = vunpack.c.l.b16 %v6287
    %v6420 = vunpack.c.h.b16 %v6287
    %v6421 = vunpack.c.l.b16 %v6288
    %v6422 = vunpack.c.h.b16 %v6288
    %v6423 = vunpack.c.l.b16 %v6289
    %v6424 = vunpack.c.h.b16 %v6289
    %v6425 = vunpack.c.l.b16 %v6290
    %v6426 = vunpack.c.h.b16 %v6290
    %v6427 = vunpack.c.l.b16 %v6291
    %v6428 = vunpack.c.h.b16 %v6291
    %v6429 = vunpack.c.l.b16 %v6292
    %v6430 = vunpack.c.h.b16 %v6292
    %v6431 = vunpack.c.l.b16 %v6293
    %v6432 = vunpack.c.h.b16 %v6293
    %v6433 = vunpack.c.l.b16 %v6294
    %v6434 = vunpack.c.h.b16 %v6294
    %v6435 = vunpack.c.l.b16 %v6295
    %v6436 = vunpack.c.h.b16 %v6295
    %v6437 = vunpack.c.l.b16 %v6296
    %v6438 = vunpack.c.h.b16 %v6296
    %v6439 = vunpack.c.l.b16 %v6297
    %v6440 = vunpack.c.h.b16 %v6297
    %v6441 = vunpack.c.l.b16 %v6298
    %v6442 = vunpack.c.h.b16 %v6298
    %v6443 = vunpack.c.l.b16 %v6299
    %v6444 = vunpack.c.h.b16 %v6299
    %v6445 = vunpack.c.l.b16 %v6300
    %v6446 = vunpack.c.h.b16 %v6300
    %v6447 = vunpack.c.l.b16 %v6301
    %v6448 = vunpack.c.h.b16 %v6301
    %v6449 = vunpack.c.l.b16 %v6302
    %v6450 = vunpack.c.h.b16 %v6302
    %v6451 = vunpack.c.l.b16 %v6303
    %v6452 = vunpack.c.h.b16 %v6303
    %v6453 = vunpack.c.l.b16 %v6304
    %v6454 = vunpack.c.h.b16 %v6304
    %v6455 = vunpack.c.l.b16 %v6305
    %v6456 = vunpack.c.h.b16 %v6305
    %v6457 = vunpack.c.l.b16 %v6306
    %v6458 = vunpack.c.h.b16 %v6306
    %v6459 = vunpack.c.l.b16 %v6307
    %v6460 = vunpack.c.h.b16 %v6307
    %v6461 = vunpack.c.l.b16 %v6308
    %v6462 = vunpack.c.h.b16 %v6308
    %v6463 = vunpack.c.l.b16 %v6309
    %v6464 = vunpack.c.h.b16 %v6309
    %v6465 = vunpack.c.l.b16 %v6310
    %v6466 = vunpack.c.h.b16 %v6310
    %v6467 = vunpack.c.l.b16 %v6311
    %v6468 = vunpack.c.h.b16 %v6311
    %v6469 = vunpack.c.l.b16 %v6312
    %v6470 = vunpack.c.h.b16 %v6312
    %v6471 = vunpack.c.l.b16 %v6313
    %v6472 = vunpack.c.h.b16 %v6313
    %v6473 = vunpack.c.l.b16 %v6314
    %v6474 = vunpack.c.h.b16 %v6314
    %v6475 = vunpack.c.l.b16 %v6315
    %v6476 = vunpack.c.h.b16 %v6315
    %v6477 = vunpack.c.l.b16 %v6316
    %v6478 = vunpack.c.h.b16 %v6316
    %v6479 = vunpack.c.l.b16 %v6317
    %v6480 = vunpack.c.h.b16 %v6317
    %v6481 = vunpack.c.l.b16 %v6318
    %v6482 = vunpack.c.h.b16 %v6318
    %v6483 = vunpack.c.l.b16 %v6319
    %v6484 = vunpack.c.h.b16 %v6319
    %v6485 = vunpack.c.l.b16 %v6320
    %v6486 = vunpack.c.h.b16 %v6320
    %v6487 = vunpack.c.l.b16 %v6321
    %v6488 = vunpack.c.h.b16 %v6321
    %v6489 = vunpack.c.l.b16 %v6322
    %v6490 = vunpack.c.h.b16 %v6322
    %v6491 = vunpack.c.l.b16 %v6323
    %v6492 = vunpack.c.h.b16 %v6323
    %v6493 = vunpack.c.l.b16 %v6324
    %v6494 = vunpack.c.h.b16 %v6324
    %v6495 = vunpack.c.l.b16 %v6325
    %v6496 = vunpack.c.h.b16 %v6325
    %v6497 = vunpack.c.l.b16 %v6326
    %v6498 = vunpack.c.h.b16 %v6326
    %v6499 = vunpack.c.l.b16 %v6327
    %v6500 = vunpack.c.h.b16 %v6327
    %v6501 = vunpack.c.l.b16 %v6328
    %v6502 = vunpack.c.h.b16 %v6328
    %v6503 = vunpack.c.l.b16 %v6329
    %v6504 = vunpack.c.h.b16 %v6329
    %v6505 = vunpack.c.l.b16 %v6330
    %v6506 = vunpack.c.h.b16 %v6330
    %v6507 = vunpack.c.l.b16 %v6331
    %v6508 = vunpack.c.h.b16 %v6331
    %v6509 = vunpack.c.l.b16 %v6332
    %v6510 = vunpack.c.h.b16 %v6332
    %v6511 = vunpack.c.l.b16 %v6333
    %v6512 = vunpack.c.h.b16 %v6333
    %v6513 = vunpack.c.l.b16 %v6334
    %v6514 = vunpack.c.h.b16 %v6334
    %v6515 = vunpack.c.l.b16 %v6335
    %v6516 = vunpack.c.h.b16 %v6335
    %v6517 = vunpack.c.l.b16 %v6336
    %v6518 = vunpack.c.h.b16 %v6336
    %v6519 = vunpack.c.l.b16 %v6337
    %v6520 = vunpack.c.h.b16 %v6337
    %v6521 = vunpack.c.l.b16 %v6338
    %v6522 = vunpack.c.h.b16 %v6338
    %v6523 = vunpack.c.l.b16 %v6339
    %v6524 = vunpack.c.h.b16 %v6339
    %v6525 = vunpack.c.l.b16 %v6340
    %v6526 = vunpack.c.h.b16 %v6340
    %v6527 = vunpack.c.l.b16 %v6341
    %v6528 = vunpack.c.h.b16 %v6341
    %v6529 = vunpack.c.l.b16 %v6342
    %v6530 = vunpack.c.h.b16 %v6342
    %v6531 = vunpack.c.l.b16 %v6343
    %v6532 = vunpack.c.h.b16 %v6343
    %v6533 = vunpack.c.l.b16 %v6344
    %v6534 = vunpack.c.h.b16 %v6344
    %v6535 = vunpack.c.l.b16 %v6345
    %v6536 = vunpack.c.h.b16 %v6345
    %v6537 = vunpack.c.l.b16 %v6346
    %v6538 = vunpack.c.h.b16 %v6346
    %v6539 = vpack.c.b16 %v6413, %v6411
    %v6540 = vpack.c.b16 %v6414, %v6412
    %v6541 = vpack.c.b16 %v6417, %v6415
    %v6542 = vpack.c.b16 %v6418, %v6416
    %v6543 = vpack.c.b16 %v6421, %v6419
    %v6544 = vpack.c.b16 %v6422, %v6420
    %v6545 = vpack.c.b16 %v6425, %v6423
    %v6546 = vpack.c.b16 %v6426, %v6424
    %v6547 = vpack.c.b16 %v6429, %v6427
    %v6548 = vpack.c.b16 %v6430, %v6428
    %v6549 = vpack.c.b16 %v6433, %v6431
    %v6550 = vpack.c.b16 %v6434, %v6432
    %v6551 = vpack.c.b16 %v6437, %v6435
    %v6552 = vpack.c.b16 %v6438, %v6436
    %v6553 = vpack.c.b16 %v6441, %v6439
    %v6554 = vpack.c.b16 %v6442, %v6440
    %v6555 = vpack.c.b16 %v6445, %v6443
    %v6556 = vpack.c.b16 %v6446, %v6444
    %v6557 = vpack.c.b16 %v6449, %v6447
    %v6558 = vpack.c.b16 %v6450, %v6448
    %v6559 = vpack.c.b16 %v6453, %v6451
    %v6560 = vpack.c.b16 %v6454, %v6452
    %v6561 = vpack.c.b16 %v6457, %v6455
    %v6562 = vpack.c.b16 %v6458, %v6456
    %v6563 = vpack.c.b16 %v6461, %v6459
    %v6564 = vpack.c.b16 %v6462, %v6460
    %v6565 = vpack.c.b16 %v6465, %v6463
    %v6566 = vpack.c.b16 %v6466, %v6464
    %v6567 = vpack.c.b16 %v6469, %v6467
    %v6568 = vpack.c.b16 %v6470, %v6468
    %v6569 = vpack.c.b16 %v6473, %v6471
    %v6570 = vpack.c.b16 %v6474, %v6472
    %v6571 = vpack.c.b16 %v6477, %v6475
    %v6572 = vpack.c.b16 %v6478, %v6476
    %v6573 = vpack.c.b16 %v6481, %v6479
    %v6574 = vpack.c.b16 %v6482, %v6480
    %v6575 = vpack.c.b16 %v6485, %v6483
    %v6576 = vpack.c.b16 %v6486, %v6484
    %v6577 = vpack.c.b16 %v6489, %v6487
    %v6578 = vpack.c.b16 %v6490, %v6488
    %v6579 = vpack.c.b16 %v6493, %v6491
    %v6580 = vpack.c.b16 %v6494, %v6492
    %v6581 = vpack.c.b16 %v6497, %v6495
    %v6582 = vpack.c.b16 %v6498, %v6496
    %v6583 = vpack.c.b16 %v6501, %v6499
    %v6584 = vpack.c.b16 %v6502, %v6500
    %v6585 = vpack.c.b16 %v6505, %v6503
    %v6586 = vpack.c.b16 %v6506, %v6504
    %v6587 = vpack.c.b16 %v6509, %v6507
    %v6588 = vpack.c.b16 %v6510, %v6508
    %v6589 = vpack.c.b16 %v6513, %v6511
    %v6590 = vpack.c.b16 %v6514, %v6512
    %v6591 = vpack.c.b16 %v6517, %v6515
    %v6592 = vpack.c.b16 %v6518, %v6516
    %v6593 = vpack.c.b16 %v6521, %v6519
    %v6594 = vpack.c.b16 %v6522, %v6520
    %v6595 = vpack.c.b16 %v6525, %v6523
    %v6596 = vpack.c.b16 %v6526, %v6524
    %v6597 = vpack.c.b16 %v6529, %v6527
    %v6598 = vpack.c.b16 %v6530, %v6528
    %v6599 = vpack.c.b16 %v6533, %v6531
    %v6600 = vpack.c.b16 %v6534, %v6532
    %v6601 = vpack.c.b16 %v6537, %v6535
    %v6602 = vpack.c.b16 %v6538, %v6536
    %6667 = vmatprep.subr.bf16.mxu0 %v6540
    %6668 = vmatpush1.bf16.msra.mxu0 %v6539
    %6669 = vmatprep.subr.bf16.mxu0 %v6542
    %6670 = vmatpush1.bf16.msra.mxu0 %v6541
    %6671 = vmatprep.subr.bf16.mxu0 %v6544
    %6672 = vmatpush1.bf16.msra.mxu0 %v6543
    %6673 = vmatprep.subr.bf16.mxu0 %v6546
    %6674 = vmatpush1.bf16.msra.mxu0 %v6545
    %6675 = vmatprep.subr.bf16.mxu0 %v6548
    %6676 = vmatpush1.bf16.msra.mxu0 %v6547
    %6677 = vmatprep.subr.bf16.mxu0 %v6550
    %6678 = vmatpush1.bf16.msra.mxu0 %v6549
    %6679 = vmatprep.subr.bf16.mxu0 %v6552
    %6680 = vmatpush1.bf16.msra.mxu0 %v6551
    %6681 = vmatprep.subr.bf16.mxu0 %v6554
    %6682 = vmatpush1.bf16.msra.mxu0 %v6553
    %6683 = vmatprep.subr.bf16.mxu0 %v6556
    %6684 = vmatpush1.bf16.msra.mxu0 %v6555
    %6685 = vmatprep.subr.bf16.mxu0 %v6558
    %6686 = vmatpush1.bf16.msra.mxu0 %v6557
    %6687 = vmatprep.subr.bf16.mxu0 %v6560
    %6688 = vmatpush1.bf16.msra.mxu0 %v6559
    %6689 = vmatprep.subr.bf16.mxu0 %v6562
    %6690 = vmatpush1.bf16.msra.mxu0 %v6561
    %6691 = vmatprep.subr.bf16.mxu0 %v6564
    %6692 = vmatpush1.bf16.msra.mxu0 %v6563
    %6693 = vmatprep.subr.bf16.mxu0 %v6566
    %6694 = vmatpush1.bf16.msra.mxu0 %v6565
    %6695 = vmatprep.subr.bf16.mxu0 %v6568
    %6696 = vmatpush1.bf16.msra.mxu0 %v6567
    %6697 = vmatprep.subr.bf16.mxu0 %v6570
    %6698 = vmatpush1.bf16.msra.mxu0 %v6569
    %6699 = vmatprep.mubr.bf16.mxu0 %v6280
    %6700 = vmatmul.mubr.bf16.gmra.mrb[0].mxu0 %v6279
    %v6701 = vpop.f32.mrb[0].mxu0
    %v6702 = vadd.f32 0.0, %v6701
    %v6703 = vpop.f32.mrb[0].mxu0
    %v6704 = vadd.f32 0.0, %v6703
    %v6705 = vpop.f32.mrb[0].mxu0
    %v6706 = vpop.f32.mrb[0].mxu0
    %6707 = vdwg.mxu0
    %6708 = vmatprep.subr.bf16.mxu0 %v6572
    %6709 = vmatpush1.bf16.msra.mxu0 %v6571
    %6710 = vmatprep.subr.bf16.mxu0 %v6574
    %6711 = vmatpush1.bf16.msra.mxu0 %v6573
    %6712 = vmatprep.subr.bf16.mxu0 %v6576
    %6713 = vmatpush1.bf16.msra.mxu0 %v6575
    %6714 = vmatprep.subr.bf16.mxu0 %v6578
    %6715 = vmatpush1.bf16.msra.mxu0 %v6577
    %6716 = vmatprep.subr.bf16.mxu0 %v6580
    %6717 = vmatpush1.bf16.msra.mxu0 %v6579
    %6718 = vmatprep.subr.bf16.mxu0 %v6582
    %6719 = vmatpush1.bf16.msra.mxu0 %v6581
    %6720 = vmatprep.subr.bf16.mxu0 %v6584
    %6721 = vmatpush1.bf16.msra.mxu0 %v6583
    %6722 = vmatprep.subr.bf16.mxu0 %v6586
    %6723 = vmatpush1.bf16.msra.mxu0 %v6585
    %6724 = vmatprep.subr.bf16.mxu0 %v6588
    %6725 = vmatpush1.bf16.msra.mxu0 %v6587
    %6726 = vmatprep.subr.bf16.mxu0 %v6590
    %6727 = vmatpush1.bf16.msra.mxu0 %v6589
    %6728 = vmatprep.subr.bf16.mxu0 %v6592
    %6729 = vmatpush1.bf16.msra.mxu0 %v6591
    %6730 = vmatprep.subr.bf16.mxu0 %v6594
    %6731 = vmatpush1.bf16.msra.mxu0 %v6593
    %6732 = vmatprep.subr.bf16.mxu0 %v6596
    %6733 = vmatpush1.bf16.msra.mxu0 %v6595
    %6734 = vmatprep.subr.bf16.mxu0 %v6598
    %6735 = vmatpush1.bf16.msra.mxu0 %v6597
    %6736 = vmatprep.subr.bf16.mxu0 %v6600
    %6737 = vmatpush1.bf16.msra.mxu0 %v6599
    %6738 = vmatprep.subr.bf16.mxu0 %v6602
    %6739 = vmatpush1.bf16.msra.mxu0 %v6601
    %6740 = vmatprep.mubr.bf16.mxu0 %v6282
    %6741 = vmatmul.mubr.bf16.gmra.mrb[0].mxu0 %v6281
    %v6742 = vpop.f32.mrb[0].mxu0
    %v6743 = vadd.f32 %v6702, %v6742
    %v6744 = vpop.f32.mrb[0].mxu0
    %v6745 = vadd.f32 %v6704, %v6744
    %v6746 = vpop.f32.mrb[0].mxu0
    %v6747 = vpop.f32.mrb[0].mxu0
    %6748 = vdwg.mxu0
    %v6749 = vld [vmem:[%s3710] ss:$8 sm:$0x3]
    %v6750 = vld [vmem:[%s3712] ss:$8 sm:$0x3]
    %v6751 = vsel %vm3041, %v6743, 0.0
    %v6752 = vrot.slane %v6751, 4
    %v6753 = vadd.f32 %v6751, %v6752
    %v6754 = vrot.slane %v6753, 2
    %v6755 = vadd.f32 %v6753, %v6754
    %v6756 = vrot.slane %v6755, 1
    %v6757 = vadd.f32 %v6755, %v6756
    %v6758 = vsel %vm3041, %v6745, 0.0
    %v6759 = vrot.slane %v6758, 4
    %v6760 = vadd.f32 %v6758, %v6759
    %v6761 = vrot.slane %v6760, 2
    %v6762 = vadd.f32 %v6760, %v6761
    %v6763 = vrot.slane %v6762, 1
    %v6764 = vadd.f32 %v6762, %v6763
    %v6765 = vmul.f32 %v6757, 0.5
    %v6766 = vmul.f32 %v6764, 0.5
    %v6767 = vsub.f32 %v6743, %v6765
    %v6768 = vsub.f32 %v6745, %v6766
    %v6769 = vmul.f32 %v6767, %v6767
    %v6770 = vmul.f32 %v6768, %v6768
    %v6771 = vsel %vm3041, %v6769, 0.0
    %v6772 = vrot.slane %v6771, 4
    %v6773 = vadd.f32 %v6771, %v6772
    %v6774 = vrot.slane %v6773, 2
    %v6775 = vadd.f32 %v6773, %v6774
    %v6776 = vrot.slane %v6775, 1
    %v6777 = vadd.f32 %v6775, %v6776
    %v6778 = vsel %vm3041, %v6770, 0.0
    %v6779 = vrot.slane %v6778, 4
    %v6780 = vadd.f32 %v6778, %v6779
    %v6781 = vrot.slane %v6780, 2
    %v6782 = vadd.f32 %v6780, %v6781
    %v6783 = vrot.slane %v6782, 1
    %v6784 = vadd.f32 %v6782, %v6783
    %v6785 = vmul.f32 %v6777, 0.5
    %v6786 = vmul.f32 %v6784, 0.5
    %v6787 = vadd.f32 %v6785, 1e-05
    %v6788 = vadd.f32 %v6786, 1e-05
    %v6789 = vrsqrt.pop %v6787
    %v6790 = vrsqrt.pop %v6788
    %v6793 = vcombine.low %v6789, %v6790
    %v6795 = vunpack.c.l.s4 1966171168
    %v6796 = vunpack.c.0.s8 %v6795
    %v6797 = vlaneseq
    %v6798 = vshrl.u32 %v6797, 7
    %v6799 = vsub.s32 %v6796, %v6798
    %v6800 = vrot.slane %v6793, %v6799
    %v6802 = vunpack.c.l.s4 1966171168
    %v6803 = vunpack.c.0.s8 %v6802
    %v6804 = vlaneseq
    %v6805 = vshrl.u32 %v6804, 7
    %v6806 = vsub.s32 %v6803, %v6805
    %v6807 = vrot.slane %v6800, %v6806
    %v6809 = vmul.f32 %v6749, %v6807
    %v6811 = vlaneseq
    %v6812 = vshrl.u32 %v6811, 7
    %v6813 = vsub.s32 0, %v6812
    %v6814 = vrot.slane %v6809, %v6813
    %v6815 = vlaneseq
    %v6816 = vshrl.u32 %v6815, 7
    %v6817 = vsub.s32 1, %v6816
    %v6818 = vrot.slane %v6809, %v6817
    %v6821 = vmul.f32 %v6765, %v6814
    %v6822 = vmul.f32 %v6766, %v6818
    %v6825 = vcombine.low %v6821, %v6822
    %v6827 = vunpack.c.l.s4 1966171168
    %v6828 = vunpack.c.0.s8 %v6827
    %v6829 = vlaneseq
    %v6830 = vshrl.u32 %v6829, 7
    %v6831 = vsub.s32 %v6828, %v6830
    %v6832 = vrot.slane %v6825, %v6831
    %v6834 = vunpack.c.l.s4 1966171168
    %v6835 = vunpack.c.0.s8 %v6834
    %v6836 = vlaneseq
    %v6837 = vshrl.u32 %v6836, 7
    %v6838 = vsub.s32 %v6835, %v6837
    %v6839 = vrot.slane %v6832, %v6838
    %v6841 = vsub.f32 %v6750, %v6839
    %v6842 = vmul.f32 %v6743, %v6814
    %v6843 = vmul.f32 %v6745, %v6818
    %v6845 = vlaneseq
    %v6846 = vshrl.u32 %v6845, 7
    %v6847 = vsub.s32 0, %v6846
    %v6848 = vrot.slane %v6841, %v6847
    %v6849 = vlaneseq
    %v6850 = vshrl.u32 %v6849, 7
    %v6851 = vsub.s32 1, %v6850
    %v6852 = vrot.slane %v6841, %v6851
    %v6855 = vadd.f32 %v6842, %v6848
    %v6856 = vadd.f32 %v6843, %v6852
    %v6857 = vmax.f32 %v6855, 0.0
    %v6858 = vmax.f32 %v6856, 0.0
    %v6859 = vpack.c.bf16 %v6857, %v6857
    %v6860 = vpack.c.bf16 %v6858, %v6858
    %v6861 = vld [vmem:[#allocation9] sm:$0xff]
    %v6862 = vld [vmem:[#allocation9 + $0x8] sm:$0xff]
    %v6863 = vld [vmem:[#allocation9 + $0x10] sm:$0xff]
    %v6864 = vld [vmem:[#allocation9 + $0x18] sm:$0xff]
    %v6865 = vld [vmem:[#allocation9 + $0x20] sm:$0xff]
    %v6866 = vld [vmem:[#allocation9 + $0x28] sm:$0xff]
    %v6867 = vld [vmem:[#allocation9 + $0x30] sm:$0xff]
    %v6868 = vld [vmem:[#allocation9 + $0x38] sm:$0xff]
    %v6869 = vld [vmem:[#allocation9 + $0x40] sm:$0xff]
    %v6870 = vld [vmem:[#allocation9 + $0x48] sm:$0xff]
    %v6871 = vld [vmem:[#allocation9 + $0x50] sm:$0xff]
    %v6872 = vld [vmem:[#allocation9 + $0x58] sm:$0xff]
    %v6873 = vld [vmem:[#allocation9 + $0x60] sm:$0xff]
    %v6874 = vld [vmem:[#allocation9 + $0x68] sm:$0xff]
    %v6875 = vld [vmem:[#allocation9 + $0x70] sm:$0xff]
    %v6876 = vld [vmem:[#allocation9 + $0x78] sm:$0xff]
    %v6877 = vld [vmem:[#allocation9 + $0x80] sm:$0xff]
    %v6878 = vld [vmem:[#allocation9 + $0x88] sm:$0xff]
    %v6879 = vld [vmem:[#allocation9 + $0x90] sm:$0xff]
    %v6880 = vld [vmem:[#allocation9 + $0x98] sm:$0xff]
    %v6881 = vld [vmem:[#allocation9 + $0xa0] sm:$0xff]
    %v6882 = vld [vmem:[#allocation9 + $0xa8] sm:$0xff]
    %v6883 = vld [vmem:[#allocation9 + $0xb0] sm:$0xff]
    %v6884 = vld [vmem:[#allocation9 + $0xb8] sm:$0xff]
    %v6885 = vld [vmem:[#allocation9 + $0xc0] sm:$0xff]
    %v6886 = vld [vmem:[#allocation9 + $0xc8] sm:$0xff]
    %v6887 = vld [vmem:[#allocation9 + $0xd0] sm:$0xff]
    %v6888 = vld [vmem:[#allocation9 + $0xd8] sm:$0xff]
    %v6889 = vld [vmem:[#allocation9 + $0xe0] sm:$0xff]
    %v6890 = vld [vmem:[#allocation9 + $0xe8] sm:$0xff]
    %v6891 = vld [vmem:[#allocation9 + $0xf0] sm:$0xff]
    %v6892 = vld [vmem:[#allocation9 + $0xf8] sm:$0xff]
    %v6893 = vld [vmem:[%s3856] ss:$8 sm:$0x3]
    %v6895 = vlaneseq
    %v6896 = vshrl.u32 %v6895, 7
    %v6897 = vsub.s32 0, %v6896
    %v6898 = vrot.slane %v6893, %v6897
    %v6899 = vlaneseq
    %v6900 = vshrl.u32 %v6899, 7
    %v6901 = vsub.s32 1, %v6900
    %v6902 = vrot.slane %v6893, %v6901
    %v6937 = vunpack.c.l.b16 %v6861
    %v6938 = vunpack.c.h.b16 %v6861
    %v6939 = vunpack.c.l.b16 %v6862
    %v6940 = vunpack.c.h.b16 %v6862
    %v6941 = vunpack.c.l.b16 %v6863
    %v6942 = vunpack.c.h.b16 %v6863
    %v6943 = vunpack.c.l.b16 %v6864
    %v6944 = vunpack.c.h.b16 %v6864
    %v6945 = vunpack.c.l.b16 %v6865
    %v6946 = vunpack.c.h.b16 %v6865
    %v6947 = vunpack.c.l.b16 %v6866
    %v6948 = vunpack.c.h.b16 %v6866
    %v6949 = vunpack.c.l.b16 %v6867
    %v6950 = vunpack.c.h.b16 %v6867
    %v6951 = vunpack.c.l.b16 %v6868
    %v6952 = vunpack.c.h.b16 %v6868
    %v6953 = vunpack.c.l.b16 %v6869
    %v6954 = vunpack.c.h.b16 %v6869
    %v6955 = vunpack.c.l.b16 %v6870
    %v6956 = vunpack.c.h.b16 %v6870
    %v6957 = vunpack.c.l.b16 %v6871
    %v6958 = vunpack.c.h.b16 %v6871
    %v6959 = vunpack.c.l.b16 %v6872
    %v6960 = vunpack.c.h.b16 %v6872
    %v6961 = vunpack.c.l.b16 %v6873
    %v6962 = vunpack.c.h.b16 %v6873
    %v6963 = vunpack.c.l.b16 %v6874
    %v6964 = vunpack.c.h.b16 %v6874
    %v6965 = vunpack.c.l.b16 %v6875
    %v6966 = vunpack.c.h.b16 %v6875
    %v6967 = vunpack.c.l.b16 %v6876
    %v6968 = vunpack.c.h.b16 %v6876
    %v6969 = vunpack.c.l.b16 %v6877
    %v6970 = vunpack.c.h.b16 %v6877
    %v6971 = vunpack.c.l.b16 %v6878
    %v6972 = vunpack.c.h.b16 %v6878
    %v6973 = vunpack.c.l.b16 %v6879
    %v6974 = vunpack.c.h.b16 %v6879
    %v6975 = vunpack.c.l.b16 %v6880
    %v6976 = vunpack.c.h.b16 %v6880
    %v6977 = vunpack.c.l.b16 %v6881
    %v6978 = vunpack.c.h.b16 %v6881
    %v6979 = vunpack.c.l.b16 %v6882
    %v6980 = vunpack.c.h.b16 %v6882
    %v6981 = vunpack.c.l.b16 %v6883
    %v6982 = vunpack.c.h.b16 %v6883
    %v6983 = vunpack.c.l.b16 %v6884
    %v6984 = vunpack.c.h.b16 %v6884
    %v6985 = vunpack.c.l.b16 %v6885
    %v6986 = vunpack.c.h.b16 %v6885
    %v6987 = vunpack.c.l.b16 %v6886
    %v6988 = vunpack.c.h.b16 %v6886
    %v6989 = vunpack.c.l.b16 %v6887
    %v6990 = vunpack.c.h.b16 %v6887
    %v6991 = vunpack.c.l.b16 %v6888
    %v6992 = vunpack.c.h.b16 %v6888
    %v6993 = vunpack.c.l.b16 %v6889
    %v6994 = vunpack.c.h.b16 %v6889
    %v6995 = vunpack.c.l.b16 %v6890
    %v6996 = vunpack.c.h.b16 %v6890
    %v6997 = vunpack.c.l.b16 %v6891
    %v6998 = vunpack.c.h.b16 %v6891
    %v6999 = vunpack.c.l.b16 %v6892
    %v7000 = vunpack.c.h.b16 %v6892
    %v7001 = vpack.c.b16 %v6939, %v6937
    %v7002 = vpack.c.b16 %v6940, %v6938
    %v7003 = vpack.c.b16 %v6943, %v6941
    %v7004 = vpack.c.b16 %v6944, %v6942
    %v7005 = vpack.c.b16 %v6947, %v6945
    %v7006 = vpack.c.b16 %v6948, %v6946
    %v7007 = vpack.c.b16 %v6951, %v6949
    %v7008 = vpack.c.b16 %v6952, %v6950
    %v7009 = vpack.c.b16 %v6955, %v6953
    %v7010 = vpack.c.b16 %v6956, %v6954
    %v7011 = vpack.c.b16 %v6959, %v6957
    %v7012 = vpack.c.b16 %v6960, %v6958
    %v7013 = vpack.c.b16 %v6963, %v6961
    %v7014 = vpack.c.b16 %v6964, %v6962
    %v7015 = vpack.c.b16 %v6967, %v6965
    %v7016 = vpack.c.b16 %v6968, %v6966
    %v7017 = vpack.c.b16 %v6971, %v6969
    %v7018 = vpack.c.b16 %v6972, %v6970
    %v7019 = vpack.c.b16 %v6975, %v6973
    %v7020 = vpack.c.b16 %v6976, %v6974
    %v7021 = vpack.c.b16 %v6979, %v6977
    %v7022 = vpack.c.b16 %v6980, %v6978
    %v7023 = vpack.c.b16 %v6983, %v6981
    %v7024 = vpack.c.b16 %v6984, %v6982
    %v7025 = vpack.c.b16 %v6987, %v6985
    %v7026 = vpack.c.b16 %v6988, %v6986
    %v7027 = vpack.c.b16 %v6991, %v6989
    %v7028 = vpack.c.b16 %v6992, %v6990
    %v7029 = vpack.c.b16 %v6995, %v6993
    %v7030 = vpack.c.b16 %v6996, %v6994
    %v7031 = vpack.c.b16 %v6999, %v6997
    %v7032 = vpack.c.b16 %v7000, %v6998
    %7065 = vmatprep.subr.bf16.mxu0 %v7002
    %7066 = vmatpush1.bf16.msra.mxu0 %v7001
    %7067 = vmatprep.subr.bf16.mxu0 %v7004
    %7068 = vmatpush1.bf16.msra.mxu0 %v7003
    %7069 = vmatprep.subr.bf16.mxu0 %v7006
    %7070 = vmatpush1.bf16.msra.mxu0 %v7005
    %7071 = vmatprep.subr.bf16.mxu0 %v7008
    %7072 = vmatpush1.bf16.msra.mxu0 %v7007
    %7073 = vmatprep.subr.bf16.mxu0 %v7010
    %7074 = vmatpush1.bf16.msra.mxu0 %v7009
    %7075 = vmatprep.subr.bf16.mxu0 %v7012
    %7076 = vmatpush1.bf16.msra.mxu0 %v7011
    %7077 = vmatprep.subr.bf16.mxu0 %v7014
    %7078 = vmatpush1.bf16.msra.mxu0 %v7013
    %7079 = vmatprep.subr.bf16.mxu0 %v7016
    %7080 = vmatpush1.bf16.msra.mxu0 %v7015
    %7081 = vmatprep.subr.bf16.mxu0 %v7018
    %7082 = vmatpush1.bf16.msra.mxu0 %v7017
    %7083 = vmatprep.subr.bf16.mxu0 %v7020
    %7084 = vmatpush1.bf16.msra.mxu0 %v7019
    %7085 = vmatprep.subr.bf16.mxu0 %v7022
    %7086 = vmatpush1.bf16.msra.mxu0 %v7021
    %7087 = vmatprep.subr.bf16.mxu0 %v7024
    %7088 = vmatpush1.bf16.msra.mxu0 %v7023
    %7089 = vmatprep.subr.bf16.mxu0 %v7026
    %7090 = vmatpush1.bf16.msra.mxu0 %v7025
    %7091 = vmatprep.subr.bf16.mxu0 %v7028
    %7092 = vmatpush1.bf16.msra.mxu0 %v7027
    %7093 = vmatprep.subr.bf16.mxu0 %v7030
    %7094 = vmatpush1.bf16.msra.mxu0 %v7029
    %7095 = vmatprep.subr.bf16.mxu0 %v7032
    %7096 = vmatpush1.bf16.msra.mxu0 %v7031
    %7097 = vmatprep.mubr.bf16.mxu0 %v6860
    %7098 = vmatmul.mubr.bf16.gmra.mrb[0].mxu0 %v6859
    %v7099 = vpop.f32.mrb[0].mxu0
    %v7100 = vadd.f32 %v6898, %v7099
    %v7101 = vpop.f32.mrb[0].mxu0
    %v7102 = vadd.f32 %v6902, %v7101
    %v7103 = vpop.f32.mrb[0].mxu0
    %v7104 = vpop.f32.mrb[0].mxu0
    %7105 = vdwg.mxu0
    %v7108 = vcombine.low %v7100, %v7102
    %v7110 = vunpack.c.l.s4 1983009808
    %v7111 = vunpack.c.0.s8 %v7110
    %v7112 = vlaneseq
    %v7113 = vshrl.u32 %v7112, 7
    %v7114 = vsub.s32 %v7111, %v7113
    %v7115 = vrot.slane %v7108, %v7114
    %s7117 = scalar_lea.vmem %s12, 12
    %7118 = vst [vmem:[%s7117] sm:$0xf] %v7115
    // Predicated region
    $region74: #{jepa_forward.1} parent=1 // pred_check
      _
    $region75: #{jepa_forward.1} parent=1 // pred_check_branch
      %7120 = sbr.rel (0) target = $region77
    $region76: #{jepa_forward.1} parent=1 // pred_region
      _
    $region77: #{jepa_forward.1} parent=1 // pred_fallthru
      _
    // Predicated region
    $region78: #{jepa_forward.1} parent=1 // pred_check
      _
    $region79: #{jepa_forward.1} parent=1 // pred_check_branch
      %7122 = sbr.rel (0) target = $region81
    $region80: #{jepa_forward.1} parent=1 // pred_region
      _
    $region81: #{jepa_forward.1} parent=1 // pred_fallthru
      _
    %7123 = vsyncpa [#allocation3], 1
    %7124 = vsyncpa [#allocation5], 1
    %7125 = vsyncpa [#allocation8], 1
    %7126 = vsyncpa [#allocation11], 1

</llo_original>
